<compile_context>
chip_gen: v5e
topology: v5e:2x2
jax: 0.10.0
libtpu: 0.0.40
codegen_flags: <defaults>
</compile_context>

<pallas_src>
import functools

import jax
import jax.numpy as jnp
from jax.experimental import pallas as pl
from jax.experimental.pallas import tpu as pltpu


_HID1_LOGICAL = 625        # PyTorch hidden size
_HID1 = 640                # padded to 5*128 for lane-dense layout
_HID2 = 256
_NUM_CLASSES = 8
_OUT_PAD = 128             # logits padded to one full lane group
_FEAT = 1792
_STEM_C = 48
_KPAD = 32                 # im2col K = 3*3*3 = 27, padded to 32

_B_TILE = 128              # images per grid step (v5e/v7x: 128, v6e: 256)


# ----------------------------------------------------------------------------
# Fused Pallas kernel: stem conv -> GAP -> projection -> MLP head
# (processes B_TILE images per invocation)
# ----------------------------------------------------------------------------
def _fused_forward_kernel(p_ref, ws_ref, bs_ref, wp_ref, bp_ref,
                          w1_ref, b1_ref, w2_ref, b2_ref, w3_ref, b3_ref,
                          o_ref, *, inv_hw):
    bt, hw, kp = p_ref.shape

    # --- stem: Conv2d(3, 48, k=3, s=2, p=1) as im2col matmul + bias + SiLU ---
    # bf16 patches x bf16 weight, f32 accumulation; M = bt*hw rows.
    patches = p_ref[...].reshape(bt * hw, kp)                    # (bt*hw, 32) bf16
    stem = jnp.dot(patches, ws_ref[...],
                   preferred_element_type=jnp.float32) + bs_ref[...]
    stem = stem * jax.nn.sigmoid(stem)                           # SiLU, (bt*hw, 48)

    # --- global average pool per image: sublane sum, scalar 1/HW on pooled ----
    pooled = jnp.sum(stem.reshape(bt, hw, _STEM_C), axis=1) * inv_hw   # (bt, 48)

    # --- backbone stand-in: 1x1 projection 48 -> 1792 + SiLU (bf16 W, f32 acc)
    z = jnp.dot(pooled.astype(jnp.bfloat16), wp_ref[...],
                preferred_element_type=jnp.float32) + bp_ref[...]
    feat = z * jax.nn.sigmoid(z)                                 # (bt, 1792)

    # --- head: Linear(1792,625->640)+ReLU -> Dropout(id) ->
    #           Linear(640,256)+ReLU -> Linear(256,8->128) ---------------------
    h = jnp.dot(feat.astype(jnp.bfloat16), w1_ref[...],
                preferred_element_type=jnp.float32) + b1_ref[...]
    h = jnp.maximum(h, 0.0)
    h = jnp.dot(h.astype(jnp.bfloat16), w2_ref[...],
                preferred_element_type=jnp.float32) + b2_ref[...]
    h = jnp.maximum(h, 0.0)
    logits = jnp.dot(h.astype(jnp.bfloat16), w3_ref[...],
                     preferred_element_type=jnp.float32) + b3_ref[...]
    o_ref[...] = logits.astype(o_ref.dtype)                      # (bt, 128)


# ----------------------------------------------------------------------------
# Host-side glue
# ----------------------------------------------------------------------------
def _im2col(x_nhwc, k=3, stride=2, pad=1):
    n, h, w, c = x_nhwc.shape
    xp = jnp.pad(x_nhwc, ((0, 0), (pad, pad), (pad, pad), (0, 0)))
    ho = (h + 2 * pad - k) // stride + 1
    wo = (w + 2 * pad - k) // stride + 1
    patches = []
    for i in range(k):
        for j in range(k):
            patches.append(
                xp[:, i:i + ho * stride:stride, j:j + wo * stride:stride, :])
    p = jnp.stack(patches, axis=-2)                     # (N, Ho, Wo, k*k, C)
    return p.reshape(n, ho * wo, k * k * c), ho, wo


def network_forward(x_nchw, params, *, b_tile=_B_TILE):
    n = x_nchw.shape[0]
    b_tile = int(min(b_tile, n))
    n_tiles = int(pl.cdiv(n, b_tile))
    n_pad = n_tiles * b_tile

    x = jnp.transpose(x_nchw, (0, 2, 3, 1))             # NCHW -> NHWC
    patches, ho, wo = _im2col(x, k=3, stride=2, pad=1)  # (N, Ho*Wo, 27) f32
    hw = ho * wo
    patches = jnp.pad(
        patches, ((0, n_pad - n), (0, 0), (0, _KPAD - patches.shape[-1])))
    patches = patches.astype(jnp.bfloat16)              # halve the DMA stream

    kernel = functools.partial(_fused_forward_kernel, inv_hw=1.0 / float(hw))

    def _resident(arr):
        # Grid-invariant weight/bias: full-array block, constant index_map,
        # single-buffered (no point double-buffering something that never moves).
        nd = arr.ndim
        return pl.BlockSpec(arr.shape, lambda b, _nd=nd: (0,) * _nd,
                            pipeline_mode=pl.Buffered(1))

    out = pl.pallas_call(
        kernel,
        out_shape=jax.ShapeDtypeStruct((n_pad, _OUT_PAD), jnp.float32),
        grid=(n_tiles,),
        in_specs=[
            pl.BlockSpec((b_tile, hw, _KPAD), lambda b: (b, 0, 0)),  # patch tile
            _resident(params["stem_w"]),
            _resident(params["stem_b"]),
            _resident(params["proj_w"]),
            _resident(params["proj_b"]),
            _resident(params["w1"]),
            _resident(params["b1"]),
            _resident(params["w2"]),
            _resident(params["b2"]),
            _resident(params["w3"]),
            _resident(params["b3"]),
        ],
        out_specs=pl.BlockSpec((b_tile, _OUT_PAD), lambda b: (b, 0)),
        compiler_params=pltpu.CompilerParams(
            dimension_semantics=("parallel",),
            vmem_limit_bytes=48 * 1024 * 1024,
        ),
    )(patches, params["stem_w"], params["stem_b"],
      params["proj_w"], params["proj_b"],
      params["w1"], params["b1"], params["w2"], params["b2"],
      params["w3"], params["b3"])

    return out[:n, :_NUM_CLASSES]


# ----------------------------------------------------------------------------
# Pure-JAX f32 reference (same padded-parameter layout) for a tolerance check.
# ----------------------------------------------------------------------------
def _reference_forward(x_nchw, params):
    n = x_nchw.shape[0]
    x = jnp.transpose(x_nchw, (0, 2, 3, 1))
    patches, ho, wo = _im2col(x, k=3, stride=2, pad=1)
    hw = ho * wo
    patches = jnp.pad(patches, ((0, 0), (0, 0), (0, _KPAD - patches.shape[-1])))
    patches = patches.astype(jnp.bfloat16).astype(jnp.float32)

    def f32(a):
        return a.astype(jnp.float32)

    stem = patches.reshape(n * hw, _KPAD) @ f32(params["stem_w"]) + params["stem_b"]
    stem = stem * jax.nn.sigmoid(stem)
    pooled = jnp.sum(stem.reshape(n, hw, _STEM_C), axis=1) * (1.0 / float(hw))
    z = pooled @ f32(params["proj_w"]) + params["proj_b"]
    feat = z * jax.nn.sigmoid(z)
    h = jnp.maximum(feat @ f32(params["w1"]) + params["b1"], 0.0)
    h = jnp.maximum(h @ f32(params["w2"]) + params["b2"], 0.0)
    logits = h @ f32(params["w3"]) + params["b3"]
    return logits[:, :_NUM_CLASSES]


# ----------------------------------------------------------------------------
# Deterministic parameter init (shapes from the module's __init__), converted
# to the kernel-friendly layout (im2col weight, 625->640 / 8->128 pads,
# bf16 weights, f32 biases).
# ----------------------------------------------------------------------------
def init_params(key):
    ks = jax.random.split(key, 8)

    def dense(k, fan_in, shape):
        return jax.random.normal(k, shape, jnp.float32) / jnp.sqrt(float(fan_in))

    # Logical (PyTorch-shaped) parameters.
    stem_w = dense(ks[0], 3 * 3 * 3, (_STEM_C, 3, 3, 3))   # Conv2d(3,48,3,s=2,p=1)
    stem_b = jnp.zeros((_STEM_C,), jnp.float32)
    proj_w = dense(ks[1], _STEM_C, (_STEM_C, _FEAT))       # backbone stand-in
    proj_b = jnp.zeros((_FEAT,), jnp.float32)
    w1 = dense(ks[2], _FEAT, (_FEAT, _HID1_LOGICAL))
    b1 = dense(ks[3], _FEAT, (_HID1_LOGICAL,))
    w2 = dense(ks[4], _HID1_LOGICAL, (_HID1_LOGICAL, _HID2))
    b2 = dense(ks[5], _HID1_LOGICAL, (_HID2,))
    w3 = dense(ks[6], _HID2, (_HID2, _NUM_CLASSES))
    b3 = dense(ks[7], _HID2, (_NUM_CLASSES,))

    # Kernel layout:
    #  - im2col stem weight (kh,kw,Cin)-major, K padded 27->32, bf16
    #  - hidden 625 zero-padded to 640; logits 8 zero-padded to 128
    #  - matmul weights in bf16 (f32 accumulation in-kernel), biases in f32
    stem_w2d = jnp.transpose(stem_w, (2, 3, 1, 0)).reshape(27, _STEM_C)
    stem_w2d = jnp.pad(stem_w2d, ((0, _KPAD - 27), (0, 0)))
    w1_p = jnp.pad(w1, ((0, 0), (0, _HID1 - _HID1_LOGICAL)))
    b1_p = jnp.pad(b1, ((0, _HID1 - _HID1_LOGICAL),))
    w2_p = jnp.pad(w2, ((0, _HID1 - _HID1_LOGICAL), (0, 0)))
    w3_p = jnp.pad(w3, ((0, 0), (0, _OUT_PAD - _NUM_CLASSES)))
    b3_p = jnp.pad(b3, ((0, _OUT_PAD - _NUM_CLASSES),))

    return {
        "stem_w": stem_w2d.astype(jnp.bfloat16),           # (32, 48)    bf16
        "stem_b": stem_b.reshape(1, -1),                   # (1, 48)     f32
        "proj_w": proj_w.astype(jnp.bfloat16),              # (48, 1792)  bf16
        "proj_b": proj_b.reshape(1, -1),                    # (1, 1792)   f32
        "w1": w1_p.astype(jnp.bfloat16),                     # (1792, 640) bf16
        "b1": b1_p.reshape(1, -1),                           # (1, 640)    f32
        "w2": w2_p.astype(jnp.bfloat16),                     # (640, 256)  bf16
        "b2": b2.reshape(1, -1),                             # (1, 256)    f32
        "w3": w3_p.astype(jnp.bfloat16),                     # (256, 128)  bf16
        "b3": b3_p.reshape(1, -1),                           # (1, 128)    f32
    }


if __name__ == "__main__":
    key = jax.random.PRNGKey(0)
    k_param, k_x = jax.random.split(key)
    params = init_params(k_param)

    # Small image input consistent with the module's forward (NCHW like PyTorch).
    x = jax.random.normal(k_x, (2, 3, 32, 32), jnp.float32)

    out = jax.jit(network_forward)(x, params)
    out = jax.block_until_ready(out)

    assert out.shape == (2, _NUM_CLASSES), out.shape
    assert out.dtype == jnp.float32

    # Tolerance check against the pure-JAX f32 reference (kernel uses bf16
    # activations between matmuls, so allow a loose absolute tolerance).
    ref = jax.block_until_ready(_reference_forward(x, params))
    max_err = float(jnp.max(jnp.abs(out - ref)))
    assert max_err < 5e-2, f"max abs error vs f32 reference: {max_err}"

    print("KERNEL_OK")
</pallas_src>

<mosaic_0001>
module attributes {stable_mosaic.version = 11 : i64} {
  func.func @_fused_forward_kernel(%arg0: i32, %arg1: memref<2x256x32xbf16, #tpu.memory_space<vmem>>, %arg2: memref<32x48xbf16, #tpu.memory_space<vmem>>, %arg3: memref<1x48xf32, #tpu.memory_space<vmem>>, %arg4: memref<48x1792xbf16, #tpu.memory_space<vmem>>, %arg5: memref<1x1792xf32, #tpu.memory_space<vmem>>, %arg6: memref<1792x640xbf16, #tpu.memory_space<vmem>>, %arg7: memref<1x640xf32, #tpu.memory_space<vmem>>, %arg8: memref<640x256xbf16, #tpu.memory_space<vmem>>, %arg9: memref<1x256xf32, #tpu.memory_space<vmem>>, %arg10: memref<256x128xbf16, #tpu.memory_space<vmem>>, %arg11: memref<1x128xf32, #tpu.memory_space<vmem>>, %arg12: memref<2x128xf32, #tpu.memory_space<vmem>>) attributes {dimension_semantics = [#tpu.dimension_semantics<parallel>], iteration_bounds = array<i64: 1>, scalar_prefetch = 0 : i64, scratch_operands = 0 : i64, tpu.core_type = #tpu.core_type<tc>, window_params = [{transform_indices = @transform_0, window_bounds = array<i64: 2, 256, 32>}, {pipeline_mode = #tpu.pipeline_mode<synchronous>, transform_indices = @transform_1, window_bounds = array<i64: 32, 48>}, {pipeline_mode = #tpu.pipeline_mode<synchronous>, transform_indices = @transform_2, window_bounds = array<i64: 1, 48>}, {pipeline_mode = #tpu.pipeline_mode<synchronous>, transform_indices = @transform_3, window_bounds = array<i64: 48, 1792>}, {pipeline_mode = #tpu.pipeline_mode<synchronous>, transform_indices = @transform_4, window_bounds = array<i64: 1, 1792>}, {pipeline_mode = #tpu.pipeline_mode<synchronous>, transform_indices = @transform_5, window_bounds = array<i64: 1792, 640>}, {pipeline_mode = #tpu.pipeline_mode<synchronous>, transform_indices = @transform_6, window_bounds = array<i64: 1, 640>}, {pipeline_mode = #tpu.pipeline_mode<synchronous>, transform_indices = @transform_7, window_bounds = array<i64: 640, 256>}, {pipeline_mode = #tpu.pipeline_mode<synchronous>, transform_indices = @transform_8, window_bounds = array<i64: 1, 256>}, {pipeline_mode = #tpu.pipeline_mode<synchronous>, transform_indices = @transform_9, window_bounds = array<i64: 256, 128>}, {pipeline_mode = #tpu.pipeline_mode<synchronous>, transform_indices = @transform_10, window_bounds = array<i64: 1, 128>}, {transform_indices = @transform_11, window_bounds = array<i64: 2, 128>}]} {
    %c0 = arith.constant 0 : index
    %c0_0 = arith.constant 0 : index
    %c0_1 = arith.constant 0 : index
    %0 = vector.load %arg1[%c0, %c0_0, %c0_1] : memref<2x256x32xbf16, #tpu.memory_space<vmem>>, vector<2x256x32xbf16>
    %1 = vector.shape_cast %0 : vector<2x256x32xbf16> to vector<512x32xbf16>
    %c0_2 = arith.constant 0 : index
    %c0_3 = arith.constant 0 : index
    %2 = vector.load %arg2[%c0_2, %c0_3] : memref<32x48xbf16, #tpu.memory_space<vmem>>, vector<32x48xbf16>
    %cst = arith.constant dense<0.000000e+00> : vector<512x48xf32>
    %3 = tpu.matmul %1, %2, %cst {dimension_numbers = #tpu.dot_dimension_numbers<[1], [0], [0], [1], [0, 0, 1, 1], [], []>} : vector<512x32xbf16>, vector<32x48xbf16>, vector<512x48xf32> -> vector<512x48xf32>
    %c0_4 = arith.constant 0 : index
    %c0_5 = arith.constant 0 : index
    %4 = vector.load %arg3[%c0_4, %c0_5] : memref<1x48xf32, #tpu.memory_space<vmem>>, vector<1x48xf32>
    %5 = vector.broadcast %4 : vector<1x48xf32> to vector<512x48xf32>
    %6 = arith.addf %3, %5 : vector<512x48xf32>
    %7 = arith.negf %6 : vector<512x48xf32>
    %8 = math.exp %7 : vector<512x48xf32>
    %cst_6 = arith.constant 1.000000e+00 : f32
    %9 = vector.broadcast %cst_6 : f32 to vector<512x48xf32>
    %10 = arith.addf %9, %8 : vector<512x48xf32>
    %11 = arith.divf %9, %10 : vector<512x48xf32>
    %12 = arith.mulf %6, %11 : vector<512x48xf32>
    %13 = vector.shape_cast %12 : vector<512x48xf32> to vector<2x256x48xf32>
    %cst_7 = arith.constant dense<0.000000e+00> : vector<2x48xf32>
    %14 = vector.multi_reduction <add>, %13, %cst_7 [1] : vector<2x256x48xf32> to vector<2x48xf32>
    %cst_8 = arith.constant 3.906250e-03 : f32
    %15 = vector.broadcast %cst_8 : f32 to vector<2x48xf32>
    %16 = arith.mulf %14, %15 : vector<2x48xf32>
    %17 = arith.truncf %16 : vector<2x48xf32> to vector<2x48xbf16>
    %c0_9 = arith.constant 0 : index
    %c0_10 = arith.constant 0 : index
    %18 = vector.load %arg4[%c0_9, %c0_10] : memref<48x1792xbf16, #tpu.memory_space<vmem>>, vector<48x1792xbf16>
    %cst_11 = arith.constant dense<0.000000e+00> : vector<2x1792xf32>
    %19 = tpu.matmul %17, %18, %cst_11 {dimension_numbers = #tpu.dot_dimension_numbers<[1], [0], [0], [1], [0, 0, 1, 1], [], []>} : vector<2x48xbf16>, vector<48x1792xbf16>, vector<2x1792xf32> -> vector<2x1792xf32>
    %c0_12 = arith.constant 0 : index
    %c0_13 = arith.constant 0 : index
    %20 = vector.load %arg5[%c0_12, %c0_13] : memref<1x1792xf32, #tpu.memory_space<vmem>>, vector<1x1792xf32>
    %21 = vector.broadcast %20 : vector<1x1792xf32> to vector<2x1792xf32>
    %22 = arith.addf %19, %21 : vector<2x1792xf32>
    %23 = arith.negf %22 : vector<2x1792xf32>
    %24 = math.exp %23 : vector<2x1792xf32>
    %cst_14 = arith.constant 1.000000e+00 : f32
    %25 = vector.broadcast %cst_14 : f32 to vector<2x1792xf32>
    %26 = arith.addf %25, %24 : vector<2x1792xf32>
    %27 = arith.divf %25, %26 : vector<2x1792xf32>
    %28 = arith.mulf %22, %27 : vector<2x1792xf32>
    %29 = arith.truncf %28 : vector<2x1792xf32> to vector<2x1792xbf16>
    %c0_15 = arith.constant 0 : index
    %c0_16 = arith.constant 0 : index
    %30 = vector.load %arg6[%c0_15, %c0_16] : memref<1792x640xbf16, #tpu.memory_space<vmem>>, vector<1792x640xbf16>
    %cst_17 = arith.constant dense<0.000000e+00> : vector<2x640xf32>
    %31 = tpu.matmul %29, %30, %cst_17 {dimension_numbers = #tpu.dot_dimension_numbers<[1], [0], [0], [1], [0, 0, 1, 1], [], []>} : vector<2x1792xbf16>, vector<1792x640xbf16>, vector<2x640xf32> -> vector<2x640xf32>
    %c0_18 = arith.constant 0 : index
    %c0_19 = arith.constant 0 : index
    %32 = vector.load %arg7[%c0_18, %c0_19] : memref<1x640xf32, #tpu.memory_space<vmem>>, vector<1x640xf32>
    %33 = vector.broadcast %32 : vector<1x640xf32> to vector<2x640xf32>
    %34 = arith.addf %31, %33 : vector<2x640xf32>
    %cst_20 = arith.constant 0.000000e+00 : f32
    %35 = vector.broadcast %cst_20 : f32 to vector<2x640xf32>
    %36 = arith.maximumf %34, %35 : vector<2x640xf32>
    %37 = arith.truncf %36 : vector<2x640xf32> to vector<2x640xbf16>
    %c0_21 = arith.constant 0 : index
    %c0_22 = arith.constant 0 : index
    %38 = vector.load %arg8[%c0_21, %c0_22] : memref<640x256xbf16, #tpu.memory_space<vmem>>, vector<640x256xbf16>
    %cst_23 = arith.constant dense<0.000000e+00> : vector<2x256xf32>
    %39 = tpu.matmul %37, %38, %cst_23 {dimension_numbers = #tpu.dot_dimension_numbers<[1], [0], [0], [1], [0, 0, 1, 1], [], []>} : vector<2x640xbf16>, vector<640x256xbf16>, vector<2x256xf32> -> vector<2x256xf32>
    %c0_24 = arith.constant 0 : index
    %c0_25 = arith.constant 0 : index
    %40 = vector.load %arg9[%c0_24, %c0_25] : memref<1x256xf32, #tpu.memory_space<vmem>>, vector<1x256xf32>
    %41 = vector.broadcast %40 : vector<1x256xf32> to vector<2x256xf32>
    %42 = arith.addf %39, %41 : vector<2x256xf32>
    %cst_26 = arith.constant 0.000000e+00 : f32
    %43 = vector.broadcast %cst_26 : f32 to vector<2x256xf32>
    %44 = arith.maximumf %42, %43 : vector<2x256xf32>
    %45 = arith.truncf %44 : vector<2x256xf32> to vector<2x256xbf16>
    %c0_27 = arith.constant 0 : index
    %c0_28 = arith.constant 0 : index
    %46 = vector.load %arg10[%c0_27, %c0_28] : memref<256x128xbf16, #tpu.memory_space<vmem>>, vector<256x128xbf16>
    %cst_29 = arith.constant dense<0.000000e+00> : vector<2x128xf32>
    %47 = tpu.matmul %45, %46, %cst_29 {dimension_numbers = #tpu.dot_dimension_numbers<[1], [0], [0], [1], [0, 0, 1, 1], [], []>} : vector<2x256xbf16>, vector<256x128xbf16>, vector<2x128xf32> -> vector<2x128xf32>
    %c0_30 = arith.constant 0 : index
    %c0_31 = arith.constant 0 : index
    %48 = vector.load %arg11[%c0_30, %c0_31] : memref<1x128xf32, #tpu.memory_space<vmem>>, vector<1x128xf32>
    %49 = vector.broadcast %48 : vector<1x128xf32> to vector<2x128xf32>
    %50 = arith.addf %47, %49 : vector<2x128xf32>
    %c0_32 = arith.constant 0 : index
    %c0_33 = arith.constant 0 : index
    %51 = vector.load %arg12[%c0_32, %c0_33] : memref<2x128xf32, #tpu.memory_space<vmem>>, vector<2x128xf32>
    tpu.vector_store %arg12[%c0_32, %c0_33], %50 {strides = array<i32>} : memref<2x128xf32, #tpu.memory_space<vmem>>, vector<2x128xf32>,
    return
  }
  func.func @transform_0(%arg0: i32) -> (i32, i32, i32) {
    %c0_i32 = arith.constant 0 : i32
    %c0_i32_0 = arith.constant 0 : i32
    %c0_i32_1 = arith.constant 0 : i32
    return %arg0, %c0_i32, %c0_i32_0 : i32, i32, i32
  }
  func.func @transform_1(%arg0: i32) -> (i32, i32) {
    %c0_i32 = arith.constant 0 : i32
    %c0_i32_0 = arith.constant 0 : i32
    %c0_i32_1 = arith.constant 0 : i32
    return %c0_i32, %c0_i32_0 : i32, i32
  }
  func.func @transform_2(%arg0: i32) -> (i32, i32) {
    %c0_i32 = arith.constant 0 : i32
    %c0_i32_0 = arith.constant 0 : i32
    %c0_i32_1 = arith.constant 0 : i32
    return %c0_i32, %c0_i32_0 : i32, i32
  }
  func.func @transform_3(%arg0: i32) -> (i32, i32) {
    %c0_i32 = arith.constant 0 : i32
    %c0_i32_0 = arith.constant 0 : i32
    %c0_i32_1 = arith.constant 0 : i32
    return %c0_i32, %c0_i32_0 : i32, i32
  }
  func.func @transform_4(%arg0: i32) -> (i32, i32) {
    %c0_i32 = arith.constant 0 : i32
    %c0_i32_0 = arith.constant 0 : i32
    %c0_i32_1 = arith.constant 0 : i32
    return %c0_i32, %c0_i32_0 : i32, i32
  }
  func.func @transform_5(%arg0: i32) -> (i32, i32) {
    %c0_i32 = arith.constant 0 : i32
    %c0_i32_0 = arith.constant 0 : i32
    %c0_i32_1 = arith.constant 0 : i32
    return %c0_i32, %c0_i32_0 : i32, i32
  }
  func.func @transform_6(%arg0: i32) -> (i32, i32) {
    %c0_i32 = arith.constant 0 : i32
    %c0_i32_0 = arith.constant 0 : i32
    %c0_i32_1 = arith.constant 0 : i32
    return %c0_i32, %c0_i32_0 : i32, i32
  }
  func.func @transform_7(%arg0: i32) -> (i32, i32) {
    %c0_i32 = arith.constant 0 : i32
    %c0_i32_0 = arith.constant 0 : i32
    %c0_i32_1 = arith.constant 0 : i32
    return %c0_i32, %c0_i32_0 : i32, i32
  }
  func.func @transform_8(%arg0: i32) -> (i32, i32) {
    %c0_i32 = arith.constant 0 : i32
    %c0_i32_0 = arith.constant 0 : i32
    %c0_i32_1 = arith.constant 0 : i32
    return %c0_i32, %c0_i32_0 : i32, i32
  }
  func.func @transform_9(%arg0: i32) -> (i32, i32) {
    %c0_i32 = arith.constant 0 : i32
    %c0_i32_0 = arith.constant 0 : i32
    %c0_i32_1 = arith.constant 0 : i32
    return %c0_i32, %c0_i32_0 : i32, i32
  }
  func.func @transform_10(%arg0: i32) -> (i32, i32) {
    %c0_i32 = arith.constant 0 : i32
    %c0_i32_0 = arith.constant 0 : i32
    %c0_i32_1 = arith.constant 0 : i32
    return %c0_i32, %c0_i32_0 : i32, i32
  }
  func.func @transform_11(%arg0: i32) -> (i32, i32) {
    %c0_i32 = arith.constant 0 : i32
    %c0_i32_0 = arith.constant 0 : i32
    return %arg0, %c0_i32 : i32, i32
  }
}

</mosaic_0001>

<llo_original>
// kernel: network_forward.1
$region0: #{network_forward.1}
  #allocation0 [shape = 'u32[]', space=smem, size = 0x4, offset = 0x4, fixed_abs, tag = 'smem constant byte address 0x4 - core index']
  #allocation1 [shape = 'u32[72,128]{1,0:T(1,128)}', space=vmem, size = 0x9000, scoped, tag = 'internal scratch']
  %s0 = inlined_call_operand.vmem [shape: bf16[2,256,32], index: 0, kind: input, shape index: {}]
  %s1 = inlined_call_operand.hbm [shape: bf16[32,48], index: 1, kind: input, shape index: {}]
  %s2 = inlined_call_operand.hbm [shape: f32[1,48], index: 2, kind: input, shape index: {}]
  %s3 = inlined_call_operand.hbm [shape: bf16[48,1792], index: 3, kind: input, shape index: {}]
  %s4 = inlined_call_operand.hbm [shape: f32[1,1792], index: 4, kind: input, shape index: {}]
  %s5 = inlined_call_operand.hbm [shape: bf16[1792,640], index: 5, kind: input, shape index: {}]
  %s6 = inlined_call_operand.hbm [shape: f32[1,640], index: 6, kind: input, shape index: {}]
  %s7 = inlined_call_operand.hbm [shape: bf16[640,256], index: 7, kind: input, shape index: {}]
  %s8 = inlined_call_operand.hbm [shape: f32[1,256], index: 8, kind: input, shape index: {}]
  %s9 = inlined_call_operand.hbm [shape: bf16[256,128], index: 9, kind: input, shape index: {}]
  %s10 = inlined_call_operand.hbm [shape: f32[1,128], index: 10, kind: input, shape index: {}]
  %s11 = inlined_call_operand.hbm [shape: f32[2,128], index: 11, kind: output, shape index: {}]
  %s12 = sld [smem:[#allocation0]]
  $region94: #{network_forward.1} parent=0
    _
  %s14 = ssub.s32 1, %s12
  %s15 = scalar_select 0, %s14, %s12
  $region1: #{network_forward.1} parent=0
    #allocation2 [shape = 'u8[8192]{0}', space=vmem, size = 0x2000, scoped, tag = 'input window, operand 1, single buffered']
    #allocation3 [shape = 's32[1]{0}', space=sflag, size = 0x4, scoped, tag = 'scoped memory for network_forward.1']
    #allocation4 [shape = 's32[1]{0}', space=sflag, size = 0x4, scoped, tag = 'scoped memory for network_forward.1']
    #allocation5 [shape = 'u8[512]{0}', space=vmem, size = 0x400, scoped, tag = 'input window, operand 2, single buffered']
    #allocation6 [shape = 's32[1]{0}', space=sflag, size = 0x4, scoped, tag = 'scoped memory for network_forward.1']
    #allocation7 [shape = 'u8[172032]{0}', space=vmem, size = 0x2a000, scoped, tag = 'input window, operand 3, single buffered']
    #allocation8 [shape = 'u8[7168]{0}', space=vmem, size = 0x1c00, scoped, tag = 'input window, operand 4, single buffered']
    #allocation9 [shape = 's32[1]{0}', space=sflag, size = 0x4, scoped, tag = 'scoped memory for network_forward.1']
    #allocation10 [shape = 'u8[2293760]{0}', space=vmem, size = 0x230000, scoped, tag = 'input window, operand 5, single buffered']
    #allocation11 [shape = 'u8[2560]{0}', space=vmem, size = 0xc00, scoped, tag = 'input window, operand 6, single buffered']
    #allocation12 [shape = 's32[1]{0}', space=sflag, size = 0x4, scoped, tag = 'scoped memory for network_forward.1']
    #allocation13 [shape = 'u8[327680]{0}', space=vmem, size = 0x50000, scoped, tag = 'input window, operand 7, single buffered']
    #allocation14 [shape = 'u8[1024]{0}', space=vmem, size = 0x400, scoped, tag = 'input window, operand 8, single buffered']
    #allocation15 [shape = 's32[1]{0}', space=sflag, size = 0x4, scoped, tag = 'scoped memory for network_forward.1']
    #allocation16 [shape = 'u8[65536]{0}', space=vmem, size = 0x10000, scoped, tag = 'input window, operand 9, single buffered']
    #allocation17 [shape = 'u8[512]{0}', space=vmem, size = 0x400, scoped, tag = 'input window, operand 10, single buffered']
    #allocation18 [shape = 's32[1]{0}', space=sflag, size = 0x4, scoped, tag = 'scoped memory for network_forward.1']
    #allocation19 [shape = 'u8[1024]{0}', space=vmem, size = 0x400, scoped, tag = 'output window, operand 0, single buffered']
    %16 = vsyncpa [#allocation3], 0
    %17 = vsyncpa [#allocation6], 0
    %18 = vsyncpa [#allocation9], 0
    %19 = vsyncpa [#allocation12], 0
    %20 = vsyncpa [#allocation15], 0
    %21 = vsyncpa [#allocation18], 0
    %22 = vsyncpa [#allocation4], 0
    // Predicated region
    $region2: #{network_forward.1} parent=1 // pred_check
      _
    $region3: #{network_forward.1} parent=1 // pred_check_branch
      %24 = sbr.rel (0) target = $region5
    $region4: #{network_forward.1} parent=1 // pred_region
      _
    $region5: #{network_forward.1} parent=1 // pred_fallthru
      _
    // Predicated region
    $region6: #{network_forward.1} parent=1 // pred_check
      _
    $region7: #{network_forward.1} parent=1 // pred_check_branch
      %26 = sbr.rel (0) target = $region9
    $region8: #{network_forward.1} parent=1 // pred_region
      %28 = vsyncadd [#allocation3], 0
      %s29 = sshll.u32 %s1, 4
      %s30 = int_to_ptr.hbm [resolvable:$true] %s29
      %s31 = sshll.u32 [#allocation2], 4
      %s32 = int_to_ptr.vmem [resolvable:$true] %s31
      %37 = dma.hbm_to_vmem [thread:$0]  %s30, 256, %s32, [#allocation3], 64, 64, 4
    $region9: #{network_forward.1} parent=1 // pred_fallthru
      _
    // Predicated region
    $region10: #{network_forward.1} parent=1 // pred_check
      _
    $region11: #{network_forward.1} parent=1 // pred_check_branch
      %39 = sbr.rel (0) target = $region13
    $region12: #{network_forward.1} parent=1 // pred_region
      %41 = vsyncadd [#allocation6], 0
      %s43 = sshll.u32 %s2, 4
      %s44 = int_to_ptr.hbm [resolvable:$true] %s43
      %s45 = sshll.u32 [#allocation5], 4
      %s46 = int_to_ptr.vmem [resolvable:$true] %s45
      %48 = dma.hbm_to_vmem [thread:$0]  %s44, 16, %s46, [#allocation6]
    $region13: #{network_forward.1} parent=1 // pred_fallthru
      _
    // Predicated region
    $region14: #{network_forward.1} parent=1 // pred_check
      _
    $region15: #{network_forward.1} parent=1 // pred_check_branch
      %50 = sbr.rel (0) target = $region17
    $region16: #{network_forward.1} parent=1 // pred_region
      %52 = vsyncadd [#allocation6], 0
      %s53 = sshll.u32 %s3, 4
      %s54 = int_to_ptr.hbm [resolvable:$true] %s53
      %s55 = sshll.u32 [#allocation7], 4
      %s56 = int_to_ptr.vmem [resolvable:$true] %s55
      %61 = dma.hbm_to_vmem [thread:$0]  %s54, 5376, %s56, [#allocation6], 896, 896, 56
    $region17: #{network_forward.1} parent=1 // pred_fallthru
      _
    // Predicated region
    $region18: #{network_forward.1} parent=1 // pred_check
      _
    $region19: #{network_forward.1} parent=1 // pred_check_branch
      %63 = sbr.rel (0) target = $region21
    $region20: #{network_forward.1} parent=1 // pred_region
      %65 = vsyncadd [#allocation9], 0
      %s67 = sshll.u32 %s4, 4
      %s68 = int_to_ptr.hbm [resolvable:$true] %s67
      %s69 = sshll.u32 [#allocation8], 4
      %s70 = int_to_ptr.vmem [resolvable:$true] %s69
      %72 = dma.hbm_to_vmem [thread:$0]  %s68, 224, %s70, [#allocation9]
    $region21: #{network_forward.1} parent=1 // pred_fallthru
      _
    // Predicated region
    $region22: #{network_forward.1} parent=1 // pred_check
      _
    $region23: #{network_forward.1} parent=1 // pred_check_branch
      %74 = sbr.rel (0) target = $region25
    $region24: #{network_forward.1} parent=1 // pred_region
      %76 = vsyncadd [#allocation9], 0
      %s77 = sshll.u32 %s5, 4
      %s78 = int_to_ptr.hbm [resolvable:$true] %s77
      %s79 = sshll.u32 [#allocation10], 4
      %s80 = int_to_ptr.vmem [resolvable:$true] %s79
      %85 = dma.hbm_to_vmem [thread:$0]  %s78, 71680, %s80, [#allocation9], 320, 320, 20
    $region25: #{network_forward.1} parent=1 // pred_fallthru
      _
    // Predicated region
    $region26: #{network_forward.1} parent=1 // pred_check
      _
    $region27: #{network_forward.1} parent=1 // pred_check_branch
      %87 = sbr.rel (0) target = $region29
    $region28: #{network_forward.1} parent=1 // pred_region
      %89 = vsyncadd [#allocation12], 0
      %s91 = sshll.u32 %s6, 4
      %s92 = int_to_ptr.hbm [resolvable:$true] %s91
      %s93 = sshll.u32 [#allocation11], 4
      %s94 = int_to_ptr.vmem [resolvable:$true] %s93
      %96 = dma.hbm_to_vmem [thread:$0]  %s92, 80, %s94, [#allocation12]
    $region29: #{network_forward.1} parent=1 // pred_fallthru
      _
    // Predicated region
    $region30: #{network_forward.1} parent=1 // pred_check
      _
    $region31: #{network_forward.1} parent=1 // pred_check_branch
      %98 = sbr.rel (0) target = $region33
    $region32: #{network_forward.1} parent=1 // pred_region
      %100 = vsyncadd [#allocation12], 0
      %s101 = sshll.u32 %s7, 4
      %s102 = int_to_ptr.hbm [resolvable:$true] %s101
      %s103 = sshll.u32 [#allocation13], 4
      %s104 = int_to_ptr.vmem [resolvable:$true] %s103
      %109 = dma.hbm_to_vmem [thread:$0]  %s102, 10240, %s104, [#allocation12], 128, 128, 8
    $region33: #{network_forward.1} parent=1 // pred_fallthru
      _
    // Predicated region
    $region34: #{network_forward.1} parent=1 // pred_check
      _
    $region35: #{network_forward.1} parent=1 // pred_check_branch
      %111 = sbr.rel (0) target = $region37
    $region36: #{network_forward.1} parent=1 // pred_region
      %113 = vsyncadd [#allocation15], 0
      %s115 = sshll.u32 %s8, 4
      %s116 = int_to_ptr.hbm [resolvable:$true] %s115
      %s117 = sshll.u32 [#allocation14], 4
      %s118 = int_to_ptr.vmem [resolvable:$true] %s117
      %120 = dma.hbm_to_vmem [thread:$0]  %s116, 32, %s118, [#allocation15]
    $region37: #{network_forward.1} parent=1 // pred_fallthru
      _
    // Predicated region
    $region38: #{network_forward.1} parent=1 // pred_check
      _
    $region39: #{network_forward.1} parent=1 // pred_check_branch
      %122 = sbr.rel (0) target = $region41
    $region40: #{network_forward.1} parent=1 // pred_region
      %124 = vsyncadd [#allocation15], 0
      %s125 = sshll.u32 %s9, 4
      %s126 = int_to_ptr.hbm [resolvable:$true] %s125
      %s127 = sshll.u32 [#allocation16], 4
      %s128 = int_to_ptr.vmem [resolvable:$true] %s127
      %133 = dma.hbm_to_vmem [thread:$0]  %s126, 2048, %s128, [#allocation15], 64, 64, 4
    $region41: #{network_forward.1} parent=1 // pred_fallthru
      _
    // Predicated region
    $region42: #{network_forward.1} parent=1 // pred_check
      _
    $region43: #{network_forward.1} parent=1 // pred_check_branch
      %135 = sbr.rel (0) target = $region45
    $region44: #{network_forward.1} parent=1 // pred_region
      %137 = vsyncadd [#allocation18], 0
      %s139 = sshll.u32 %s10, 4
      %s140 = int_to_ptr.hbm [resolvable:$true] %s139
      %s141 = sshll.u32 [#allocation17], 4
      %s142 = int_to_ptr.vmem [resolvable:$true] %s141
      %144 = dma.hbm_to_vmem [thread:$0]  %s140, 16, %s142, [#allocation18]
    $region45: #{network_forward.1} parent=1 // pred_fallthru
      _
    // Predicated region
    $region46: #{network_forward.1} parent=1 // pred_check
      _
    $region47: #{network_forward.1} parent=1 // pred_check_branch
      %146 = sbr.rel (0) target = $region49
    $region48: #{network_forward.1} parent=1 // pred_region
      %148 = dma.done [#allocation3], 256
    $region49: #{network_forward.1} parent=1 // pred_fallthru
      _
    // Predicated region
    $region50: #{network_forward.1} parent=1 // pred_check
      _
    $region51: #{network_forward.1} parent=1 // pred_check_branch
      %150 = sbr.rel (0) target = $region53
    $region52: #{network_forward.1} parent=1 // pred_region
      %152 = dma.done [#allocation6], 16
    $region53: #{network_forward.1} parent=1 // pred_fallthru
      _
    // Predicated region
    $region54: #{network_forward.1} parent=1 // pred_check
      _
    $region55: #{network_forward.1} parent=1 // pred_check_branch
      %154 = sbr.rel (0) target = $region57
    $region56: #{network_forward.1} parent=1 // pred_region
      %156 = dma.done [#allocation6], 5376
    $region57: #{network_forward.1} parent=1 // pred_fallthru
      _
    // Predicated region
    $region58: #{network_forward.1} parent=1 // pred_check
      _
    $region59: #{network_forward.1} parent=1 // pred_check_branch
      %158 = sbr.rel (0) target = $region61
    $region60: #{network_forward.1} parent=1 // pred_region
      %160 = dma.done [#allocation9], 224
    $region61: #{network_forward.1} parent=1 // pred_fallthru
      _
    // Predicated region
    $region62: #{network_forward.1} parent=1 // pred_check
      _
    $region63: #{network_forward.1} parent=1 // pred_check_branch
      %162 = sbr.rel (0) target = $region65
    $region64: #{network_forward.1} parent=1 // pred_region
      %164 = dma.done [#allocation9], 71680
    $region65: #{network_forward.1} parent=1 // pred_fallthru
      _
    // Predicated region
    $region66: #{network_forward.1} parent=1 // pred_check
      _
    $region67: #{network_forward.1} parent=1 // pred_check_branch
      %166 = sbr.rel (0) target = $region69
    $region68: #{network_forward.1} parent=1 // pred_region
      %168 = dma.done [#allocation12], 80
    $region69: #{network_forward.1} parent=1 // pred_fallthru
      _
    // Predicated region
    $region70: #{network_forward.1} parent=1 // pred_check
      _
    $region71: #{network_forward.1} parent=1 // pred_check_branch
      %170 = sbr.rel (0) target = $region73
    $region72: #{network_forward.1} parent=1 // pred_region
      %172 = dma.done [#allocation12], 10240
    $region73: #{network_forward.1} parent=1 // pred_fallthru
      _
    // Predicated region
    $region74: #{network_forward.1} parent=1 // pred_check
      _
    $region75: #{network_forward.1} parent=1 // pred_check_branch
      %174 = sbr.rel (0) target = $region77
    $region76: #{network_forward.1} parent=1 // pred_region
      %176 = dma.done [#allocation15], 32
    $region77: #{network_forward.1} parent=1 // pred_fallthru
      _
    // Predicated region
    $region78: #{network_forward.1} parent=1 // pred_check
      _
    $region79: #{network_forward.1} parent=1 // pred_check_branch
      %178 = sbr.rel (0) target = $region81
    $region80: #{network_forward.1} parent=1 // pred_region
      %180 = dma.done [#allocation15], 2048
    $region81: #{network_forward.1} parent=1 // pred_fallthru
      _
    // Predicated region
    $region82: #{network_forward.1} parent=1 // pred_check
      _
    $region83: #{network_forward.1} parent=1 // pred_check_branch
      %182 = sbr.rel (0) target = $region85
    $region84: #{network_forward.1} parent=1 // pred_region
      %184 = dma.done [#allocation18], 16
    $region85: #{network_forward.1} parent=1 // pred_fallthru
      _
    %v186 = vld [vmem:[%s0] sm:$0xf]
    %v187 = vld [vmem:[%s0 + $0x4] sm:$0xf]
    %v188 = vld [vmem:[%s0 + $0x8] sm:$0xf]
    %v189 = vld [vmem:[%s0 + $0xc] sm:$0xf]
    %v190 = vld [vmem:[%s0 + $0x10] sm:$0xf]
    %v191 = vld [vmem:[%s0 + $0x14] sm:$0xf]
    %v192 = vld [vmem:[%s0 + $0x18] sm:$0xf]
    %v193 = vld [vmem:[%s0 + $0x1c] sm:$0xf]
    %v194 = vld [vmem:[%s0 + $0x20] sm:$0xf]
    %v195 = vld [vmem:[%s0 + $0x24] sm:$0xf]
    %v196 = vld [vmem:[%s0 + $0x28] sm:$0xf]
    %v197 = vld [vmem:[%s0 + $0x2c] sm:$0xf]
    %v198 = vld [vmem:[%s0 + $0x30] sm:$0xf]
    %v199 = vld [vmem:[%s0 + $0x34] sm:$0xf]
    %v200 = vld [vmem:[%s0 + $0x38] sm:$0xf]
    %v201 = vld [vmem:[%s0 + $0x3c] sm:$0xf]
    %v202 = vld [vmem:[%s0 + $0x40] sm:$0xf]
    %v203 = vld [vmem:[%s0 + $0x44] sm:$0xf]
    %v204 = vld [vmem:[%s0 + $0x48] sm:$0xf]
    %v205 = vld [vmem:[%s0 + $0x4c] sm:$0xf]
    %v206 = vld [vmem:[%s0 + $0x50] sm:$0xf]
    %v207 = vld [vmem:[%s0 + $0x54] sm:$0xf]
    %v208 = vld [vmem:[%s0 + $0x58] sm:$0xf]
    %v209 = vld [vmem:[%s0 + $0x5c] sm:$0xf]
    %v210 = vld [vmem:[%s0 + $0x60] sm:$0xf]
    %v211 = vld [vmem:[%s0 + $0x64] sm:$0xf]
    %v212 = vld [vmem:[%s0 + $0x68] sm:$0xf]
    %v213 = vld [vmem:[%s0 + $0x6c] sm:$0xf]
    %v214 = vld [vmem:[%s0 + $0x70] sm:$0xf]
    %v215 = vld [vmem:[%s0 + $0x74] sm:$0xf]
    %v216 = vld [vmem:[%s0 + $0x78] sm:$0xf]
    %v217 = vld [vmem:[%s0 + $0x7c] sm:$0xf]
    %v218 = vld [vmem:[%s0 + $0x80] sm:$0xf]
    %v219 = vld [vmem:[%s0 + $0x84] sm:$0xf]
    %v220 = vld [vmem:[%s0 + $0x88] sm:$0xf]
    %v221 = vld [vmem:[%s0 + $0x8c] sm:$0xf]
    %v222 = vld [vmem:[%s0 + $0x90] sm:$0xf]
    %v223 = vld [vmem:[%s0 + $0x94] sm:$0xf]
    %v224 = vld [vmem:[%s0 + $0x98] sm:$0xf]
    %v225 = vld [vmem:[%s0 + $0x9c] sm:$0xf]
    %v226 = vld [vmem:[%s0 + $0xa0] sm:$0xf]
    %v227 = vld [vmem:[%s0 + $0xa4] sm:$0xf]
    %v228 = vld [vmem:[%s0 + $0xa8] sm:$0xf]
    %v229 = vld [vmem:[%s0 + $0xac] sm:$0xf]
    %v230 = vld [vmem:[%s0 + $0xb0] sm:$0xf]
    %v231 = vld [vmem:[%s0 + $0xb4] sm:$0xf]
    %v232 = vld [vmem:[%s0 + $0xb8] sm:$0xf]
    %v233 = vld [vmem:[%s0 + $0xbc] sm:$0xf]
    %v234 = vld [vmem:[%s0 + $0xc0] sm:$0xf]
    %v235 = vld [vmem:[%s0 + $0xc4] sm:$0xf]
    %v236 = vld [vmem:[%s0 + $0xc8] sm:$0xf]
    %v237 = vld [vmem:[%s0 + $0xcc] sm:$0xf]
    %v238 = vld [vmem:[%s0 + $0xd0] sm:$0xf]
    %v239 = vld [vmem:[%s0 + $0xd4] sm:$0xf]
    %v240 = vld [vmem:[%s0 + $0xd8] sm:$0xf]
    %v241 = vld [vmem:[%s0 + $0xdc] sm:$0xf]
    %v242 = vld [vmem:[%s0 + $0xe0] sm:$0xf]
    %v243 = vld [vmem:[%s0 + $0xe4] sm:$0xf]
    %v244 = vld [vmem:[%s0 + $0xe8] sm:$0xf]
    %v245 = vld [vmem:[%s0 + $0xec] sm:$0xf]
    %v246 = vld [vmem:[%s0 + $0xf0] sm:$0xf]
    %v247 = vld [vmem:[%s0 + $0xf4] sm:$0xf]
    %v248 = vld [vmem:[%s0 + $0xf8] sm:$0xf]
    %v249 = vld [vmem:[%s0 + $0xfc] sm:$0xf]
    %v250 = vld [vmem:[#allocation2] sm:$0xf]
    %v251 = vld [vmem:[#allocation2 + $0x4] sm:$0xf]
    %v252 = vld [vmem:[#allocation2 + $0x8] sm:$0xf]
    %v253 = vld [vmem:[#allocation2 + $0xc] sm:$0xf]
    %v254 = vld [vmem:[#allocation5] sm:$0x1]
    %v256 = vperm.slane %v254, 0
    %v322 = vunpack.c.l.b16 %v186
    %v323 = vunpack.c.l.b16 %v187
    %v324 = vunpack.c.l.b16 %v188
    %v325 = vunpack.c.l.b16 %v189
    %v326 = vunpack.c.l.b16 %v190
    %v327 = vunpack.c.l.b16 %v191
    %v328 = vunpack.c.l.b16 %v192
    %v329 = vunpack.c.l.b16 %v193
    %v330 = vunpack.c.l.b16 %v194
    %v331 = vunpack.c.l.b16 %v195
    %v332 = vunpack.c.l.b16 %v196
    %v333 = vunpack.c.l.b16 %v197
    %v334 = vunpack.c.l.b16 %v198
    %v335 = vunpack.c.l.b16 %v199
    %v336 = vunpack.c.l.b16 %v200
    %v337 = vunpack.c.l.b16 %v201
    %v338 = vunpack.c.l.b16 %v202
    %v339 = vunpack.c.l.b16 %v203
    %v340 = vunpack.c.l.b16 %v204
    %v341 = vunpack.c.l.b16 %v205
    %v342 = vunpack.c.l.b16 %v206
    %v343 = vunpack.c.l.b16 %v207
    %v344 = vunpack.c.l.b16 %v208
    %v345 = vunpack.c.l.b16 %v209
    %v346 = vunpack.c.l.b16 %v210
    %v347 = vunpack.c.l.b16 %v211
    %v348 = vunpack.c.l.b16 %v212
    %v349 = vunpack.c.l.b16 %v213
    %v350 = vunpack.c.l.b16 %v214
    %v351 = vunpack.c.l.b16 %v215
    %v352 = vunpack.c.l.b16 %v216
    %v353 = vunpack.c.l.b16 %v217
    %v354 = vunpack.c.l.b16 %v218
    %v355 = vunpack.c.l.b16 %v219
    %v356 = vunpack.c.l.b16 %v220
    %v357 = vunpack.c.l.b16 %v221
    %v358 = vunpack.c.l.b16 %v222
    %v359 = vunpack.c.l.b16 %v223
    %v360 = vunpack.c.l.b16 %v224
    %v361 = vunpack.c.l.b16 %v225
    %v362 = vunpack.c.l.b16 %v226
    %v363 = vunpack.c.l.b16 %v227
    %v364 = vunpack.c.l.b16 %v228
    %v365 = vunpack.c.l.b16 %v229
    %v366 = vunpack.c.l.b16 %v230
    %v367 = vunpack.c.l.b16 %v231
    %v368 = vunpack.c.l.b16 %v232
    %v369 = vunpack.c.l.b16 %v233
    %v370 = vunpack.c.l.b16 %v234
    %v371 = vunpack.c.l.b16 %v235
    %v372 = vunpack.c.l.b16 %v236
    %v373 = vunpack.c.l.b16 %v237
    %v374 = vunpack.c.l.b16 %v238
    %v375 = vunpack.c.l.b16 %v239
    %v376 = vunpack.c.l.b16 %v240
    %v377 = vunpack.c.l.b16 %v241
    %v378 = vunpack.c.l.b16 %v242
    %v379 = vunpack.c.l.b16 %v243
    %v380 = vunpack.c.l.b16 %v244
    %v381 = vunpack.c.l.b16 %v245
    %v382 = vunpack.c.l.b16 %v246
    %v383 = vunpack.c.l.b16 %v247
    %v384 = vunpack.c.l.b16 %v248
    %v385 = vunpack.c.l.b16 %v249
    %v386 = vpack.c.b16 %v323, %v322
    %v387 = vpack.c.b16 %v325, %v324
    %v388 = vpack.c.b16 %v327, %v326
    %v389 = vpack.c.b16 %v329, %v328
    %v390 = vpack.c.b16 %v331, %v330
    %v391 = vpack.c.b16 %v333, %v332
    %v392 = vpack.c.b16 %v335, %v334
    %v393 = vpack.c.b16 %v337, %v336
    %v394 = vpack.c.b16 %v339, %v338
    %v395 = vpack.c.b16 %v341, %v340
    %v396 = vpack.c.b16 %v343, %v342
    %v397 = vpack.c.b16 %v345, %v344
    %v398 = vpack.c.b16 %v347, %v346
    %v399 = vpack.c.b16 %v349, %v348
    %v400 = vpack.c.b16 %v351, %v350
    %v401 = vpack.c.b16 %v353, %v352
    %v402 = vpack.c.b16 %v355, %v354
    %v403 = vpack.c.b16 %v357, %v356
    %v404 = vpack.c.b16 %v359, %v358
    %v405 = vpack.c.b16 %v361, %v360
    %v406 = vpack.c.b16 %v363, %v362
    %v407 = vpack.c.b16 %v365, %v364
    %v408 = vpack.c.b16 %v367, %v366
    %v409 = vpack.c.b16 %v369, %v368
    %v410 = vpack.c.b16 %v371, %v370
    %v411 = vpack.c.b16 %v373, %v372
    %v412 = vpack.c.b16 %v375, %v374
    %v413 = vpack.c.b16 %v377, %v376
    %v414 = vpack.c.b16 %v379, %v378
    %v415 = vpack.c.b16 %v381, %v380
    %v416 = vpack.c.b16 %v383, %v382
    %v417 = vpack.c.b16 %v385, %v384
    %v422 = vunpack.c.l.b16 %v250
    %v423 = vunpack.c.l.b16 %v251
    %v424 = vunpack.c.l.b16 %v252
    %v425 = vunpack.c.l.b16 %v253
    %v426 = vpack.c.b16 %v423, %v422
    %v427 = vpack.c.b16 %v425, %v424
    %vm430 = vcmask 261120
    %v432 = vsel %vm430, %v386, 0
    %v435 = vsel %vm430, %v387, 0
    %v438 = vsel %vm430, %v388, 0
    %v441 = vsel %vm430, %v389, 0
    %v444 = vsel %vm430, %v390, 0
    %v447 = vsel %vm430, %v391, 0
    %v450 = vsel %vm430, %v392, 0
    %v453 = vsel %vm430, %v393, 0
    %v456 = vsel %vm430, %v394, 0
    %v459 = vsel %vm430, %v395, 0
    %v462 = vsel %vm430, %v396, 0
    %v465 = vsel %vm430, %v397, 0
    %v468 = vsel %vm430, %v398, 0
    %v471 = vsel %vm430, %v399, 0
    %v474 = vsel %vm430, %v400, 0
    %v477 = vsel %vm430, %v401, 0
    %v480 = vsel %vm430, %v402, 0
    %v483 = vsel %vm430, %v403, 0
    %v486 = vsel %vm430, %v404, 0
    %v489 = vsel %vm430, %v405, 0
    %v492 = vsel %vm430, %v406, 0
    %v495 = vsel %vm430, %v407, 0
    %v498 = vsel %vm430, %v408, 0
    %v501 = vsel %vm430, %v409, 0
    %v504 = vsel %vm430, %v410, 0
    %v507 = vsel %vm430, %v411, 0
    %v510 = vsel %vm430, %v412, 0
    %v513 = vsel %vm430, %v413, 0
    %v516 = vsel %vm430, %v414, 0
    %v519 = vsel %vm430, %v415, 0
    %v522 = vsel %vm430, %v416, 0
    %v525 = vsel %vm430, %v417, 0
    %527 = vmatpush.bf16.msra.mxu0 0
    %528 = vmatpush.bf16.msra.mxu0 0
    %529 = vmatpush.bf16.msra.mxu0 0
    %530 = vmatpush.bf16.msra.mxu0 0
    %531 = vmatpush.bf16.msra.mxu0 0
    %532 = vmatpush.bf16.msra.mxu0 0
    %533 = vmatpush.bf16.msra.mxu0 %v427
    %534 = vmatpush.bf16.msra.mxu0 %v426
    %535 = vmatmul.bf16.gmra.mxu0 %v432
    %v536 = vpop.f32.mrf.mxu0
    %v537 = vadd.f32 %v256, %v536
    %v538 = vpop.f32.mrf.mxu0
    %v539 = vadd.f32 %v256, %v538
    %540 = vmatmul.bf16.gmra.mxu0 %v435
    %v541 = vpop.f32.mrf.mxu0
    %v542 = vadd.f32 %v256, %v541
    %v543 = vpop.f32.mrf.mxu0
    %v544 = vadd.f32 %v256, %v543
    %545 = vmatmul.bf16.gmra.mxu0 %v438
    %v546 = vpop.f32.mrf.mxu0
    %v547 = vadd.f32 %v256, %v546
    %v548 = vpop.f32.mrf.mxu0
    %v549 = vadd.f32 %v256, %v548
    %550 = vmatmul.bf16.gmra.mxu0 %v441
    %v551 = vpop.f32.mrf.mxu0
    %v552 = vadd.f32 %v256, %v551
    %v553 = vpop.f32.mrf.mxu0
    %v554 = vadd.f32 %v256, %v553
    %555 = vmatmul.bf16.gmra.mxu0 %v444
    %v556 = vpop.f32.mrf.mxu0
    %v557 = vadd.f32 %v256, %v556
    %v558 = vpop.f32.mrf.mxu0
    %v559 = vadd.f32 %v256, %v558
    %560 = vmatmul.bf16.gmra.mxu0 %v447
    %v561 = vpop.f32.mrf.mxu0
    %v562 = vadd.f32 %v256, %v561
    %v563 = vpop.f32.mrf.mxu0
    %v564 = vadd.f32 %v256, %v563
    %565 = vmatmul.bf16.gmra.mxu0 %v450
    %v566 = vpop.f32.mrf.mxu0
    %v567 = vadd.f32 %v256, %v566
    %v568 = vpop.f32.mrf.mxu0
    %v569 = vadd.f32 %v256, %v568
    %570 = vmatmul.bf16.gmra.mxu0 %v453
    %v571 = vpop.f32.mrf.mxu0
    %v572 = vadd.f32 %v256, %v571
    %v573 = vpop.f32.mrf.mxu0
    %v574 = vadd.f32 %v256, %v573
    %575 = vmatmul.bf16.gmra.mxu0 %v456
    %v576 = vpop.f32.mrf.mxu0
    %v577 = vadd.f32 %v256, %v576
    %v578 = vpop.f32.mrf.mxu0
    %v579 = vadd.f32 %v256, %v578
    %580 = vmatmul.bf16.gmra.mxu0 %v459
    %v581 = vpop.f32.mrf.mxu0
    %v582 = vadd.f32 %v256, %v581
    %v583 = vpop.f32.mrf.mxu0
    %v584 = vadd.f32 %v256, %v583
    %585 = vmatmul.bf16.gmra.mxu0 %v462
    %v586 = vpop.f32.mrf.mxu0
    %v587 = vadd.f32 %v256, %v586
    %v588 = vpop.f32.mrf.mxu0
    %v589 = vadd.f32 %v256, %v588
    %590 = vmatmul.bf16.gmra.mxu0 %v465
    %v591 = vpop.f32.mrf.mxu0
    %v592 = vadd.f32 %v256, %v591
    %v593 = vpop.f32.mrf.mxu0
    %v594 = vadd.f32 %v256, %v593
    %595 = vmatmul.bf16.gmra.mxu0 %v468
    %v596 = vpop.f32.mrf.mxu0
    %v597 = vadd.f32 %v256, %v596
    %v598 = vpop.f32.mrf.mxu0
    %v599 = vadd.f32 %v256, %v598
    %600 = vmatmul.bf16.gmra.mxu0 %v471
    %v601 = vpop.f32.mrf.mxu0
    %v602 = vadd.f32 %v256, %v601
    %v603 = vpop.f32.mrf.mxu0
    %v604 = vadd.f32 %v256, %v603
    %605 = vmatmul.bf16.gmra.mxu0 %v474
    %v606 = vpop.f32.mrf.mxu0
    %v607 = vadd.f32 %v256, %v606
    %v608 = vpop.f32.mrf.mxu0
    %v609 = vadd.f32 %v256, %v608
    %610 = vmatmul.bf16.gmra.mxu0 %v477
    %v611 = vpop.f32.mrf.mxu0
    %v612 = vadd.f32 %v256, %v611
    %v613 = vpop.f32.mrf.mxu0
    %v614 = vadd.f32 %v256, %v613
    %615 = vmatmul.bf16.gmra.mxu0 %v480
    %v616 = vpop.f32.mrf.mxu0
    %v617 = vadd.f32 %v256, %v616
    %v618 = vpop.f32.mrf.mxu0
    %v619 = vadd.f32 %v256, %v618
    %620 = vmatmul.bf16.gmra.mxu0 %v483
    %v621 = vpop.f32.mrf.mxu0
    %v622 = vadd.f32 %v256, %v621
    %v623 = vpop.f32.mrf.mxu0
    %v624 = vadd.f32 %v256, %v623
    %625 = vmatmul.bf16.gmra.mxu0 %v486
    %v626 = vpop.f32.mrf.mxu0
    %v627 = vadd.f32 %v256, %v626
    %v628 = vpop.f32.mrf.mxu0
    %v629 = vadd.f32 %v256, %v628
    %630 = vmatmul.bf16.gmra.mxu0 %v489
    %v631 = vpop.f32.mrf.mxu0
    %v632 = vadd.f32 %v256, %v631
    %v633 = vpop.f32.mrf.mxu0
    %v634 = vadd.f32 %v256, %v633
    %635 = vmatmul.bf16.gmra.mxu0 %v492
    %v636 = vpop.f32.mrf.mxu0
    %v637 = vadd.f32 %v256, %v636
    %v638 = vpop.f32.mrf.mxu0
    %v639 = vadd.f32 %v256, %v638
    %640 = vmatmul.bf16.gmra.mxu0 %v495
    %v641 = vpop.f32.mrf.mxu0
    %v642 = vadd.f32 %v256, %v641
    %v643 = vpop.f32.mrf.mxu0
    %v644 = vadd.f32 %v256, %v643
    %645 = vmatmul.bf16.gmra.mxu0 %v498
    %v646 = vpop.f32.mrf.mxu0
    %v647 = vadd.f32 %v256, %v646
    %v648 = vpop.f32.mrf.mxu0
    %v649 = vadd.f32 %v256, %v648
    %650 = vmatmul.bf16.gmra.mxu0 %v501
    %v651 = vpop.f32.mrf.mxu0
    %v652 = vadd.f32 %v256, %v651
    %v653 = vpop.f32.mrf.mxu0
    %v654 = vadd.f32 %v256, %v653
    %655 = vmatmul.bf16.gmra.mxu0 %v504
    %v656 = vpop.f32.mrf.mxu0
    %v657 = vadd.f32 %v256, %v656
    %v658 = vpop.f32.mrf.mxu0
    %v659 = vadd.f32 %v256, %v658
    %660 = vmatmul.bf16.gmra.mxu0 %v507
    %v661 = vpop.f32.mrf.mxu0
    %v662 = vadd.f32 %v256, %v661
    %v663 = vpop.f32.mrf.mxu0
    %v664 = vadd.f32 %v256, %v663
    %665 = vmatmul.bf16.gmra.mxu0 %v510
    %v666 = vpop.f32.mrf.mxu0
    %v667 = vadd.f32 %v256, %v666
    %v668 = vpop.f32.mrf.mxu0
    %v669 = vadd.f32 %v256, %v668
    %670 = vmatmul.bf16.gmra.mxu0 %v513
    %v671 = vpop.f32.mrf.mxu0
    %v672 = vadd.f32 %v256, %v671
    %v673 = vpop.f32.mrf.mxu0
    %v674 = vadd.f32 %v256, %v673
    %675 = vmatmul.bf16.gmra.mxu0 %v516
    %v676 = vpop.f32.mrf.mxu0
    %v677 = vadd.f32 %v256, %v676
    %v678 = vpop.f32.mrf.mxu0
    %v679 = vadd.f32 %v256, %v678
    %680 = vmatmul.bf16.gmra.mxu0 %v519
    %v681 = vpop.f32.mrf.mxu0
    %v682 = vadd.f32 %v256, %v681
    %v683 = vpop.f32.mrf.mxu0
    %v684 = vadd.f32 %v256, %v683
    %685 = vmatmul.bf16.gmra.mxu0 %v522
    %v686 = vpop.f32.mrf.mxu0
    %v687 = vadd.f32 %v256, %v686
    %v688 = vpop.f32.mrf.mxu0
    %v689 = vadd.f32 %v256, %v688
    %690 = vmatmul.bf16.gmra.mxu0 %v525
    %v691 = vpop.f32.mrf.mxu0
    %v692 = vadd.f32 %v256, %v691
    %v693 = vpop.f32.mrf.mxu0
    %v694 = vadd.f32 %v256, %v693
    %695 = vdwg.mxu0
    %v696 = vxor.u32 %v537, 2147483648
    %v697 = vxor.u32 %v539, 2147483648
    %v698 = vxor.u32 %v542, 2147483648
    %v699 = vxor.u32 %v544, 2147483648
    %v700 = vxor.u32 %v547, 2147483648
    %v701 = vxor.u32 %v549, 2147483648
    %v702 = vxor.u32 %v552, 2147483648
    %v703 = vxor.u32 %v554, 2147483648
    %v704 = vxor.u32 %v557, 2147483648
    %v705 = vxor.u32 %v559, 2147483648
    %v706 = vxor.u32 %v562, 2147483648
    %v707 = vxor.u32 %v564, 2147483648
    %v708 = vxor.u32 %v567, 2147483648
    %v709 = vxor.u32 %v569, 2147483648
    %v710 = vxor.u32 %v572, 2147483648
    %v711 = vxor.u32 %v574, 2147483648
    %v712 = vxor.u32 %v577, 2147483648
    %v713 = vxor.u32 %v579, 2147483648
    %v714 = vxor.u32 %v582, 2147483648
    %v715 = vxor.u32 %v584, 2147483648
    %v716 = vxor.u32 %v587, 2147483648
    %v717 = vxor.u32 %v589, 2147483648
    %v718 = vxor.u32 %v592, 2147483648
    %v719 = vxor.u32 %v594, 2147483648
    %v720 = vxor.u32 %v597, 2147483648
    %v721 = vxor.u32 %v599, 2147483648
    %v722 = vxor.u32 %v602, 2147483648
    %v723 = vxor.u32 %v604, 2147483648
    %v724 = vxor.u32 %v607, 2147483648
    %v725 = vxor.u32 %v609, 2147483648
    %v726 = vxor.u32 %v612, 2147483648
    %v727 = vxor.u32 %v614, 2147483648
    %v728 = vxor.u32 %v617, 2147483648
    %v729 = vxor.u32 %v619, 2147483648
    %v730 = vxor.u32 %v622, 2147483648
    %v731 = vxor.u32 %v624, 2147483648
    %v732 = vxor.u32 %v627, 2147483648
    %v733 = vxor.u32 %v629, 2147483648
    %v734 = vxor.u32 %v632, 2147483648
    %v735 = vxor.u32 %v634, 2147483648
    %v736 = vxor.u32 %v637, 2147483648
    %v737 = vxor.u32 %v639, 2147483648
    %v738 = vxor.u32 %v642, 2147483648
    %v739 = vxor.u32 %v644, 2147483648
    %v740 = vxor.u32 %v647, 2147483648
    %v741 = vxor.u32 %v649, 2147483648
    %v742 = vxor.u32 %v652, 2147483648
    %v743 = vxor.u32 %v654, 2147483648
    %v744 = vxor.u32 %v657, 2147483648
    %v745 = vxor.u32 %v659, 2147483648
    %v746 = vxor.u32 %v662, 2147483648
    %v747 = vxor.u32 %v664, 2147483648
    %v748 = vxor.u32 %v667, 2147483648
    %v749 = vxor.u32 %v669, 2147483648
    %v750 = vxor.u32 %v672, 2147483648
    %v751 = vxor.u32 %v674, 2147483648
    %v752 = vxor.u32 %v677, 2147483648
    %v753 = vxor.u32 %v679, 2147483648
    %v754 = vxor.u32 %v682, 2147483648
    %v755 = vxor.u32 %v684, 2147483648
    %v756 = vxor.u32 %v687, 2147483648
    %v757 = vxor.u32 %v689, 2147483648
    %v758 = vxor.u32 %v692, 2147483648
    %v759 = vxor.u32 %v694, 2147483648
    %v760 = vmul.f32 %v696, 1.442695
    %v761 = vpow.pop %v760
    %v762 = vmul.f32 %v697, 1.442695
    %v763 = vpow.pop %v762
    %v764 = vmul.f32 %v698, 1.442695
    %v765 = vpow.pop %v764
    %v766 = vmul.f32 %v699, 1.442695
    %v767 = vpow.pop %v766
    %v768 = vmul.f32 %v700, 1.442695
    %v769 = vpow.pop %v768
    %v770 = vmul.f32 %v701, 1.442695
    %v771 = vpow.pop %v770
    %v772 = vmul.f32 %v702, 1.442695
    %v773 = vpow.pop %v772
    %v774 = vmul.f32 %v703, 1.442695
    %v775 = vpow.pop %v774
    %v776 = vmul.f32 %v704, 1.442695
    %v777 = vpow.pop %v776
    %v778 = vmul.f32 %v705, 1.442695
    %v779 = vpow.pop %v778
    %v780 = vmul.f32 %v706, 1.442695
    %v781 = vpow.pop %v780
    %v782 = vmul.f32 %v707, 1.442695
    %v783 = vpow.pop %v782
    %v784 = vmul.f32 %v708, 1.442695
    %v785 = vpow.pop %v784
    %v786 = vmul.f32 %v709, 1.442695
    %v787 = vpow.pop %v786
    %v788 = vmul.f32 %v710, 1.442695
    %v789 = vpow.pop %v788
    %v790 = vmul.f32 %v711, 1.442695
    %v791 = vpow.pop %v790
    %v792 = vmul.f32 %v712, 1.442695
    %v793 = vpow.pop %v792
    %v794 = vmul.f32 %v713, 1.442695
    %v795 = vpow.pop %v794
    %v796 = vmul.f32 %v714, 1.442695
    %v797 = vpow.pop %v796
    %v798 = vmul.f32 %v715, 1.442695
    %v799 = vpow.pop %v798
    %v800 = vmul.f32 %v716, 1.442695
    %v801 = vpow.pop %v800
    %v802 = vmul.f32 %v717, 1.442695
    %v803 = vpow.pop %v802
    %v804 = vmul.f32 %v718, 1.442695
    %v805 = vpow.pop %v804
    %v806 = vmul.f32 %v719, 1.442695
    %v807 = vpow.pop %v806
    %v808 = vmul.f32 %v720, 1.442695
    %v809 = vpow.pop %v808
    %v810 = vmul.f32 %v721, 1.442695
    %v811 = vpow.pop %v810
    %v812 = vmul.f32 %v722, 1.442695
    %v813 = vpow.pop %v812
    %v814 = vmul.f32 %v723, 1.442695
    %v815 = vpow.pop %v814
    %v816 = vmul.f32 %v724, 1.442695
    %v817 = vpow.pop %v816
    %v818 = vmul.f32 %v725, 1.442695
    %v819 = vpow.pop %v818
    %v820 = vmul.f32 %v726, 1.442695
    %v821 = vpow.pop %v820
    %v822 = vmul.f32 %v727, 1.442695
    %v823 = vpow.pop %v822
    %v824 = vmul.f32 %v728, 1.442695
    %v825 = vpow.pop %v824
    %v826 = vmul.f32 %v729, 1.442695
    %v827 = vpow.pop %v826
    %v828 = vmul.f32 %v730, 1.442695
    %v829 = vpow.pop %v828
    %v830 = vmul.f32 %v731, 1.442695
    %v831 = vpow.pop %v830
    %v832 = vmul.f32 %v732, 1.442695
    %v833 = vpow.pop %v832
    %v834 = vmul.f32 %v733, 1.442695
    %v835 = vpow.pop %v834
    %v836 = vmul.f32 %v734, 1.442695
    %v837 = vpow.pop %v836
    %v838 = vmul.f32 %v735, 1.442695
    %v839 = vpow.pop %v838
    %v840 = vmul.f32 %v736, 1.442695
    %v841 = vpow.pop %v840
    %v842 = vmul.f32 %v737, 1.442695
    %v843 = vpow.pop %v842
    %v844 = vmul.f32 %v738, 1.442695
    %v845 = vpow.pop %v844
    %v846 = vmul.f32 %v739, 1.442695
    %v847 = vpow.pop %v846
    %v848 = vmul.f32 %v740, 1.442695
    %v849 = vpow.pop %v848
    %v850 = vmul.f32 %v741, 1.442695
    %v851 = vpow.pop %v850
    %v852 = vmul.f32 %v742, 1.442695
    %v853 = vpow.pop %v852
    %v854 = vmul.f32 %v743, 1.442695
    %v855 = vpow.pop %v854
    %v856 = vmul.f32 %v744, 1.442695
    %v857 = vpow.pop %v856
    %v858 = vmul.f32 %v745, 1.442695
    %v859 = vpow.pop %v858
    %v860 = vmul.f32 %v746, 1.442695
    %v861 = vpow.pop %v860
    %v862 = vmul.f32 %v747, 1.442695
    %v863 = vpow.pop %v862
    %v864 = vmul.f32 %v748, 1.442695
    %v865 = vpow.pop %v864
    %v866 = vmul.f32 %v749, 1.442695
    %v867 = vpow.pop %v866
    %v868 = vmul.f32 %v750, 1.442695
    %v869 = vpow.pop %v868
    %v870 = vmul.f32 %v751, 1.442695
    %v871 = vpow.pop %v870
    %v872 = vmul.f32 %v752, 1.442695
    %v873 = vpow.pop %v872
    %v874 = vmul.f32 %v753, 1.442695
    %v875 = vpow.pop %v874
    %v876 = vmul.f32 %v754, 1.442695
    %v877 = vpow.pop %v876
    %v878 = vmul.f32 %v755, 1.442695
    %v879 = vpow.pop %v878
    %v880 = vmul.f32 %v756, 1.442695
    %v881 = vpow.pop %v880
    %v882 = vmul.f32 %v757, 1.442695
    %v883 = vpow.pop %v882
    %v884 = vmul.f32 %v758, 1.442695
    %v885 = vpow.pop %v884
    %v886 = vmul.f32 %v759, 1.442695
    %v887 = vpow.pop %v886
    %v888 = vadd.f32 %v761, 1.0
    %v889 = vadd.f32 %v763, 1.0
    %v890 = vadd.f32 %v765, 1.0
    %v891 = vadd.f32 %v767, 1.0
    %v892 = vadd.f32 %v769, 1.0
    %v893 = vadd.f32 %v771, 1.0
    %v894 = vadd.f32 %v773, 1.0
    %v895 = vadd.f32 %v775, 1.0
    %v896 = vadd.f32 %v777, 1.0
    %v897 = vadd.f32 %v779, 1.0
    %v898 = vadd.f32 %v781, 1.0
    %v899 = vadd.f32 %v783, 1.0
    %v900 = vadd.f32 %v785, 1.0
    %v901 = vadd.f32 %v787, 1.0
    %v902 = vadd.f32 %v789, 1.0
    %v903 = vadd.f32 %v791, 1.0
    %v904 = vadd.f32 %v793, 1.0
    %v905 = vadd.f32 %v795, 1.0
    %v906 = vadd.f32 %v797, 1.0
    %v907 = vadd.f32 %v799, 1.0
    %v908 = vadd.f32 %v801, 1.0
    %v909 = vadd.f32 %v803, 1.0
    %v910 = vadd.f32 %v805, 1.0
    %v911 = vadd.f32 %v807, 1.0
    %v912 = vadd.f32 %v809, 1.0
    %v913 = vadd.f32 %v811, 1.0
    %v914 = vadd.f32 %v813, 1.0
    %v915 = vadd.f32 %v815, 1.0
    %v916 = vadd.f32 %v817, 1.0
    %v917 = vadd.f32 %v819, 1.0
    %v918 = vadd.f32 %v821, 1.0
    %v919 = vadd.f32 %v823, 1.0
    %v920 = vadd.f32 %v825, 1.0
    %v921 = vadd.f32 %v827, 1.0
    %v922 = vadd.f32 %v829, 1.0
    %v923 = vadd.f32 %v831, 1.0
    %v924 = vadd.f32 %v833, 1.0
    %v925 = vadd.f32 %v835, 1.0
    %v926 = vadd.f32 %v837, 1.0
    %v927 = vadd.f32 %v839, 1.0
    %v928 = vadd.f32 %v841, 1.0
    %v929 = vadd.f32 %v843, 1.0
    %v930 = vadd.f32 %v845, 1.0
    %v931 = vadd.f32 %v847, 1.0
    %v932 = vadd.f32 %v849, 1.0
    %v933 = vadd.f32 %v851, 1.0
    %v934 = vadd.f32 %v853, 1.0
    %v935 = vadd.f32 %v855, 1.0
    %v936 = vadd.f32 %v857, 1.0
    %v937 = vadd.f32 %v859, 1.0
    %v938 = vadd.f32 %v861, 1.0
    %v939 = vadd.f32 %v863, 1.0
    %v940 = vadd.f32 %v865, 1.0
    %v941 = vadd.f32 %v867, 1.0
    %v942 = vadd.f32 %v869, 1.0
    %v943 = vadd.f32 %v871, 1.0
    %v944 = vadd.f32 %v873, 1.0
    %v945 = vadd.f32 %v875, 1.0
    %v946 = vadd.f32 %v877, 1.0
    %v947 = vadd.f32 %v879, 1.0
    %v948 = vadd.f32 %v881, 1.0
    %v949 = vadd.f32 %v883, 1.0
    %v950 = vadd.f32 %v885, 1.0
    %v951 = vadd.f32 %v887, 1.0
    %v952 = vrcp.pop %v888
    %v953 = vmul.f32 %v888, %v952
    %v954 = vsub.f32 1.0, %v953
    %v955 = vmul.f32 %v952, %v954
    %v956 = vadd.f32 %v952, %v955
    %vm957 = vweird.f32 %v888
    %vm958 = vweird.f32 %v952
    %vm959 = vmor %vm957, %vm958
    %v960 = vsel %vm959, %v952, %v956
    %v961 = vand.u32 2147483647, %v888
    %vm962 = vcmp.eq.f32.partialorder %v961, 8.507059e+37
    %v963 = vand.u32 %v888, 2147483648
    %v964 = vor.u32 1.1754944e-38, %v963
    %v965 = vsel %vm962, %v964, %v960
    %v966 = vmul.f32 1.0, %v965
    %v967 = vrcp.pop %v889
    %v968 = vmul.f32 %v889, %v967
    %v969 = vsub.f32 1.0, %v968
    %v970 = vmul.f32 %v967, %v969
    %v971 = vadd.f32 %v967, %v970
    %vm972 = vweird.f32 %v889
    %vm973 = vweird.f32 %v967
    %vm974 = vmor %vm972, %vm973
    %v975 = vsel %vm974, %v967, %v971
    %v976 = vand.u32 2147483647, %v889
    %vm977 = vcmp.eq.f32.partialorder %v976, 8.507059e+37
    %v978 = vand.u32 %v889, 2147483648
    %v979 = vor.u32 1.1754944e-38, %v978
    %v980 = vsel %vm977, %v979, %v975
    %v981 = vmul.f32 1.0, %v980
    %v982 = vrcp.pop %v890
    %v983 = vmul.f32 %v890, %v982
    %v984 = vsub.f32 1.0, %v983
    %v985 = vmul.f32 %v982, %v984
    %v986 = vadd.f32 %v982, %v985
    %vm987 = vweird.f32 %v890
    %vm988 = vweird.f32 %v982
    %vm989 = vmor %vm987, %vm988
    %v990 = vsel %vm989, %v982, %v986
    %v991 = vand.u32 2147483647, %v890
    %vm992 = vcmp.eq.f32.partialorder %v991, 8.507059e+37
    %v993 = vand.u32 %v890, 2147483648
    %v994 = vor.u32 1.1754944e-38, %v993
    %v995 = vsel %vm992, %v994, %v990
    %v996 = vmul.f32 1.0, %v995
    %v997 = vrcp.pop %v891
    %v998 = vmul.f32 %v891, %v997
    %v999 = vsub.f32 1.0, %v998
    %v1000 = vmul.f32 %v997, %v999
    %v1001 = vadd.f32 %v997, %v1000
    %vm1002 = vweird.f32 %v891
    %vm1003 = vweird.f32 %v997
    %vm1004 = vmor %vm1002, %vm1003
    %v1005 = vsel %vm1004, %v997, %v1001
    %v1006 = vand.u32 2147483647, %v891
    %vm1007 = vcmp.eq.f32.partialorder %v1006, 8.507059e+37
    %v1008 = vand.u32 %v891, 2147483648
    %v1009 = vor.u32 1.1754944e-38, %v1008
    %v1010 = vsel %vm1007, %v1009, %v1005
    %v1011 = vmul.f32 1.0, %v1010
    %v1012 = vrcp.pop %v892
    %v1013 = vmul.f32 %v892, %v1012
    %v1014 = vsub.f32 1.0, %v1013
    %v1015 = vmul.f32 %v1012, %v1014
    %v1016 = vadd.f32 %v1012, %v1015
    %vm1017 = vweird.f32 %v892
    %vm1018 = vweird.f32 %v1012
    %vm1019 = vmor %vm1017, %vm1018
    %v1020 = vsel %vm1019, %v1012, %v1016
    %v1021 = vand.u32 2147483647, %v892
    %vm1022 = vcmp.eq.f32.partialorder %v1021, 8.507059e+37
    %v1023 = vand.u32 %v892, 2147483648
    %v1024 = vor.u32 1.1754944e-38, %v1023
    %v1025 = vsel %vm1022, %v1024, %v1020
    %v1026 = vmul.f32 1.0, %v1025
    %v1027 = vrcp.pop %v893
    %v1028 = vmul.f32 %v893, %v1027
    %v1029 = vsub.f32 1.0, %v1028
    %v1030 = vmul.f32 %v1027, %v1029
    %v1031 = vadd.f32 %v1027, %v1030
    %vm1032 = vweird.f32 %v893
    %vm1033 = vweird.f32 %v1027
    %vm1034 = vmor %vm1032, %vm1033
    %v1035 = vsel %vm1034, %v1027, %v1031
    %v1036 = vand.u32 2147483647, %v893
    %vm1037 = vcmp.eq.f32.partialorder %v1036, 8.507059e+37
    %v1038 = vand.u32 %v893, 2147483648
    %v1039 = vor.u32 1.1754944e-38, %v1038
    %v1040 = vsel %vm1037, %v1039, %v1035
    %v1041 = vmul.f32 1.0, %v1040
    %v1042 = vrcp.pop %v894
    %v1043 = vmul.f32 %v894, %v1042
    %v1044 = vsub.f32 1.0, %v1043
    %v1045 = vmul.f32 %v1042, %v1044
    %v1046 = vadd.f32 %v1042, %v1045
    %vm1047 = vweird.f32 %v894
    %vm1048 = vweird.f32 %v1042
    %vm1049 = vmor %vm1047, %vm1048
    %v1050 = vsel %vm1049, %v1042, %v1046
    %v1051 = vand.u32 2147483647, %v894
    %vm1052 = vcmp.eq.f32.partialorder %v1051, 8.507059e+37
    %v1053 = vand.u32 %v894, 2147483648
    %v1054 = vor.u32 1.1754944e-38, %v1053
    %v1055 = vsel %vm1052, %v1054, %v1050
    %v1056 = vmul.f32 1.0, %v1055
    %v1057 = vrcp.pop %v895
    %v1058 = vmul.f32 %v895, %v1057
    %v1059 = vsub.f32 1.0, %v1058
    %v1060 = vmul.f32 %v1057, %v1059
    %v1061 = vadd.f32 %v1057, %v1060
    %vm1062 = vweird.f32 %v895
    %vm1063 = vweird.f32 %v1057
    %vm1064 = vmor %vm1062, %vm1063
    %v1065 = vsel %vm1064, %v1057, %v1061
    %v1066 = vand.u32 2147483647, %v895
    %vm1067 = vcmp.eq.f32.partialorder %v1066, 8.507059e+37
    %v1068 = vand.u32 %v895, 2147483648
    %v1069 = vor.u32 1.1754944e-38, %v1068
    %v1070 = vsel %vm1067, %v1069, %v1065
    %v1071 = vmul.f32 1.0, %v1070
    %v1072 = vrcp.pop %v896
    %v1073 = vmul.f32 %v896, %v1072
    %v1074 = vsub.f32 1.0, %v1073
    %v1075 = vmul.f32 %v1072, %v1074
    %v1076 = vadd.f32 %v1072, %v1075
    %vm1077 = vweird.f32 %v896
    %vm1078 = vweird.f32 %v1072
    %vm1079 = vmor %vm1077, %vm1078
    %v1080 = vsel %vm1079, %v1072, %v1076
    %v1081 = vand.u32 2147483647, %v896
    %vm1082 = vcmp.eq.f32.partialorder %v1081, 8.507059e+37
    %v1083 = vand.u32 %v896, 2147483648
    %v1084 = vor.u32 1.1754944e-38, %v1083
    %v1085 = vsel %vm1082, %v1084, %v1080
    %v1086 = vmul.f32 1.0, %v1085
    %v1087 = vrcp.pop %v897
    %v1088 = vmul.f32 %v897, %v1087
    %v1089 = vsub.f32 1.0, %v1088
    %v1090 = vmul.f32 %v1087, %v1089
    %v1091 = vadd.f32 %v1087, %v1090
    %vm1092 = vweird.f32 %v897
    %vm1093 = vweird.f32 %v1087
    %vm1094 = vmor %vm1092, %vm1093
    %v1095 = vsel %vm1094, %v1087, %v1091
    %v1096 = vand.u32 2147483647, %v897
    %vm1097 = vcmp.eq.f32.partialorder %v1096, 8.507059e+37
    %v1098 = vand.u32 %v897, 2147483648
    %v1099 = vor.u32 1.1754944e-38, %v1098
    %v1100 = vsel %vm1097, %v1099, %v1095
    %v1101 = vmul.f32 1.0, %v1100
    %v1102 = vrcp.pop %v898
    %v1103 = vmul.f32 %v898, %v1102
    %v1104 = vsub.f32 1.0, %v1103
    %v1105 = vmul.f32 %v1102, %v1104
    %v1106 = vadd.f32 %v1102, %v1105
    %vm1107 = vweird.f32 %v898
    %vm1108 = vweird.f32 %v1102
    %vm1109 = vmor %vm1107, %vm1108
    %v1110 = vsel %vm1109, %v1102, %v1106
    %v1111 = vand.u32 2147483647, %v898
    %vm1112 = vcmp.eq.f32.partialorder %v1111, 8.507059e+37
    %v1113 = vand.u32 %v898, 2147483648
    %v1114 = vor.u32 1.1754944e-38, %v1113
    %v1115 = vsel %vm1112, %v1114, %v1110
    %v1116 = vmul.f32 1.0, %v1115
    %v1117 = vrcp.pop %v899
    %v1118 = vmul.f32 %v899, %v1117
    %v1119 = vsub.f32 1.0, %v1118
    %v1120 = vmul.f32 %v1117, %v1119
    %v1121 = vadd.f32 %v1117, %v1120
    %vm1122 = vweird.f32 %v899
    %vm1123 = vweird.f32 %v1117
    %vm1124 = vmor %vm1122, %vm1123
    %v1125 = vsel %vm1124, %v1117, %v1121
    %v1126 = vand.u32 2147483647, %v899
    %vm1127 = vcmp.eq.f32.partialorder %v1126, 8.507059e+37
    %v1128 = vand.u32 %v899, 2147483648
    %v1129 = vor.u32 1.1754944e-38, %v1128
    %v1130 = vsel %vm1127, %v1129, %v1125
    %v1131 = vmul.f32 1.0, %v1130
    %v1132 = vrcp.pop %v900
    %v1133 = vmul.f32 %v900, %v1132
    %v1134 = vsub.f32 1.0, %v1133
    %v1135 = vmul.f32 %v1132, %v1134
    %v1136 = vadd.f32 %v1132, %v1135
    %vm1137 = vweird.f32 %v900
    %vm1138 = vweird.f32 %v1132
    %vm1139 = vmor %vm1137, %vm1138
    %v1140 = vsel %vm1139, %v1132, %v1136
    %v1141 = vand.u32 2147483647, %v900
    %vm1142 = vcmp.eq.f32.partialorder %v1141, 8.507059e+37
    %v1143 = vand.u32 %v900, 2147483648
    %v1144 = vor.u32 1.1754944e-38, %v1143
    %v1145 = vsel %vm1142, %v1144, %v1140
    %v1146 = vmul.f32 1.0, %v1145
    %v1147 = vrcp.pop %v901
    %v1148 = vmul.f32 %v901, %v1147
    %v1149 = vsub.f32 1.0, %v1148
    %v1150 = vmul.f32 %v1147, %v1149
    %v1151 = vadd.f32 %v1147, %v1150
    %vm1152 = vweird.f32 %v901
    %vm1153 = vweird.f32 %v1147
    %vm1154 = vmor %vm1152, %vm1153
    %v1155 = vsel %vm1154, %v1147, %v1151
    %v1156 = vand.u32 2147483647, %v901
    %vm1157 = vcmp.eq.f32.partialorder %v1156, 8.507059e+37
    %v1158 = vand.u32 %v901, 2147483648
    %v1159 = vor.u32 1.1754944e-38, %v1158
    %v1160 = vsel %vm1157, %v1159, %v1155
    %v1161 = vmul.f32 1.0, %v1160
    %v1162 = vrcp.pop %v902
    %v1163 = vmul.f32 %v902, %v1162
    %v1164 = vsub.f32 1.0, %v1163
    %v1165 = vmul.f32 %v1162, %v1164
    %v1166 = vadd.f32 %v1162, %v1165
    %vm1167 = vweird.f32 %v902
    %vm1168 = vweird.f32 %v1162
    %vm1169 = vmor %vm1167, %vm1168
    %v1170 = vsel %vm1169, %v1162, %v1166
    %v1171 = vand.u32 2147483647, %v902
    %vm1172 = vcmp.eq.f32.partialorder %v1171, 8.507059e+37
    %v1173 = vand.u32 %v902, 2147483648
    %v1174 = vor.u32 1.1754944e-38, %v1173
    %v1175 = vsel %vm1172, %v1174, %v1170
    %v1176 = vmul.f32 1.0, %v1175
    %v1177 = vrcp.pop %v903
    %v1178 = vmul.f32 %v903, %v1177
    %v1179 = vsub.f32 1.0, %v1178
    %v1180 = vmul.f32 %v1177, %v1179
    %v1181 = vadd.f32 %v1177, %v1180
    %vm1182 = vweird.f32 %v903
    %vm1183 = vweird.f32 %v1177
    %vm1184 = vmor %vm1182, %vm1183
    %v1185 = vsel %vm1184, %v1177, %v1181
    %v1186 = vand.u32 2147483647, %v903
    %vm1187 = vcmp.eq.f32.partialorder %v1186, 8.507059e+37
    %v1188 = vand.u32 %v903, 2147483648
    %v1189 = vor.u32 1.1754944e-38, %v1188
    %v1190 = vsel %vm1187, %v1189, %v1185
    %v1191 = vmul.f32 1.0, %v1190
    %v1192 = vrcp.pop %v904
    %v1193 = vmul.f32 %v904, %v1192
    %v1194 = vsub.f32 1.0, %v1193
    %v1195 = vmul.f32 %v1192, %v1194
    %v1196 = vadd.f32 %v1192, %v1195
    %vm1197 = vweird.f32 %v904
    %vm1198 = vweird.f32 %v1192
    %vm1199 = vmor %vm1197, %vm1198
    %v1200 = vsel %vm1199, %v1192, %v1196
    %v1201 = vand.u32 2147483647, %v904
    %vm1202 = vcmp.eq.f32.partialorder %v1201, 8.507059e+37
    %v1203 = vand.u32 %v904, 2147483648
    %v1204 = vor.u32 1.1754944e-38, %v1203
    %v1205 = vsel %vm1202, %v1204, %v1200
    %v1206 = vmul.f32 1.0, %v1205
    %v1207 = vrcp.pop %v905
    %v1208 = vmul.f32 %v905, %v1207
    %v1209 = vsub.f32 1.0, %v1208
    %v1210 = vmul.f32 %v1207, %v1209
    %v1211 = vadd.f32 %v1207, %v1210
    %vm1212 = vweird.f32 %v905
    %vm1213 = vweird.f32 %v1207
    %vm1214 = vmor %vm1212, %vm1213
    %v1215 = vsel %vm1214, %v1207, %v1211
    %v1216 = vand.u32 2147483647, %v905
    %vm1217 = vcmp.eq.f32.partialorder %v1216, 8.507059e+37
    %v1218 = vand.u32 %v905, 2147483648
    %v1219 = vor.u32 1.1754944e-38, %v1218
    %v1220 = vsel %vm1217, %v1219, %v1215
    %v1221 = vmul.f32 1.0, %v1220
    %v1222 = vrcp.pop %v906
    %v1223 = vmul.f32 %v906, %v1222
    %v1224 = vsub.f32 1.0, %v1223
    %v1225 = vmul.f32 %v1222, %v1224
    %v1226 = vadd.f32 %v1222, %v1225
    %vm1227 = vweird.f32 %v906
    %vm1228 = vweird.f32 %v1222
    %vm1229 = vmor %vm1227, %vm1228
    %v1230 = vsel %vm1229, %v1222, %v1226
    %v1231 = vand.u32 2147483647, %v906
    %vm1232 = vcmp.eq.f32.partialorder %v1231, 8.507059e+37
    %v1233 = vand.u32 %v906, 2147483648
    %v1234 = vor.u32 1.1754944e-38, %v1233
    %v1235 = vsel %vm1232, %v1234, %v1230
    %v1236 = vmul.f32 1.0, %v1235
    %v1237 = vrcp.pop %v907
    %v1238 = vmul.f32 %v907, %v1237
    %v1239 = vsub.f32 1.0, %v1238
    %v1240 = vmul.f32 %v1237, %v1239
    %v1241 = vadd.f32 %v1237, %v1240
    %vm1242 = vweird.f32 %v907
    %vm1243 = vweird.f32 %v1237
    %vm1244 = vmor %vm1242, %vm1243
    %v1245 = vsel %vm1244, %v1237, %v1241
    %v1246 = vand.u32 2147483647, %v907
    %vm1247 = vcmp.eq.f32.partialorder %v1246, 8.507059e+37
    %v1248 = vand.u32 %v907, 2147483648
    %v1249 = vor.u32 1.1754944e-38, %v1248
    %v1250 = vsel %vm1247, %v1249, %v1245
    %v1251 = vmul.f32 1.0, %v1250
    %v1252 = vrcp.pop %v908
    %v1253 = vmul.f32 %v908, %v1252
    %v1254 = vsub.f32 1.0, %v1253
    %v1255 = vmul.f32 %v1252, %v1254
    %v1256 = vadd.f32 %v1252, %v1255
    %vm1257 = vweird.f32 %v908
    %vm1258 = vweird.f32 %v1252
    %vm1259 = vmor %vm1257, %vm1258
    %v1260 = vsel %vm1259, %v1252, %v1256
    %v1261 = vand.u32 2147483647, %v908
    %vm1262 = vcmp.eq.f32.partialorder %v1261, 8.507059e+37
    %v1263 = vand.u32 %v908, 2147483648
    %v1264 = vor.u32 1.1754944e-38, %v1263
    %v1265 = vsel %vm1262, %v1264, %v1260
    %v1266 = vmul.f32 1.0, %v1265
    %v1267 = vrcp.pop %v909
    %v1268 = vmul.f32 %v909, %v1267
    %v1269 = vsub.f32 1.0, %v1268
    %v1270 = vmul.f32 %v1267, %v1269
    %v1271 = vadd.f32 %v1267, %v1270
    %vm1272 = vweird.f32 %v909
    %vm1273 = vweird.f32 %v1267
    %vm1274 = vmor %vm1272, %vm1273
    %v1275 = vsel %vm1274, %v1267, %v1271
    %v1276 = vand.u32 2147483647, %v909
    %vm1277 = vcmp.eq.f32.partialorder %v1276, 8.507059e+37
    %v1278 = vand.u32 %v909, 2147483648
    %v1279 = vor.u32 1.1754944e-38, %v1278
    %v1280 = vsel %vm1277, %v1279, %v1275
    %v1281 = vmul.f32 1.0, %v1280
    %v1282 = vrcp.pop %v910
    %v1283 = vmul.f32 %v910, %v1282
    %v1284 = vsub.f32 1.0, %v1283
    %v1285 = vmul.f32 %v1282, %v1284
    %v1286 = vadd.f32 %v1282, %v1285
    %vm1287 = vweird.f32 %v910
    %vm1288 = vweird.f32 %v1282
    %vm1289 = vmor %vm1287, %vm1288
    %v1290 = vsel %vm1289, %v1282, %v1286
    %v1291 = vand.u32 2147483647, %v910
    %vm1292 = vcmp.eq.f32.partialorder %v1291, 8.507059e+37
    %v1293 = vand.u32 %v910, 2147483648
    %v1294 = vor.u32 1.1754944e-38, %v1293
    %v1295 = vsel %vm1292, %v1294, %v1290
    %v1296 = vmul.f32 1.0, %v1295
    %v1297 = vrcp.pop %v911
    %v1298 = vmul.f32 %v911, %v1297
    %v1299 = vsub.f32 1.0, %v1298
    %v1300 = vmul.f32 %v1297, %v1299
    %v1301 = vadd.f32 %v1297, %v1300
    %vm1302 = vweird.f32 %v911
    %vm1303 = vweird.f32 %v1297
    %vm1304 = vmor %vm1302, %vm1303
    %v1305 = vsel %vm1304, %v1297, %v1301
    %v1306 = vand.u32 2147483647, %v911
    %vm1307 = vcmp.eq.f32.partialorder %v1306, 8.507059e+37
    %v1308 = vand.u32 %v911, 2147483648
    %v1309 = vor.u32 1.1754944e-38, %v1308
    %v1310 = vsel %vm1307, %v1309, %v1305
    %v1311 = vmul.f32 1.0, %v1310
    %v1312 = vrcp.pop %v912
    %v1313 = vmul.f32 %v912, %v1312
    %v1314 = vsub.f32 1.0, %v1313
    %v1315 = vmul.f32 %v1312, %v1314
    %v1316 = vadd.f32 %v1312, %v1315
    %vm1317 = vweird.f32 %v912
    %vm1318 = vweird.f32 %v1312
    %vm1319 = vmor %vm1317, %vm1318
    %v1320 = vsel %vm1319, %v1312, %v1316
    %v1321 = vand.u32 2147483647, %v912
    %vm1322 = vcmp.eq.f32.partialorder %v1321, 8.507059e+37
    %v1323 = vand.u32 %v912, 2147483648
    %v1324 = vor.u32 1.1754944e-38, %v1323
    %v1325 = vsel %vm1322, %v1324, %v1320
    %v1326 = vmul.f32 1.0, %v1325
    %v1327 = vrcp.pop %v913
    %v1328 = vmul.f32 %v913, %v1327
    %v1329 = vsub.f32 1.0, %v1328
    %v1330 = vmul.f32 %v1327, %v1329
    %v1331 = vadd.f32 %v1327, %v1330
    %vm1332 = vweird.f32 %v913
    %vm1333 = vweird.f32 %v1327
    %vm1334 = vmor %vm1332, %vm1333
    %v1335 = vsel %vm1334, %v1327, %v1331
    %v1336 = vand.u32 2147483647, %v913
    %vm1337 = vcmp.eq.f32.partialorder %v1336, 8.507059e+37
    %v1338 = vand.u32 %v913, 2147483648
    %v1339 = vor.u32 1.1754944e-38, %v1338
    %v1340 = vsel %vm1337, %v1339, %v1335
    %v1341 = vmul.f32 1.0, %v1340
    %v1342 = vrcp.pop %v914
    %v1343 = vmul.f32 %v914, %v1342
    %v1344 = vsub.f32 1.0, %v1343
    %v1345 = vmul.f32 %v1342, %v1344
    %v1346 = vadd.f32 %v1342, %v1345
    %vm1347 = vweird.f32 %v914
    %vm1348 = vweird.f32 %v1342
    %vm1349 = vmor %vm1347, %vm1348
    %v1350 = vsel %vm1349, %v1342, %v1346
    %v1351 = vand.u32 2147483647, %v914
    %vm1352 = vcmp.eq.f32.partialorder %v1351, 8.507059e+37
    %v1353 = vand.u32 %v914, 2147483648
    %v1354 = vor.u32 1.1754944e-38, %v1353
    %v1355 = vsel %vm1352, %v1354, %v1350
    %v1356 = vmul.f32 1.0, %v1355
    %v1357 = vrcp.pop %v915
    %v1358 = vmul.f32 %v915, %v1357
    %v1359 = vsub.f32 1.0, %v1358
    %v1360 = vmul.f32 %v1357, %v1359
    %v1361 = vadd.f32 %v1357, %v1360
    %vm1362 = vweird.f32 %v915
    %vm1363 = vweird.f32 %v1357
    %vm1364 = vmor %vm1362, %vm1363
    %v1365 = vsel %vm1364, %v1357, %v1361
    %v1366 = vand.u32 2147483647, %v915
    %vm1367 = vcmp.eq.f32.partialorder %v1366, 8.507059e+37
    %v1368 = vand.u32 %v915, 2147483648
    %v1369 = vor.u32 1.1754944e-38, %v1368
    %v1370 = vsel %vm1367, %v1369, %v1365
    %v1371 = vmul.f32 1.0, %v1370
    %v1372 = vrcp.pop %v916
    %v1373 = vmul.f32 %v916, %v1372
    %v1374 = vsub.f32 1.0, %v1373
    %v1375 = vmul.f32 %v1372, %v1374
    %v1376 = vadd.f32 %v1372, %v1375
    %vm1377 = vweird.f32 %v916
    %vm1378 = vweird.f32 %v1372
    %vm1379 = vmor %vm1377, %vm1378
    %v1380 = vsel %vm1379, %v1372, %v1376
    %v1381 = vand.u32 2147483647, %v916
    %vm1382 = vcmp.eq.f32.partialorder %v1381, 8.507059e+37
    %v1383 = vand.u32 %v916, 2147483648
    %v1384 = vor.u32 1.1754944e-38, %v1383
    %v1385 = vsel %vm1382, %v1384, %v1380
    %v1386 = vmul.f32 1.0, %v1385
    %v1387 = vrcp.pop %v917
    %v1388 = vmul.f32 %v917, %v1387
    %v1389 = vsub.f32 1.0, %v1388
    %v1390 = vmul.f32 %v1387, %v1389
    %v1391 = vadd.f32 %v1387, %v1390
    %vm1392 = vweird.f32 %v917
    %vm1393 = vweird.f32 %v1387
    %vm1394 = vmor %vm1392, %vm1393
    %v1395 = vsel %vm1394, %v1387, %v1391
    %v1396 = vand.u32 2147483647, %v917
    %vm1397 = vcmp.eq.f32.partialorder %v1396, 8.507059e+37
    %v1398 = vand.u32 %v917, 2147483648
    %v1399 = vor.u32 1.1754944e-38, %v1398
    %v1400 = vsel %vm1397, %v1399, %v1395
    %v1401 = vmul.f32 1.0, %v1400
    %v1402 = vrcp.pop %v918
    %v1403 = vmul.f32 %v918, %v1402
    %v1404 = vsub.f32 1.0, %v1403
    %v1405 = vmul.f32 %v1402, %v1404
    %v1406 = vadd.f32 %v1402, %v1405
    %vm1407 = vweird.f32 %v918
    %vm1408 = vweird.f32 %v1402
    %vm1409 = vmor %vm1407, %vm1408
    %v1410 = vsel %vm1409, %v1402, %v1406
    %v1411 = vand.u32 2147483647, %v918
    %vm1412 = vcmp.eq.f32.partialorder %v1411, 8.507059e+37
    %v1413 = vand.u32 %v918, 2147483648
    %v1414 = vor.u32 1.1754944e-38, %v1413
    %v1415 = vsel %vm1412, %v1414, %v1410
    %v1416 = vmul.f32 1.0, %v1415
    %v1417 = vrcp.pop %v919
    %v1418 = vmul.f32 %v919, %v1417
    %v1419 = vsub.f32 1.0, %v1418
    %v1420 = vmul.f32 %v1417, %v1419
    %v1421 = vadd.f32 %v1417, %v1420
    %vm1422 = vweird.f32 %v919
    %vm1423 = vweird.f32 %v1417
    %vm1424 = vmor %vm1422, %vm1423
    %v1425 = vsel %vm1424, %v1417, %v1421
    %v1426 = vand.u32 2147483647, %v919
    %vm1427 = vcmp.eq.f32.partialorder %v1426, 8.507059e+37
    %v1428 = vand.u32 %v919, 2147483648
    %v1429 = vor.u32 1.1754944e-38, %v1428
    %v1430 = vsel %vm1427, %v1429, %v1425
    %v1431 = vmul.f32 1.0, %v1430
    %v1432 = vrcp.pop %v920
    %v1433 = vmul.f32 %v920, %v1432
    %v1434 = vsub.f32 1.0, %v1433
    %v1435 = vmul.f32 %v1432, %v1434
    %v1436 = vadd.f32 %v1432, %v1435
    %vm1437 = vweird.f32 %v920
    %vm1438 = vweird.f32 %v1432
    %vm1439 = vmor %vm1437, %vm1438
    %v1440 = vsel %vm1439, %v1432, %v1436
    %v1441 = vand.u32 2147483647, %v920
    %vm1442 = vcmp.eq.f32.partialorder %v1441, 8.507059e+37
    %v1443 = vand.u32 %v920, 2147483648
    %v1444 = vor.u32 1.1754944e-38, %v1443
    %v1445 = vsel %vm1442, %v1444, %v1440
    %v1446 = vmul.f32 1.0, %v1445
    %v1447 = vrcp.pop %v921
    %v1448 = vmul.f32 %v921, %v1447
    %v1449 = vsub.f32 1.0, %v1448
    %v1450 = vmul.f32 %v1447, %v1449
    %v1451 = vadd.f32 %v1447, %v1450
    %vm1452 = vweird.f32 %v921
    %vm1453 = vweird.f32 %v1447
    %vm1454 = vmor %vm1452, %vm1453
    %v1455 = vsel %vm1454, %v1447, %v1451
    %v1456 = vand.u32 2147483647, %v921
    %vm1457 = vcmp.eq.f32.partialorder %v1456, 8.507059e+37
    %v1458 = vand.u32 %v921, 2147483648
    %v1459 = vor.u32 1.1754944e-38, %v1458
    %v1460 = vsel %vm1457, %v1459, %v1455
    %v1461 = vmul.f32 1.0, %v1460
    %v1462 = vrcp.pop %v922
    %v1463 = vmul.f32 %v922, %v1462
    %v1464 = vsub.f32 1.0, %v1463
    %v1465 = vmul.f32 %v1462, %v1464
    %v1466 = vadd.f32 %v1462, %v1465
    %vm1467 = vweird.f32 %v922
    %vm1468 = vweird.f32 %v1462
    %vm1469 = vmor %vm1467, %vm1468
    %v1470 = vsel %vm1469, %v1462, %v1466
    %v1471 = vand.u32 2147483647, %v922
    %vm1472 = vcmp.eq.f32.partialorder %v1471, 8.507059e+37
    %v1473 = vand.u32 %v922, 2147483648
    %v1474 = vor.u32 1.1754944e-38, %v1473
    %v1475 = vsel %vm1472, %v1474, %v1470
    %v1476 = vmul.f32 1.0, %v1475
    %v1477 = vrcp.pop %v923
    %v1478 = vmul.f32 %v923, %v1477
    %v1479 = vsub.f32 1.0, %v1478
    %v1480 = vmul.f32 %v1477, %v1479
    %v1481 = vadd.f32 %v1477, %v1480
    %vm1482 = vweird.f32 %v923
    %vm1483 = vweird.f32 %v1477
    %vm1484 = vmor %vm1482, %vm1483
    %v1485 = vsel %vm1484, %v1477, %v1481
    %v1486 = vand.u32 2147483647, %v923
    %vm1487 = vcmp.eq.f32.partialorder %v1486, 8.507059e+37
    %v1488 = vand.u32 %v923, 2147483648
    %v1489 = vor.u32 1.1754944e-38, %v1488
    %v1490 = vsel %vm1487, %v1489, %v1485
    %v1491 = vmul.f32 1.0, %v1490
    %v1492 = vrcp.pop %v924
    %v1493 = vmul.f32 %v924, %v1492
    %v1494 = vsub.f32 1.0, %v1493
    %v1495 = vmul.f32 %v1492, %v1494
    %v1496 = vadd.f32 %v1492, %v1495
    %vm1497 = vweird.f32 %v924
    %vm1498 = vweird.f32 %v1492
    %vm1499 = vmor %vm1497, %vm1498
    %v1500 = vsel %vm1499, %v1492, %v1496
    %v1501 = vand.u32 2147483647, %v924
    %vm1502 = vcmp.eq.f32.partialorder %v1501, 8.507059e+37
    %v1503 = vand.u32 %v924, 2147483648
    %v1504 = vor.u32 1.1754944e-38, %v1503
    %v1505 = vsel %vm1502, %v1504, %v1500
    %v1506 = vmul.f32 1.0, %v1505
    %v1507 = vrcp.pop %v925
    %v1508 = vmul.f32 %v925, %v1507
    %v1509 = vsub.f32 1.0, %v1508
    %v1510 = vmul.f32 %v1507, %v1509
    %v1511 = vadd.f32 %v1507, %v1510
    %vm1512 = vweird.f32 %v925
    %vm1513 = vweird.f32 %v1507
    %vm1514 = vmor %vm1512, %vm1513
    %v1515 = vsel %vm1514, %v1507, %v1511
    %v1516 = vand.u32 2147483647, %v925
    %vm1517 = vcmp.eq.f32.partialorder %v1516, 8.507059e+37
    %v1518 = vand.u32 %v925, 2147483648
    %v1519 = vor.u32 1.1754944e-38, %v1518
    %v1520 = vsel %vm1517, %v1519, %v1515
    %v1521 = vmul.f32 1.0, %v1520
    %v1522 = vrcp.pop %v926
    %v1523 = vmul.f32 %v926, %v1522
    %v1524 = vsub.f32 1.0, %v1523
    %v1525 = vmul.f32 %v1522, %v1524
    %v1526 = vadd.f32 %v1522, %v1525
    %vm1527 = vweird.f32 %v926
    %vm1528 = vweird.f32 %v1522
    %vm1529 = vmor %vm1527, %vm1528
    %v1530 = vsel %vm1529, %v1522, %v1526
    %v1531 = vand.u32 2147483647, %v926
    %vm1532 = vcmp.eq.f32.partialorder %v1531, 8.507059e+37
    %v1533 = vand.u32 %v926, 2147483648
    %v1534 = vor.u32 1.1754944e-38, %v1533
    %v1535 = vsel %vm1532, %v1534, %v1530
    %v1536 = vmul.f32 1.0, %v1535
    %v1537 = vrcp.pop %v927
    %v1538 = vmul.f32 %v927, %v1537
    %v1539 = vsub.f32 1.0, %v1538
    %v1540 = vmul.f32 %v1537, %v1539
    %v1541 = vadd.f32 %v1537, %v1540
    %vm1542 = vweird.f32 %v927
    %vm1543 = vweird.f32 %v1537
    %vm1544 = vmor %vm1542, %vm1543
    %v1545 = vsel %vm1544, %v1537, %v1541
    %v1546 = vand.u32 2147483647, %v927
    %vm1547 = vcmp.eq.f32.partialorder %v1546, 8.507059e+37
    %v1548 = vand.u32 %v927, 2147483648
    %v1549 = vor.u32 1.1754944e-38, %v1548
    %v1550 = vsel %vm1547, %v1549, %v1545
    %v1551 = vmul.f32 1.0, %v1550
    %v1552 = vrcp.pop %v928
    %v1553 = vmul.f32 %v928, %v1552
    %v1554 = vsub.f32 1.0, %v1553
    %v1555 = vmul.f32 %v1552, %v1554
    %v1556 = vadd.f32 %v1552, %v1555
    %vm1557 = vweird.f32 %v928
    %vm1558 = vweird.f32 %v1552
    %vm1559 = vmor %vm1557, %vm1558
    %v1560 = vsel %vm1559, %v1552, %v1556
    %v1561 = vand.u32 2147483647, %v928
    %vm1562 = vcmp.eq.f32.partialorder %v1561, 8.507059e+37
    %v1563 = vand.u32 %v928, 2147483648
    %v1564 = vor.u32 1.1754944e-38, %v1563
    %v1565 = vsel %vm1562, %v1564, %v1560
    %v1566 = vmul.f32 1.0, %v1565
    %v1567 = vrcp.pop %v929
    %v1568 = vmul.f32 %v929, %v1567
    %v1569 = vsub.f32 1.0, %v1568
    %v1570 = vmul.f32 %v1567, %v1569
    %v1571 = vadd.f32 %v1567, %v1570
    %vm1572 = vweird.f32 %v929
    %vm1573 = vweird.f32 %v1567
    %vm1574 = vmor %vm1572, %vm1573
    %v1575 = vsel %vm1574, %v1567, %v1571
    %v1576 = vand.u32 2147483647, %v929
    %vm1577 = vcmp.eq.f32.partialorder %v1576, 8.507059e+37
    %v1578 = vand.u32 %v929, 2147483648
    %v1579 = vor.u32 1.1754944e-38, %v1578
    %v1580 = vsel %vm1577, %v1579, %v1575
    %v1581 = vmul.f32 1.0, %v1580
    %v1582 = vrcp.pop %v930
    %v1583 = vmul.f32 %v930, %v1582
    %v1584 = vsub.f32 1.0, %v1583
    %v1585 = vmul.f32 %v1582, %v1584
    %v1586 = vadd.f32 %v1582, %v1585
    %vm1587 = vweird.f32 %v930
    %vm1588 = vweird.f32 %v1582
    %vm1589 = vmor %vm1587, %vm1588
    %v1590 = vsel %vm1589, %v1582, %v1586
    %v1591 = vand.u32 2147483647, %v930
    %vm1592 = vcmp.eq.f32.partialorder %v1591, 8.507059e+37
    %v1593 = vand.u32 %v930, 2147483648
    %v1594 = vor.u32 1.1754944e-38, %v1593
    %v1595 = vsel %vm1592, %v1594, %v1590
    %v1596 = vmul.f32 1.0, %v1595
    %v1597 = vrcp.pop %v931
    %v1598 = vmul.f32 %v931, %v1597
    %v1599 = vsub.f32 1.0, %v1598
    %v1600 = vmul.f32 %v1597, %v1599
    %v1601 = vadd.f32 %v1597, %v1600
    %vm1602 = vweird.f32 %v931
    %vm1603 = vweird.f32 %v1597
    %vm1604 = vmor %vm1602, %vm1603
    %v1605 = vsel %vm1604, %v1597, %v1601
    %v1606 = vand.u32 2147483647, %v931
    %vm1607 = vcmp.eq.f32.partialorder %v1606, 8.507059e+37
    %v1608 = vand.u32 %v931, 2147483648
    %v1609 = vor.u32 1.1754944e-38, %v1608
    %v1610 = vsel %vm1607, %v1609, %v1605
    %v1611 = vmul.f32 1.0, %v1610
    %v1612 = vrcp.pop %v932
    %v1613 = vmul.f32 %v932, %v1612
    %v1614 = vsub.f32 1.0, %v1613
    %v1615 = vmul.f32 %v1612, %v1614
    %v1616 = vadd.f32 %v1612, %v1615
    %vm1617 = vweird.f32 %v932
    %vm1618 = vweird.f32 %v1612
    %vm1619 = vmor %vm1617, %vm1618
    %v1620 = vsel %vm1619, %v1612, %v1616
    %v1621 = vand.u32 2147483647, %v932
    %vm1622 = vcmp.eq.f32.partialorder %v1621, 8.507059e+37
    %v1623 = vand.u32 %v932, 2147483648
    %v1624 = vor.u32 1.1754944e-38, %v1623
    %v1625 = vsel %vm1622, %v1624, %v1620
    %v1626 = vmul.f32 1.0, %v1625
    %v1627 = vrcp.pop %v933
    %v1628 = vmul.f32 %v933, %v1627
    %v1629 = vsub.f32 1.0, %v1628
    %v1630 = vmul.f32 %v1627, %v1629
    %v1631 = vadd.f32 %v1627, %v1630
    %vm1632 = vweird.f32 %v933
    %vm1633 = vweird.f32 %v1627
    %vm1634 = vmor %vm1632, %vm1633
    %v1635 = vsel %vm1634, %v1627, %v1631
    %v1636 = vand.u32 2147483647, %v933
    %vm1637 = vcmp.eq.f32.partialorder %v1636, 8.507059e+37
    %v1638 = vand.u32 %v933, 2147483648
    %v1639 = vor.u32 1.1754944e-38, %v1638
    %v1640 = vsel %vm1637, %v1639, %v1635
    %v1641 = vmul.f32 1.0, %v1640
    %v1642 = vrcp.pop %v934
    %v1643 = vmul.f32 %v934, %v1642
    %v1644 = vsub.f32 1.0, %v1643
    %v1645 = vmul.f32 %v1642, %v1644
    %v1646 = vadd.f32 %v1642, %v1645
    %vm1647 = vweird.f32 %v934
    %vm1648 = vweird.f32 %v1642
    %vm1649 = vmor %vm1647, %vm1648
    %v1650 = vsel %vm1649, %v1642, %v1646
    %v1651 = vand.u32 2147483647, %v934
    %vm1652 = vcmp.eq.f32.partialorder %v1651, 8.507059e+37
    %v1653 = vand.u32 %v934, 2147483648
    %v1654 = vor.u32 1.1754944e-38, %v1653
    %v1655 = vsel %vm1652, %v1654, %v1650
    %v1656 = vmul.f32 1.0, %v1655
    %v1657 = vrcp.pop %v935
    %v1658 = vmul.f32 %v935, %v1657
    %v1659 = vsub.f32 1.0, %v1658
    %v1660 = vmul.f32 %v1657, %v1659
    %v1661 = vadd.f32 %v1657, %v1660
    %vm1662 = vweird.f32 %v935
    %vm1663 = vweird.f32 %v1657
    %vm1664 = vmor %vm1662, %vm1663
    %v1665 = vsel %vm1664, %v1657, %v1661
    %v1666 = vand.u32 2147483647, %v935
    %vm1667 = vcmp.eq.f32.partialorder %v1666, 8.507059e+37
    %v1668 = vand.u32 %v935, 2147483648
    %v1669 = vor.u32 1.1754944e-38, %v1668
    %v1670 = vsel %vm1667, %v1669, %v1665
    %v1671 = vmul.f32 1.0, %v1670
    %v1672 = vrcp.pop %v936
    %v1673 = vmul.f32 %v936, %v1672
    %v1674 = vsub.f32 1.0, %v1673
    %v1675 = vmul.f32 %v1672, %v1674
    %v1676 = vadd.f32 %v1672, %v1675
    %vm1677 = vweird.f32 %v936
    %vm1678 = vweird.f32 %v1672
    %vm1679 = vmor %vm1677, %vm1678
    %v1680 = vsel %vm1679, %v1672, %v1676
    %v1681 = vand.u32 2147483647, %v936
    %vm1682 = vcmp.eq.f32.partialorder %v1681, 8.507059e+37
    %v1683 = vand.u32 %v936, 2147483648
    %v1684 = vor.u32 1.1754944e-38, %v1683
    %v1685 = vsel %vm1682, %v1684, %v1680
    %v1686 = vmul.f32 1.0, %v1685
    %v1687 = vrcp.pop %v937
    %v1688 = vmul.f32 %v937, %v1687
    %v1689 = vsub.f32 1.0, %v1688
    %v1690 = vmul.f32 %v1687, %v1689
    %v1691 = vadd.f32 %v1687, %v1690
    %vm1692 = vweird.f32 %v937
    %vm1693 = vweird.f32 %v1687
    %vm1694 = vmor %vm1692, %vm1693
    %v1695 = vsel %vm1694, %v1687, %v1691
    %v1696 = vand.u32 2147483647, %v937
    %vm1697 = vcmp.eq.f32.partialorder %v1696, 8.507059e+37
    %v1698 = vand.u32 %v937, 2147483648
    %v1699 = vor.u32 1.1754944e-38, %v1698
    %v1700 = vsel %vm1697, %v1699, %v1695
    %v1701 = vmul.f32 1.0, %v1700
    %v1702 = vrcp.pop %v938
    %v1703 = vmul.f32 %v938, %v1702
    %v1704 = vsub.f32 1.0, %v1703
    %v1705 = vmul.f32 %v1702, %v1704
    %v1706 = vadd.f32 %v1702, %v1705
    %vm1707 = vweird.f32 %v938
    %vm1708 = vweird.f32 %v1702
    %vm1709 = vmor %vm1707, %vm1708
    %v1710 = vsel %vm1709, %v1702, %v1706
    %v1711 = vand.u32 2147483647, %v938
    %vm1712 = vcmp.eq.f32.partialorder %v1711, 8.507059e+37
    %v1713 = vand.u32 %v938, 2147483648
    %v1714 = vor.u32 1.1754944e-38, %v1713
    %v1715 = vsel %vm1712, %v1714, %v1710
    %v1716 = vmul.f32 1.0, %v1715
    %v1717 = vrcp.pop %v939
    %v1718 = vmul.f32 %v939, %v1717
    %v1719 = vsub.f32 1.0, %v1718
    %v1720 = vmul.f32 %v1717, %v1719
    %v1721 = vadd.f32 %v1717, %v1720
    %vm1722 = vweird.f32 %v939
    %vm1723 = vweird.f32 %v1717
    %vm1724 = vmor %vm1722, %vm1723
    %v1725 = vsel %vm1724, %v1717, %v1721
    %v1726 = vand.u32 2147483647, %v939
    %vm1727 = vcmp.eq.f32.partialorder %v1726, 8.507059e+37
    %v1728 = vand.u32 %v939, 2147483648
    %v1729 = vor.u32 1.1754944e-38, %v1728
    %v1730 = vsel %vm1727, %v1729, %v1725
    %v1731 = vmul.f32 1.0, %v1730
    %v1732 = vrcp.pop %v940
    %v1733 = vmul.f32 %v940, %v1732
    %v1734 = vsub.f32 1.0, %v1733
    %v1735 = vmul.f32 %v1732, %v1734
    %v1736 = vadd.f32 %v1732, %v1735
    %vm1737 = vweird.f32 %v940
    %vm1738 = vweird.f32 %v1732
    %vm1739 = vmor %vm1737, %vm1738
    %v1740 = vsel %vm1739, %v1732, %v1736
    %v1741 = vand.u32 2147483647, %v940
    %vm1742 = vcmp.eq.f32.partialorder %v1741, 8.507059e+37
    %v1743 = vand.u32 %v940, 2147483648
    %v1744 = vor.u32 1.1754944e-38, %v1743
    %v1745 = vsel %vm1742, %v1744, %v1740
    %v1746 = vmul.f32 1.0, %v1745
    %v1747 = vrcp.pop %v941
    %v1748 = vmul.f32 %v941, %v1747
    %v1749 = vsub.f32 1.0, %v1748
    %v1750 = vmul.f32 %v1747, %v1749
    %v1751 = vadd.f32 %v1747, %v1750
    %vm1752 = vweird.f32 %v941
    %vm1753 = vweird.f32 %v1747
    %vm1754 = vmor %vm1752, %vm1753
    %v1755 = vsel %vm1754, %v1747, %v1751
    %v1756 = vand.u32 2147483647, %v941
    %vm1757 = vcmp.eq.f32.partialorder %v1756, 8.507059e+37
    %v1758 = vand.u32 %v941, 2147483648
    %v1759 = vor.u32 1.1754944e-38, %v1758
    %v1760 = vsel %vm1757, %v1759, %v1755
    %v1761 = vmul.f32 1.0, %v1760
    %v1762 = vrcp.pop %v942
    %v1763 = vmul.f32 %v942, %v1762
    %v1764 = vsub.f32 1.0, %v1763
    %v1765 = vmul.f32 %v1762, %v1764
    %v1766 = vadd.f32 %v1762, %v1765
    %vm1767 = vweird.f32 %v942
    %vm1768 = vweird.f32 %v1762
    %vm1769 = vmor %vm1767, %vm1768
    %v1770 = vsel %vm1769, %v1762, %v1766
    %v1771 = vand.u32 2147483647, %v942
    %vm1772 = vcmp.eq.f32.partialorder %v1771, 8.507059e+37
    %v1773 = vand.u32 %v942, 2147483648
    %v1774 = vor.u32 1.1754944e-38, %v1773
    %v1775 = vsel %vm1772, %v1774, %v1770
    %v1776 = vmul.f32 1.0, %v1775
    %v1777 = vrcp.pop %v943
    %v1778 = vmul.f32 %v943, %v1777
    %v1779 = vsub.f32 1.0, %v1778
    %v1780 = vmul.f32 %v1777, %v1779
    %v1781 = vadd.f32 %v1777, %v1780
    %vm1782 = vweird.f32 %v943
    %vm1783 = vweird.f32 %v1777
    %vm1784 = vmor %vm1782, %vm1783
    %v1785 = vsel %vm1784, %v1777, %v1781
    %v1786 = vand.u32 2147483647, %v943
    %vm1787 = vcmp.eq.f32.partialorder %v1786, 8.507059e+37
    %v1788 = vand.u32 %v943, 2147483648
    %v1789 = vor.u32 1.1754944e-38, %v1788
    %v1790 = vsel %vm1787, %v1789, %v1785
    %v1791 = vmul.f32 1.0, %v1790
    %v1792 = vrcp.pop %v944
    %v1793 = vmul.f32 %v944, %v1792
    %v1794 = vsub.f32 1.0, %v1793
    %v1795 = vmul.f32 %v1792, %v1794
    %v1796 = vadd.f32 %v1792, %v1795
    %vm1797 = vweird.f32 %v944
    %vm1798 = vweird.f32 %v1792
    %vm1799 = vmor %vm1797, %vm1798
    %v1800 = vsel %vm1799, %v1792, %v1796
    %v1801 = vand.u32 2147483647, %v944
    %vm1802 = vcmp.eq.f32.partialorder %v1801, 8.507059e+37
    %v1803 = vand.u32 %v944, 2147483648
    %v1804 = vor.u32 1.1754944e-38, %v1803
    %v1805 = vsel %vm1802, %v1804, %v1800
    %v1806 = vmul.f32 1.0, %v1805
    %v1807 = vrcp.pop %v945
    %v1808 = vmul.f32 %v945, %v1807
    %v1809 = vsub.f32 1.0, %v1808
    %v1810 = vmul.f32 %v1807, %v1809
    %v1811 = vadd.f32 %v1807, %v1810
    %vm1812 = vweird.f32 %v945
    %vm1813 = vweird.f32 %v1807
    %vm1814 = vmor %vm1812, %vm1813
    %v1815 = vsel %vm1814, %v1807, %v1811
    %v1816 = vand.u32 2147483647, %v945
    %vm1817 = vcmp.eq.f32.partialorder %v1816, 8.507059e+37
    %v1818 = vand.u32 %v945, 2147483648
    %v1819 = vor.u32 1.1754944e-38, %v1818
    %v1820 = vsel %vm1817, %v1819, %v1815
    %v1821 = vmul.f32 1.0, %v1820
    %v1822 = vrcp.pop %v946
    %v1823 = vmul.f32 %v946, %v1822
    %v1824 = vsub.f32 1.0, %v1823
    %v1825 = vmul.f32 %v1822, %v1824
    %v1826 = vadd.f32 %v1822, %v1825
    %vm1827 = vweird.f32 %v946
    %vm1828 = vweird.f32 %v1822
    %vm1829 = vmor %vm1827, %vm1828
    %v1830 = vsel %vm1829, %v1822, %v1826
    %v1831 = vand.u32 2147483647, %v946
    %vm1832 = vcmp.eq.f32.partialorder %v1831, 8.507059e+37
    %v1833 = vand.u32 %v946, 2147483648
    %v1834 = vor.u32 1.1754944e-38, %v1833
    %v1835 = vsel %vm1832, %v1834, %v1830
    %v1836 = vmul.f32 1.0, %v1835
    %v1837 = vrcp.pop %v947
    %v1838 = vmul.f32 %v947, %v1837
    %v1839 = vsub.f32 1.0, %v1838
    %v1840 = vmul.f32 %v1837, %v1839
    %v1841 = vadd.f32 %v1837, %v1840
    %vm1842 = vweird.f32 %v947
    %vm1843 = vweird.f32 %v1837
    %vm1844 = vmor %vm1842, %vm1843
    %v1845 = vsel %vm1844, %v1837, %v1841
    %v1846 = vand.u32 2147483647, %v947
    %vm1847 = vcmp.eq.f32.partialorder %v1846, 8.507059e+37
    %v1848 = vand.u32 %v947, 2147483648
    %v1849 = vor.u32 1.1754944e-38, %v1848
    %v1850 = vsel %vm1847, %v1849, %v1845
    %v1851 = vmul.f32 1.0, %v1850
    %v1852 = vrcp.pop %v948
    %v1853 = vmul.f32 %v948, %v1852
    %v1854 = vsub.f32 1.0, %v1853
    %v1855 = vmul.f32 %v1852, %v1854
    %v1856 = vadd.f32 %v1852, %v1855
    %vm1857 = vweird.f32 %v948
    %vm1858 = vweird.f32 %v1852
    %vm1859 = vmor %vm1857, %vm1858
    %v1860 = vsel %vm1859, %v1852, %v1856
    %v1861 = vand.u32 2147483647, %v948
    %vm1862 = vcmp.eq.f32.partialorder %v1861, 8.507059e+37
    %v1863 = vand.u32 %v948, 2147483648
    %v1864 = vor.u32 1.1754944e-38, %v1863
    %v1865 = vsel %vm1862, %v1864, %v1860
    %v1866 = vmul.f32 1.0, %v1865
    %v1867 = vrcp.pop %v949
    %v1868 = vmul.f32 %v949, %v1867
    %v1869 = vsub.f32 1.0, %v1868
    %v1870 = vmul.f32 %v1867, %v1869
    %v1871 = vadd.f32 %v1867, %v1870
    %vm1872 = vweird.f32 %v949
    %vm1873 = vweird.f32 %v1867
    %vm1874 = vmor %vm1872, %vm1873
    %v1875 = vsel %vm1874, %v1867, %v1871
    %v1876 = vand.u32 2147483647, %v949
    %vm1877 = vcmp.eq.f32.partialorder %v1876, 8.507059e+37
    %v1878 = vand.u32 %v949, 2147483648
    %v1879 = vor.u32 1.1754944e-38, %v1878
    %v1880 = vsel %vm1877, %v1879, %v1875
    %v1881 = vmul.f32 1.0, %v1880
    %v1882 = vrcp.pop %v950
    %v1883 = vmul.f32 %v950, %v1882
    %v1884 = vsub.f32 1.0, %v1883
    %v1885 = vmul.f32 %v1882, %v1884
    %v1886 = vadd.f32 %v1882, %v1885
    %vm1887 = vweird.f32 %v950
    %vm1888 = vweird.f32 %v1882
    %vm1889 = vmor %vm1887, %vm1888
    %v1890 = vsel %vm1889, %v1882, %v1886
    %v1891 = vand.u32 2147483647, %v950
    %vm1892 = vcmp.eq.f32.partialorder %v1891, 8.507059e+37
    %v1893 = vand.u32 %v950, 2147483648
    %v1894 = vor.u32 1.1754944e-38, %v1893
    %v1895 = vsel %vm1892, %v1894, %v1890
    %v1896 = vmul.f32 1.0, %v1895
    %v1897 = vrcp.pop %v951
    %v1898 = vmul.f32 %v951, %v1897
    %v1899 = vsub.f32 1.0, %v1898
    %v1900 = vmul.f32 %v1897, %v1899
    %v1901 = vadd.f32 %v1897, %v1900
    %vm1902 = vweird.f32 %v951
    %vm1903 = vweird.f32 %v1897
    %vm1904 = vmor %vm1902, %vm1903
    %v1905 = vsel %vm1904, %v1897, %v1901
    %v1906 = vand.u32 2147483647, %v951
    %vm1907 = vcmp.eq.f32.partialorder %v1906, 8.507059e+37
    %v1908 = vand.u32 %v951, 2147483648
    %v1909 = vor.u32 1.1754944e-38, %v1908
    %v1910 = vsel %vm1907, %v1909, %v1905
    %v1911 = vmul.f32 1.0, %v1910
    %v1912 = vmul.f32 %v537, %v966
    %v1913 = vmul.f32 %v539, %v981
    %v1914 = vmul.f32 %v542, %v996
    %v1915 = vmul.f32 %v544, %v1011
    %v1916 = vmul.f32 %v547, %v1026
    %v1917 = vmul.f32 %v549, %v1041
    %v1918 = vmul.f32 %v552, %v1056
    %v1919 = vmul.f32 %v554, %v1071
    %v1920 = vmul.f32 %v557, %v1086
    %v1921 = vmul.f32 %v559, %v1101
    %v1922 = vmul.f32 %v562, %v1116
    %v1923 = vmul.f32 %v564, %v1131
    %v1924 = vmul.f32 %v567, %v1146
    %v1925 = vmul.f32 %v569, %v1161
    %v1926 = vmul.f32 %v572, %v1176
    %v1927 = vmul.f32 %v574, %v1191
    %v1928 = vmul.f32 %v577, %v1206
    %v1929 = vmul.f32 %v579, %v1221
    %v1930 = vmul.f32 %v582, %v1236
    %v1931 = vmul.f32 %v584, %v1251
    %v1932 = vmul.f32 %v587, %v1266
    %v1933 = vmul.f32 %v589, %v1281
    %v1934 = vmul.f32 %v592, %v1296
    %v1935 = vmul.f32 %v594, %v1311
    %v1936 = vmul.f32 %v597, %v1326
    %v1937 = vmul.f32 %v599, %v1341
    %v1938 = vmul.f32 %v602, %v1356
    %v1939 = vmul.f32 %v604, %v1371
    %v1940 = vmul.f32 %v607, %v1386
    %v1941 = vmul.f32 %v609, %v1401
    %v1942 = vmul.f32 %v612, %v1416
    %v1943 = vmul.f32 %v614, %v1431
    %v1944 = vmul.f32 %v617, %v1446
    %v1945 = vmul.f32 %v619, %v1461
    %v1946 = vmul.f32 %v622, %v1476
    %v1947 = vmul.f32 %v624, %v1491
    %v1948 = vmul.f32 %v627, %v1506
    %v1949 = vmul.f32 %v629, %v1521
    %v1950 = vmul.f32 %v632, %v1536
    %v1951 = vmul.f32 %v634, %v1551
    %v1952 = vmul.f32 %v637, %v1566
    %v1953 = vmul.f32 %v639, %v1581
    %v1954 = vmul.f32 %v642, %v1596
    %v1955 = vmul.f32 %v644, %v1611
    %v1956 = vmul.f32 %v647, %v1626
    %v1957 = vmul.f32 %v649, %v1641
    %v1958 = vmul.f32 %v652, %v1656
    %v1959 = vmul.f32 %v654, %v1671
    %v1960 = vmul.f32 %v657, %v1686
    %v1961 = vmul.f32 %v659, %v1701
    %v1962 = vmul.f32 %v662, %v1716
    %v1963 = vmul.f32 %v664, %v1731
    %v1964 = vmul.f32 %v667, %v1746
    %v1965 = vmul.f32 %v669, %v1761
    %v1966 = vmul.f32 %v672, %v1776
    %v1967 = vmul.f32 %v674, %v1791
    %v1968 = vmul.f32 %v677, %v1806
    %v1969 = vmul.f32 %v679, %v1821
    %v1970 = vmul.f32 %v682, %v1836
    %v1971 = vmul.f32 %v684, %v1851
    %v1972 = vmul.f32 %v687, %v1866
    %v1973 = vmul.f32 %v689, %v1881
    %v1974 = vmul.f32 %v692, %v1896
    %v1975 = vmul.f32 %v694, %v1911
    %vm1976 = vcmask 392192
    %v1977 = vsel %vm1976, %v1912, 0.0
    %v1978 = vsel %vm1976, %v1913, 0.0
    %v1979 = vadd.f32 %v1977, %v1978
    %v1980 = vsel %vm1976, %v1914, 0.0
    %v1981 = vadd.f32 %v1979, %v1980
    %v1982 = vsel %vm1976, %v1915, 0.0
    %v1983 = vadd.f32 %v1981, %v1982
    %v1984 = vsel %vm1976, %v1916, 0.0
    %v1985 = vadd.f32 %v1983, %v1984
    %v1986 = vsel %vm1976, %v1917, 0.0
    %v1987 = vadd.f32 %v1985, %v1986
    %v1988 = vsel %vm1976, %v1918, 0.0
    %v1989 = vadd.f32 %v1987, %v1988
    %v1990 = vsel %vm1976, %v1919, 0.0
    %v1991 = vadd.f32 %v1989, %v1990
    %v1992 = vsel %vm1976, %v1920, 0.0
    %v1993 = vadd.f32 %v1991, %v1992
    %v1994 = vsel %vm1976, %v1921, 0.0
    %v1995 = vadd.f32 %v1993, %v1994
    %v1996 = vsel %vm1976, %v1922, 0.0
    %v1997 = vadd.f32 %v1995, %v1996
    %v1998 = vsel %vm1976, %v1923, 0.0
    %v1999 = vadd.f32 %v1997, %v1998
    %v2000 = vsel %vm1976, %v1924, 0.0
    %v2001 = vadd.f32 %v1999, %v2000
    %v2002 = vsel %vm1976, %v1925, 0.0
    %v2003 = vadd.f32 %v2001, %v2002
    %v2004 = vsel %vm1976, %v1926, 0.0
    %v2005 = vadd.f32 %v2003, %v2004
    %v2006 = vsel %vm1976, %v1927, 0.0
    %v2007 = vadd.f32 %v2005, %v2006
    %v2008 = vsel %vm1976, %v1928, 0.0
    %v2009 = vadd.f32 %v2007, %v2008
    %v2010 = vsel %vm1976, %v1929, 0.0
    %v2011 = vadd.f32 %v2009, %v2010
    %v2012 = vsel %vm1976, %v1930, 0.0
    %v2013 = vadd.f32 %v2011, %v2012
    %v2014 = vsel %vm1976, %v1931, 0.0
    %v2015 = vadd.f32 %v2013, %v2014
    %v2016 = vsel %vm1976, %v1932, 0.0
    %v2017 = vadd.f32 %v2015, %v2016
    %v2018 = vsel %vm1976, %v1933, 0.0
    %v2019 = vadd.f32 %v2017, %v2018
    %v2020 = vsel %vm1976, %v1934, 0.0
    %v2021 = vadd.f32 %v2019, %v2020
    %v2022 = vsel %vm1976, %v1935, 0.0
    %v2023 = vadd.f32 %v2021, %v2022
    %v2024 = vsel %vm1976, %v1936, 0.0
    %v2025 = vadd.f32 %v2023, %v2024
    %v2026 = vsel %vm1976, %v1937, 0.0
    %v2027 = vadd.f32 %v2025, %v2026
    %v2028 = vsel %vm1976, %v1938, 0.0
    %v2029 = vadd.f32 %v2027, %v2028
    %v2030 = vsel %vm1976, %v1939, 0.0
    %v2031 = vadd.f32 %v2029, %v2030
    %v2032 = vsel %vm1976, %v1940, 0.0
    %v2033 = vadd.f32 %v2031, %v2032
    %v2034 = vsel %vm1976, %v1941, 0.0
    %v2035 = vadd.f32 %v2033, %v2034
    %v2036 = vsel %vm1976, %v1942, 0.0
    %v2037 = vadd.f32 %v2035, %v2036
    %v2038 = vsel %vm1976, %v1943, 0.0
    %v2039 = vadd.f32 %v2037, %v2038
    %v2040 = vrot.slane %v2039, 4
    %v2041 = vadd.f32 %v2039, %v2040
    %v2042 = vrot.slane %v2041, 2
    %v2043 = vadd.f32 %v2041, %v2042
    %v2044 = vrot.slane %v2043, 1
    %v2045 = vadd.f32 %v2043, %v2044
    %v2046 = vsel %vm1976, %v1944, 0.0
    %v2047 = vsel %vm1976, %v1945, 0.0
    %v2048 = vadd.f32 %v2046, %v2047
    %v2049 = vsel %vm1976, %v1946, 0.0
    %v2050 = vadd.f32 %v2048, %v2049
    %v2051 = vsel %vm1976, %v1947, 0.0
    %v2052 = vadd.f32 %v2050, %v2051
    %v2053 = vsel %vm1976, %v1948, 0.0
    %v2054 = vadd.f32 %v2052, %v2053
    %v2055 = vsel %vm1976, %v1949, 0.0
    %v2056 = vadd.f32 %v2054, %v2055
    %v2057 = vsel %vm1976, %v1950, 0.0
    %v2058 = vadd.f32 %v2056, %v2057
    %v2059 = vsel %vm1976, %v1951, 0.0
    %v2060 = vadd.f32 %v2058, %v2059
    %v2061 = vsel %vm1976, %v1952, 0.0
    %v2062 = vadd.f32 %v2060, %v2061
    %v2063 = vsel %vm1976, %v1953, 0.0
    %v2064 = vadd.f32 %v2062, %v2063
    %v2065 = vsel %vm1976, %v1954, 0.0
    %v2066 = vadd.f32 %v2064, %v2065
    %v2067 = vsel %vm1976, %v1955, 0.0
    %v2068 = vadd.f32 %v2066, %v2067
    %v2069 = vsel %vm1976, %v1956, 0.0
    %v2070 = vadd.f32 %v2068, %v2069
    %v2071 = vsel %vm1976, %v1957, 0.0
    %v2072 = vadd.f32 %v2070, %v2071
    %v2073 = vsel %vm1976, %v1958, 0.0
    %v2074 = vadd.f32 %v2072, %v2073
    %v2075 = vsel %vm1976, %v1959, 0.0
    %v2076 = vadd.f32 %v2074, %v2075
    %v2077 = vsel %vm1976, %v1960, 0.0
    %v2078 = vadd.f32 %v2076, %v2077
    %v2079 = vsel %vm1976, %v1961, 0.0
    %v2080 = vadd.f32 %v2078, %v2079
    %v2081 = vsel %vm1976, %v1962, 0.0
    %v2082 = vadd.f32 %v2080, %v2081
    %v2083 = vsel %vm1976, %v1963, 0.0
    %v2084 = vadd.f32 %v2082, %v2083
    %v2085 = vsel %vm1976, %v1964, 0.0
    %v2086 = vadd.f32 %v2084, %v2085
    %v2087 = vsel %vm1976, %v1965, 0.0
    %v2088 = vadd.f32 %v2086, %v2087
    %v2089 = vsel %vm1976, %v1966, 0.0
    %v2090 = vadd.f32 %v2088, %v2089
    %v2091 = vsel %vm1976, %v1967, 0.0
    %v2092 = vadd.f32 %v2090, %v2091
    %v2093 = vsel %vm1976, %v1968, 0.0
    %v2094 = vadd.f32 %v2092, %v2093
    %v2095 = vsel %vm1976, %v1969, 0.0
    %v2096 = vadd.f32 %v2094, %v2095
    %v2097 = vsel %vm1976, %v1970, 0.0
    %v2098 = vadd.f32 %v2096, %v2097
    %v2099 = vsel %vm1976, %v1971, 0.0
    %v2100 = vadd.f32 %v2098, %v2099
    %v2101 = vsel %vm1976, %v1972, 0.0
    %v2102 = vadd.f32 %v2100, %v2101
    %v2103 = vsel %vm1976, %v1973, 0.0
    %v2104 = vadd.f32 %v2102, %v2103
    %v2105 = vsel %vm1976, %v1974, 0.0
    %v2106 = vadd.f32 %v2104, %v2105
    %v2107 = vsel %vm1976, %v1975, 0.0
    %v2108 = vadd.f32 %v2106, %v2107
    %v2109 = vrot.slane %v2108, 4
    %v2110 = vadd.f32 %v2108, %v2109
    %v2111 = vrot.slane %v2110, 2
    %v2112 = vadd.f32 %v2110, %v2111
    %v2113 = vrot.slane %v2112, 1
    %v2114 = vadd.f32 %v2112, %v2113
    %v2115 = vmul.f32 %v2045, 0.00390625
    %v2116 = vmul.f32 %v2114, 0.00390625
    %v2117 = vpack.c.bf16 %v2115, %v2115
    %v2118 = vpack.c.bf16 %v2116, %v2116
    %v2119 = vld [vmem:[#allocation7] sm:$0xff]
    %v2120 = vld [vmem:[#allocation7 + $0x8] sm:$0xff]
    %v2121 = vld [vmem:[#allocation7 + $0x10] sm:$0xff]
    %v2122 = vld [vmem:[#allocation7 + $0x18] sm:$0xff]
    %v2123 = vld [vmem:[#allocation7 + $0x20] sm:$0xff]
    %v2124 = vld [vmem:[#allocation7 + $0x28] sm:$0xff]
    %v2125 = vld [vmem:[#allocation7 + $0x30] sm:$0xff]
    %v2126 = vld [vmem:[#allocation7 + $0x38] sm:$0xff]
    %v2127 = vld [vmem:[#allocation7 + $0x40] sm:$0xff]
    %v2128 = vld [vmem:[#allocation7 + $0x48] sm:$0xff]
    %v2129 = vld [vmem:[#allocation7 + $0x50] sm:$0xff]
    %v2130 = vld [vmem:[#allocation7 + $0x58] sm:$0xff]
    %v2131 = vld [vmem:[#allocation7 + $0x60] sm:$0xff]
    %v2132 = vld [vmem:[#allocation7 + $0x68] sm:$0xff]
    %v2133 = vld [vmem:[#allocation7 + $0x70] sm:$0xff]
    %v2134 = vld [vmem:[#allocation7 + $0x78] sm:$0xff]
    %v2135 = vld [vmem:[#allocation7 + $0x80] sm:$0xff]
    %v2136 = vld [vmem:[#allocation7 + $0x88] sm:$0xff]
    %v2137 = vld [vmem:[#allocation7 + $0x90] sm:$0xff]
    %v2138 = vld [vmem:[#allocation7 + $0x98] sm:$0xff]
    %v2139 = vld [vmem:[#allocation7 + $0xa0] sm:$0xff]
    %v2140 = vld [vmem:[#allocation7 + $0xa8] sm:$0xff]
    %v2141 = vld [vmem:[#allocation7 + $0xb0] sm:$0xff]
    %v2142 = vld [vmem:[#allocation7 + $0xb8] sm:$0xff]
    %v2143 = vld [vmem:[#allocation7 + $0xc0] sm:$0xff]
    %v2144 = vld [vmem:[#allocation7 + $0xc8] sm:$0xff]
    %v2145 = vld [vmem:[#allocation7 + $0xd0] sm:$0xff]
    %v2146 = vld [vmem:[#allocation7 + $0xd8] sm:$0xff]
    %v2147 = vld [vmem:[#allocation7 + $0xe0] sm:$0xff]
    %v2148 = vld [vmem:[#allocation7 + $0xe8] sm:$0xff]
    %v2149 = vld [vmem:[#allocation7 + $0xf0] sm:$0xff]
    %v2150 = vld [vmem:[#allocation7 + $0xf8] sm:$0xff]
    %v2151 = vld [vmem:[#allocation7 + $0x100] sm:$0xff]
    %v2152 = vld [vmem:[#allocation7 + $0x108] sm:$0xff]
    %v2153 = vld [vmem:[#allocation7 + $0x110] sm:$0xff]
    %v2154 = vld [vmem:[#allocation7 + $0x118] sm:$0xff]
    %v2155 = vld [vmem:[#allocation7 + $0x120] sm:$0xff]
    %v2156 = vld [vmem:[#allocation7 + $0x128] sm:$0xff]
    %v2157 = vld [vmem:[#allocation7 + $0x130] sm:$0xff]
    %v2158 = vld [vmem:[#allocation7 + $0x138] sm:$0xff]
    %v2159 = vld [vmem:[#allocation7 + $0x140] sm:$0xff]
    %v2160 = vld [vmem:[#allocation7 + $0x148] sm:$0xff]
    %v2161 = vld [vmem:[#allocation8] sm:$0xff]
    %v2162 = vld [vmem:[#allocation8 + $0x8] sm:$0x3f]
    %v2165 = vperm.slane %v2161, 0
    %v2166 = vperm.slane %v2161, 1
    %v2167 = vperm.slane %v2161, 2
    %v2168 = vperm.slane %v2161, 3
    %v2169 = vperm.slane %v2161, 4
    %v2170 = vperm.slane %v2161, 5
    %v2171 = vperm.slane %v2161, 6
    %v2172 = vperm.slane %v2161, 7
    %v2173 = vperm.slane %v2162, 0
    %v2174 = vperm.slane %v2162, 1
    %v2175 = vperm.slane %v2162, 2
    %v2176 = vperm.slane %v2162, 3
    %v2177 = vperm.slane %v2162, 4
    %v2178 = vperm.slane %v2162, 5
    %v2195 = vunpack.c.l.b16 %v2117
    %v2196 = vunpack.c.l.b16 %v2118
    %vm2197 = vcmask 1041409
    %v2198 = vsel %vm2197, %v2196, %v2195
    %v2199 = vpack.c.b16 %v2198, %v2198
    %v2242 = vunpack.c.l.b16 %v2119
    %v2243 = vunpack.c.h.b16 %v2119
    %v2244 = vunpack.c.l.b16 %v2120
    %v2245 = vunpack.c.h.b16 %v2120
    %v2246 = vunpack.c.l.b16 %v2121
    %v2247 = vunpack.c.h.b16 %v2121
    %v2248 = vunpack.c.l.b16 %v2122
    %v2249 = vunpack.c.h.b16 %v2122
    %v2250 = vunpack.c.l.b16 %v2123
    %v2251 = vunpack.c.h.b16 %v2123
    %v2252 = vunpack.c.l.b16 %v2124
    %v2253 = vunpack.c.h.b16 %v2124
    %v2254 = vunpack.c.l.b16 %v2125
    %v2255 = vunpack.c.h.b16 %v2125
    %v2256 = vunpack.c.l.b16 %v2126
    %v2257 = vunpack.c.h.b16 %v2126
    %v2258 = vunpack.c.l.b16 %v2127
    %v2259 = vunpack.c.h.b16 %v2127
    %v2260 = vunpack.c.l.b16 %v2128
    %v2261 = vunpack.c.h.b16 %v2128
    %v2262 = vunpack.c.l.b16 %v2129
    %v2263 = vunpack.c.h.b16 %v2129
    %v2264 = vunpack.c.l.b16 %v2130
    %v2265 = vunpack.c.h.b16 %v2130
    %v2266 = vunpack.c.l.b16 %v2131
    %v2267 = vunpack.c.h.b16 %v2131
    %v2268 = vunpack.c.l.b16 %v2132
    %v2269 = vunpack.c.h.b16 %v2132
    %v2270 = vunpack.c.l.b16 %v2133
    %v2271 = vunpack.c.h.b16 %v2133
    %v2272 = vunpack.c.l.b16 %v2134
    %v2273 = vunpack.c.h.b16 %v2134
    %v2274 = vunpack.c.l.b16 %v2135
    %v2275 = vunpack.c.h.b16 %v2135
    %v2276 = vunpack.c.l.b16 %v2136
    %v2277 = vunpack.c.h.b16 %v2136
    %v2278 = vunpack.c.l.b16 %v2137
    %v2279 = vunpack.c.h.b16 %v2137
    %v2280 = vunpack.c.l.b16 %v2138
    %v2281 = vunpack.c.h.b16 %v2138
    %v2282 = vunpack.c.l.b16 %v2139
    %v2283 = vunpack.c.h.b16 %v2139
    %v2284 = vunpack.c.l.b16 %v2140
    %v2285 = vunpack.c.h.b16 %v2140
    %v2286 = vunpack.c.l.b16 %v2141
    %v2287 = vunpack.c.h.b16 %v2141
    %v2288 = vunpack.c.l.b16 %v2142
    %v2289 = vunpack.c.h.b16 %v2142
    %v2290 = vunpack.c.l.b16 %v2143
    %v2291 = vunpack.c.h.b16 %v2143
    %v2292 = vunpack.c.l.b16 %v2144
    %v2293 = vunpack.c.h.b16 %v2144
    %v2294 = vunpack.c.l.b16 %v2145
    %v2295 = vunpack.c.h.b16 %v2145
    %v2296 = vunpack.c.l.b16 %v2146
    %v2297 = vunpack.c.h.b16 %v2146
    %v2298 = vunpack.c.l.b16 %v2147
    %v2299 = vunpack.c.h.b16 %v2147
    %v2300 = vunpack.c.l.b16 %v2148
    %v2301 = vunpack.c.h.b16 %v2148
    %v2302 = vunpack.c.l.b16 %v2149
    %v2303 = vunpack.c.h.b16 %v2149
    %v2304 = vunpack.c.l.b16 %v2150
    %v2305 = vunpack.c.h.b16 %v2150
    %v2306 = vunpack.c.l.b16 %v2151
    %v2307 = vunpack.c.h.b16 %v2151
    %v2308 = vunpack.c.l.b16 %v2152
    %v2309 = vunpack.c.h.b16 %v2152
    %v2310 = vunpack.c.l.b16 %v2153
    %v2311 = vunpack.c.h.b16 %v2153
    %v2312 = vunpack.c.l.b16 %v2154
    %v2313 = vunpack.c.h.b16 %v2154
    %v2314 = vunpack.c.l.b16 %v2155
    %v2315 = vunpack.c.h.b16 %v2155
    %v2316 = vunpack.c.l.b16 %v2156
    %v2317 = vunpack.c.h.b16 %v2156
    %v2318 = vunpack.c.l.b16 %v2157
    %v2319 = vunpack.c.h.b16 %v2157
    %v2320 = vunpack.c.l.b16 %v2158
    %v2321 = vunpack.c.h.b16 %v2158
    %v2322 = vunpack.c.l.b16 %v2159
    %v2323 = vunpack.c.h.b16 %v2159
    %v2324 = vunpack.c.l.b16 %v2160
    %v2325 = vunpack.c.h.b16 %v2160
    %v2326 = vpack.c.b16 %v2256, %v2242
    %v2327 = vpack.c.b16 %v2257, %v2243
    %v2328 = vpack.c.b16 %v2258, %v2244
    %v2329 = vpack.c.b16 %v2259, %v2245
    %v2330 = vpack.c.b16 %v2260, %v2246
    %v2331 = vpack.c.b16 %v2261, %v2247
    %v2332 = vpack.c.b16 %v2262, %v2248
    %v2333 = vpack.c.b16 %v2263, %v2249
    %v2334 = vpack.c.b16 %v2264, %v2250
    %v2335 = vpack.c.b16 %v2265, %v2251
    %v2336 = vpack.c.b16 %v2266, %v2252
    %v2337 = vpack.c.b16 %v2267, %v2253
    %v2338 = vpack.c.b16 %v2268, %v2254
    %v2339 = vpack.c.b16 %v2269, %v2255
    %v2340 = vpack.c.b16 %v2284, %v2270
    %v2341 = vpack.c.b16 %v2285, %v2271
    %v2342 = vpack.c.b16 %v2286, %v2272
    %v2343 = vpack.c.b16 %v2287, %v2273
    %v2344 = vpack.c.b16 %v2288, %v2274
    %v2345 = vpack.c.b16 %v2289, %v2275
    %v2346 = vpack.c.b16 %v2290, %v2276
    %v2347 = vpack.c.b16 %v2291, %v2277
    %v2348 = vpack.c.b16 %v2292, %v2278
    %v2349 = vpack.c.b16 %v2293, %v2279
    %v2350 = vpack.c.b16 %v2294, %v2280
    %v2351 = vpack.c.b16 %v2295, %v2281
    %v2352 = vpack.c.b16 %v2296, %v2282
    %v2353 = vpack.c.b16 %v2297, %v2283
    %v2354 = vpack.c.b16 %v2312, %v2298
    %v2355 = vpack.c.b16 %v2313, %v2299
    %v2356 = vpack.c.b16 %v2314, %v2300
    %v2357 = vpack.c.b16 %v2315, %v2301
    %v2358 = vpack.c.b16 %v2316, %v2302
    %v2359 = vpack.c.b16 %v2317, %v2303
    %v2360 = vpack.c.b16 %v2318, %v2304
    %v2361 = vpack.c.b16 %v2319, %v2305
    %v2362 = vpack.c.b16 %v2320, %v2306
    %v2363 = vpack.c.b16 %v2321, %v2307
    %v2364 = vpack.c.b16 %v2322, %v2308
    %v2365 = vpack.c.b16 %v2323, %v2309
    %v2366 = vpack.c.b16 %v2324, %v2310
    %v2367 = vpack.c.b16 %v2325, %v2311
    %v2411 = vsel %vm1976, %v2199, 0
    %2413 = vmatpush.bf16.msra.mxu0 0
    %2414 = vmatpush.bf16.msra.mxu0 0
    %2415 = vmatpush.bf16.msra.mxu0 0
    %2416 = vmatpush.bf16.msra.mxu0 0
    %2417 = vmatpush.bf16.msra.mxu0 0
    %2418 = vmatpush.bf16.msra.mxu0 %v2354
    %2419 = vmatpush.bf16.msra.mxu0 %v2340
    %2420 = vmatpush.bf16.msra.mxu0 %v2326
    %2421 = vmatmul.bf16.gmra.mxu0 %v2411
    %v2422 = vpop.f32.mrf.mxu0
    %v2423 = vadd.f32 %v2165, %v2422
    %v2424 = vpop.f32.mrf.mxu0
    %2425 = vdwg.mxu0
    %2426 = vmatpush.bf16.msra.mxu0 0
    %2427 = vmatpush.bf16.msra.mxu0 0
    %2428 = vmatpush.bf16.msra.mxu0 0
    %2429 = vmatpush.bf16.msra.mxu0 0
    %2430 = vmatpush.bf16.msra.mxu0 0
    %2431 = vmatpush.bf16.msra.mxu0 %v2355
    %2432 = vmatpush.bf16.msra.mxu0 %v2341
    %2433 = vmatpush.bf16.msra.mxu0 %v2327
    %2434 = vmatmul.bf16.gmra.mxu0 %v2411
    %v2435 = vpop.f32.mrf.mxu0
    %v2436 = vadd.f32 %v2166, %v2435
    %v2437 = vpop.f32.mrf.mxu0
    %2438 = vdwg.mxu0
    %2439 = vmatpush.bf16.msra.mxu0 0
    %2440 = vmatpush.bf16.msra.mxu0 0
    %2441 = vmatpush.bf16.msra.mxu0 0
    %2442 = vmatpush.bf16.msra.mxu0 0
    %2443 = vmatpush.bf16.msra.mxu0 0
    %2444 = vmatpush.bf16.msra.mxu0 %v2356
    %2445 = vmatpush.bf16.msra.mxu0 %v2342
    %2446 = vmatpush.bf16.msra.mxu0 %v2328
    %2447 = vmatmul.bf16.gmra.mxu0 %v2411
    %v2448 = vpop.f32.mrf.mxu0
    %v2449 = vadd.f32 %v2167, %v2448
    %v2450 = vpop.f32.mrf.mxu0
    %2451 = vdwg.mxu0
    %2452 = vmatpush.bf16.msra.mxu0 0
    %2453 = vmatpush.bf16.msra.mxu0 0
    %2454 = vmatpush.bf16.msra.mxu0 0
    %2455 = vmatpush.bf16.msra.mxu0 0
    %2456 = vmatpush.bf16.msra.mxu0 0
    %2457 = vmatpush.bf16.msra.mxu0 %v2357
    %2458 = vmatpush.bf16.msra.mxu0 %v2343
    %2459 = vmatpush.bf16.msra.mxu0 %v2329
    %2460 = vmatmul.bf16.gmra.mxu0 %v2411
    %v2461 = vpop.f32.mrf.mxu0
    %v2462 = vadd.f32 %v2168, %v2461
    %v2463 = vpop.f32.mrf.mxu0
    %2464 = vdwg.mxu0
    %2465 = vmatpush.bf16.msra.mxu0 0
    %2466 = vmatpush.bf16.msra.mxu0 0
    %2467 = vmatpush.bf16.msra.mxu0 0
    %2468 = vmatpush.bf16.msra.mxu0 0
    %2469 = vmatpush.bf16.msra.mxu0 0
    %2470 = vmatpush.bf16.msra.mxu0 %v2358
    %2471 = vmatpush.bf16.msra.mxu0 %v2344
    %2472 = vmatpush.bf16.msra.mxu0 %v2330
    %2473 = vmatmul.bf16.gmra.mxu0 %v2411
    %v2474 = vpop.f32.mrf.mxu0
    %v2475 = vadd.f32 %v2169, %v2474
    %v2476 = vpop.f32.mrf.mxu0
    %2477 = vdwg.mxu0
    %2478 = vmatpush.bf16.msra.mxu0 0
    %2479 = vmatpush.bf16.msra.mxu0 0
    %2480 = vmatpush.bf16.msra.mxu0 0
    %2481 = vmatpush.bf16.msra.mxu0 0
    %2482 = vmatpush.bf16.msra.mxu0 0
    %2483 = vmatpush.bf16.msra.mxu0 %v2359
    %2484 = vmatpush.bf16.msra.mxu0 %v2345
    %2485 = vmatpush.bf16.msra.mxu0 %v2331
    %2486 = vmatmul.bf16.gmra.mxu0 %v2411
    %v2487 = vpop.f32.mrf.mxu0
    %v2488 = vadd.f32 %v2170, %v2487
    %v2489 = vpop.f32.mrf.mxu0
    %2490 = vdwg.mxu0
    %2491 = vmatpush.bf16.msra.mxu0 0
    %2492 = vmatpush.bf16.msra.mxu0 0
    %2493 = vmatpush.bf16.msra.mxu0 0
    %2494 = vmatpush.bf16.msra.mxu0 0
    %2495 = vmatpush.bf16.msra.mxu0 0
    %2496 = vmatpush.bf16.msra.mxu0 %v2360
    %2497 = vmatpush.bf16.msra.mxu0 %v2346
    %2498 = vmatpush.bf16.msra.mxu0 %v2332
    %2499 = vmatmul.bf16.gmra.mxu0 %v2411
    %v2500 = vpop.f32.mrf.mxu0
    %v2501 = vadd.f32 %v2171, %v2500
    %v2502 = vpop.f32.mrf.mxu0
    %2503 = vdwg.mxu0
    %2504 = vmatpush.bf16.msra.mxu0 0
    %2505 = vmatpush.bf16.msra.mxu0 0
    %2506 = vmatpush.bf16.msra.mxu0 0
    %2507 = vmatpush.bf16.msra.mxu0 0
    %2508 = vmatpush.bf16.msra.mxu0 0
    %2509 = vmatpush.bf16.msra.mxu0 %v2361
    %2510 = vmatpush.bf16.msra.mxu0 %v2347
    %2511 = vmatpush.bf16.msra.mxu0 %v2333
    %2512 = vmatmul.bf16.gmra.mxu0 %v2411
    %v2513 = vpop.f32.mrf.mxu0
    %v2514 = vadd.f32 %v2172, %v2513
    %v2515 = vpop.f32.mrf.mxu0
    %2516 = vdwg.mxu0
    %2517 = vmatpush.bf16.msra.mxu0 0
    %2518 = vmatpush.bf16.msra.mxu0 0
    %2519 = vmatpush.bf16.msra.mxu0 0
    %2520 = vmatpush.bf16.msra.mxu0 0
    %2521 = vmatpush.bf16.msra.mxu0 0
    %2522 = vmatpush.bf16.msra.mxu0 %v2362
    %2523 = vmatpush.bf16.msra.mxu0 %v2348
    %2524 = vmatpush.bf16.msra.mxu0 %v2334
    %2525 = vmatmul.bf16.gmra.mxu0 %v2411
    %v2526 = vpop.f32.mrf.mxu0
    %v2527 = vadd.f32 %v2173, %v2526
    %v2528 = vpop.f32.mrf.mxu0
    %2529 = vdwg.mxu0
    %2530 = vmatpush.bf16.msra.mxu0 0
    %2531 = vmatpush.bf16.msra.mxu0 0
    %2532 = vmatpush.bf16.msra.mxu0 0
    %2533 = vmatpush.bf16.msra.mxu0 0
    %2534 = vmatpush.bf16.msra.mxu0 0
    %2535 = vmatpush.bf16.msra.mxu0 %v2363
    %2536 = vmatpush.bf16.msra.mxu0 %v2349
    %2537 = vmatpush.bf16.msra.mxu0 %v2335
    %2538 = vmatmul.bf16.gmra.mxu0 %v2411
    %v2539 = vpop.f32.mrf.mxu0
    %v2540 = vadd.f32 %v2174, %v2539
    %v2541 = vpop.f32.mrf.mxu0
    %2542 = vdwg.mxu0
    %2543 = vmatpush.bf16.msra.mxu0 0
    %2544 = vmatpush.bf16.msra.mxu0 0
    %2545 = vmatpush.bf16.msra.mxu0 0
    %2546 = vmatpush.bf16.msra.mxu0 0
    %2547 = vmatpush.bf16.msra.mxu0 0
    %2548 = vmatpush.bf16.msra.mxu0 %v2364
    %2549 = vmatpush.bf16.msra.mxu0 %v2350
    %2550 = vmatpush.bf16.msra.mxu0 %v2336
    %2551 = vmatmul.bf16.gmra.mxu0 %v2411
    %v2552 = vpop.f32.mrf.mxu0
    %v2553 = vadd.f32 %v2175, %v2552
    %v2554 = vpop.f32.mrf.mxu0
    %2555 = vdwg.mxu0
    %2556 = vmatpush.bf16.msra.mxu0 0
    %2557 = vmatpush.bf16.msra.mxu0 0
    %2558 = vmatpush.bf16.msra.mxu0 0
    %2559 = vmatpush.bf16.msra.mxu0 0
    %2560 = vmatpush.bf16.msra.mxu0 0
    %2561 = vmatpush.bf16.msra.mxu0 %v2365
    %2562 = vmatpush.bf16.msra.mxu0 %v2351
    %2563 = vmatpush.bf16.msra.mxu0 %v2337
    %2564 = vmatmul.bf16.gmra.mxu0 %v2411
    %v2565 = vpop.f32.mrf.mxu0
    %v2566 = vadd.f32 %v2176, %v2565
    %v2567 = vpop.f32.mrf.mxu0
    %2568 = vdwg.mxu0
    %2569 = vmatpush.bf16.msra.mxu0 0
    %2570 = vmatpush.bf16.msra.mxu0 0
    %2571 = vmatpush.bf16.msra.mxu0 0
    %2572 = vmatpush.bf16.msra.mxu0 0
    %2573 = vmatpush.bf16.msra.mxu0 0
    %2574 = vmatpush.bf16.msra.mxu0 %v2366
    %2575 = vmatpush.bf16.msra.mxu0 %v2352
    %2576 = vmatpush.bf16.msra.mxu0 %v2338
    %2577 = vmatmul.bf16.gmra.mxu0 %v2411
    %v2578 = vpop.f32.mrf.mxu0
    %v2579 = vadd.f32 %v2177, %v2578
    %v2580 = vpop.f32.mrf.mxu0
    %2581 = vdwg.mxu0
    %2582 = vmatpush.bf16.msra.mxu0 0
    %2583 = vmatpush.bf16.msra.mxu0 0
    %2584 = vmatpush.bf16.msra.mxu0 0
    %2585 = vmatpush.bf16.msra.mxu0 0
    %2586 = vmatpush.bf16.msra.mxu0 0
    %2587 = vmatpush.bf16.msra.mxu0 %v2367
    %2588 = vmatpush.bf16.msra.mxu0 %v2353
    %2589 = vmatpush.bf16.msra.mxu0 %v2339
    %2590 = vmatmul.bf16.gmra.mxu0 %v2411
    %v2591 = vpop.f32.mrf.mxu0
    %v2592 = vadd.f32 %v2178, %v2591
    %v2593 = vpop.f32.mrf.mxu0
    %2594 = vdwg.mxu0
    %v2595 = vxor.u32 %v2423, 2147483648
    %v2596 = vxor.u32 %v2436, 2147483648
    %v2597 = vxor.u32 %v2449, 2147483648
    %v2598 = vxor.u32 %v2462, 2147483648
    %v2599 = vxor.u32 %v2475, 2147483648
    %v2600 = vxor.u32 %v2488, 2147483648
    %v2601 = vxor.u32 %v2501, 2147483648
    %v2602 = vxor.u32 %v2514, 2147483648
    %v2603 = vxor.u32 %v2527, 2147483648
    %v2604 = vxor.u32 %v2540, 2147483648
    %v2605 = vxor.u32 %v2553, 2147483648
    %v2606 = vxor.u32 %v2566, 2147483648
    %v2607 = vxor.u32 %v2579, 2147483648
    %v2608 = vxor.u32 %v2592, 2147483648
    %v2609 = vmul.f32 %v2595, 1.442695
    %v2610 = vpow.pop %v2609
    %v2611 = vmul.f32 %v2596, 1.442695
    %v2612 = vpow.pop %v2611
    %v2613 = vmul.f32 %v2597, 1.442695
    %v2614 = vpow.pop %v2613
    %v2615 = vmul.f32 %v2598, 1.442695
    %v2616 = vpow.pop %v2615
    %v2617 = vmul.f32 %v2599, 1.442695
    %v2618 = vpow.pop %v2617
    %v2619 = vmul.f32 %v2600, 1.442695
    %v2620 = vpow.pop %v2619
    %v2621 = vmul.f32 %v2601, 1.442695
    %v2622 = vpow.pop %v2621
    %v2623 = vmul.f32 %v2602, 1.442695
    %v2624 = vpow.pop %v2623
    %v2625 = vmul.f32 %v2603, 1.442695
    %v2626 = vpow.pop %v2625
    %v2627 = vmul.f32 %v2604, 1.442695
    %v2628 = vpow.pop %v2627
    %v2629 = vmul.f32 %v2605, 1.442695
    %v2630 = vpow.pop %v2629
    %v2631 = vmul.f32 %v2606, 1.442695
    %v2632 = vpow.pop %v2631
    %v2633 = vmul.f32 %v2607, 1.442695
    %v2634 = vpow.pop %v2633
    %v2635 = vmul.f32 %v2608, 1.442695
    %v2636 = vpow.pop %v2635
    %v2637 = vadd.f32 %v2610, 1.0
    %v2638 = vadd.f32 %v2612, 1.0
    %v2639 = vadd.f32 %v2614, 1.0
    %v2640 = vadd.f32 %v2616, 1.0
    %v2641 = vadd.f32 %v2618, 1.0
    %v2642 = vadd.f32 %v2620, 1.0
    %v2643 = vadd.f32 %v2622, 1.0
    %v2644 = vadd.f32 %v2624, 1.0
    %v2645 = vadd.f32 %v2626, 1.0
    %v2646 = vadd.f32 %v2628, 1.0
    %v2647 = vadd.f32 %v2630, 1.0
    %v2648 = vadd.f32 %v2632, 1.0
    %v2649 = vadd.f32 %v2634, 1.0
    %v2650 = vadd.f32 %v2636, 1.0
    %v2651 = vrcp.pop %v2637
    %v2652 = vmul.f32 %v2637, %v2651
    %v2653 = vsub.f32 1.0, %v2652
    %v2654 = vmul.f32 %v2651, %v2653
    %v2655 = vadd.f32 %v2651, %v2654
    %vm2656 = vweird.f32 %v2637
    %vm2657 = vweird.f32 %v2651
    %vm2658 = vmor %vm2656, %vm2657
    %v2659 = vsel %vm2658, %v2651, %v2655
    %v2660 = vand.u32 2147483647, %v2637
    %vm2661 = vcmp.eq.f32.partialorder %v2660, 8.507059e+37
    %v2662 = vand.u32 %v2637, 2147483648
    %v2663 = vor.u32 1.1754944e-38, %v2662
    %v2664 = vsel %vm2661, %v2663, %v2659
    %v2665 = vmul.f32 1.0, %v2664
    %v2666 = vrcp.pop %v2638
    %v2667 = vmul.f32 %v2638, %v2666
    %v2668 = vsub.f32 1.0, %v2667
    %v2669 = vmul.f32 %v2666, %v2668
    %v2670 = vadd.f32 %v2666, %v2669
    %vm2671 = vweird.f32 %v2638
    %vm2672 = vweird.f32 %v2666
    %vm2673 = vmor %vm2671, %vm2672
    %v2674 = vsel %vm2673, %v2666, %v2670
    %v2675 = vand.u32 2147483647, %v2638
    %vm2676 = vcmp.eq.f32.partialorder %v2675, 8.507059e+37
    %v2677 = vand.u32 %v2638, 2147483648
    %v2678 = vor.u32 1.1754944e-38, %v2677
    %v2679 = vsel %vm2676, %v2678, %v2674
    %v2680 = vmul.f32 1.0, %v2679
    %v2681 = vrcp.pop %v2639
    %v2682 = vmul.f32 %v2639, %v2681
    %v2683 = vsub.f32 1.0, %v2682
    %v2684 = vmul.f32 %v2681, %v2683
    %v2685 = vadd.f32 %v2681, %v2684
    %vm2686 = vweird.f32 %v2639
    %vm2687 = vweird.f32 %v2681
    %vm2688 = vmor %vm2686, %vm2687
    %v2689 = vsel %vm2688, %v2681, %v2685
    %v2690 = vand.u32 2147483647, %v2639
    %vm2691 = vcmp.eq.f32.partialorder %v2690, 8.507059e+37
    %v2692 = vand.u32 %v2639, 2147483648
    %v2693 = vor.u32 1.1754944e-38, %v2692
    %v2694 = vsel %vm2691, %v2693, %v2689
    %v2695 = vmul.f32 1.0, %v2694
    %v2696 = vrcp.pop %v2640
    %v2697 = vmul.f32 %v2640, %v2696
    %v2698 = vsub.f32 1.0, %v2697
    %v2699 = vmul.f32 %v2696, %v2698
    %v2700 = vadd.f32 %v2696, %v2699
    %vm2701 = vweird.f32 %v2640
    %vm2702 = vweird.f32 %v2696
    %vm2703 = vmor %vm2701, %vm2702
    %v2704 = vsel %vm2703, %v2696, %v2700
    %v2705 = vand.u32 2147483647, %v2640
    %vm2706 = vcmp.eq.f32.partialorder %v2705, 8.507059e+37
    %v2707 = vand.u32 %v2640, 2147483648
    %v2708 = vor.u32 1.1754944e-38, %v2707
    %v2709 = vsel %vm2706, %v2708, %v2704
    %v2710 = vmul.f32 1.0, %v2709
    %v2711 = vrcp.pop %v2641
    %v2712 = vmul.f32 %v2641, %v2711
    %v2713 = vsub.f32 1.0, %v2712
    %v2714 = vmul.f32 %v2711, %v2713
    %v2715 = vadd.f32 %v2711, %v2714
    %vm2716 = vweird.f32 %v2641
    %vm2717 = vweird.f32 %v2711
    %vm2718 = vmor %vm2716, %vm2717
    %v2719 = vsel %vm2718, %v2711, %v2715
    %v2720 = vand.u32 2147483647, %v2641
    %vm2721 = vcmp.eq.f32.partialorder %v2720, 8.507059e+37
    %v2722 = vand.u32 %v2641, 2147483648
    %v2723 = vor.u32 1.1754944e-38, %v2722
    %v2724 = vsel %vm2721, %v2723, %v2719
    %v2725 = vmul.f32 1.0, %v2724
    %v2726 = vrcp.pop %v2642
    %v2727 = vmul.f32 %v2642, %v2726
    %v2728 = vsub.f32 1.0, %v2727
    %v2729 = vmul.f32 %v2726, %v2728
    %v2730 = vadd.f32 %v2726, %v2729
    %vm2731 = vweird.f32 %v2642
    %vm2732 = vweird.f32 %v2726
    %vm2733 = vmor %vm2731, %vm2732
    %v2734 = vsel %vm2733, %v2726, %v2730
    %v2735 = vand.u32 2147483647, %v2642
    %vm2736 = vcmp.eq.f32.partialorder %v2735, 8.507059e+37
    %v2737 = vand.u32 %v2642, 2147483648
    %v2738 = vor.u32 1.1754944e-38, %v2737
    %v2739 = vsel %vm2736, %v2738, %v2734
    %v2740 = vmul.f32 1.0, %v2739
    %v2741 = vrcp.pop %v2643
    %v2742 = vmul.f32 %v2643, %v2741
    %v2743 = vsub.f32 1.0, %v2742
    %v2744 = vmul.f32 %v2741, %v2743
    %v2745 = vadd.f32 %v2741, %v2744
    %vm2746 = vweird.f32 %v2643
    %vm2747 = vweird.f32 %v2741
    %vm2748 = vmor %vm2746, %vm2747
    %v2749 = vsel %vm2748, %v2741, %v2745
    %v2750 = vand.u32 2147483647, %v2643
    %vm2751 = vcmp.eq.f32.partialorder %v2750, 8.507059e+37
    %v2752 = vand.u32 %v2643, 2147483648
    %v2753 = vor.u32 1.1754944e-38, %v2752
    %v2754 = vsel %vm2751, %v2753, %v2749
    %v2755 = vmul.f32 1.0, %v2754
    %v2756 = vrcp.pop %v2644
    %v2757 = vmul.f32 %v2644, %v2756
    %v2758 = vsub.f32 1.0, %v2757
    %v2759 = vmul.f32 %v2756, %v2758
    %v2760 = vadd.f32 %v2756, %v2759
    %vm2761 = vweird.f32 %v2644
    %vm2762 = vweird.f32 %v2756
    %vm2763 = vmor %vm2761, %vm2762
    %v2764 = vsel %vm2763, %v2756, %v2760
    %v2765 = vand.u32 2147483647, %v2644
    %vm2766 = vcmp.eq.f32.partialorder %v2765, 8.507059e+37
    %v2767 = vand.u32 %v2644, 2147483648
    %v2768 = vor.u32 1.1754944e-38, %v2767
    %v2769 = vsel %vm2766, %v2768, %v2764
    %v2770 = vmul.f32 1.0, %v2769
    %v2771 = vrcp.pop %v2645
    %v2772 = vmul.f32 %v2645, %v2771
    %v2773 = vsub.f32 1.0, %v2772
    %v2774 = vmul.f32 %v2771, %v2773
    %v2775 = vadd.f32 %v2771, %v2774
    %vm2776 = vweird.f32 %v2645
    %vm2777 = vweird.f32 %v2771
    %vm2778 = vmor %vm2776, %vm2777
    %v2779 = vsel %vm2778, %v2771, %v2775
    %v2780 = vand.u32 2147483647, %v2645
    %vm2781 = vcmp.eq.f32.partialorder %v2780, 8.507059e+37
    %v2782 = vand.u32 %v2645, 2147483648
    %v2783 = vor.u32 1.1754944e-38, %v2782
    %v2784 = vsel %vm2781, %v2783, %v2779
    %v2785 = vmul.f32 1.0, %v2784
    %v2786 = vrcp.pop %v2646
    %v2787 = vmul.f32 %v2646, %v2786
    %v2788 = vsub.f32 1.0, %v2787
    %v2789 = vmul.f32 %v2786, %v2788
    %v2790 = vadd.f32 %v2786, %v2789
    %vm2791 = vweird.f32 %v2646
    %vm2792 = vweird.f32 %v2786
    %vm2793 = vmor %vm2791, %vm2792
    %v2794 = vsel %vm2793, %v2786, %v2790
    %v2795 = vand.u32 2147483647, %v2646
    %vm2796 = vcmp.eq.f32.partialorder %v2795, 8.507059e+37
    %v2797 = vand.u32 %v2646, 2147483648
    %v2798 = vor.u32 1.1754944e-38, %v2797
    %v2799 = vsel %vm2796, %v2798, %v2794
    %v2800 = vmul.f32 1.0, %v2799
    %v2801 = vrcp.pop %v2647
    %v2802 = vmul.f32 %v2647, %v2801
    %v2803 = vsub.f32 1.0, %v2802
    %v2804 = vmul.f32 %v2801, %v2803
    %v2805 = vadd.f32 %v2801, %v2804
    %vm2806 = vweird.f32 %v2647
    %vm2807 = vweird.f32 %v2801
    %vm2808 = vmor %vm2806, %vm2807
    %v2809 = vsel %vm2808, %v2801, %v2805
    %v2810 = vand.u32 2147483647, %v2647
    %vm2811 = vcmp.eq.f32.partialorder %v2810, 8.507059e+37
    %v2812 = vand.u32 %v2647, 2147483648
    %v2813 = vor.u32 1.1754944e-38, %v2812
    %v2814 = vsel %vm2811, %v2813, %v2809
    %v2815 = vmul.f32 1.0, %v2814
    %v2816 = vrcp.pop %v2648
    %v2817 = vmul.f32 %v2648, %v2816
    %v2818 = vsub.f32 1.0, %v2817
    %v2819 = vmul.f32 %v2816, %v2818
    %v2820 = vadd.f32 %v2816, %v2819
    %vm2821 = vweird.f32 %v2648
    %vm2822 = vweird.f32 %v2816
    %vm2823 = vmor %vm2821, %vm2822
    %v2824 = vsel %vm2823, %v2816, %v2820
    %v2825 = vand.u32 2147483647, %v2648
    %vm2826 = vcmp.eq.f32.partialorder %v2825, 8.507059e+37
    %v2827 = vand.u32 %v2648, 2147483648
    %v2828 = vor.u32 1.1754944e-38, %v2827
    %v2829 = vsel %vm2826, %v2828, %v2824
    %v2830 = vmul.f32 1.0, %v2829
    %v2831 = vrcp.pop %v2649
    %v2832 = vmul.f32 %v2649, %v2831
    %v2833 = vsub.f32 1.0, %v2832
    %v2834 = vmul.f32 %v2831, %v2833
    %v2835 = vadd.f32 %v2831, %v2834
    %vm2836 = vweird.f32 %v2649
    %vm2837 = vweird.f32 %v2831
    %vm2838 = vmor %vm2836, %vm2837
    %v2839 = vsel %vm2838, %v2831, %v2835
    %v2840 = vand.u32 2147483647, %v2649
    %vm2841 = vcmp.eq.f32.partialorder %v2840, 8.507059e+37
    %v2842 = vand.u32 %v2649, 2147483648
    %v2843 = vor.u32 1.1754944e-38, %v2842
    %v2844 = vsel %vm2841, %v2843, %v2839
    %v2845 = vmul.f32 1.0, %v2844
    %v2846 = vrcp.pop %v2650
    %v2847 = vmul.f32 %v2650, %v2846
    %v2848 = vsub.f32 1.0, %v2847
    %v2849 = vmul.f32 %v2846, %v2848
    %v2850 = vadd.f32 %v2846, %v2849
    %vm2851 = vweird.f32 %v2650
    %vm2852 = vweird.f32 %v2846
    %vm2853 = vmor %vm2851, %vm2852
    %v2854 = vsel %vm2853, %v2846, %v2850
    %v2855 = vand.u32 2147483647, %v2650
    %vm2856 = vcmp.eq.f32.partialorder %v2855, 8.507059e+37
    %v2857 = vand.u32 %v2650, 2147483648
    %v2858 = vor.u32 1.1754944e-38, %v2857
    %v2859 = vsel %vm2856, %v2858, %v2854
    %v2860 = vmul.f32 1.0, %v2859
    %v2861 = vmul.f32 %v2423, %v2665
    %v2862 = vmul.f32 %v2436, %v2680
    %v2863 = vmul.f32 %v2449, %v2695
    %v2864 = vmul.f32 %v2462, %v2710
    %v2865 = vmul.f32 %v2475, %v2725
    %v2866 = vmul.f32 %v2488, %v2740
    %v2867 = vmul.f32 %v2501, %v2755
    %v2868 = vmul.f32 %v2514, %v2770
    %v2869 = vmul.f32 %v2527, %v2785
    %v2870 = vmul.f32 %v2540, %v2800
    %v2871 = vmul.f32 %v2553, %v2815
    %v2872 = vmul.f32 %v2566, %v2830
    %v2873 = vmul.f32 %v2579, %v2845
    %v2874 = vmul.f32 %v2592, %v2860
    %v2875 = vpack.c.bf16 %v2861, %v2861
    %v2876 = vpack.c.bf16 %v2862, %v2862
    %v2877 = vpack.c.bf16 %v2863, %v2863
    %v2878 = vpack.c.bf16 %v2864, %v2864
    %v2879 = vpack.c.bf16 %v2865, %v2865
    %v2880 = vpack.c.bf16 %v2866, %v2866
    %v2881 = vpack.c.bf16 %v2867, %v2867
    %v2882 = vpack.c.bf16 %v2868, %v2868
    %v2883 = vpack.c.bf16 %v2869, %v2869
    %v2884 = vpack.c.bf16 %v2870, %v2870
    %v2885 = vpack.c.bf16 %v2871, %v2871
    %v2886 = vpack.c.bf16 %v2872, %v2872
    %v2887 = vpack.c.bf16 %v2873, %v2873
    %v2888 = vpack.c.bf16 %v2874, %v2874
    %v2889 = vld [vmem:[#allocation10] sm:$0xff]
    %v2890 = vld [vmem:[#allocation10 + $0x8] sm:$0xff]
    %v2891 = vld [vmem:[#allocation10 + $0x10] sm:$0xf]
    %v2892 = vld [vmem:[#allocation10 + $0x14] sm:$0xff]
    %v2893 = vld [vmem:[#allocation10 + $0x1c] sm:$0xff]
    %v2894 = vld [vmem:[#allocation10 + $0x24] sm:$0xf]
    %v2895 = vld [vmem:[#allocation10 + $0x28] sm:$0xff]
    %v2896 = vld [vmem:[#allocation10 + $0x30] sm:$0xff]
    %v2897 = vld [vmem:[#allocation10 + $0x38] sm:$0xf]
    %v2898 = vld [vmem:[#allocation10 + $0x3c] sm:$0xff]
    %v2899 = vld [vmem:[#allocation10 + $0x44] sm:$0xff]
    %v2900 = vld [vmem:[#allocation10 + $0x4c] sm:$0xf]
    %v2901 = vld [vmem:[#allocation10 + $0x50] sm:$0xff]
    %v2902 = vld [vmem:[#allocation10 + $0x58] sm:$0xff]
    %v2903 = vld [vmem:[#allocation10 + $0x60] sm:$0xf]
    %v2904 = vld [vmem:[#allocation10 + $0x64] sm:$0xff]
    %v2905 = vld [vmem:[#allocation10 + $0x6c] sm:$0xff]
    %v2906 = vld [vmem:[#allocation10 + $0x74] sm:$0xf]
    %v2907 = vld [vmem:[#allocation10 + $0x78] sm:$0xff]
    %v2908 = vld [vmem:[#allocation10 + $0x80] sm:$0xff]
    %v2909 = vld [vmem:[#allocation10 + $0x88] sm:$0xf]
    %v2910 = vld [vmem:[#allocation10 + $0x8c] sm:$0xff]
    %v2911 = vld [vmem:[#allocation10 + $0x94] sm:$0xff]
    %v2912 = vld [vmem:[#allocation10 + $0x9c] sm:$0xf]
    %v2913 = vld [vmem:[#allocation10 + $0xa0] sm:$0xff]
    %v2914 = vld [vmem:[#allocation10 + $0xa8] sm:$0xff]
    %v2915 = vld [vmem:[#allocation10 + $0xb0] sm:$0xf]
    %v2916 = vld [vmem:[#allocation10 + $0xb4] sm:$0xff]
    %v2917 = vld [vmem:[#allocation10 + $0xbc] sm:$0xff]
    %v2918 = vld [vmem:[#allocation10 + $0xc4] sm:$0xf]
    %v2919 = vld [vmem:[#allocation10 + $0xc8] sm:$0xff]
    %v2920 = vld [vmem:[#allocation10 + $0xd0] sm:$0xff]
    %v2921 = vld [vmem:[#allocation10 + $0xd8] sm:$0xf]
    %v2922 = vld [vmem:[#allocation10 + $0xdc] sm:$0xff]
    %v2923 = vld [vmem:[#allocation10 + $0xe4] sm:$0xff]
    %v2924 = vld [vmem:[#allocation10 + $0xec] sm:$0xf]
    %v2925 = vld [vmem:[#allocation10 + $0xf0] sm:$0xff]
    %v2926 = vld [vmem:[#allocation10 + $0xf8] sm:$0xff]
    %v2927 = vld [vmem:[#allocation10 + $0x100] sm:$0xf]
    %v2928 = vld [vmem:[#allocation10 + $0x104] sm:$0xff]
    %v2929 = vld [vmem:[#allocation10 + $0x10c] sm:$0xff]
    %v2930 = vld [vmem:[#allocation10 + $0x114] sm:$0xf]
    %v2931 = vld [vmem:[#allocation10 + $0x118] sm:$0xff]
    %v2932 = vld [vmem:[#allocation10 + $0x120] sm:$0xff]
    %v2933 = vld [vmem:[#allocation10 + $0x128] sm:$0xf]
    %v2934 = vld [vmem:[#allocation10 + $0x12c] sm:$0xff]
    %v2935 = vld [vmem:[#allocation10 + $0x134] sm:$0xff]
    %v2936 = vld [vmem:[#allocation10 + $0x13c] sm:$0xf]
    %v2937 = vld [vmem:[#allocation10 + $0x140] sm:$0xff]
    %v2938 = vld [vmem:[#allocation10 + $0x148] sm:$0xff]
    %v2939 = vld [vmem:[#allocation10 + $0x150] sm:$0xf]
    %v2940 = vld [vmem:[#allocation10 + $0x154] sm:$0xff]
    %v2941 = vld [vmem:[#allocation10 + $0x15c] sm:$0xff]
    %v2942 = vld [vmem:[#allocation10 + $0x164] sm:$0xf]
    %v2943 = vld [vmem:[#allocation10 + $0x168] sm:$0xff]
    %v2944 = vld [vmem:[#allocation10 + $0x170] sm:$0xff]
    %v2945 = vld [vmem:[#allocation10 + $0x178] sm:$0xf]
    %v2946 = vld [vmem:[#allocation10 + $0x17c] sm:$0xff]
    %v2947 = vld [vmem:[#allocation10 + $0x184] sm:$0xff]
    %v2948 = vld [vmem:[#allocation10 + $0x18c] sm:$0xf]
    %v2949 = vld [vmem:[#allocation10 + $0x190] sm:$0xff]
    %v2950 = vld [vmem:[#allocation10 + $0x198] sm:$0xff]
    %v2951 = vld [vmem:[#allocation10 + $0x1a0] sm:$0xf]
    %v2952 = vld [vmem:[#allocation10 + $0x1a4] sm:$0xff]
    %v2953 = vld [vmem:[#allocation10 + $0x1ac] sm:$0xff]
    %v2954 = vld [vmem:[#allocation10 + $0x1b4] sm:$0xf]
    %v2955 = vld [vmem:[#allocation10 + $0x1b8] sm:$0xff]
    %v2956 = vld [vmem:[#allocation10 + $0x1c0] sm:$0xff]
    %v2957 = vld [vmem:[#allocation10 + $0x1c8] sm:$0xf]
    %v2958 = vld [vmem:[#allocation10 + $0x1cc] sm:$0xff]
    %v2959 = vld [vmem:[#allocation10 + $0x1d4] sm:$0xff]
    %v2960 = vld [vmem:[#allocation10 + $0x1dc] sm:$0xf]
    %v2961 = vld [vmem:[#allocation10 + $0x1e0] sm:$0xff]
    %v2962 = vld [vmem:[#allocation10 + $0x1e8] sm:$0xff]
    %v2963 = vld [vmem:[#allocation10 + $0x1f0] sm:$0xf]
    %v2964 = vld [vmem:[#allocation10 + $0x1f4] sm:$0xff]
    %v2965 = vld [vmem:[#allocation10 + $0x1fc] sm:$0xff]
    %v2966 = vld [vmem:[#allocation10 + $0x204] sm:$0xf]
    %v2967 = vld [vmem:[#allocation10 + $0x208] sm:$0xff]
    %v2968 = vld [vmem:[#allocation10 + $0x210] sm:$0xff]
    %v2969 = vld [vmem:[#allocation10 + $0x218] sm:$0xf]
    %v2970 = vld [vmem:[#allocation10 + $0x21c] sm:$0xff]
    %v2971 = vld [vmem:[#allocation10 + $0x224] sm:$0xff]
    %v2972 = vld [vmem:[#allocation10 + $0x22c] sm:$0xf]
    %v2973 = vld [vmem:[#allocation10 + $0x230] sm:$0xff]
    %v2974 = vld [vmem:[#allocation10 + $0x238] sm:$0xff]
    %v2975 = vld [vmem:[#allocation10 + $0x240] sm:$0xf]
    %v2976 = vld [vmem:[#allocation10 + $0x244] sm:$0xff]
    %v2977 = vld [vmem:[#allocation10 + $0x24c] sm:$0xff]
    %v2978 = vld [vmem:[#allocation10 + $0x254] sm:$0xf]
    %v2979 = vld [vmem:[#allocation10 + $0x258] sm:$0xff]
    %v2980 = vld [vmem:[#allocation10 + $0x260] sm:$0xff]
    %v2981 = vld [vmem:[#allocation10 + $0x268] sm:$0xf]
    %v2982 = vld [vmem:[#allocation10 + $0x26c] sm:$0xff]
    %v2983 = vld [vmem:[#allocation10 + $0x274] sm:$0xff]
    %v2984 = vld [vmem:[#allocation10 + $0x27c] sm:$0xf]
    %v2985 = vld [vmem:[#allocation10 + $0x280] sm:$0xff]
    %v2986 = vld [vmem:[#allocation10 + $0x288] sm:$0xff]
    %v2987 = vld [vmem:[#allocation10 + $0x290] sm:$0xf]
    %v2988 = vld [vmem:[#allocation10 + $0x294] sm:$0xff]
    %v2989 = vld [vmem:[#allocation10 + $0x29c] sm:$0xff]
    %v2990 = vld [vmem:[#allocation10 + $0x2a4] sm:$0xf]
    %v2991 = vld [vmem:[#allocation10 + $0x2a8] sm:$0xff]
    %v2992 = vld [vmem:[#allocation10 + $0x2b0] sm:$0xff]
    %v2993 = vld [vmem:[#allocation10 + $0x2b8] sm:$0xf]
    %v2994 = vld [vmem:[#allocation10 + $0x2bc] sm:$0xff]
    %v2995 = vld [vmem:[#allocation10 + $0x2c4] sm:$0xff]
    %v2996 = vld [vmem:[#allocation10 + $0x2cc] sm:$0xf]
    %v2997 = vld [vmem:[#allocation10 + $0x2d0] sm:$0xff]
    %v2998 = vld [vmem:[#allocation10 + $0x2d8] sm:$0xff]
    %v2999 = vld [vmem:[#allocation10 + $0x2e0] sm:$0xf]
    %v3000 = vld [vmem:[#allocation10 + $0x2e4] sm:$0xff]
    %v3001 = vld [vmem:[#allocation10 + $0x2ec] sm:$0xff]
    %v3002 = vld [vmem:[#allocation10 + $0x2f4] sm:$0xf]
    %v3003 = vld [vmem:[#allocation10 + $0x2f8] sm:$0xff]
    %v3004 = vld [vmem:[#allocation10 + $0x300] sm:$0xff]
    %v3005 = vld [vmem:[#allocation10 + $0x308] sm:$0xf]
    %v3006 = vld [vmem:[#allocation10 + $0x30c] sm:$0xff]
    %v3007 = vld [vmem:[#allocation10 + $0x314] sm:$0xff]
    %v3008 = vld [vmem:[#allocation10 + $0x31c] sm:$0xf]
    %v3009 = vld [vmem:[#allocation10 + $0x320] sm:$0xff]
    %v3010 = vld [vmem:[#allocation10 + $0x328] sm:$0xff]
    %v3011 = vld [vmem:[#allocation10 + $0x330] sm:$0xf]
    %v3012 = vld [vmem:[#allocation10 + $0x334] sm:$0xff]
    %v3013 = vld [vmem:[#allocation10 + $0x33c] sm:$0xff]
    %v3014 = vld [vmem:[#allocation10 + $0x344] sm:$0xf]
    %v3015 = vld [vmem:[#allocation10 + $0x348] sm:$0xff]
    %v3016 = vld [vmem:[#allocation10 + $0x350] sm:$0xff]
    %v3017 = vld [vmem:[#allocation10 + $0x358] sm:$0xf]
    %v3018 = vld [vmem:[#allocation10 + $0x35c] sm:$0xff]
    %v3019 = vld [vmem:[#allocation10 + $0x364] sm:$0xff]
    %v3020 = vld [vmem:[#allocation10 + $0x36c] sm:$0xf]
    %v3021 = vld [vmem:[#allocation10 + $0x370] sm:$0xff]
    %v3022 = vld [vmem:[#allocation10 + $0x378] sm:$0xff]
    %v3023 = vld [vmem:[#allocation10 + $0x380] sm:$0xf]
    %v3024 = vld [vmem:[#allocation10 + $0x384] sm:$0xff]
    %v3025 = vld [vmem:[#allocation10 + $0x38c] sm:$0xff]
    %v3026 = vld [vmem:[#allocation10 + $0x394] sm:$0xf]
    %v3027 = vld [vmem:[#allocation10 + $0x398] sm:$0xff]
    %v3028 = vld [vmem:[#allocation10 + $0x3a0] sm:$0xff]
    %v3029 = vld [vmem:[#allocation10 + $0x3a8] sm:$0xf]
    %v3030 = vld [vmem:[#allocation10 + $0x3ac] sm:$0xff]
    %v3031 = vld [vmem:[#allocation10 + $0x3b4] sm:$0xff]
    %v3032 = vld [vmem:[#allocation10 + $0x3bc] sm:$0xf]
    %v3033 = vld [vmem:[#allocation10 + $0x3c0] sm:$0xff]
    %v3034 = vld [vmem:[#allocation10 + $0x3c8] sm:$0xff]
    %v3035 = vld [vmem:[#allocation10 + $0x3d0] sm:$0xf]
    %v3036 = vld [vmem:[#allocation10 + $0x3d4] sm:$0xff]
    %v3037 = vld [vmem:[#allocation10 + $0x3dc] sm:$0xff]
    %v3038 = vld [vmem:[#allocation10 + $0x3e4] sm:$0xf]
    %v3039 = vld [vmem:[#allocation10 + $0x3e8] sm:$0xff]
    %v3040 = vld [vmem:[#allocation10 + $0x3f0] sm:$0xff]
    %v3041 = vld [vmem:[#allocation10 + $0x3f8] sm:$0xf]
    %v3042 = vld [vmem:[#allocation10 + $0x3fc] sm:$0xff]
    %v3043 = vld [vmem:[#allocation10 + $0x404] sm:$0xff]
    %v3044 = vld [vmem:[#allocation10 + $0x40c] sm:$0xf]
    %v3045 = vld [vmem:[#allocation10 + $0x410] sm:$0xff]
    %v3046 = vld [vmem:[#allocation10 + $0x418] sm:$0xff]
    %v3047 = vld [vmem:[#allocation10 + $0x420] sm:$0xf]
    %v3048 = vld [vmem:[#allocation10 + $0x424] sm:$0xff]
    %v3049 = vld [vmem:[#allocation10 + $0x42c] sm:$0xff]
    %v3050 = vld [vmem:[#allocation10 + $0x434] sm:$0xf]
    %v3051 = vld [vmem:[#allocation10 + $0x438] sm:$0xff]
    %v3052 = vld [vmem:[#allocation10 + $0x440] sm:$0xff]
    %v3053 = vld [vmem:[#allocation10 + $0x448] sm:$0xf]
    %v3054 = vld [vmem:[#allocation10 + $0x44c] sm:$0xff]
    %v3055 = vld [vmem:[#allocation10 + $0x454] sm:$0xff]
    %v3056 = vld [vmem:[#allocation10 + $0x45c] sm:$0xf]
    %v3057 = vld [vmem:[#allocation10 + $0x460] sm:$0xff]
    %v3058 = vld [vmem:[#allocation10 + $0x468] sm:$0xff]
    %v3059 = vld [vmem:[#allocation10 + $0x470] sm:$0xf]
    %v3060 = vld [vmem:[#allocation10 + $0x474] sm:$0xff]
    %v3061 = vld [vmem:[#allocation10 + $0x47c] sm:$0xff]
    %v3062 = vld [vmem:[#allocation10 + $0x484] sm:$0xf]
    %v3063 = vld [vmem:[#allocation10 + $0x488] sm:$0xff]
    %v3064 = vld [vmem:[#allocation10 + $0x490] sm:$0xff]
    %v3065 = vld [vmem:[#allocation10 + $0x498] sm:$0xf]
    %v3066 = vld [vmem:[#allocation10 + $0x49c] sm:$0xff]
    %v3067 = vld [vmem:[#allocation10 + $0x4a4] sm:$0xff]
    %v3068 = vld [vmem:[#allocation10 + $0x4ac] sm:$0xf]
    %v3069 = vld [vmem:[#allocation10 + $0x4b0] sm:$0xff]
    %v3070 = vld [vmem:[#allocation10 + $0x4b8] sm:$0xff]
    %v3071 = vld [vmem:[#allocation10 + $0x4c0] sm:$0xf]
    %v3072 = vld [vmem:[#allocation10 + $0x4c4] sm:$0xff]
    %v3073 = vld [vmem:[#allocation10 + $0x4cc] sm:$0xff]
    %v3074 = vld [vmem:[#allocation10 + $0x4d4] sm:$0xf]
    %v3075 = vld [vmem:[#allocation10 + $0x4d8] sm:$0xff]
    %v3076 = vld [vmem:[#allocation10 + $0x4e0] sm:$0xff]
    %v3077 = vld [vmem:[#allocation10 + $0x4e8] sm:$0xf]
    %v3078 = vld [vmem:[#allocation10 + $0x4ec] sm:$0xff]
    %v3079 = vld [vmem:[#allocation10 + $0x4f4] sm:$0xff]
    %v3080 = vld [vmem:[#allocation10 + $0x4fc] sm:$0xf]
    %v3081 = vld [vmem:[#allocation10 + $0x500] sm:$0xff]
    %v3082 = vld [vmem:[#allocation10 + $0x508] sm:$0xff]
    %v3083 = vld [vmem:[#allocation10 + $0x510] sm:$0xf]
    %v3084 = vld [vmem:[#allocation10 + $0x514] sm:$0xff]
    %v3085 = vld [vmem:[#allocation10 + $0x51c] sm:$0xff]
    %v3086 = vld [vmem:[#allocation10 + $0x524] sm:$0xf]
    %v3087 = vld [vmem:[#allocation10 + $0x528] sm:$0xff]
    %v3088 = vld [vmem:[#allocation10 + $0x530] sm:$0xff]
    %v3089 = vld [vmem:[#allocation10 + $0x538] sm:$0xf]
    %v3090 = vld [vmem:[#allocation10 + $0x53c] sm:$0xff]
    %v3091 = vld [vmem:[#allocation10 + $0x544] sm:$0xff]
    %v3092 = vld [vmem:[#allocation10 + $0x54c] sm:$0xf]
    %v3093 = vld [vmem:[#allocation10 + $0x550] sm:$0xff]
    %v3094 = vld [vmem:[#allocation10 + $0x558] sm:$0xff]
    %v3095 = vld [vmem:[#allocation10 + $0x560] sm:$0xf]
    %v3096 = vld [vmem:[#allocation10 + $0x564] sm:$0xff]
    %v3097 = vld [vmem:[#allocation10 + $0x56c] sm:$0xff]
    %v3098 = vld [vmem:[#allocation10 + $0x574] sm:$0xf]
    %v3099 = vld [vmem:[#allocation10 + $0x578] sm:$0xff]
    %v3100 = vld [vmem:[#allocation10 + $0x580] sm:$0xff]
    %v3101 = vld [vmem:[#allocation10 + $0x588] sm:$0xf]
    %v3102 = vld [vmem:[#allocation10 + $0x58c] sm:$0xff]
    %v3103 = vld [vmem:[#allocation10 + $0x594] sm:$0xff]
    %v3104 = vld [vmem:[#allocation10 + $0x59c] sm:$0xf]
    %v3105 = vld [vmem:[#allocation10 + $0x5a0] sm:$0xff]
    %v3106 = vld [vmem:[#allocation10 + $0x5a8] sm:$0xff]
    %v3107 = vld [vmem:[#allocation10 + $0x5b0] sm:$0xf]
    %v3108 = vld [vmem:[#allocation10 + $0x5b4] sm:$0xff]
    %v3109 = vld [vmem:[#allocation10 + $0x5bc] sm:$0xff]
    %v3110 = vld [vmem:[#allocation10 + $0x5c4] sm:$0xf]
    %v3111 = vld [vmem:[#allocation10 + $0x5c8] sm:$0xff]
    %v3112 = vld [vmem:[#allocation10 + $0x5d0] sm:$0xff]
    %v3113 = vld [vmem:[#allocation10 + $0x5d8] sm:$0xf]
    %v3114 = vld [vmem:[#allocation10 + $0x5dc] sm:$0xff]
    %v3115 = vld [vmem:[#allocation10 + $0x5e4] sm:$0xff]
    %v3116 = vld [vmem:[#allocation10 + $0x5ec] sm:$0xf]
    %v3117 = vld [vmem:[#allocation10 + $0x5f0] sm:$0xff]
    %v3118 = vld [vmem:[#allocation10 + $0x5f8] sm:$0xff]
    %v3119 = vld [vmem:[#allocation10 + $0x600] sm:$0xf]
    %v3120 = vld [vmem:[#allocation10 + $0x604] sm:$0xff]
    %v3121 = vld [vmem:[#allocation10 + $0x60c] sm:$0xff]
    %v3122 = vld [vmem:[#allocation10 + $0x614] sm:$0xf]
    %v3123 = vld [vmem:[#allocation10 + $0x618] sm:$0xff]
    %v3124 = vld [vmem:[#allocation10 + $0x620] sm:$0xff]
    %v3125 = vld [vmem:[#allocation10 + $0x628] sm:$0xf]
    %v3126 = vld [vmem:[#allocation10 + $0x62c] sm:$0xff]
    %v3127 = vld [vmem:[#allocation10 + $0x634] sm:$0xff]
    %v3128 = vld [vmem:[#allocation10 + $0x63c] sm:$0xf]
    %v3129 = vld [vmem:[#allocation10 + $0x640] sm:$0xff]
    %v3130 = vld [vmem:[#allocation10 + $0x648] sm:$0xff]
    %v3131 = vld [vmem:[#allocation10 + $0x650] sm:$0xf]
    %v3132 = vld [vmem:[#allocation10 + $0x654] sm:$0xff]
    %v3133 = vld [vmem:[#allocation10 + $0x65c] sm:$0xff]
    %v3134 = vld [vmem:[#allocation10 + $0x664] sm:$0xf]
    %v3135 = vld [vmem:[#allocation10 + $0x668] sm:$0xff]
    %v3136 = vld [vmem:[#allocation10 + $0x670] sm:$0xff]
    %v3137 = vld [vmem:[#allocation10 + $0x678] sm:$0xf]
    %v3138 = vld [vmem:[#allocation10 + $0x67c] sm:$0xff]
    %v3139 = vld [vmem:[#allocation10 + $0x684] sm:$0xff]
    %v3140 = vld [vmem:[#allocation10 + $0x68c] sm:$0xf]
    %v3141 = vld [vmem:[#allocation10 + $0x690] sm:$0xff]
    %v3142 = vld [vmem:[#allocation10 + $0x698] sm:$0xff]
    %v3143 = vld [vmem:[#allocation10 + $0x6a0] sm:$0xf]
    %v3144 = vld [vmem:[#allocation10 + $0x6a4] sm:$0xff]
    %v3145 = vld [vmem:[#allocation10 + $0x6ac] sm:$0xff]
    %v3146 = vld [vmem:[#allocation10 + $0x6b4] sm:$0xf]
    %v3147 = vld [vmem:[#allocation10 + $0x6b8] sm:$0xff]
    %v3148 = vld [vmem:[#allocation10 + $0x6c0] sm:$0xff]
    %v3149 = vld [vmem:[#allocation10 + $0x6c8] sm:$0xf]
    %v3150 = vld [vmem:[#allocation10 + $0x6cc] sm:$0xff]
    %v3151 = vld [vmem:[#allocation10 + $0x6d4] sm:$0xff]
    %v3152 = vld [vmem:[#allocation10 + $0x6dc] sm:$0xf]
    %v3153 = vld [vmem:[#allocation10 + $0x6e0] sm:$0xff]
    %v3154 = vld [vmem:[#allocation10 + $0x6e8] sm:$0xff]
    %v3155 = vld [vmem:[#allocation10 + $0x6f0] sm:$0xf]
    %v3156 = vld [vmem:[#allocation10 + $0x6f4] sm:$0xff]
    %v3157 = vld [vmem:[#allocation10 + $0x6fc] sm:$0xff]
    %v3158 = vld [vmem:[#allocation10 + $0x704] sm:$0xf]
    %v3159 = vld [vmem:[#allocation10 + $0x708] sm:$0xff]
    %v3160 = vld [vmem:[#allocation10 + $0x710] sm:$0xff]
    %v3161 = vld [vmem:[#allocation10 + $0x718] sm:$0xf]
    %v3162 = vld [vmem:[#allocation10 + $0x71c] sm:$0xff]
    %v3163 = vld [vmem:[#allocation10 + $0x724] sm:$0xff]
    %v3164 = vld [vmem:[#allocation10 + $0x72c] sm:$0xf]
    %v3165 = vld [vmem:[#allocation10 + $0x730] sm:$0xff]
    %v3166 = vld [vmem:[#allocation10 + $0x738] sm:$0xff]
    %v3167 = vld [vmem:[#allocation10 + $0x740] sm:$0xf]
    %v3168 = vld [vmem:[#allocation10 + $0x744] sm:$0xff]
    %v3169 = vld [vmem:[#allocation10 + $0x74c] sm:$0xff]
    %v3170 = vld [vmem:[#allocation10 + $0x754] sm:$0xf]
    %v3171 = vld [vmem:[#allocation10 + $0x758] sm:$0xff]
    %v3172 = vld [vmem:[#allocation10 + $0x760] sm:$0xff]
    %v3173 = vld [vmem:[#allocation10 + $0x768] sm:$0xf]
    %v3174 = vld [vmem:[#allocation10 + $0x76c] sm:$0xff]
    %v3175 = vld [vmem:[#allocation10 + $0x774] sm:$0xff]
    %v3176 = vld [vmem:[#allocation10 + $0x77c] sm:$0xf]
    %v3177 = vld [vmem:[#allocation10 + $0x780] sm:$0xff]
    %v3178 = vld [vmem:[#allocation10 + $0x788] sm:$0xff]
    %v3179 = vld [vmem:[#allocation10 + $0x790] sm:$0xf]
    %v3180 = vld [vmem:[#allocation10 + $0x794] sm:$0xff]
    %v3181 = vld [vmem:[#allocation10 + $0x79c] sm:$0xff]
    %v3182 = vld [vmem:[#allocation10 + $0x7a4] sm:$0xf]
    %v3183 = vld [vmem:[#allocation10 + $0x7a8] sm:$0xff]
    %v3184 = vld [vmem:[#allocation10 + $0x7b0] sm:$0xff]
    %v3185 = vld [vmem:[#allocation10 + $0x7b8] sm:$0xf]
    %v3186 = vld [vmem:[#allocation10 + $0x7bc] sm:$0xff]
    %v3187 = vld [vmem:[#allocation10 + $0x7c4] sm:$0xff]
    %v3188 = vld [vmem:[#allocation10 + $0x7cc] sm:$0xf]
    %v3189 = vld [vmem:[#allocation10 + $0x7d0] sm:$0xff]
    %v3190 = vld [vmem:[#allocation10 + $0x7d8] sm:$0xff]
    %v3191 = vld [vmem:[#allocation10 + $0x7e0] sm:$0xf]
    %v3192 = vld [vmem:[#allocation10 + $0x7e4] sm:$0xff]
    %v3193 = vld [vmem:[#allocation10 + $0x7ec] sm:$0xff]
    %v3194 = vld [vmem:[#allocation10 + $0x7f4] sm:$0xf]
    %v3195 = vld [vmem:[#allocation10 + $0x7f8] sm:$0xff]
    %v3196 = vld [vmem:[#allocation10 + $0x800] sm:$0xff]
    %v3197 = vld [vmem:[#allocation10 + $0x808] sm:$0xf]
    %v3198 = vld [vmem:[#allocation10 + $0x80c] sm:$0xff]
    %v3199 = vld [vmem:[#allocation10 + $0x814] sm:$0xff]
    %v3200 = vld [vmem:[#allocation10 + $0x81c] sm:$0xf]
    %v3201 = vld [vmem:[#allocation10 + $0x820] sm:$0xff]
    %v3202 = vld [vmem:[#allocation10 + $0x828] sm:$0xff]
    %v3203 = vld [vmem:[#allocation10 + $0x830] sm:$0xf]
    %v3204 = vld [vmem:[#allocation10 + $0x834] sm:$0xff]
    %v3205 = vld [vmem:[#allocation10 + $0x83c] sm:$0xff]
    %v3206 = vld [vmem:[#allocation10 + $0x844] sm:$0xf]
    %v3207 = vld [vmem:[#allocation10 + $0x848] sm:$0xff]
    %v3208 = vld [vmem:[#allocation10 + $0x850] sm:$0xff]
    %v3209 = vld [vmem:[#allocation10 + $0x858] sm:$0xf]
    %v3210 = vld [vmem:[#allocation10 + $0x85c] sm:$0xff]
    %v3211 = vld [vmem:[#allocation10 + $0x864] sm:$0xff]
    %v3212 = vld [vmem:[#allocation10 + $0x86c] sm:$0xf]
    %v3213 = vld [vmem:[#allocation10 + $0x870] sm:$0xff]
    %v3214 = vld [vmem:[#allocation10 + $0x878] sm:$0xff]
    %v3215 = vld [vmem:[#allocation10 + $0x880] sm:$0xf]
    %v3216 = vld [vmem:[#allocation10 + $0x884] sm:$0xff]
    %v3217 = vld [vmem:[#allocation10 + $0x88c] sm:$0xff]
    %v3218 = vld [vmem:[#allocation10 + $0x894] sm:$0xf]
    %v3219 = vld [vmem:[#allocation10 + $0x898] sm:$0xff]
    %v3220 = vld [vmem:[#allocation10 + $0x8a0] sm:$0xff]
    %v3221 = vld [vmem:[#allocation10 + $0x8a8] sm:$0xf]
    %v3222 = vld [vmem:[#allocation10 + $0x8ac] sm:$0xff]
    %v3223 = vld [vmem:[#allocation10 + $0x8b4] sm:$0xff]
    %v3224 = vld [vmem:[#allocation10 + $0x8bc] sm:$0xf]
    %v3225 = vld [vmem:[#allocation10 + $0x8c0] sm:$0xff]
    %v3226 = vld [vmem:[#allocation10 + $0x8c8] sm:$0xff]
    %v3227 = vld [vmem:[#allocation10 + $0x8d0] sm:$0xf]
    %v3228 = vld [vmem:[#allocation10 + $0x8d4] sm:$0xff]
    %v3229 = vld [vmem:[#allocation10 + $0x8dc] sm:$0xff]
    %v3230 = vld [vmem:[#allocation10 + $0x8e4] sm:$0xf]
    %v3231 = vld [vmem:[#allocation10 + $0x8e8] sm:$0xff]
    %v3232 = vld [vmem:[#allocation10 + $0x8f0] sm:$0xff]
    %v3233 = vld [vmem:[#allocation10 + $0x8f8] sm:$0xf]
    %v3234 = vld [vmem:[#allocation10 + $0x8fc] sm:$0xff]
    %v3235 = vld [vmem:[#allocation10 + $0x904] sm:$0xff]
    %v3236 = vld [vmem:[#allocation10 + $0x90c] sm:$0xf]
    %v3237 = vld [vmem:[#allocation10 + $0x910] sm:$0xff]
    %v3238 = vld [vmem:[#allocation10 + $0x918] sm:$0xff]
    %v3239 = vld [vmem:[#allocation10 + $0x920] sm:$0xf]
    %v3240 = vld [vmem:[#allocation10 + $0x924] sm:$0xff]
    %v3241 = vld [vmem:[#allocation10 + $0x92c] sm:$0xff]
    %v3242 = vld [vmem:[#allocation10 + $0x934] sm:$0xf]
    %v3243 = vld [vmem:[#allocation10 + $0x938] sm:$0xff]
    %v3244 = vld [vmem:[#allocation10 + $0x940] sm:$0xff]
    %v3245 = vld [vmem:[#allocation10 + $0x948] sm:$0xf]
    %v3246 = vld [vmem:[#allocation10 + $0x94c] sm:$0xff]
    %v3247 = vld [vmem:[#allocation10 + $0x954] sm:$0xff]
    %v3248 = vld [vmem:[#allocation10 + $0x95c] sm:$0xf]
    %v3249 = vld [vmem:[#allocation10 + $0x960] sm:$0xff]
    %v3250 = vld [vmem:[#allocation10 + $0x968] sm:$0xff]
    %v3251 = vld [vmem:[#allocation10 + $0x970] sm:$0xf]
    %v3252 = vld [vmem:[#allocation10 + $0x974] sm:$0xff]
    %v3253 = vld [vmem:[#allocation10 + $0x97c] sm:$0xff]
    %v3254 = vld [vmem:[#allocation10 + $0x984] sm:$0xf]
    %v3255 = vld [vmem:[#allocation10 + $0x988] sm:$0xff]
    %v3256 = vld [vmem:[#allocation10 + $0x990] sm:$0xff]
    %v3257 = vld [vmem:[#allocation10 + $0x998] sm:$0xf]
    %v3258 = vld [vmem:[#allocation10 + $0x99c] sm:$0xff]
    %v3259 = vld [vmem:[#allocation10 + $0x9a4] sm:$0xff]
    %v3260 = vld [vmem:[#allocation10 + $0x9ac] sm:$0xf]
    %v3261 = vld [vmem:[#allocation10 + $0x9b0] sm:$0xff]
    %v3262 = vld [vmem:[#allocation10 + $0x9b8] sm:$0xff]
    %v3263 = vld [vmem:[#allocation10 + $0x9c0] sm:$0xf]
    %v3264 = vld [vmem:[#allocation10 + $0x9c4] sm:$0xff]
    %v3265 = vld [vmem:[#allocation10 + $0x9cc] sm:$0xff]
    %v3266 = vld [vmem:[#allocation10 + $0x9d4] sm:$0xf]
    %v3267 = vld [vmem:[#allocation10 + $0x9d8] sm:$0xff]
    %v3268 = vld [vmem:[#allocation10 + $0x9e0] sm:$0xff]
    %v3269 = vld [vmem:[#allocation10 + $0x9e8] sm:$0xf]
    %v3270 = vld [vmem:[#allocation10 + $0x9ec] sm:$0xff]
    %v3271 = vld [vmem:[#allocation10 + $0x9f4] sm:$0xff]
    %v3272 = vld [vmem:[#allocation10 + $0x9fc] sm:$0xf]
    %v3273 = vld [vmem:[#allocation10 + $0xa00] sm:$0xff]
    %v3274 = vld [vmem:[#allocation10 + $0xa08] sm:$0xff]
    %v3275 = vld [vmem:[#allocation10 + $0xa10] sm:$0xf]
    %v3276 = vld [vmem:[#allocation10 + $0xa14] sm:$0xff]
    %v3277 = vld [vmem:[#allocation10 + $0xa1c] sm:$0xff]
    %v3278 = vld [vmem:[#allocation10 + $0xa24] sm:$0xf]
    %v3279 = vld [vmem:[#allocation10 + $0xa28] sm:$0xff]
    %v3280 = vld [vmem:[#allocation10 + $0xa30] sm:$0xff]
    %v3281 = vld [vmem:[#allocation10 + $0xa38] sm:$0xf]
    %v3282 = vld [vmem:[#allocation10 + $0xa3c] sm:$0xff]
    %v3283 = vld [vmem:[#allocation10 + $0xa44] sm:$0xff]
    %v3284 = vld [vmem:[#allocation10 + $0xa4c] sm:$0xf]
    %v3285 = vld [vmem:[#allocation10 + $0xa50] sm:$0xff]
    %v3286 = vld [vmem:[#allocation10 + $0xa58] sm:$0xff]
    %v3287 = vld [vmem:[#allocation10 + $0xa60] sm:$0xf]
    %v3288 = vld [vmem:[#allocation10 + $0xa64] sm:$0xff]
    %v3289 = vld [vmem:[#allocation10 + $0xa6c] sm:$0xff]
    %v3290 = vld [vmem:[#allocation10 + $0xa74] sm:$0xf]
    %v3291 = vld [vmem:[#allocation10 + $0xa78] sm:$0xff]
    %v3292 = vld [vmem:[#allocation10 + $0xa80] sm:$0xff]
    %v3293 = vld [vmem:[#allocation10 + $0xa88] sm:$0xf]
    %v3294 = vld [vmem:[#allocation10 + $0xa8c] sm:$0xff]
    %v3295 = vld [vmem:[#allocation10 + $0xa94] sm:$0xff]
    %v3296 = vld [vmem:[#allocation10 + $0xa9c] sm:$0xf]
    %v3297 = vld [vmem:[#allocation10 + $0xaa0] sm:$0xff]
    %v3298 = vld [vmem:[#allocation10 + $0xaa8] sm:$0xff]
    %v3299 = vld [vmem:[#allocation10 + $0xab0] sm:$0xf]
    %v3300 = vld [vmem:[#allocation10 + $0xab4] sm:$0xff]
    %v3301 = vld [vmem:[#allocation10 + $0xabc] sm:$0xff]
    %v3302 = vld [vmem:[#allocation10 + $0xac4] sm:$0xf]
    %v3303 = vld [vmem:[#allocation10 + $0xac8] sm:$0xff]
    %v3304 = vld [vmem:[#allocation10 + $0xad0] sm:$0xff]
    %v3305 = vld [vmem:[#allocation10 + $0xad8] sm:$0xf]
    %v3306 = vld [vmem:[#allocation10 + $0xadc] sm:$0xff]
    %v3307 = vld [vmem:[#allocation10 + $0xae4] sm:$0xff]
    %v3308 = vld [vmem:[#allocation10 + $0xaec] sm:$0xf]
    %v3309 = vld [vmem:[#allocation10 + $0xaf0] sm:$0xff]
    %v3310 = vld [vmem:[#allocation10 + $0xaf8] sm:$0xff]
    %v3311 = vld [vmem:[#allocation10 + $0xb00] sm:$0xf]
    %v3312 = vld [vmem:[#allocation10 + $0xb04] sm:$0xff]
    %v3313 = vld [vmem:[#allocation10 + $0xb0c] sm:$0xff]
    %v3314 = vld [vmem:[#allocation10 + $0xb14] sm:$0xf]
    %v3315 = vld [vmem:[#allocation10 + $0xb18] sm:$0xff]
    %v3316 = vld [vmem:[#allocation10 + $0xb20] sm:$0xff]
    %v3317 = vld [vmem:[#allocation10 + $0xb28] sm:$0xf]
    %v3318 = vld [vmem:[#allocation10 + $0xb2c] sm:$0xff]
    %v3319 = vld [vmem:[#allocation10 + $0xb34] sm:$0xff]
    %v3320 = vld [vmem:[#allocation10 + $0xb3c] sm:$0xf]
    %v3321 = vld [vmem:[#allocation10 + $0xb40] sm:$0xff]
    %v3322 = vld [vmem:[#allocation10 + $0xb48] sm:$0xff]
    %v3323 = vld [vmem:[#allocation10 + $0xb50] sm:$0xf]
    %v3324 = vld [vmem:[#allocation10 + $0xb54] sm:$0xff]
    %v3325 = vld [vmem:[#allocation10 + $0xb5c] sm:$0xff]
    %v3326 = vld [vmem:[#allocation10 + $0xb64] sm:$0xf]
    %v3327 = vld [vmem:[#allocation10 + $0xb68] sm:$0xff]
    %v3328 = vld [vmem:[#allocation10 + $0xb70] sm:$0xff]
    %v3329 = vld [vmem:[#allocation10 + $0xb78] sm:$0xf]
    %v3330 = vld [vmem:[#allocation10 + $0xb7c] sm:$0xff]
    %v3331 = vld [vmem:[#allocation10 + $0xb84] sm:$0xff]
    %v3332 = vld [vmem:[#allocation10 + $0xb8c] sm:$0xf]
    %v3333 = vld [vmem:[#allocation10 + $0xb90] sm:$0xff]
    %v3334 = vld [vmem:[#allocation10 + $0xb98] sm:$0xff]
    %v3335 = vld [vmem:[#allocation10 + $0xba0] sm:$0xf]
    %v3336 = vld [vmem:[#allocation10 + $0xba4] sm:$0xff]
    %v3337 = vld [vmem:[#allocation10 + $0xbac] sm:$0xff]
    %v3338 = vld [vmem:[#allocation10 + $0xbb4] sm:$0xf]
    %v3339 = vld [vmem:[#allocation10 + $0xbb8] sm:$0xff]
    %v3340 = vld [vmem:[#allocation10 + $0xbc0] sm:$0xff]
    %v3341 = vld [vmem:[#allocation10 + $0xbc8] sm:$0xf]
    %v3342 = vld [vmem:[#allocation10 + $0xbcc] sm:$0xff]
    %v3343 = vld [vmem:[#allocation10 + $0xbd4] sm:$0xff]
    %v3344 = vld [vmem:[#allocation10 + $0xbdc] sm:$0xf]
    %v3345 = vld [vmem:[#allocation10 + $0xbe0] sm:$0xff]
    %v3346 = vld [vmem:[#allocation10 + $0xbe8] sm:$0xff]
    %v3347 = vld [vmem:[#allocation10 + $0xbf0] sm:$0xf]
    %v3348 = vld [vmem:[#allocation10 + $0xbf4] sm:$0xff]
    %v3349 = vld [vmem:[#allocation10 + $0xbfc] sm:$0xff]
    %v3350 = vld [vmem:[#allocation10 + $0xc04] sm:$0xf]
    %v3351 = vld [vmem:[#allocation10 + $0xc08] sm:$0xff]
    %v3352 = vld [vmem:[#allocation10 + $0xc10] sm:$0xff]
    %v3353 = vld [vmem:[#allocation10 + $0xc18] sm:$0xf]
    %v3354 = vld [vmem:[#allocation10 + $0xc1c] sm:$0xff]
    %v3355 = vld [vmem:[#allocation10 + $0xc24] sm:$0xff]
    %v3356 = vld [vmem:[#allocation10 + $0xc2c] sm:$0xf]
    %v3357 = vld [vmem:[#allocation10 + $0xc30] sm:$0xff]
    %v3358 = vld [vmem:[#allocation10 + $0xc38] sm:$0xff]
    %v3359 = vld [vmem:[#allocation10 + $0xc40] sm:$0xf]
    %v3360 = vld [vmem:[#allocation10 + $0xc44] sm:$0xff]
    %v3361 = vld [vmem:[#allocation10 + $0xc4c] sm:$0xff]
    %v3362 = vld [vmem:[#allocation10 + $0xc54] sm:$0xf]
    %v3363 = vld [vmem:[#allocation10 + $0xc58] sm:$0xff]
    %v3364 = vld [vmem:[#allocation10 + $0xc60] sm:$0xff]
    %v3365 = vld [vmem:[#allocation10 + $0xc68] sm:$0xf]
    %v3366 = vld [vmem:[#allocation10 + $0xc6c] sm:$0xff]
    %v3367 = vld [vmem:[#allocation10 + $0xc74] sm:$0xff]
    %v3368 = vld [vmem:[#allocation10 + $0xc7c] sm:$0xf]
    %v3369 = vld [vmem:[#allocation10 + $0xc80] sm:$0xff]
    %v3370 = vld [vmem:[#allocation10 + $0xc88] sm:$0xff]
    %v3371 = vld [vmem:[#allocation10 + $0xc90] sm:$0xf]
    %v3372 = vld [vmem:[#allocation10 + $0xc94] sm:$0xff]
    %v3373 = vld [vmem:[#allocation10 + $0xc9c] sm:$0xff]
    %v3374 = vld [vmem:[#allocation10 + $0xca4] sm:$0xf]
    %v3375 = vld [vmem:[#allocation10 + $0xca8] sm:$0xff]
    %v3376 = vld [vmem:[#allocation10 + $0xcb0] sm:$0xff]
    %v3377 = vld [vmem:[#allocation10 + $0xcb8] sm:$0xf]
    %v3378 = vld [vmem:[#allocation10 + $0xcbc] sm:$0xff]
    %v3379 = vld [vmem:[#allocation10 + $0xcc4] sm:$0xff]
    %v3380 = vld [vmem:[#allocation10 + $0xccc] sm:$0xf]
    %v3381 = vld [vmem:[#allocation10 + $0xcd0] sm:$0xff]
    %v3382 = vld [vmem:[#allocation10 + $0xcd8] sm:$0xff]
    %v3383 = vld [vmem:[#allocation10 + $0xce0] sm:$0xf]
    %v3384 = vld [vmem:[#allocation10 + $0xce4] sm:$0xff]
    %v3385 = vld [vmem:[#allocation10 + $0xcec] sm:$0xff]
    %v3386 = vld [vmem:[#allocation10 + $0xcf4] sm:$0xf]
    %v3387 = vld [vmem:[#allocation10 + $0xcf8] sm:$0xff]
    %v3388 = vld [vmem:[#allocation10 + $0xd00] sm:$0xff]
    %v3389 = vld [vmem:[#allocation10 + $0xd08] sm:$0xf]
    %v3390 = vld [vmem:[#allocation10 + $0xd0c] sm:$0xff]
    %v3391 = vld [vmem:[#allocation10 + $0xd14] sm:$0xff]
    %v3392 = vld [vmem:[#allocation10 + $0xd1c] sm:$0xf]
    %v3393 = vld [vmem:[#allocation10 + $0xd20] sm:$0xff]
    %v3394 = vld [vmem:[#allocation10 + $0xd28] sm:$0xff]
    %v3395 = vld [vmem:[#allocation10 + $0xd30] sm:$0xf]
    %v3396 = vld [vmem:[#allocation10 + $0xd34] sm:$0xff]
    %v3397 = vld [vmem:[#allocation10 + $0xd3c] sm:$0xff]
    %v3398 = vld [vmem:[#allocation10 + $0xd44] sm:$0xf]
    %v3399 = vld [vmem:[#allocation10 + $0xd48] sm:$0xff]
    %v3400 = vld [vmem:[#allocation10 + $0xd50] sm:$0xff]
    %v3401 = vld [vmem:[#allocation10 + $0xd58] sm:$0xf]
    %v3402 = vld [vmem:[#allocation10 + $0xd5c] sm:$0xff]
    %v3403 = vld [vmem:[#allocation10 + $0xd64] sm:$0xff]
    %v3404 = vld [vmem:[#allocation10 + $0xd6c] sm:$0xf]
    %v3405 = vld [vmem:[#allocation10 + $0xd70] sm:$0xff]
    %v3406 = vld [vmem:[#allocation10 + $0xd78] sm:$0xff]
    %v3407 = vld [vmem:[#allocation10 + $0xd80] sm:$0xf]
    %v3408 = vld [vmem:[#allocation10 + $0xd84] sm:$0xff]
    %v3409 = vld [vmem:[#allocation10 + $0xd8c] sm:$0xff]
    %v3410 = vld [vmem:[#allocation10 + $0xd94] sm:$0xf]
    %v3411 = vld [vmem:[#allocation10 + $0xd98] sm:$0xff]
    %v3412 = vld [vmem:[#allocation10 + $0xda0] sm:$0xff]
    %v3413 = vld [vmem:[#allocation10 + $0xda8] sm:$0xf]
    %v3414 = vld [vmem:[#allocation10 + $0xdac] sm:$0xff]
    %v3415 = vld [vmem:[#allocation10 + $0xdb4] sm:$0xff]
    %v3416 = vld [vmem:[#allocation10 + $0xdbc] sm:$0xf]
    %v3417 = vld [vmem:[#allocation10 + $0xdc0] sm:$0xff]
    %v3418 = vld [vmem:[#allocation10 + $0xdc8] sm:$0xff]
    %v3419 = vld [vmem:[#allocation10 + $0xdd0] sm:$0xf]
    %v3420 = vld [vmem:[#allocation10 + $0xdd4] sm:$0xff]
    %v3421 = vld [vmem:[#allocation10 + $0xddc] sm:$0xff]
    %v3422 = vld [vmem:[#allocation10 + $0xde4] sm:$0xf]
    %v3423 = vld [vmem:[#allocation10 + $0xde8] sm:$0xff]
    %v3424 = vld [vmem:[#allocation10 + $0xdf0] sm:$0xff]
    %v3425 = vld [vmem:[#allocation10 + $0xdf8] sm:$0xf]
    %v3426 = vld [vmem:[#allocation10 + $0xdfc] sm:$0xff]
    %v3427 = vld [vmem:[#allocation10 + $0xe04] sm:$0xff]
    %v3428 = vld [vmem:[#allocation10 + $0xe0c] sm:$0xf]
    %v3429 = vld [vmem:[#allocation10 + $0xe10] sm:$0xff]
    %v3430 = vld [vmem:[#allocation10 + $0xe18] sm:$0xff]
    %v3431 = vld [vmem:[#allocation10 + $0xe20] sm:$0xf]
    %v3432 = vld [vmem:[#allocation10 + $0xe24] sm:$0xff]
    %v3433 = vld [vmem:[#allocation10 + $0xe2c] sm:$0xff]
    %v3434 = vld [vmem:[#allocation10 + $0xe34] sm:$0xf]
    %v3435 = vld [vmem:[#allocation10 + $0xe38] sm:$0xff]
    %v3436 = vld [vmem:[#allocation10 + $0xe40] sm:$0xff]
    %v3437 = vld [vmem:[#allocation10 + $0xe48] sm:$0xf]
    %v3438 = vld [vmem:[#allocation10 + $0xe4c] sm:$0xff]
    %v3439 = vld [vmem:[#allocation10 + $0xe54] sm:$0xff]
    %v3440 = vld [vmem:[#allocation10 + $0xe5c] sm:$0xf]
    %v3441 = vld [vmem:[#allocation10 + $0xe60] sm:$0xff]
    %v3442 = vld [vmem:[#allocation10 + $0xe68] sm:$0xff]
    %v3443 = vld [vmem:[#allocation10 + $0xe70] sm:$0xf]
    %v3444 = vld [vmem:[#allocation10 + $0xe74] sm:$0xff]
    %v3445 = vld [vmem:[#allocation10 + $0xe7c] sm:$0xff]
    %v3446 = vld [vmem:[#allocation10 + $0xe84] sm:$0xf]
    %v3447 = vld [vmem:[#allocation10 + $0xe88] sm:$0xff]
    %v3448 = vld [vmem:[#allocation10 + $0xe90] sm:$0xff]
    %v3449 = vld [vmem:[#allocation10 + $0xe98] sm:$0xf]
    %v3450 = vld [vmem:[#allocation10 + $0xe9c] sm:$0xff]
    %v3451 = vld [vmem:[#allocation10 + $0xea4] sm:$0xff]
    %v3452 = vld [vmem:[#allocation10 + $0xeac] sm:$0xf]
    %v3453 = vld [vmem:[#allocation10 + $0xeb0] sm:$0xff]
    %v3454 = vld [vmem:[#allocation10 + $0xeb8] sm:$0xff]
    %v3455 = vld [vmem:[#allocation10 + $0xec0] sm:$0xf]
    %v3456 = vld [vmem:[#allocation10 + $0xec4] sm:$0xff]
    %v3457 = vld [vmem:[#allocation10 + $0xecc] sm:$0xff]
    %v3458 = vld [vmem:[#allocation10 + $0xed4] sm:$0xf]
    %v3459 = vld [vmem:[#allocation10 + $0xed8] sm:$0xff]
    %v3460 = vld [vmem:[#allocation10 + $0xee0] sm:$0xff]
    %v3461 = vld [vmem:[#allocation10 + $0xee8] sm:$0xf]
    %v3462 = vld [vmem:[#allocation10 + $0xeec] sm:$0xff]
    %v3463 = vld [vmem:[#allocation10 + $0xef4] sm:$0xff]
    %v3464 = vld [vmem:[#allocation10 + $0xefc] sm:$0xf]
    %v3465 = vld [vmem:[#allocation10 + $0xf00] sm:$0xff]
    %v3466 = vld [vmem:[#allocation10 + $0xf08] sm:$0xff]
    %v3467 = vld [vmem:[#allocation10 + $0xf10] sm:$0xf]
    %v3468 = vld [vmem:[#allocation10 + $0xf14] sm:$0xff]
    %v3469 = vld [vmem:[#allocation10 + $0xf1c] sm:$0xff]
    %v3470 = vld [vmem:[#allocation10 + $0xf24] sm:$0xf]
    %v3471 = vld [vmem:[#allocation10 + $0xf28] sm:$0xff]
    %v3472 = vld [vmem:[#allocation10 + $0xf30] sm:$0xff]
    %v3473 = vld [vmem:[#allocation10 + $0xf38] sm:$0xf]
    %v3474 = vld [vmem:[#allocation10 + $0xf3c] sm:$0xff]
    %v3475 = vld [vmem:[#allocation10 + $0xf44] sm:$0xff]
    %v3476 = vld [vmem:[#allocation10 + $0xf4c] sm:$0xf]
    %v3477 = vld [vmem:[#allocation10 + $0xf50] sm:$0xff]
    %v3478 = vld [vmem:[#allocation10 + $0xf58] sm:$0xff]
    %v3479 = vld [vmem:[#allocation10 + $0xf60] sm:$0xf]
    %v3480 = vld [vmem:[#allocation10 + $0xf64] sm:$0xff]
    %v3481 = vld [vmem:[#allocation10 + $0xf6c] sm:$0xff]
    %v3482 = vld [vmem:[#allocation10 + $0xf74] sm:$0xf]
    %v3483 = vld [vmem:[#allocation10 + $0xf78] sm:$0xff]
    %v3484 = vld [vmem:[#allocation10 + $0xf80] sm:$0xff]
    %v3485 = vld [vmem:[#allocation10 + $0xf88] sm:$0xf]
    %v3486 = vld [vmem:[#allocation10 + $0xf8c] sm:$0xff]
    %v3487 = vld [vmem:[#allocation10 + $0xf94] sm:$0xff]
    %v3488 = vld [vmem:[#allocation10 + $0xf9c] sm:$0xf]
    %v3489 = vld [vmem:[#allocation10 + $0xfa0] sm:$0xff]
    %v3490 = vld [vmem:[#allocation10 + $0xfa8] sm:$0xff]
    %v3491 = vld [vmem:[#allocation10 + $0xfb0] sm:$0xf]
    %v3492 = vld [vmem:[#allocation10 + $0xfb4] sm:$0xff]
    %v3493 = vld [vmem:[#allocation10 + $0xfbc] sm:$0xff]
    %v3494 = vld [vmem:[#allocation10 + $0xfc4] sm:$0xf]
    %v3495 = vld [vmem:[#allocation10 + $0xfc8] sm:$0xff]
    %v3496 = vld [vmem:[#allocation10 + $0xfd0] sm:$0xff]
    %v3497 = vld [vmem:[#allocation10 + $0xfd8] sm:$0xf]
    %v3498 = vld [vmem:[#allocation10 + $0xfdc] sm:$0xff]
    %v3499 = vld [vmem:[#allocation10 + $0xfe4] sm:$0xff]
    %v3500 = vld [vmem:[#allocation10 + $0xfec] sm:$0xf]
    %v3501 = vld [vmem:[#allocation10 + $0xff0] sm:$0xff]
    %v3502 = vld [vmem:[#allocation10 + $0xff8] sm:$0xff]
    %v3503 = vld [vmem:[#allocation10 + $0x1000] sm:$0xf]
    %v3504 = vld [vmem:[#allocation10 + $0x1004] sm:$0xff]
    %v3505 = vld [vmem:[#allocation10 + $0x100c] sm:$0xff]
    %v3506 = vld [vmem:[#allocation10 + $0x1014] sm:$0xf]
    %v3507 = vld [vmem:[#allocation10 + $0x1018] sm:$0xff]
    %v3508 = vld [vmem:[#allocation10 + $0x1020] sm:$0xff]
    %v3509 = vld [vmem:[#allocation10 + $0x1028] sm:$0xf]
    %v3510 = vld [vmem:[#allocation10 + $0x102c] sm:$0xff]
    %v3511 = vld [vmem:[#allocation10 + $0x1034] sm:$0xff]
    %v3512 = vld [vmem:[#allocation10 + $0x103c] sm:$0xf]
    %v3513 = vld [vmem:[#allocation10 + $0x1040] sm:$0xff]
    %v3514 = vld [vmem:[#allocation10 + $0x1048] sm:$0xff]
    %v3515 = vld [vmem:[#allocation10 + $0x1050] sm:$0xf]
    %v3516 = vld [vmem:[#allocation10 + $0x1054] sm:$0xff]
    %v3517 = vld [vmem:[#allocation10 + $0x105c] sm:$0xff]
    %v3518 = vld [vmem:[#allocation10 + $0x1064] sm:$0xf]
    %v3519 = vld [vmem:[#allocation10 + $0x1068] sm:$0xff]
    %v3520 = vld [vmem:[#allocation10 + $0x1070] sm:$0xff]
    %v3521 = vld [vmem:[#allocation10 + $0x1078] sm:$0xf]
    %v3522 = vld [vmem:[#allocation10 + $0x107c] sm:$0xff]
    %v3523 = vld [vmem:[#allocation10 + $0x1084] sm:$0xff]
    %v3524 = vld [vmem:[#allocation10 + $0x108c] sm:$0xf]
    %v3525 = vld [vmem:[#allocation10 + $0x1090] sm:$0xff]
    %v3526 = vld [vmem:[#allocation10 + $0x1098] sm:$0xff]
    %v3527 = vld [vmem:[#allocation10 + $0x10a0] sm:$0xf]
    %v3528 = vld [vmem:[#allocation10 + $0x10a4] sm:$0xff]
    %v3529 = vld [vmem:[#allocation10 + $0x10ac] sm:$0xff]
    %v3530 = vld [vmem:[#allocation10 + $0x10b4] sm:$0xf]
    %v3531 = vld [vmem:[#allocation10 + $0x10b8] sm:$0xff]
    %v3532 = vld [vmem:[#allocation10 + $0x10c0] sm:$0xff]
    %v3533 = vld [vmem:[#allocation10 + $0x10c8] sm:$0xf]
    %v3534 = vld [vmem:[#allocation10 + $0x10cc] sm:$0xff]
    %v3535 = vld [vmem:[#allocation10 + $0x10d4] sm:$0xff]
    %v3536 = vld [vmem:[#allocation10 + $0x10dc] sm:$0xf]
    %v3537 = vld [vmem:[#allocation10 + $0x10e0] sm:$0xff]
    %v3538 = vld [vmem:[#allocation10 + $0x10e8] sm:$0xff]
    %v3539 = vld [vmem:[#allocation10 + $0x10f0] sm:$0xf]
    %v3540 = vld [vmem:[#allocation10 + $0x10f4] sm:$0xff]
    %v3541 = vld [vmem:[#allocation10 + $0x10fc] sm:$0xff]
    %v3542 = vld [vmem:[#allocation10 + $0x1104] sm:$0xf]
    %v3543 = vld [vmem:[#allocation10 + $0x1108] sm:$0xff]
    %v3544 = vld [vmem:[#allocation10 + $0x1110] sm:$0xff]
    %v3545 = vld [vmem:[#allocation10 + $0x1118] sm:$0xf]
    %v3546 = vld [vmem:[#allocation10 + $0x111c] sm:$0xff]
    %v3547 = vld [vmem:[#allocation10 + $0x1124] sm:$0xff]
    %v3548 = vld [vmem:[#allocation10 + $0x112c] sm:$0xf]
    %v3549 = vld [vmem:[#allocation10 + $0x1130] sm:$0xff]
    %v3550 = vld [vmem:[#allocation10 + $0x1138] sm:$0xff]
    %v3551 = vld [vmem:[#allocation10 + $0x1140] sm:$0xf]
    %v3552 = vld [vmem:[#allocation10 + $0x1144] sm:$0xff]
    %v3553 = vld [vmem:[#allocation10 + $0x114c] sm:$0xff]
    %v3554 = vld [vmem:[#allocation10 + $0x1154] sm:$0xf]
    %v3555 = vld [vmem:[#allocation10 + $0x1158] sm:$0xff]
    %v3556 = vld [vmem:[#allocation10 + $0x1160] sm:$0xff]
    %v3557 = vld [vmem:[#allocation10 + $0x1168] sm:$0xf]
    %v3558 = vld [vmem:[#allocation10 + $0x116c] sm:$0xff]
    %v3559 = vld [vmem:[#allocation10 + $0x1174] sm:$0xff]
    %v3560 = vld [vmem:[#allocation10 + $0x117c] sm:$0xf]
    %v3561 = vld [vmem:[#allocation11] sm:$0x1f]
    %v3563 = vperm.slane %v3561, 0
    %v3564 = vperm.slane %v3561, 1
    %v3565 = vperm.slane %v3561, 2
    %v3566 = vperm.slane %v3561, 3
    %v3567 = vperm.slane %v3561, 4
    %v4245 = vunpack.c.l.b16 %v2889
    %v4246 = vunpack.c.h.b16 %v2889
    %v4247 = vunpack.c.l.b16 %v2890
    %v4248 = vunpack.c.h.b16 %v2890
    %v4249 = vunpack.c.l.b16 %v2891
    %v4250 = vunpack.c.l.b16 %v2892
    %v4251 = vunpack.c.h.b16 %v2892
    %v4252 = vunpack.c.l.b16 %v2893
    %v4253 = vunpack.c.h.b16 %v2893
    %v4254 = vunpack.c.l.b16 %v2894
    %v4255 = vunpack.c.l.b16 %v2895
    %v4256 = vunpack.c.h.b16 %v2895
    %v4257 = vunpack.c.l.b16 %v2896
    %v4258 = vunpack.c.h.b16 %v2896
    %v4259 = vunpack.c.l.b16 %v2897
    %v4260 = vunpack.c.l.b16 %v2898
    %v4261 = vunpack.c.h.b16 %v2898
    %v4262 = vunpack.c.l.b16 %v2899
    %v4263 = vunpack.c.h.b16 %v2899
    %v4264 = vunpack.c.l.b16 %v2900
    %v4265 = vunpack.c.l.b16 %v2901
    %v4266 = vunpack.c.h.b16 %v2901
    %v4267 = vunpack.c.l.b16 %v2902
    %v4268 = vunpack.c.h.b16 %v2902
    %v4269 = vunpack.c.l.b16 %v2903
    %v4270 = vunpack.c.l.b16 %v2904
    %v4271 = vunpack.c.h.b16 %v2904
    %v4272 = vunpack.c.l.b16 %v2905
    %v4273 = vunpack.c.h.b16 %v2905
    %v4274 = vunpack.c.l.b16 %v2906
    %v4275 = vunpack.c.l.b16 %v2907
    %v4276 = vunpack.c.h.b16 %v2907
    %v4277 = vunpack.c.l.b16 %v2908
    %v4278 = vunpack.c.h.b16 %v2908
    %v4279 = vunpack.c.l.b16 %v2909
    %v4280 = vunpack.c.l.b16 %v2910
    %v4281 = vunpack.c.h.b16 %v2910
    %v4282 = vunpack.c.l.b16 %v2911
    %v4283 = vunpack.c.h.b16 %v2911
    %v4284 = vunpack.c.l.b16 %v2912
    %v4285 = vunpack.c.l.b16 %v2913
    %v4286 = vunpack.c.h.b16 %v2913
    %v4287 = vunpack.c.l.b16 %v2914
    %v4288 = vunpack.c.h.b16 %v2914
    %v4289 = vunpack.c.l.b16 %v2915
    %v4290 = vunpack.c.l.b16 %v2916
    %v4291 = vunpack.c.h.b16 %v2916
    %v4292 = vunpack.c.l.b16 %v2917
    %v4293 = vunpack.c.h.b16 %v2917
    %v4294 = vunpack.c.l.b16 %v2918
    %v4295 = vunpack.c.l.b16 %v2919
    %v4296 = vunpack.c.h.b16 %v2919
    %v4297 = vunpack.c.l.b16 %v2920
    %v4298 = vunpack.c.h.b16 %v2920
    %v4299 = vunpack.c.l.b16 %v2921
    %v4300 = vunpack.c.l.b16 %v2922
    %v4301 = vunpack.c.h.b16 %v2922
    %v4302 = vunpack.c.l.b16 %v2923
    %v4303 = vunpack.c.h.b16 %v2923
    %v4304 = vunpack.c.l.b16 %v2924
    %v4305 = vunpack.c.l.b16 %v2925
    %v4306 = vunpack.c.h.b16 %v2925
    %v4307 = vunpack.c.l.b16 %v2926
    %v4308 = vunpack.c.h.b16 %v2926
    %v4309 = vunpack.c.l.b16 %v2927
    %v4310 = vunpack.c.l.b16 %v2928
    %v4311 = vunpack.c.h.b16 %v2928
    %v4312 = vunpack.c.l.b16 %v2929
    %v4313 = vunpack.c.h.b16 %v2929
    %v4314 = vunpack.c.l.b16 %v2930
    %v4315 = vunpack.c.l.b16 %v2931
    %v4316 = vunpack.c.h.b16 %v2931
    %v4317 = vunpack.c.l.b16 %v2932
    %v4318 = vunpack.c.h.b16 %v2932
    %v4319 = vunpack.c.l.b16 %v2933
    %v4320 = vunpack.c.l.b16 %v2934
    %v4321 = vunpack.c.h.b16 %v2934
    %v4322 = vunpack.c.l.b16 %v2935
    %v4323 = vunpack.c.h.b16 %v2935
    %v4324 = vunpack.c.l.b16 %v2936
    %v4325 = vunpack.c.l.b16 %v2937
    %v4326 = vunpack.c.h.b16 %v2937
    %v4327 = vunpack.c.l.b16 %v2938
    %v4328 = vunpack.c.h.b16 %v2938
    %v4329 = vunpack.c.l.b16 %v2939
    %v4330 = vunpack.c.l.b16 %v2940
    %v4331 = vunpack.c.h.b16 %v2940
    %v4332 = vunpack.c.l.b16 %v2941
    %v4333 = vunpack.c.h.b16 %v2941
    %v4334 = vunpack.c.l.b16 %v2942
    %v4335 = vunpack.c.l.b16 %v2943
    %v4336 = vunpack.c.h.b16 %v2943
    %v4337 = vunpack.c.l.b16 %v2944
    %v4338 = vunpack.c.h.b16 %v2944
    %v4339 = vunpack.c.l.b16 %v2945
    %v4340 = vunpack.c.l.b16 %v2946
    %v4341 = vunpack.c.h.b16 %v2946
    %v4342 = vunpack.c.l.b16 %v2947
    %v4343 = vunpack.c.h.b16 %v2947
    %v4344 = vunpack.c.l.b16 %v2948
    %v4345 = vunpack.c.l.b16 %v2949
    %v4346 = vunpack.c.h.b16 %v2949
    %v4347 = vunpack.c.l.b16 %v2950
    %v4348 = vunpack.c.h.b16 %v2950
    %v4349 = vunpack.c.l.b16 %v2951
    %v4350 = vunpack.c.l.b16 %v2952
    %v4351 = vunpack.c.h.b16 %v2952
    %v4352 = vunpack.c.l.b16 %v2953
    %v4353 = vunpack.c.h.b16 %v2953
    %v4354 = vunpack.c.l.b16 %v2954
    %v4355 = vunpack.c.l.b16 %v2955
    %v4356 = vunpack.c.h.b16 %v2955
    %v4357 = vunpack.c.l.b16 %v2956
    %v4358 = vunpack.c.h.b16 %v2956
    %v4359 = vunpack.c.l.b16 %v2957
    %v4360 = vunpack.c.l.b16 %v2958
    %v4361 = vunpack.c.h.b16 %v2958
    %v4362 = vunpack.c.l.b16 %v2959
    %v4363 = vunpack.c.h.b16 %v2959
    %v4364 = vunpack.c.l.b16 %v2960
    %v4365 = vunpack.c.l.b16 %v2961
    %v4366 = vunpack.c.h.b16 %v2961
    %v4367 = vunpack.c.l.b16 %v2962
    %v4368 = vunpack.c.h.b16 %v2962
    %v4369 = vunpack.c.l.b16 %v2963
    %v4370 = vunpack.c.l.b16 %v2964
    %v4371 = vunpack.c.h.b16 %v2964
    %v4372 = vunpack.c.l.b16 %v2965
    %v4373 = vunpack.c.h.b16 %v2965
    %v4374 = vunpack.c.l.b16 %v2966
    %v4375 = vunpack.c.l.b16 %v2967
    %v4376 = vunpack.c.h.b16 %v2967
    %v4377 = vunpack.c.l.b16 %v2968
    %v4378 = vunpack.c.h.b16 %v2968
    %v4379 = vunpack.c.l.b16 %v2969
    %v4380 = vunpack.c.l.b16 %v2970
    %v4381 = vunpack.c.h.b16 %v2970
    %v4382 = vunpack.c.l.b16 %v2971
    %v4383 = vunpack.c.h.b16 %v2971
    %v4384 = vunpack.c.l.b16 %v2972
    %v4385 = vunpack.c.l.b16 %v2973
    %v4386 = vunpack.c.h.b16 %v2973
    %v4387 = vunpack.c.l.b16 %v2974
    %v4388 = vunpack.c.h.b16 %v2974
    %v4389 = vunpack.c.l.b16 %v2975
    %v4390 = vunpack.c.l.b16 %v2976
    %v4391 = vunpack.c.h.b16 %v2976
    %v4392 = vunpack.c.l.b16 %v2977
    %v4393 = vunpack.c.h.b16 %v2977
    %v4394 = vunpack.c.l.b16 %v2978
    %v4395 = vunpack.c.l.b16 %v2979
    %v4396 = vunpack.c.h.b16 %v2979
    %v4397 = vunpack.c.l.b16 %v2980
    %v4398 = vunpack.c.h.b16 %v2980
    %v4399 = vunpack.c.l.b16 %v2981
    %v4400 = vunpack.c.l.b16 %v2982
    %v4401 = vunpack.c.h.b16 %v2982
    %v4402 = vunpack.c.l.b16 %v2983
    %v4403 = vunpack.c.h.b16 %v2983
    %v4404 = vunpack.c.l.b16 %v2984
    %v4405 = vunpack.c.l.b16 %v2985
    %v4406 = vunpack.c.h.b16 %v2985
    %v4407 = vunpack.c.l.b16 %v2986
    %v4408 = vunpack.c.h.b16 %v2986
    %v4409 = vunpack.c.l.b16 %v2987
    %v4410 = vunpack.c.l.b16 %v2988
    %v4411 = vunpack.c.h.b16 %v2988
    %v4412 = vunpack.c.l.b16 %v2989
    %v4413 = vunpack.c.h.b16 %v2989
    %v4414 = vunpack.c.l.b16 %v2990
    %v4415 = vunpack.c.l.b16 %v2991
    %v4416 = vunpack.c.h.b16 %v2991
    %v4417 = vunpack.c.l.b16 %v2992
    %v4418 = vunpack.c.h.b16 %v2992
    %v4419 = vunpack.c.l.b16 %v2993
    %v4420 = vunpack.c.l.b16 %v2994
    %v4421 = vunpack.c.h.b16 %v2994
    %v4422 = vunpack.c.l.b16 %v2995
    %v4423 = vunpack.c.h.b16 %v2995
    %v4424 = vunpack.c.l.b16 %v2996
    %v4425 = vunpack.c.l.b16 %v2997
    %v4426 = vunpack.c.h.b16 %v2997
    %v4427 = vunpack.c.l.b16 %v2998
    %v4428 = vunpack.c.h.b16 %v2998
    %v4429 = vunpack.c.l.b16 %v2999
    %v4430 = vunpack.c.l.b16 %v3000
    %v4431 = vunpack.c.h.b16 %v3000
    %v4432 = vunpack.c.l.b16 %v3001
    %v4433 = vunpack.c.h.b16 %v3001
    %v4434 = vunpack.c.l.b16 %v3002
    %v4435 = vunpack.c.l.b16 %v3003
    %v4436 = vunpack.c.h.b16 %v3003
    %v4437 = vunpack.c.l.b16 %v3004
    %v4438 = vunpack.c.h.b16 %v3004
    %v4439 = vunpack.c.l.b16 %v3005
    %v4440 = vunpack.c.l.b16 %v3006
    %v4441 = vunpack.c.h.b16 %v3006
    %v4442 = vunpack.c.l.b16 %v3007
    %v4443 = vunpack.c.h.b16 %v3007
    %v4444 = vunpack.c.l.b16 %v3008
    %v4445 = vunpack.c.l.b16 %v3009
    %v4446 = vunpack.c.h.b16 %v3009
    %v4447 = vunpack.c.l.b16 %v3010
    %v4448 = vunpack.c.h.b16 %v3010
    %v4449 = vunpack.c.l.b16 %v3011
    %v4450 = vunpack.c.l.b16 %v3012
    %v4451 = vunpack.c.h.b16 %v3012
    %v4452 = vunpack.c.l.b16 %v3013
    %v4453 = vunpack.c.h.b16 %v3013
    %v4454 = vunpack.c.l.b16 %v3014
    %v4455 = vunpack.c.l.b16 %v3015
    %v4456 = vunpack.c.h.b16 %v3015
    %v4457 = vunpack.c.l.b16 %v3016
    %v4458 = vunpack.c.h.b16 %v3016
    %v4459 = vunpack.c.l.b16 %v3017
    %v4460 = vunpack.c.l.b16 %v3018
    %v4461 = vunpack.c.h.b16 %v3018
    %v4462 = vunpack.c.l.b16 %v3019
    %v4463 = vunpack.c.h.b16 %v3019
    %v4464 = vunpack.c.l.b16 %v3020
    %v4465 = vunpack.c.l.b16 %v3021
    %v4466 = vunpack.c.h.b16 %v3021
    %v4467 = vunpack.c.l.b16 %v3022
    %v4468 = vunpack.c.h.b16 %v3022
    %v4469 = vunpack.c.l.b16 %v3023
    %v4470 = vunpack.c.l.b16 %v3024
    %v4471 = vunpack.c.h.b16 %v3024
    %v4472 = vunpack.c.l.b16 %v3025
    %v4473 = vunpack.c.h.b16 %v3025
    %v4474 = vunpack.c.l.b16 %v3026
    %v4475 = vunpack.c.l.b16 %v3027
    %v4476 = vunpack.c.h.b16 %v3027
    %v4477 = vunpack.c.l.b16 %v3028
    %v4478 = vunpack.c.h.b16 %v3028
    %v4479 = vunpack.c.l.b16 %v3029
    %v4480 = vunpack.c.l.b16 %v3030
    %v4481 = vunpack.c.h.b16 %v3030
    %v4482 = vunpack.c.l.b16 %v3031
    %v4483 = vunpack.c.h.b16 %v3031
    %v4484 = vunpack.c.l.b16 %v3032
    %v4485 = vunpack.c.l.b16 %v3033
    %v4486 = vunpack.c.h.b16 %v3033
    %v4487 = vunpack.c.l.b16 %v3034
    %v4488 = vunpack.c.h.b16 %v3034
    %v4489 = vunpack.c.l.b16 %v3035
    %v4490 = vunpack.c.l.b16 %v3036
    %v4491 = vunpack.c.h.b16 %v3036
    %v4492 = vunpack.c.l.b16 %v3037
    %v4493 = vunpack.c.h.b16 %v3037
    %v4494 = vunpack.c.l.b16 %v3038
    %v4495 = vunpack.c.l.b16 %v3039
    %v4496 = vunpack.c.h.b16 %v3039
    %v4497 = vunpack.c.l.b16 %v3040
    %v4498 = vunpack.c.h.b16 %v3040
    %v4499 = vunpack.c.l.b16 %v3041
    %v4500 = vunpack.c.l.b16 %v3042
    %v4501 = vunpack.c.h.b16 %v3042
    %v4502 = vunpack.c.l.b16 %v3043
    %v4503 = vunpack.c.h.b16 %v3043
    %v4504 = vunpack.c.l.b16 %v3044
    %v4505 = vunpack.c.l.b16 %v3045
    %v4506 = vunpack.c.h.b16 %v3045
    %v4507 = vunpack.c.l.b16 %v3046
    %v4508 = vunpack.c.h.b16 %v3046
    %v4509 = vunpack.c.l.b16 %v3047
    %v4510 = vunpack.c.l.b16 %v3048
    %v4511 = vunpack.c.h.b16 %v3048
    %v4512 = vunpack.c.l.b16 %v3049
    %v4513 = vunpack.c.h.b16 %v3049
    %v4514 = vunpack.c.l.b16 %v3050
    %v4515 = vunpack.c.l.b16 %v3051
    %v4516 = vunpack.c.h.b16 %v3051
    %v4517 = vunpack.c.l.b16 %v3052
    %v4518 = vunpack.c.h.b16 %v3052
    %v4519 = vunpack.c.l.b16 %v3053
    %v4520 = vunpack.c.l.b16 %v3054
    %v4521 = vunpack.c.h.b16 %v3054
    %v4522 = vunpack.c.l.b16 %v3055
    %v4523 = vunpack.c.h.b16 %v3055
    %v4524 = vunpack.c.l.b16 %v3056
    %v4525 = vunpack.c.l.b16 %v3057
    %v4526 = vunpack.c.h.b16 %v3057
    %v4527 = vunpack.c.l.b16 %v3058
    %v4528 = vunpack.c.h.b16 %v3058
    %v4529 = vunpack.c.l.b16 %v3059
    %v4530 = vunpack.c.l.b16 %v3060
    %v4531 = vunpack.c.h.b16 %v3060
    %v4532 = vunpack.c.l.b16 %v3061
    %v4533 = vunpack.c.h.b16 %v3061
    %v4534 = vunpack.c.l.b16 %v3062
    %v4535 = vunpack.c.l.b16 %v3063
    %v4536 = vunpack.c.h.b16 %v3063
    %v4537 = vunpack.c.l.b16 %v3064
    %v4538 = vunpack.c.h.b16 %v3064
    %v4539 = vunpack.c.l.b16 %v3065
    %v4540 = vunpack.c.l.b16 %v3066
    %v4541 = vunpack.c.h.b16 %v3066
    %v4542 = vunpack.c.l.b16 %v3067
    %v4543 = vunpack.c.h.b16 %v3067
    %v4544 = vunpack.c.l.b16 %v3068
    %v4545 = vunpack.c.l.b16 %v3069
    %v4546 = vunpack.c.h.b16 %v3069
    %v4547 = vunpack.c.l.b16 %v3070
    %v4548 = vunpack.c.h.b16 %v3070
    %v4549 = vunpack.c.l.b16 %v3071
    %v4550 = vunpack.c.l.b16 %v3072
    %v4551 = vunpack.c.h.b16 %v3072
    %v4552 = vunpack.c.l.b16 %v3073
    %v4553 = vunpack.c.h.b16 %v3073
    %v4554 = vunpack.c.l.b16 %v3074
    %v4555 = vunpack.c.l.b16 %v3075
    %v4556 = vunpack.c.h.b16 %v3075
    %v4557 = vunpack.c.l.b16 %v3076
    %v4558 = vunpack.c.h.b16 %v3076
    %v4559 = vunpack.c.l.b16 %v3077
    %v4560 = vunpack.c.l.b16 %v3078
    %v4561 = vunpack.c.h.b16 %v3078
    %v4562 = vunpack.c.l.b16 %v3079
    %v4563 = vunpack.c.h.b16 %v3079
    %v4564 = vunpack.c.l.b16 %v3080
    %v4565 = vunpack.c.l.b16 %v3081
    %v4566 = vunpack.c.h.b16 %v3081
    %v4567 = vunpack.c.l.b16 %v3082
    %v4568 = vunpack.c.h.b16 %v3082
    %v4569 = vunpack.c.l.b16 %v3083
    %v4570 = vunpack.c.l.b16 %v3084
    %v4571 = vunpack.c.h.b16 %v3084
    %v4572 = vunpack.c.l.b16 %v3085
    %v4573 = vunpack.c.h.b16 %v3085
    %v4574 = vunpack.c.l.b16 %v3086
    %v4575 = vunpack.c.l.b16 %v3087
    %v4576 = vunpack.c.h.b16 %v3087
    %v4577 = vunpack.c.l.b16 %v3088
    %v4578 = vunpack.c.h.b16 %v3088
    %v4579 = vunpack.c.l.b16 %v3089
    %v4580 = vunpack.c.l.b16 %v3090
    %v4581 = vunpack.c.h.b16 %v3090
    %v4582 = vunpack.c.l.b16 %v3091
    %v4583 = vunpack.c.h.b16 %v3091
    %v4584 = vunpack.c.l.b16 %v3092
    %v4585 = vunpack.c.l.b16 %v3093
    %v4586 = vunpack.c.h.b16 %v3093
    %v4587 = vunpack.c.l.b16 %v3094
    %v4588 = vunpack.c.h.b16 %v3094
    %v4589 = vunpack.c.l.b16 %v3095
    %v4590 = vunpack.c.l.b16 %v3096
    %v4591 = vunpack.c.h.b16 %v3096
    %v4592 = vunpack.c.l.b16 %v3097
    %v4593 = vunpack.c.h.b16 %v3097
    %v4594 = vunpack.c.l.b16 %v3098
    %v4595 = vunpack.c.l.b16 %v3099
    %v4596 = vunpack.c.h.b16 %v3099
    %v4597 = vunpack.c.l.b16 %v3100
    %v4598 = vunpack.c.h.b16 %v3100
    %v4599 = vunpack.c.l.b16 %v3101
    %v4600 = vunpack.c.l.b16 %v3102
    %v4601 = vunpack.c.h.b16 %v3102
    %v4602 = vunpack.c.l.b16 %v3103
    %v4603 = vunpack.c.h.b16 %v3103
    %v4604 = vunpack.c.l.b16 %v3104
    %v4605 = vunpack.c.l.b16 %v3105
    %v4606 = vunpack.c.h.b16 %v3105
    %v4607 = vunpack.c.l.b16 %v3106
    %v4608 = vunpack.c.h.b16 %v3106
    %v4609 = vunpack.c.l.b16 %v3107
    %v4610 = vunpack.c.l.b16 %v3108
    %v4611 = vunpack.c.h.b16 %v3108
    %v4612 = vunpack.c.l.b16 %v3109
    %v4613 = vunpack.c.h.b16 %v3109
    %v4614 = vunpack.c.l.b16 %v3110
    %v4615 = vunpack.c.l.b16 %v3111
    %v4616 = vunpack.c.h.b16 %v3111
    %v4617 = vunpack.c.l.b16 %v3112
    %v4618 = vunpack.c.h.b16 %v3112
    %v4619 = vunpack.c.l.b16 %v3113
    %v4620 = vunpack.c.l.b16 %v3114
    %v4621 = vunpack.c.h.b16 %v3114
    %v4622 = vunpack.c.l.b16 %v3115
    %v4623 = vunpack.c.h.b16 %v3115
    %v4624 = vunpack.c.l.b16 %v3116
    %v4625 = vunpack.c.l.b16 %v3117
    %v4626 = vunpack.c.h.b16 %v3117
    %v4627 = vunpack.c.l.b16 %v3118
    %v4628 = vunpack.c.h.b16 %v3118
    %v4629 = vunpack.c.l.b16 %v3119
    %v4630 = vunpack.c.l.b16 %v3120
    %v4631 = vunpack.c.h.b16 %v3120
    %v4632 = vunpack.c.l.b16 %v3121
    %v4633 = vunpack.c.h.b16 %v3121
    %v4634 = vunpack.c.l.b16 %v3122
    %v4635 = vunpack.c.l.b16 %v3123
    %v4636 = vunpack.c.h.b16 %v3123
    %v4637 = vunpack.c.l.b16 %v3124
    %v4638 = vunpack.c.h.b16 %v3124
    %v4639 = vunpack.c.l.b16 %v3125
    %v4640 = vunpack.c.l.b16 %v3126
    %v4641 = vunpack.c.h.b16 %v3126
    %v4642 = vunpack.c.l.b16 %v3127
    %v4643 = vunpack.c.h.b16 %v3127
    %v4644 = vunpack.c.l.b16 %v3128
    %v4645 = vunpack.c.l.b16 %v3129
    %v4646 = vunpack.c.h.b16 %v3129
    %v4647 = vunpack.c.l.b16 %v3130
    %v4648 = vunpack.c.h.b16 %v3130
    %v4649 = vunpack.c.l.b16 %v3131
    %v4650 = vunpack.c.l.b16 %v3132
    %v4651 = vunpack.c.h.b16 %v3132
    %v4652 = vunpack.c.l.b16 %v3133
    %v4653 = vunpack.c.h.b16 %v3133
    %v4654 = vunpack.c.l.b16 %v3134
    %v4655 = vunpack.c.l.b16 %v3135
    %v4656 = vunpack.c.h.b16 %v3135
    %v4657 = vunpack.c.l.b16 %v3136
    %v4658 = vunpack.c.h.b16 %v3136
    %v4659 = vunpack.c.l.b16 %v3137
    %v4660 = vunpack.c.l.b16 %v3138
    %v4661 = vunpack.c.h.b16 %v3138
    %v4662 = vunpack.c.l.b16 %v3139
    %v4663 = vunpack.c.h.b16 %v3139
    %v4664 = vunpack.c.l.b16 %v3140
    %v4665 = vunpack.c.l.b16 %v3141
    %v4666 = vunpack.c.h.b16 %v3141
    %v4667 = vunpack.c.l.b16 %v3142
    %v4668 = vunpack.c.h.b16 %v3142
    %v4669 = vunpack.c.l.b16 %v3143
    %v4670 = vunpack.c.l.b16 %v3144
    %v4671 = vunpack.c.h.b16 %v3144
    %v4672 = vunpack.c.l.b16 %v3145
    %v4673 = vunpack.c.h.b16 %v3145
    %v4674 = vunpack.c.l.b16 %v3146
    %v4675 = vunpack.c.l.b16 %v3147
    %v4676 = vunpack.c.h.b16 %v3147
    %v4677 = vunpack.c.l.b16 %v3148
    %v4678 = vunpack.c.h.b16 %v3148
    %v4679 = vunpack.c.l.b16 %v3149
    %v4680 = vunpack.c.l.b16 %v3150
    %v4681 = vunpack.c.h.b16 %v3150
    %v4682 = vunpack.c.l.b16 %v3151
    %v4683 = vunpack.c.h.b16 %v3151
    %v4684 = vunpack.c.l.b16 %v3152
    %v4685 = vunpack.c.l.b16 %v3153
    %v4686 = vunpack.c.h.b16 %v3153
    %v4687 = vunpack.c.l.b16 %v3154
    %v4688 = vunpack.c.h.b16 %v3154
    %v4689 = vunpack.c.l.b16 %v3155
    %v4690 = vunpack.c.l.b16 %v3156
    %v4691 = vunpack.c.h.b16 %v3156
    %v4692 = vunpack.c.l.b16 %v3157
    %v4693 = vunpack.c.h.b16 %v3157
    %v4694 = vunpack.c.l.b16 %v3158
    %v4695 = vunpack.c.l.b16 %v3159
    %v4696 = vunpack.c.h.b16 %v3159
    %v4697 = vunpack.c.l.b16 %v3160
    %v4698 = vunpack.c.h.b16 %v3160
    %v4699 = vunpack.c.l.b16 %v3161
    %v4700 = vunpack.c.l.b16 %v3162
    %v4701 = vunpack.c.h.b16 %v3162
    %v4702 = vunpack.c.l.b16 %v3163
    %v4703 = vunpack.c.h.b16 %v3163
    %v4704 = vunpack.c.l.b16 %v3164
    %v4705 = vunpack.c.l.b16 %v3165
    %v4706 = vunpack.c.h.b16 %v3165
    %v4707 = vunpack.c.l.b16 %v3166
    %v4708 = vunpack.c.h.b16 %v3166
    %v4709 = vunpack.c.l.b16 %v3167
    %v4710 = vunpack.c.l.b16 %v3168
    %v4711 = vunpack.c.h.b16 %v3168
    %v4712 = vunpack.c.l.b16 %v3169
    %v4713 = vunpack.c.h.b16 %v3169
    %v4714 = vunpack.c.l.b16 %v3170
    %v4715 = vunpack.c.l.b16 %v3171
    %v4716 = vunpack.c.h.b16 %v3171
    %v4717 = vunpack.c.l.b16 %v3172
    %v4718 = vunpack.c.h.b16 %v3172
    %v4719 = vunpack.c.l.b16 %v3173
    %v4720 = vunpack.c.l.b16 %v3174
    %v4721 = vunpack.c.h.b16 %v3174
    %v4722 = vunpack.c.l.b16 %v3175
    %v4723 = vunpack.c.h.b16 %v3175
    %v4724 = vunpack.c.l.b16 %v3176
    %v4725 = vunpack.c.l.b16 %v3177
    %v4726 = vunpack.c.h.b16 %v3177
    %v4727 = vunpack.c.l.b16 %v3178
    %v4728 = vunpack.c.h.b16 %v3178
    %v4729 = vunpack.c.l.b16 %v3179
    %v4730 = vunpack.c.l.b16 %v3180
    %v4731 = vunpack.c.h.b16 %v3180
    %v4732 = vunpack.c.l.b16 %v3181
    %v4733 = vunpack.c.h.b16 %v3181
    %v4734 = vunpack.c.l.b16 %v3182
    %v4735 = vunpack.c.l.b16 %v3183
    %v4736 = vunpack.c.h.b16 %v3183
    %v4737 = vunpack.c.l.b16 %v3184
    %v4738 = vunpack.c.h.b16 %v3184
    %v4739 = vunpack.c.l.b16 %v3185
    %v4740 = vunpack.c.l.b16 %v3186
    %v4741 = vunpack.c.h.b16 %v3186
    %v4742 = vunpack.c.l.b16 %v3187
    %v4743 = vunpack.c.h.b16 %v3187
    %v4744 = vunpack.c.l.b16 %v3188
    %v4745 = vunpack.c.l.b16 %v3189
    %v4746 = vunpack.c.h.b16 %v3189
    %v4747 = vunpack.c.l.b16 %v3190
    %v4748 = vunpack.c.h.b16 %v3190
    %v4749 = vunpack.c.l.b16 %v3191
    %v4750 = vunpack.c.l.b16 %v3192
    %v4751 = vunpack.c.h.b16 %v3192
    %v4752 = vunpack.c.l.b16 %v3193
    %v4753 = vunpack.c.h.b16 %v3193
    %v4754 = vunpack.c.l.b16 %v3194
    %v4755 = vunpack.c.l.b16 %v3195
    %v4756 = vunpack.c.h.b16 %v3195
    %v4757 = vunpack.c.l.b16 %v3196
    %v4758 = vunpack.c.h.b16 %v3196
    %v4759 = vunpack.c.l.b16 %v3197
    %v4760 = vunpack.c.l.b16 %v3198
    %v4761 = vunpack.c.h.b16 %v3198
    %v4762 = vunpack.c.l.b16 %v3199
    %v4763 = vunpack.c.h.b16 %v3199
    %v4764 = vunpack.c.l.b16 %v3200
    %v4765 = vunpack.c.l.b16 %v3201
    %v4766 = vunpack.c.h.b16 %v3201
    %v4767 = vunpack.c.l.b16 %v3202
    %v4768 = vunpack.c.h.b16 %v3202
    %v4769 = vunpack.c.l.b16 %v3203
    %v4770 = vunpack.c.l.b16 %v3204
    %v4771 = vunpack.c.h.b16 %v3204
    %v4772 = vunpack.c.l.b16 %v3205
    %v4773 = vunpack.c.h.b16 %v3205
    %v4774 = vunpack.c.l.b16 %v3206
    %v4775 = vunpack.c.l.b16 %v3207
    %v4776 = vunpack.c.h.b16 %v3207
    %v4777 = vunpack.c.l.b16 %v3208
    %v4778 = vunpack.c.h.b16 %v3208
    %v4779 = vunpack.c.l.b16 %v3209
    %v4780 = vunpack.c.l.b16 %v3210
    %v4781 = vunpack.c.h.b16 %v3210
    %v4782 = vunpack.c.l.b16 %v3211
    %v4783 = vunpack.c.h.b16 %v3211
    %v4784 = vunpack.c.l.b16 %v3212
    %v4785 = vunpack.c.l.b16 %v3213
    %v4786 = vunpack.c.h.b16 %v3213
    %v4787 = vunpack.c.l.b16 %v3214
    %v4788 = vunpack.c.h.b16 %v3214
    %v4789 = vunpack.c.l.b16 %v3215
    %v4790 = vunpack.c.l.b16 %v3216
    %v4791 = vunpack.c.h.b16 %v3216
    %v4792 = vunpack.c.l.b16 %v3217
    %v4793 = vunpack.c.h.b16 %v3217
    %v4794 = vunpack.c.l.b16 %v3218
    %v4795 = vunpack.c.l.b16 %v3219
    %v4796 = vunpack.c.h.b16 %v3219
    %v4797 = vunpack.c.l.b16 %v3220
    %v4798 = vunpack.c.h.b16 %v3220
    %v4799 = vunpack.c.l.b16 %v3221
    %v4800 = vunpack.c.l.b16 %v3222
    %v4801 = vunpack.c.h.b16 %v3222
    %v4802 = vunpack.c.l.b16 %v3223
    %v4803 = vunpack.c.h.b16 %v3223
    %v4804 = vunpack.c.l.b16 %v3224
    %v4805 = vunpack.c.l.b16 %v3225
    %v4806 = vunpack.c.h.b16 %v3225
    %v4807 = vunpack.c.l.b16 %v3226
    %v4808 = vunpack.c.h.b16 %v3226
    %v4809 = vunpack.c.l.b16 %v3227
    %v4810 = vunpack.c.l.b16 %v3228
    %v4811 = vunpack.c.h.b16 %v3228
    %v4812 = vunpack.c.l.b16 %v3229
    %v4813 = vunpack.c.h.b16 %v3229
    %v4814 = vunpack.c.l.b16 %v3230
    %v4815 = vunpack.c.l.b16 %v3231
    %v4816 = vunpack.c.h.b16 %v3231
    %v4817 = vunpack.c.l.b16 %v3232
    %v4818 = vunpack.c.h.b16 %v3232
    %v4819 = vunpack.c.l.b16 %v3233
    %v4820 = vunpack.c.l.b16 %v3234
    %v4821 = vunpack.c.h.b16 %v3234
    %v4822 = vunpack.c.l.b16 %v3235
    %v4823 = vunpack.c.h.b16 %v3235
    %v4824 = vunpack.c.l.b16 %v3236
    %v4825 = vunpack.c.l.b16 %v3237
    %v4826 = vunpack.c.h.b16 %v3237
    %v4827 = vunpack.c.l.b16 %v3238
    %v4828 = vunpack.c.h.b16 %v3238
    %v4829 = vunpack.c.l.b16 %v3239
    %v4830 = vunpack.c.l.b16 %v3240
    %v4831 = vunpack.c.h.b16 %v3240
    %v4832 = vunpack.c.l.b16 %v3241
    %v4833 = vunpack.c.h.b16 %v3241
    %v4834 = vunpack.c.l.b16 %v3242
    %v4835 = vunpack.c.l.b16 %v3243
    %v4836 = vunpack.c.h.b16 %v3243
    %v4837 = vunpack.c.l.b16 %v3244
    %v4838 = vunpack.c.h.b16 %v3244
    %v4839 = vunpack.c.l.b16 %v3245
    %v4840 = vunpack.c.l.b16 %v3246
    %v4841 = vunpack.c.h.b16 %v3246
    %v4842 = vunpack.c.l.b16 %v3247
    %v4843 = vunpack.c.h.b16 %v3247
    %v4844 = vunpack.c.l.b16 %v3248
    %v4845 = vunpack.c.l.b16 %v3249
    %v4846 = vunpack.c.h.b16 %v3249
    %v4847 = vunpack.c.l.b16 %v3250
    %v4848 = vunpack.c.h.b16 %v3250
    %v4849 = vunpack.c.l.b16 %v3251
    %v4850 = vunpack.c.l.b16 %v3252
    %v4851 = vunpack.c.h.b16 %v3252
    %v4852 = vunpack.c.l.b16 %v3253
    %v4853 = vunpack.c.h.b16 %v3253
    %v4854 = vunpack.c.l.b16 %v3254
    %v4855 = vunpack.c.l.b16 %v3255
    %v4856 = vunpack.c.h.b16 %v3255
    %v4857 = vunpack.c.l.b16 %v3256
    %v4858 = vunpack.c.h.b16 %v3256
    %v4859 = vunpack.c.l.b16 %v3257
    %v4860 = vunpack.c.l.b16 %v3258
    %v4861 = vunpack.c.h.b16 %v3258
    %v4862 = vunpack.c.l.b16 %v3259
    %v4863 = vunpack.c.h.b16 %v3259
    %v4864 = vunpack.c.l.b16 %v3260
    %v4865 = vunpack.c.l.b16 %v3261
    %v4866 = vunpack.c.h.b16 %v3261
    %v4867 = vunpack.c.l.b16 %v3262
    %v4868 = vunpack.c.h.b16 %v3262
    %v4869 = vunpack.c.l.b16 %v3263
    %v4870 = vunpack.c.l.b16 %v3264
    %v4871 = vunpack.c.h.b16 %v3264
    %v4872 = vunpack.c.l.b16 %v3265
    %v4873 = vunpack.c.h.b16 %v3265
    %v4874 = vunpack.c.l.b16 %v3266
    %v4875 = vunpack.c.l.b16 %v3267
    %v4876 = vunpack.c.h.b16 %v3267
    %v4877 = vunpack.c.l.b16 %v3268
    %v4878 = vunpack.c.h.b16 %v3268
    %v4879 = vunpack.c.l.b16 %v3269
    %v4880 = vunpack.c.l.b16 %v3270
    %v4881 = vunpack.c.h.b16 %v3270
    %v4882 = vunpack.c.l.b16 %v3271
    %v4883 = vunpack.c.h.b16 %v3271
    %v4884 = vunpack.c.l.b16 %v3272
    %v4885 = vunpack.c.l.b16 %v3273
    %v4886 = vunpack.c.h.b16 %v3273
    %v4887 = vunpack.c.l.b16 %v3274
    %v4888 = vunpack.c.h.b16 %v3274
    %v4889 = vunpack.c.l.b16 %v3275
    %v4890 = vunpack.c.l.b16 %v3276
    %v4891 = vunpack.c.h.b16 %v3276
    %v4892 = vunpack.c.l.b16 %v3277
    %v4893 = vunpack.c.h.b16 %v3277
    %v4894 = vunpack.c.l.b16 %v3278
    %v4895 = vunpack.c.l.b16 %v3279
    %v4896 = vunpack.c.h.b16 %v3279
    %v4897 = vunpack.c.l.b16 %v3280
    %v4898 = vunpack.c.h.b16 %v3280
    %v4899 = vunpack.c.l.b16 %v3281
    %v4900 = vunpack.c.l.b16 %v3282
    %v4901 = vunpack.c.h.b16 %v3282
    %v4902 = vunpack.c.l.b16 %v3283
    %v4903 = vunpack.c.h.b16 %v3283
    %v4904 = vunpack.c.l.b16 %v3284
    %v4905 = vunpack.c.l.b16 %v3285
    %v4906 = vunpack.c.h.b16 %v3285
    %v4907 = vunpack.c.l.b16 %v3286
    %v4908 = vunpack.c.h.b16 %v3286
    %v4909 = vunpack.c.l.b16 %v3287
    %v4910 = vunpack.c.l.b16 %v3288
    %v4911 = vunpack.c.h.b16 %v3288
    %v4912 = vunpack.c.l.b16 %v3289
    %v4913 = vunpack.c.h.b16 %v3289
    %v4914 = vunpack.c.l.b16 %v3290
    %v4915 = vunpack.c.l.b16 %v3291
    %v4916 = vunpack.c.h.b16 %v3291
    %v4917 = vunpack.c.l.b16 %v3292
    %v4918 = vunpack.c.h.b16 %v3292
    %v4919 = vunpack.c.l.b16 %v3293
    %v4920 = vunpack.c.l.b16 %v3294
    %v4921 = vunpack.c.h.b16 %v3294
    %v4922 = vunpack.c.l.b16 %v3295
    %v4923 = vunpack.c.h.b16 %v3295
    %v4924 = vunpack.c.l.b16 %v3296
    %v4925 = vunpack.c.l.b16 %v3297
    %v4926 = vunpack.c.h.b16 %v3297
    %v4927 = vunpack.c.l.b16 %v3298
    %v4928 = vunpack.c.h.b16 %v3298
    %v4929 = vunpack.c.l.b16 %v3299
    %v4930 = vunpack.c.l.b16 %v3300
    %v4931 = vunpack.c.h.b16 %v3300
    %v4932 = vunpack.c.l.b16 %v3301
    %v4933 = vunpack.c.h.b16 %v3301
    %v4934 = vunpack.c.l.b16 %v3302
    %v4935 = vunpack.c.l.b16 %v3303
    %v4936 = vunpack.c.h.b16 %v3303
    %v4937 = vunpack.c.l.b16 %v3304
    %v4938 = vunpack.c.h.b16 %v3304
    %v4939 = vunpack.c.l.b16 %v3305
    %v4940 = vunpack.c.l.b16 %v3306
    %v4941 = vunpack.c.h.b16 %v3306
    %v4942 = vunpack.c.l.b16 %v3307
    %v4943 = vunpack.c.h.b16 %v3307
    %v4944 = vunpack.c.l.b16 %v3308
    %v4945 = vunpack.c.l.b16 %v3309
    %v4946 = vunpack.c.h.b16 %v3309
    %v4947 = vunpack.c.l.b16 %v3310
    %v4948 = vunpack.c.h.b16 %v3310
    %v4949 = vunpack.c.l.b16 %v3311
    %v4950 = vunpack.c.l.b16 %v3312
    %v4951 = vunpack.c.h.b16 %v3312
    %v4952 = vunpack.c.l.b16 %v3313
    %v4953 = vunpack.c.h.b16 %v3313
    %v4954 = vunpack.c.l.b16 %v3314
    %v4955 = vunpack.c.l.b16 %v3315
    %v4956 = vunpack.c.h.b16 %v3315
    %v4957 = vunpack.c.l.b16 %v3316
    %v4958 = vunpack.c.h.b16 %v3316
    %v4959 = vunpack.c.l.b16 %v3317
    %v4960 = vunpack.c.l.b16 %v3318
    %v4961 = vunpack.c.h.b16 %v3318
    %v4962 = vunpack.c.l.b16 %v3319
    %v4963 = vunpack.c.h.b16 %v3319
    %v4964 = vunpack.c.l.b16 %v3320
    %v4965 = vunpack.c.l.b16 %v3321
    %v4966 = vunpack.c.h.b16 %v3321
    %v4967 = vunpack.c.l.b16 %v3322
    %v4968 = vunpack.c.h.b16 %v3322
    %v4969 = vunpack.c.l.b16 %v3323
    %v4970 = vunpack.c.l.b16 %v3324
    %v4971 = vunpack.c.h.b16 %v3324
    %v4972 = vunpack.c.l.b16 %v3325
    %v4973 = vunpack.c.h.b16 %v3325
    %v4974 = vunpack.c.l.b16 %v3326
    %v4975 = vunpack.c.l.b16 %v3327
    %v4976 = vunpack.c.h.b16 %v3327
    %v4977 = vunpack.c.l.b16 %v3328
    %v4978 = vunpack.c.h.b16 %v3328
    %v4979 = vunpack.c.l.b16 %v3329
    %v4980 = vunpack.c.l.b16 %v3330
    %v4981 = vunpack.c.h.b16 %v3330
    %v4982 = vunpack.c.l.b16 %v3331
    %v4983 = vunpack.c.h.b16 %v3331
    %v4984 = vunpack.c.l.b16 %v3332
    %v4985 = vunpack.c.l.b16 %v3333
    %v4986 = vunpack.c.h.b16 %v3333
    %v4987 = vunpack.c.l.b16 %v3334
    %v4988 = vunpack.c.h.b16 %v3334
    %v4989 = vunpack.c.l.b16 %v3335
    %v4990 = vunpack.c.l.b16 %v3336
    %v4991 = vunpack.c.h.b16 %v3336
    %v4992 = vunpack.c.l.b16 %v3337
    %v4993 = vunpack.c.h.b16 %v3337
    %v4994 = vunpack.c.l.b16 %v3338
    %v4995 = vunpack.c.l.b16 %v3339
    %v4996 = vunpack.c.h.b16 %v3339
    %v4997 = vunpack.c.l.b16 %v3340
    %v4998 = vunpack.c.h.b16 %v3340
    %v4999 = vunpack.c.l.b16 %v3341
    %v5000 = vunpack.c.l.b16 %v3342
    %v5001 = vunpack.c.h.b16 %v3342
    %v5002 = vunpack.c.l.b16 %v3343
    %v5003 = vunpack.c.h.b16 %v3343
    %v5004 = vunpack.c.l.b16 %v3344
    %v5005 = vunpack.c.l.b16 %v3345
    %v5006 = vunpack.c.h.b16 %v3345
    %v5007 = vunpack.c.l.b16 %v3346
    %v5008 = vunpack.c.h.b16 %v3346
    %v5009 = vunpack.c.l.b16 %v3347
    %v5010 = vunpack.c.l.b16 %v3348
    %v5011 = vunpack.c.h.b16 %v3348
    %v5012 = vunpack.c.l.b16 %v3349
    %v5013 = vunpack.c.h.b16 %v3349
    %v5014 = vunpack.c.l.b16 %v3350
    %v5015 = vunpack.c.l.b16 %v3351
    %v5016 = vunpack.c.h.b16 %v3351
    %v5017 = vunpack.c.l.b16 %v3352
    %v5018 = vunpack.c.h.b16 %v3352
    %v5019 = vunpack.c.l.b16 %v3353
    %v5020 = vunpack.c.l.b16 %v3354
    %v5021 = vunpack.c.h.b16 %v3354
    %v5022 = vunpack.c.l.b16 %v3355
    %v5023 = vunpack.c.h.b16 %v3355
    %v5024 = vunpack.c.l.b16 %v3356
    %v5025 = vunpack.c.l.b16 %v3357
    %v5026 = vunpack.c.h.b16 %v3357
    %v5027 = vunpack.c.l.b16 %v3358
    %v5028 = vunpack.c.h.b16 %v3358
    %v5029 = vunpack.c.l.b16 %v3359
    %v5030 = vunpack.c.l.b16 %v3360
    %v5031 = vunpack.c.h.b16 %v3360
    %v5032 = vunpack.c.l.b16 %v3361
    %v5033 = vunpack.c.h.b16 %v3361
    %v5034 = vunpack.c.l.b16 %v3362
    %v5035 = vunpack.c.l.b16 %v3363
    %v5036 = vunpack.c.h.b16 %v3363
    %v5037 = vunpack.c.l.b16 %v3364
    %v5038 = vunpack.c.h.b16 %v3364
    %v5039 = vunpack.c.l.b16 %v3365
    %v5040 = vunpack.c.l.b16 %v3366
    %v5041 = vunpack.c.h.b16 %v3366
    %v5042 = vunpack.c.l.b16 %v3367
    %v5043 = vunpack.c.h.b16 %v3367
    %v5044 = vunpack.c.l.b16 %v3368
    %v5045 = vunpack.c.l.b16 %v3369
    %v5046 = vunpack.c.h.b16 %v3369
    %v5047 = vunpack.c.l.b16 %v3370
    %v5048 = vunpack.c.h.b16 %v3370
    %v5049 = vunpack.c.l.b16 %v3371
    %v5050 = vunpack.c.l.b16 %v3372
    %v5051 = vunpack.c.h.b16 %v3372
    %v5052 = vunpack.c.l.b16 %v3373
    %v5053 = vunpack.c.h.b16 %v3373
    %v5054 = vunpack.c.l.b16 %v3374
    %v5055 = vunpack.c.l.b16 %v3375
    %v5056 = vunpack.c.h.b16 %v3375
    %v5057 = vunpack.c.l.b16 %v3376
    %v5058 = vunpack.c.h.b16 %v3376
    %v5059 = vunpack.c.l.b16 %v3377
    %v5060 = vunpack.c.l.b16 %v3378
    %v5061 = vunpack.c.h.b16 %v3378
    %v5062 = vunpack.c.l.b16 %v3379
    %v5063 = vunpack.c.h.b16 %v3379
    %v5064 = vunpack.c.l.b16 %v3380
    %v5065 = vunpack.c.l.b16 %v3381
    %v5066 = vunpack.c.h.b16 %v3381
    %v5067 = vunpack.c.l.b16 %v3382
    %v5068 = vunpack.c.h.b16 %v3382
    %v5069 = vunpack.c.l.b16 %v3383
    %v5070 = vunpack.c.l.b16 %v3384
    %v5071 = vunpack.c.h.b16 %v3384
    %v5072 = vunpack.c.l.b16 %v3385
    %v5073 = vunpack.c.h.b16 %v3385
    %v5074 = vunpack.c.l.b16 %v3386
    %v5075 = vunpack.c.l.b16 %v3387
    %v5076 = vunpack.c.h.b16 %v3387
    %v5077 = vunpack.c.l.b16 %v3388
    %v5078 = vunpack.c.h.b16 %v3388
    %v5079 = vunpack.c.l.b16 %v3389
    %v5080 = vunpack.c.l.b16 %v3390
    %v5081 = vunpack.c.h.b16 %v3390
    %v5082 = vunpack.c.l.b16 %v3391
    %v5083 = vunpack.c.h.b16 %v3391
    %v5084 = vunpack.c.l.b16 %v3392
    %v5085 = vunpack.c.l.b16 %v3393
    %v5086 = vunpack.c.h.b16 %v3393
    %v5087 = vunpack.c.l.b16 %v3394
    %v5088 = vunpack.c.h.b16 %v3394
    %v5089 = vunpack.c.l.b16 %v3395
    %v5090 = vunpack.c.l.b16 %v3396
    %v5091 = vunpack.c.h.b16 %v3396
    %v5092 = vunpack.c.l.b16 %v3397
    %v5093 = vunpack.c.h.b16 %v3397
    %v5094 = vunpack.c.l.b16 %v3398
    %v5095 = vunpack.c.l.b16 %v3399
    %v5096 = vunpack.c.h.b16 %v3399
    %v5097 = vunpack.c.l.b16 %v3400
    %v5098 = vunpack.c.h.b16 %v3400
    %v5099 = vunpack.c.l.b16 %v3401
    %v5100 = vunpack.c.l.b16 %v3402
    %v5101 = vunpack.c.h.b16 %v3402
    %v5102 = vunpack.c.l.b16 %v3403
    %v5103 = vunpack.c.h.b16 %v3403
    %v5104 = vunpack.c.l.b16 %v3404
    %v5105 = vunpack.c.l.b16 %v3405
    %v5106 = vunpack.c.h.b16 %v3405
    %v5107 = vunpack.c.l.b16 %v3406
    %v5108 = vunpack.c.h.b16 %v3406
    %v5109 = vunpack.c.l.b16 %v3407
    %v5110 = vunpack.c.l.b16 %v3408
    %v5111 = vunpack.c.h.b16 %v3408
    %v5112 = vunpack.c.l.b16 %v3409
    %v5113 = vunpack.c.h.b16 %v3409
    %v5114 = vunpack.c.l.b16 %v3410
    %v5115 = vunpack.c.l.b16 %v3411
    %v5116 = vunpack.c.h.b16 %v3411
    %v5117 = vunpack.c.l.b16 %v3412
    %v5118 = vunpack.c.h.b16 %v3412
    %v5119 = vunpack.c.l.b16 %v3413
    %v5120 = vunpack.c.l.b16 %v3414
    %v5121 = vunpack.c.h.b16 %v3414
    %v5122 = vunpack.c.l.b16 %v3415
    %v5123 = vunpack.c.h.b16 %v3415
    %v5124 = vunpack.c.l.b16 %v3416
    %v5125 = vunpack.c.l.b16 %v3417
    %v5126 = vunpack.c.h.b16 %v3417
    %v5127 = vunpack.c.l.b16 %v3418
    %v5128 = vunpack.c.h.b16 %v3418
    %v5129 = vunpack.c.l.b16 %v3419
    %v5130 = vunpack.c.l.b16 %v3420
    %v5131 = vunpack.c.h.b16 %v3420
    %v5132 = vunpack.c.l.b16 %v3421
    %v5133 = vunpack.c.h.b16 %v3421
    %v5134 = vunpack.c.l.b16 %v3422
    %v5135 = vunpack.c.l.b16 %v3423
    %v5136 = vunpack.c.h.b16 %v3423
    %v5137 = vunpack.c.l.b16 %v3424
    %v5138 = vunpack.c.h.b16 %v3424
    %v5139 = vunpack.c.l.b16 %v3425
    %v5140 = vunpack.c.l.b16 %v3426
    %v5141 = vunpack.c.h.b16 %v3426
    %v5142 = vunpack.c.l.b16 %v3427
    %v5143 = vunpack.c.h.b16 %v3427
    %v5144 = vunpack.c.l.b16 %v3428
    %v5145 = vunpack.c.l.b16 %v3429
    %v5146 = vunpack.c.h.b16 %v3429
    %v5147 = vunpack.c.l.b16 %v3430
    %v5148 = vunpack.c.h.b16 %v3430
    %v5149 = vunpack.c.l.b16 %v3431
    %v5150 = vunpack.c.l.b16 %v3432
    %v5151 = vunpack.c.h.b16 %v3432
    %v5152 = vunpack.c.l.b16 %v3433
    %v5153 = vunpack.c.h.b16 %v3433
    %v5154 = vunpack.c.l.b16 %v3434
    %v5155 = vunpack.c.l.b16 %v3435
    %v5156 = vunpack.c.h.b16 %v3435
    %v5157 = vunpack.c.l.b16 %v3436
    %v5158 = vunpack.c.h.b16 %v3436
    %v5159 = vunpack.c.l.b16 %v3437
    %v5160 = vunpack.c.l.b16 %v3438
    %v5161 = vunpack.c.h.b16 %v3438
    %v5162 = vunpack.c.l.b16 %v3439
    %v5163 = vunpack.c.h.b16 %v3439
    %v5164 = vunpack.c.l.b16 %v3440
    %v5165 = vunpack.c.l.b16 %v3441
    %v5166 = vunpack.c.h.b16 %v3441
    %v5167 = vunpack.c.l.b16 %v3442
    %v5168 = vunpack.c.h.b16 %v3442
    %v5169 = vunpack.c.l.b16 %v3443
    %v5170 = vunpack.c.l.b16 %v3444
    %v5171 = vunpack.c.h.b16 %v3444
    %v5172 = vunpack.c.l.b16 %v3445
    %v5173 = vunpack.c.h.b16 %v3445
    %v5174 = vunpack.c.l.b16 %v3446
    %v5175 = vunpack.c.l.b16 %v3447
    %v5176 = vunpack.c.h.b16 %v3447
    %v5177 = vunpack.c.l.b16 %v3448
    %v5178 = vunpack.c.h.b16 %v3448
    %v5179 = vunpack.c.l.b16 %v3449
    %v5180 = vunpack.c.l.b16 %v3450
    %v5181 = vunpack.c.h.b16 %v3450
    %v5182 = vunpack.c.l.b16 %v3451
    %v5183 = vunpack.c.h.b16 %v3451
    %v5184 = vunpack.c.l.b16 %v3452
    %v5185 = vunpack.c.l.b16 %v3453
    %v5186 = vunpack.c.h.b16 %v3453
    %v5187 = vunpack.c.l.b16 %v3454
    %v5188 = vunpack.c.h.b16 %v3454
    %v5189 = vunpack.c.l.b16 %v3455
    %v5190 = vunpack.c.l.b16 %v3456
    %v5191 = vunpack.c.h.b16 %v3456
    %v5192 = vunpack.c.l.b16 %v3457
    %v5193 = vunpack.c.h.b16 %v3457
    %v5194 = vunpack.c.l.b16 %v3458
    %v5195 = vunpack.c.l.b16 %v3459
    %v5196 = vunpack.c.h.b16 %v3459
    %v5197 = vunpack.c.l.b16 %v3460
    %v5198 = vunpack.c.h.b16 %v3460
    %v5199 = vunpack.c.l.b16 %v3461
    %v5200 = vunpack.c.l.b16 %v3462
    %v5201 = vunpack.c.h.b16 %v3462
    %v5202 = vunpack.c.l.b16 %v3463
    %v5203 = vunpack.c.h.b16 %v3463
    %v5204 = vunpack.c.l.b16 %v3464
    %v5205 = vunpack.c.l.b16 %v3465
    %v5206 = vunpack.c.h.b16 %v3465
    %v5207 = vunpack.c.l.b16 %v3466
    %v5208 = vunpack.c.h.b16 %v3466
    %v5209 = vunpack.c.l.b16 %v3467
    %v5210 = vunpack.c.l.b16 %v3468
    %v5211 = vunpack.c.h.b16 %v3468
    %v5212 = vunpack.c.l.b16 %v3469
    %v5213 = vunpack.c.h.b16 %v3469
    %v5214 = vunpack.c.l.b16 %v3470
    %v5215 = vunpack.c.l.b16 %v3471
    %v5216 = vunpack.c.h.b16 %v3471
    %v5217 = vunpack.c.l.b16 %v3472
    %v5218 = vunpack.c.h.b16 %v3472
    %v5219 = vunpack.c.l.b16 %v3473
    %v5220 = vunpack.c.l.b16 %v3474
    %v5221 = vunpack.c.h.b16 %v3474
    %v5222 = vunpack.c.l.b16 %v3475
    %v5223 = vunpack.c.h.b16 %v3475
    %v5224 = vunpack.c.l.b16 %v3476
    %v5225 = vunpack.c.l.b16 %v3477
    %v5226 = vunpack.c.h.b16 %v3477
    %v5227 = vunpack.c.l.b16 %v3478
    %v5228 = vunpack.c.h.b16 %v3478
    %v5229 = vunpack.c.l.b16 %v3479
    %v5230 = vunpack.c.l.b16 %v3480
    %v5231 = vunpack.c.h.b16 %v3480
    %v5232 = vunpack.c.l.b16 %v3481
    %v5233 = vunpack.c.h.b16 %v3481
    %v5234 = vunpack.c.l.b16 %v3482
    %v5235 = vunpack.c.l.b16 %v3483
    %v5236 = vunpack.c.h.b16 %v3483
    %v5237 = vunpack.c.l.b16 %v3484
    %v5238 = vunpack.c.h.b16 %v3484
    %v5239 = vunpack.c.l.b16 %v3485
    %v5240 = vunpack.c.l.b16 %v3486
    %v5241 = vunpack.c.h.b16 %v3486
    %v5242 = vunpack.c.l.b16 %v3487
    %v5243 = vunpack.c.h.b16 %v3487
    %v5244 = vunpack.c.l.b16 %v3488
    %v5245 = vunpack.c.l.b16 %v3489
    %v5246 = vunpack.c.h.b16 %v3489
    %v5247 = vunpack.c.l.b16 %v3490
    %v5248 = vunpack.c.h.b16 %v3490
    %v5249 = vunpack.c.l.b16 %v3491
    %v5250 = vunpack.c.l.b16 %v3492
    %v5251 = vunpack.c.h.b16 %v3492
    %v5252 = vunpack.c.l.b16 %v3493
    %v5253 = vunpack.c.h.b16 %v3493
    %v5254 = vunpack.c.l.b16 %v3494
    %v5255 = vunpack.c.l.b16 %v3495
    %v5256 = vunpack.c.h.b16 %v3495
    %v5257 = vunpack.c.l.b16 %v3496
    %v5258 = vunpack.c.h.b16 %v3496
    %v5259 = vunpack.c.l.b16 %v3497
    %v5260 = vunpack.c.l.b16 %v3498
    %v5261 = vunpack.c.h.b16 %v3498
    %v5262 = vunpack.c.l.b16 %v3499
    %v5263 = vunpack.c.h.b16 %v3499
    %v5264 = vunpack.c.l.b16 %v3500
    %v5265 = vunpack.c.l.b16 %v3501
    %v5266 = vunpack.c.h.b16 %v3501
    %v5267 = vunpack.c.l.b16 %v3502
    %v5268 = vunpack.c.h.b16 %v3502
    %v5269 = vunpack.c.l.b16 %v3503
    %v5270 = vunpack.c.l.b16 %v3504
    %v5271 = vunpack.c.h.b16 %v3504
    %v5272 = vunpack.c.l.b16 %v3505
    %v5273 = vunpack.c.h.b16 %v3505
    %v5274 = vunpack.c.l.b16 %v3506
    %v5275 = vunpack.c.l.b16 %v3507
    %v5276 = vunpack.c.h.b16 %v3507
    %v5277 = vunpack.c.l.b16 %v3508
    %v5278 = vunpack.c.h.b16 %v3508
    %v5279 = vunpack.c.l.b16 %v3509
    %v5280 = vunpack.c.l.b16 %v3510
    %v5281 = vunpack.c.h.b16 %v3510
    %v5282 = vunpack.c.l.b16 %v3511
    %v5283 = vunpack.c.h.b16 %v3511
    %v5284 = vunpack.c.l.b16 %v3512
    %v5285 = vunpack.c.l.b16 %v3513
    %v5286 = vunpack.c.h.b16 %v3513
    %v5287 = vunpack.c.l.b16 %v3514
    %v5288 = vunpack.c.h.b16 %v3514
    %v5289 = vunpack.c.l.b16 %v3515
    %v5290 = vunpack.c.l.b16 %v3516
    %v5291 = vunpack.c.h.b16 %v3516
    %v5292 = vunpack.c.l.b16 %v3517
    %v5293 = vunpack.c.h.b16 %v3517
    %v5294 = vunpack.c.l.b16 %v3518
    %v5295 = vunpack.c.l.b16 %v3519
    %v5296 = vunpack.c.h.b16 %v3519
    %v5297 = vunpack.c.l.b16 %v3520
    %v5298 = vunpack.c.h.b16 %v3520
    %v5299 = vunpack.c.l.b16 %v3521
    %v5300 = vunpack.c.l.b16 %v3522
    %v5301 = vunpack.c.h.b16 %v3522
    %v5302 = vunpack.c.l.b16 %v3523
    %v5303 = vunpack.c.h.b16 %v3523
    %v5304 = vunpack.c.l.b16 %v3524
    %v5305 = vunpack.c.l.b16 %v3525
    %v5306 = vunpack.c.h.b16 %v3525
    %v5307 = vunpack.c.l.b16 %v3526
    %v5308 = vunpack.c.h.b16 %v3526
    %v5309 = vunpack.c.l.b16 %v3527
    %v5310 = vunpack.c.l.b16 %v3528
    %v5311 = vunpack.c.h.b16 %v3528
    %v5312 = vunpack.c.l.b16 %v3529
    %v5313 = vunpack.c.h.b16 %v3529
    %v5314 = vunpack.c.l.b16 %v3530
    %v5315 = vunpack.c.l.b16 %v3531
    %v5316 = vunpack.c.h.b16 %v3531
    %v5317 = vunpack.c.l.b16 %v3532
    %v5318 = vunpack.c.h.b16 %v3532
    %v5319 = vunpack.c.l.b16 %v3533
    %v5320 = vunpack.c.l.b16 %v3534
    %v5321 = vunpack.c.h.b16 %v3534
    %v5322 = vunpack.c.l.b16 %v3535
    %v5323 = vunpack.c.h.b16 %v3535
    %v5324 = vunpack.c.l.b16 %v3536
    %v5325 = vunpack.c.l.b16 %v3537
    %v5326 = vunpack.c.h.b16 %v3537
    %v5327 = vunpack.c.l.b16 %v3538
    %v5328 = vunpack.c.h.b16 %v3538
    %v5329 = vunpack.c.l.b16 %v3539
    %v5330 = vunpack.c.l.b16 %v3540
    %v5331 = vunpack.c.h.b16 %v3540
    %v5332 = vunpack.c.l.b16 %v3541
    %v5333 = vunpack.c.h.b16 %v3541
    %v5334 = vunpack.c.l.b16 %v3542
    %v5335 = vunpack.c.l.b16 %v3543
    %v5336 = vunpack.c.h.b16 %v3543
    %v5337 = vunpack.c.l.b16 %v3544
    %v5338 = vunpack.c.h.b16 %v3544
    %v5339 = vunpack.c.l.b16 %v3545
    %v5340 = vunpack.c.l.b16 %v3546
    %v5341 = vunpack.c.h.b16 %v3546
    %v5342 = vunpack.c.l.b16 %v3547
    %v5343 = vunpack.c.h.b16 %v3547
    %v5344 = vunpack.c.l.b16 %v3548
    %v5345 = vunpack.c.l.b16 %v3549
    %v5346 = vunpack.c.h.b16 %v3549
    %v5347 = vunpack.c.l.b16 %v3550
    %v5348 = vunpack.c.h.b16 %v3550
    %v5349 = vunpack.c.l.b16 %v3551
    %v5350 = vunpack.c.l.b16 %v3552
    %v5351 = vunpack.c.h.b16 %v3552
    %v5352 = vunpack.c.l.b16 %v3553
    %v5353 = vunpack.c.h.b16 %v3553
    %v5354 = vunpack.c.l.b16 %v3554
    %v5355 = vunpack.c.l.b16 %v3555
    %v5356 = vunpack.c.h.b16 %v3555
    %v5357 = vunpack.c.l.b16 %v3556
    %v5358 = vunpack.c.h.b16 %v3556
    %v5359 = vunpack.c.l.b16 %v3557
    %v5360 = vunpack.c.l.b16 %v3558
    %v5361 = vunpack.c.h.b16 %v3558
    %v5362 = vunpack.c.l.b16 %v3559
    %v5363 = vunpack.c.h.b16 %v3559
    %v5364 = vunpack.c.l.b16 %v3560
    %v5365 = vpack.c.b16 %v4250, %v4245
    %v5366 = vpack.c.b16 %v4251, %v4246
    %v5367 = vpack.c.b16 %v4252, %v4247
    %v5368 = vpack.c.b16 %v4253, %v4248
    %v5369 = vpack.c.b16 %v4254, %v4249
    %v5370 = vpack.c.b16 %v4260, %v4255
    %v5371 = vpack.c.b16 %v4261, %v4256
    %v5372 = vpack.c.b16 %v4262, %v4257
    %v5373 = vpack.c.b16 %v4263, %v4258
    %v5374 = vpack.c.b16 %v4264, %v4259
    %v5375 = vpack.c.b16 %v4270, %v4265
    %v5376 = vpack.c.b16 %v4271, %v4266
    %v5377 = vpack.c.b16 %v4272, %v4267
    %v5378 = vpack.c.b16 %v4273, %v4268
    %v5379 = vpack.c.b16 %v4274, %v4269
    %v5380 = vpack.c.b16 %v4280, %v4275
    %v5381 = vpack.c.b16 %v4281, %v4276
    %v5382 = vpack.c.b16 %v4282, %v4277
    %v5383 = vpack.c.b16 %v4283, %v4278
    %v5384 = vpack.c.b16 %v4284, %v4279
    %v5385 = vpack.c.b16 %v4290, %v4285
    %v5386 = vpack.c.b16 %v4291, %v4286
    %v5387 = vpack.c.b16 %v4292, %v4287
    %v5388 = vpack.c.b16 %v4293, %v4288
    %v5389 = vpack.c.b16 %v4294, %v4289
    %v5390 = vpack.c.b16 %v4300, %v4295
    %v5391 = vpack.c.b16 %v4301, %v4296
    %v5392 = vpack.c.b16 %v4302, %v4297
    %v5393 = vpack.c.b16 %v4303, %v4298
    %v5394 = vpack.c.b16 %v4304, %v4299
    %v5395 = vpack.c.b16 %v4310, %v4305
    %v5396 = vpack.c.b16 %v4311, %v4306
    %v5397 = vpack.c.b16 %v4312, %v4307
    %v5398 = vpack.c.b16 %v4313, %v4308
    %v5399 = vpack.c.b16 %v4314, %v4309
    %v5400 = vpack.c.b16 %v4320, %v4315
    %v5401 = vpack.c.b16 %v4321, %v4316
    %v5402 = vpack.c.b16 %v4322, %v4317
    %v5403 = vpack.c.b16 %v4323, %v4318
    %v5404 = vpack.c.b16 %v4324, %v4319
    %v5405 = vpack.c.b16 %v4330, %v4325
    %v5406 = vpack.c.b16 %v4331, %v4326
    %v5407 = vpack.c.b16 %v4332, %v4327
    %v5408 = vpack.c.b16 %v4333, %v4328
    %v5409 = vpack.c.b16 %v4334, %v4329
    %v5410 = vpack.c.b16 %v4340, %v4335
    %v5411 = vpack.c.b16 %v4341, %v4336
    %v5412 = vpack.c.b16 %v4342, %v4337
    %v5413 = vpack.c.b16 %v4343, %v4338
    %v5414 = vpack.c.b16 %v4344, %v4339
    %v5415 = vpack.c.b16 %v4350, %v4345
    %v5416 = vpack.c.b16 %v4351, %v4346
    %v5417 = vpack.c.b16 %v4352, %v4347
    %v5418 = vpack.c.b16 %v4353, %v4348
    %v5419 = vpack.c.b16 %v4354, %v4349
    %v5420 = vpack.c.b16 %v4360, %v4355
    %v5421 = vpack.c.b16 %v4361, %v4356
    %v5422 = vpack.c.b16 %v4362, %v4357
    %v5423 = vpack.c.b16 %v4363, %v4358
    %v5424 = vpack.c.b16 %v4364, %v4359
    %v5425 = vpack.c.b16 %v4370, %v4365
    %v5426 = vpack.c.b16 %v4371, %v4366
    %v5427 = vpack.c.b16 %v4372, %v4367
    %v5428 = vpack.c.b16 %v4373, %v4368
    %v5429 = vpack.c.b16 %v4374, %v4369
    %v5430 = vpack.c.b16 %v4380, %v4375
    %v5431 = vpack.c.b16 %v4381, %v4376
    %v5432 = vpack.c.b16 %v4382, %v4377
    %v5433 = vpack.c.b16 %v4383, %v4378
    %v5434 = vpack.c.b16 %v4384, %v4379
    %v5435 = vpack.c.b16 %v4390, %v4385
    %v5436 = vpack.c.b16 %v4391, %v4386
    %v5437 = vpack.c.b16 %v4392, %v4387
    %v5438 = vpack.c.b16 %v4393, %v4388
    %v5439 = vpack.c.b16 %v4394, %v4389
    %v5440 = vpack.c.b16 %v4400, %v4395
    %v5441 = vpack.c.b16 %v4401, %v4396
    %v5442 = vpack.c.b16 %v4402, %v4397
    %v5443 = vpack.c.b16 %v4403, %v4398
    %v5444 = vpack.c.b16 %v4404, %v4399
    %v5445 = vpack.c.b16 %v4410, %v4405
    %v5446 = vpack.c.b16 %v4411, %v4406
    %v5447 = vpack.c.b16 %v4412, %v4407
    %v5448 = vpack.c.b16 %v4413, %v4408
    %v5449 = vpack.c.b16 %v4414, %v4409
    %v5450 = vpack.c.b16 %v4420, %v4415
    %v5451 = vpack.c.b16 %v4421, %v4416
    %v5452 = vpack.c.b16 %v4422, %v4417
    %v5453 = vpack.c.b16 %v4423, %v4418
    %v5454 = vpack.c.b16 %v4424, %v4419
    %v5455 = vpack.c.b16 %v4430, %v4425
    %v5456 = vpack.c.b16 %v4431, %v4426
    %v5457 = vpack.c.b16 %v4432, %v4427
    %v5458 = vpack.c.b16 %v4433, %v4428
    %v5459 = vpack.c.b16 %v4434, %v4429
    %v5460 = vpack.c.b16 %v4440, %v4435
    %v5461 = vpack.c.b16 %v4441, %v4436
    %v5462 = vpack.c.b16 %v4442, %v4437
    %v5463 = vpack.c.b16 %v4443, %v4438
    %v5464 = vpack.c.b16 %v4444, %v4439
    %v5465 = vpack.c.b16 %v4450, %v4445
    %v5466 = vpack.c.b16 %v4451, %v4446
    %v5467 = vpack.c.b16 %v4452, %v4447
    %v5468 = vpack.c.b16 %v4453, %v4448
    %v5469 = vpack.c.b16 %v4454, %v4449
    %v5470 = vpack.c.b16 %v4460, %v4455
    %v5471 = vpack.c.b16 %v4461, %v4456
    %v5472 = vpack.c.b16 %v4462, %v4457
    %v5473 = vpack.c.b16 %v4463, %v4458
    %v5474 = vpack.c.b16 %v4464, %v4459
    %v5475 = vpack.c.b16 %v4470, %v4465
    %v5476 = vpack.c.b16 %v4471, %v4466
    %v5477 = vpack.c.b16 %v4472, %v4467
    %v5478 = vpack.c.b16 %v4473, %v4468
    %v5479 = vpack.c.b16 %v4474, %v4469
    %v5480 = vpack.c.b16 %v4480, %v4475
    %v5481 = vpack.c.b16 %v4481, %v4476
    %v5482 = vpack.c.b16 %v4482, %v4477
    %v5483 = vpack.c.b16 %v4483, %v4478
    %v5484 = vpack.c.b16 %v4484, %v4479
    %v5485 = vpack.c.b16 %v4490, %v4485
    %v5486 = vpack.c.b16 %v4491, %v4486
    %v5487 = vpack.c.b16 %v4492, %v4487
    %v5488 = vpack.c.b16 %v4493, %v4488
    %v5489 = vpack.c.b16 %v4494, %v4489
    %v5490 = vpack.c.b16 %v4500, %v4495
    %v5491 = vpack.c.b16 %v4501, %v4496
    %v5492 = vpack.c.b16 %v4502, %v4497
    %v5493 = vpack.c.b16 %v4503, %v4498
    %v5494 = vpack.c.b16 %v4504, %v4499
    %v5495 = vpack.c.b16 %v4510, %v4505
    %v5496 = vpack.c.b16 %v4511, %v4506
    %v5497 = vpack.c.b16 %v4512, %v4507
    %v5498 = vpack.c.b16 %v4513, %v4508
    %v5499 = vpack.c.b16 %v4514, %v4509
    %v5500 = vpack.c.b16 %v4520, %v4515
    %v5501 = vpack.c.b16 %v4521, %v4516
    %v5502 = vpack.c.b16 %v4522, %v4517
    %v5503 = vpack.c.b16 %v4523, %v4518
    %v5504 = vpack.c.b16 %v4524, %v4519
    %v5505 = vpack.c.b16 %v4530, %v4525
    %v5506 = vpack.c.b16 %v4531, %v4526
    %v5507 = vpack.c.b16 %v4532, %v4527
    %v5508 = vpack.c.b16 %v4533, %v4528
    %v5509 = vpack.c.b16 %v4534, %v4529
    %v5510 = vpack.c.b16 %v4540, %v4535
    %v5511 = vpack.c.b16 %v4541, %v4536
    %v5512 = vpack.c.b16 %v4542, %v4537
    %v5513 = vpack.c.b16 %v4543, %v4538
    %v5514 = vpack.c.b16 %v4544, %v4539
    %v5515 = vpack.c.b16 %v4550, %v4545
    %v5516 = vpack.c.b16 %v4551, %v4546
    %v5517 = vpack.c.b16 %v4552, %v4547
    %v5518 = vpack.c.b16 %v4553, %v4548
    %v5519 = vpack.c.b16 %v4554, %v4549
    %v5520 = vpack.c.b16 %v4560, %v4555
    %v5521 = vpack.c.b16 %v4561, %v4556
    %v5522 = vpack.c.b16 %v4562, %v4557
    %v5523 = vpack.c.b16 %v4563, %v4558
    %v5524 = vpack.c.b16 %v4564, %v4559
    %v5525 = vpack.c.b16 %v4570, %v4565
    %v5526 = vpack.c.b16 %v4571, %v4566
    %v5527 = vpack.c.b16 %v4572, %v4567
    %v5528 = vpack.c.b16 %v4573, %v4568
    %v5529 = vpack.c.b16 %v4574, %v4569
    %v5530 = vpack.c.b16 %v4580, %v4575
    %v5531 = vpack.c.b16 %v4581, %v4576
    %v5532 = vpack.c.b16 %v4582, %v4577
    %v5533 = vpack.c.b16 %v4583, %v4578
    %v5534 = vpack.c.b16 %v4584, %v4579
    %v5535 = vpack.c.b16 %v4590, %v4585
    %v5536 = vpack.c.b16 %v4591, %v4586
    %v5537 = vpack.c.b16 %v4592, %v4587
    %v5538 = vpack.c.b16 %v4593, %v4588
    %v5539 = vpack.c.b16 %v4594, %v4589
    %v5540 = vpack.c.b16 %v4600, %v4595
    %v5541 = vpack.c.b16 %v4601, %v4596
    %v5542 = vpack.c.b16 %v4602, %v4597
    %v5543 = vpack.c.b16 %v4603, %v4598
    %v5544 = vpack.c.b16 %v4604, %v4599
    %v5545 = vpack.c.b16 %v4610, %v4605
    %v5546 = vpack.c.b16 %v4611, %v4606
    %v5547 = vpack.c.b16 %v4612, %v4607
    %v5548 = vpack.c.b16 %v4613, %v4608
    %v5549 = vpack.c.b16 %v4614, %v4609
    %v5550 = vpack.c.b16 %v4620, %v4615
    %v5551 = vpack.c.b16 %v4621, %v4616
    %v5552 = vpack.c.b16 %v4622, %v4617
    %v5553 = vpack.c.b16 %v4623, %v4618
    %v5554 = vpack.c.b16 %v4624, %v4619
    %v5555 = vpack.c.b16 %v4630, %v4625
    %v5556 = vpack.c.b16 %v4631, %v4626
    %v5557 = vpack.c.b16 %v4632, %v4627
    %v5558 = vpack.c.b16 %v4633, %v4628
    %v5559 = vpack.c.b16 %v4634, %v4629
    %v5560 = vpack.c.b16 %v4640, %v4635
    %v5561 = vpack.c.b16 %v4641, %v4636
    %v5562 = vpack.c.b16 %v4642, %v4637
    %v5563 = vpack.c.b16 %v4643, %v4638
    %v5564 = vpack.c.b16 %v4644, %v4639
    %v5565 = vpack.c.b16 %v4650, %v4645
    %v5566 = vpack.c.b16 %v4651, %v4646
    %v5567 = vpack.c.b16 %v4652, %v4647
    %v5568 = vpack.c.b16 %v4653, %v4648
    %v5569 = vpack.c.b16 %v4654, %v4649
    %v5570 = vpack.c.b16 %v4660, %v4655
    %v5571 = vpack.c.b16 %v4661, %v4656
    %v5572 = vpack.c.b16 %v4662, %v4657
    %v5573 = vpack.c.b16 %v4663, %v4658
    %v5574 = vpack.c.b16 %v4664, %v4659
    %v5575 = vpack.c.b16 %v4670, %v4665
    %v5576 = vpack.c.b16 %v4671, %v4666
    %v5577 = vpack.c.b16 %v4672, %v4667
    %v5578 = vpack.c.b16 %v4673, %v4668
    %v5579 = vpack.c.b16 %v4674, %v4669
    %v5580 = vpack.c.b16 %v4680, %v4675
    %v5581 = vpack.c.b16 %v4681, %v4676
    %v5582 = vpack.c.b16 %v4682, %v4677
    %v5583 = vpack.c.b16 %v4683, %v4678
    %v5584 = vpack.c.b16 %v4684, %v4679
    %v5585 = vpack.c.b16 %v4690, %v4685
    %v5586 = vpack.c.b16 %v4691, %v4686
    %v5587 = vpack.c.b16 %v4692, %v4687
    %v5588 = vpack.c.b16 %v4693, %v4688
    %v5589 = vpack.c.b16 %v4694, %v4689
    %v5590 = vpack.c.b16 %v4700, %v4695
    %v5591 = vpack.c.b16 %v4701, %v4696
    %v5592 = vpack.c.b16 %v4702, %v4697
    %v5593 = vpack.c.b16 %v4703, %v4698
    %v5594 = vpack.c.b16 %v4704, %v4699
    %v5595 = vpack.c.b16 %v4710, %v4705
    %v5596 = vpack.c.b16 %v4711, %v4706
    %v5597 = vpack.c.b16 %v4712, %v4707
    %v5598 = vpack.c.b16 %v4713, %v4708
    %v5599 = vpack.c.b16 %v4714, %v4709
    %v5600 = vpack.c.b16 %v4720, %v4715
    %v5601 = vpack.c.b16 %v4721, %v4716
    %v5602 = vpack.c.b16 %v4722, %v4717
    %v5603 = vpack.c.b16 %v4723, %v4718
    %v5604 = vpack.c.b16 %v4724, %v4719
    %v5605 = vpack.c.b16 %v4730, %v4725
    %v5606 = vpack.c.b16 %v4731, %v4726
    %v5607 = vpack.c.b16 %v4732, %v4727
    %v5608 = vpack.c.b16 %v4733, %v4728
    %v5609 = vpack.c.b16 %v4734, %v4729
    %v5610 = vpack.c.b16 %v4740, %v4735
    %v5611 = vpack.c.b16 %v4741, %v4736
    %v5612 = vpack.c.b16 %v4742, %v4737
    %v5613 = vpack.c.b16 %v4743, %v4738
    %v5614 = vpack.c.b16 %v4744, %v4739
    %v5615 = vpack.c.b16 %v4750, %v4745
    %v5616 = vpack.c.b16 %v4751, %v4746
    %v5617 = vpack.c.b16 %v4752, %v4747
    %v5618 = vpack.c.b16 %v4753, %v4748
    %v5619 = vpack.c.b16 %v4754, %v4749
    %v5620 = vpack.c.b16 %v4760, %v4755
    %v5621 = vpack.c.b16 %v4761, %v4756
    %v5622 = vpack.c.b16 %v4762, %v4757
    %v5623 = vpack.c.b16 %v4763, %v4758
    %v5624 = vpack.c.b16 %v4764, %v4759
    %v5625 = vpack.c.b16 %v4770, %v4765
    %v5626 = vpack.c.b16 %v4771, %v4766
    %v5627 = vpack.c.b16 %v4772, %v4767
    %v5628 = vpack.c.b16 %v4773, %v4768
    %v5629 = vpack.c.b16 %v4774, %v4769
    %v5630 = vpack.c.b16 %v4780, %v4775
    %v5631 = vpack.c.b16 %v4781, %v4776
    %v5632 = vpack.c.b16 %v4782, %v4777
    %v5633 = vpack.c.b16 %v4783, %v4778
    %v5634 = vpack.c.b16 %v4784, %v4779
    %v5635 = vpack.c.b16 %v4790, %v4785
    %v5636 = vpack.c.b16 %v4791, %v4786
    %v5637 = vpack.c.b16 %v4792, %v4787
    %v5638 = vpack.c.b16 %v4793, %v4788
    %v5639 = vpack.c.b16 %v4794, %v4789
    %v5640 = vpack.c.b16 %v4800, %v4795
    %v5641 = vpack.c.b16 %v4801, %v4796
    %v5642 = vpack.c.b16 %v4802, %v4797
    %v5643 = vpack.c.b16 %v4803, %v4798
    %v5644 = vpack.c.b16 %v4804, %v4799
    %v5645 = vpack.c.b16 %v4810, %v4805
    %v5646 = vpack.c.b16 %v4811, %v4806
    %v5647 = vpack.c.b16 %v4812, %v4807
    %v5648 = vpack.c.b16 %v4813, %v4808
    %v5649 = vpack.c.b16 %v4814, %v4809
    %v5650 = vpack.c.b16 %v4820, %v4815
    %v5651 = vpack.c.b16 %v4821, %v4816
    %v5652 = vpack.c.b16 %v4822, %v4817
    %v5653 = vpack.c.b16 %v4823, %v4818
    %v5654 = vpack.c.b16 %v4824, %v4819
    %v5655 = vpack.c.b16 %v4830, %v4825
    %v5656 = vpack.c.b16 %v4831, %v4826
    %v5657 = vpack.c.b16 %v4832, %v4827
    %v5658 = vpack.c.b16 %v4833, %v4828
    %v5659 = vpack.c.b16 %v4834, %v4829
    %v5660 = vpack.c.b16 %v4840, %v4835
    %v5661 = vpack.c.b16 %v4841, %v4836
    %v5662 = vpack.c.b16 %v4842, %v4837
    %v5663 = vpack.c.b16 %v4843, %v4838
    %v5664 = vpack.c.b16 %v4844, %v4839
    %v5665 = vpack.c.b16 %v4850, %v4845
    %v5666 = vpack.c.b16 %v4851, %v4846
    %v5667 = vpack.c.b16 %v4852, %v4847
    %v5668 = vpack.c.b16 %v4853, %v4848
    %v5669 = vpack.c.b16 %v4854, %v4849
    %v5670 = vpack.c.b16 %v4860, %v4855
    %v5671 = vpack.c.b16 %v4861, %v4856
    %v5672 = vpack.c.b16 %v4862, %v4857
    %v5673 = vpack.c.b16 %v4863, %v4858
    %v5674 = vpack.c.b16 %v4864, %v4859
    %v5675 = vpack.c.b16 %v4870, %v4865
    %v5676 = vpack.c.b16 %v4871, %v4866
    %v5677 = vpack.c.b16 %v4872, %v4867
    %v5678 = vpack.c.b16 %v4873, %v4868
    %v5679 = vpack.c.b16 %v4874, %v4869
    %v5680 = vpack.c.b16 %v4880, %v4875
    %v5681 = vpack.c.b16 %v4881, %v4876
    %v5682 = vpack.c.b16 %v4882, %v4877
    %v5683 = vpack.c.b16 %v4883, %v4878
    %v5684 = vpack.c.b16 %v4884, %v4879
    %v5685 = vpack.c.b16 %v4890, %v4885
    %v5686 = vpack.c.b16 %v4891, %v4886
    %v5687 = vpack.c.b16 %v4892, %v4887
    %v5688 = vpack.c.b16 %v4893, %v4888
    %v5689 = vpack.c.b16 %v4894, %v4889
    %v5690 = vpack.c.b16 %v4900, %v4895
    %v5691 = vpack.c.b16 %v4901, %v4896
    %v5692 = vpack.c.b16 %v4902, %v4897
    %v5693 = vpack.c.b16 %v4903, %v4898
    %v5694 = vpack.c.b16 %v4904, %v4899
    %v5695 = vpack.c.b16 %v4910, %v4905
    %v5696 = vpack.c.b16 %v4911, %v4906
    %v5697 = vpack.c.b16 %v4912, %v4907
    %v5698 = vpack.c.b16 %v4913, %v4908
    %v5699 = vpack.c.b16 %v4914, %v4909
    %v5700 = vpack.c.b16 %v4920, %v4915
    %v5701 = vpack.c.b16 %v4921, %v4916
    %v5702 = vpack.c.b16 %v4922, %v4917
    %v5703 = vpack.c.b16 %v4923, %v4918
    %v5704 = vpack.c.b16 %v4924, %v4919
    %v5705 = vpack.c.b16 %v4930, %v4925
    %v5706 = vpack.c.b16 %v4931, %v4926
    %v5707 = vpack.c.b16 %v4932, %v4927
    %v5708 = vpack.c.b16 %v4933, %v4928
    %v5709 = vpack.c.b16 %v4934, %v4929
    %v5710 = vpack.c.b16 %v4940, %v4935
    %v5711 = vpack.c.b16 %v4941, %v4936
    %v5712 = vpack.c.b16 %v4942, %v4937
    %v5713 = vpack.c.b16 %v4943, %v4938
    %v5714 = vpack.c.b16 %v4944, %v4939
    %v5715 = vpack.c.b16 %v4950, %v4945
    %v5716 = vpack.c.b16 %v4951, %v4946
    %v5717 = vpack.c.b16 %v4952, %v4947
    %v5718 = vpack.c.b16 %v4953, %v4948
    %v5719 = vpack.c.b16 %v4954, %v4949
    %v5720 = vpack.c.b16 %v4960, %v4955
    %v5721 = vpack.c.b16 %v4961, %v4956
    %v5722 = vpack.c.b16 %v4962, %v4957
    %v5723 = vpack.c.b16 %v4963, %v4958
    %v5724 = vpack.c.b16 %v4964, %v4959
    %v5725 = vpack.c.b16 %v4970, %v4965
    %v5726 = vpack.c.b16 %v4971, %v4966
    %v5727 = vpack.c.b16 %v4972, %v4967
    %v5728 = vpack.c.b16 %v4973, %v4968
    %v5729 = vpack.c.b16 %v4974, %v4969
    %v5730 = vpack.c.b16 %v4980, %v4975
    %v5731 = vpack.c.b16 %v4981, %v4976
    %v5732 = vpack.c.b16 %v4982, %v4977
    %v5733 = vpack.c.b16 %v4983, %v4978
    %v5734 = vpack.c.b16 %v4984, %v4979
    %v5735 = vpack.c.b16 %v4990, %v4985
    %v5736 = vpack.c.b16 %v4991, %v4986
    %v5737 = vpack.c.b16 %v4992, %v4987
    %v5738 = vpack.c.b16 %v4993, %v4988
    %v5739 = vpack.c.b16 %v4994, %v4989
    %v5740 = vpack.c.b16 %v5000, %v4995
    %v5741 = vpack.c.b16 %v5001, %v4996
    %v5742 = vpack.c.b16 %v5002, %v4997
    %v5743 = vpack.c.b16 %v5003, %v4998
    %v5744 = vpack.c.b16 %v5004, %v4999
    %v5745 = vpack.c.b16 %v5010, %v5005
    %v5746 = vpack.c.b16 %v5011, %v5006
    %v5747 = vpack.c.b16 %v5012, %v5007
    %v5748 = vpack.c.b16 %v5013, %v5008
    %v5749 = vpack.c.b16 %v5014, %v5009
    %v5750 = vpack.c.b16 %v5020, %v5015
    %v5751 = vpack.c.b16 %v5021, %v5016
    %v5752 = vpack.c.b16 %v5022, %v5017
    %v5753 = vpack.c.b16 %v5023, %v5018
    %v5754 = vpack.c.b16 %v5024, %v5019
    %v5755 = vpack.c.b16 %v5030, %v5025
    %v5756 = vpack.c.b16 %v5031, %v5026
    %v5757 = vpack.c.b16 %v5032, %v5027
    %v5758 = vpack.c.b16 %v5033, %v5028
    %v5759 = vpack.c.b16 %v5034, %v5029
    %v5760 = vpack.c.b16 %v5040, %v5035
    %v5761 = vpack.c.b16 %v5041, %v5036
    %v5762 = vpack.c.b16 %v5042, %v5037
    %v5763 = vpack.c.b16 %v5043, %v5038
    %v5764 = vpack.c.b16 %v5044, %v5039
    %v5765 = vpack.c.b16 %v5050, %v5045
    %v5766 = vpack.c.b16 %v5051, %v5046
    %v5767 = vpack.c.b16 %v5052, %v5047
    %v5768 = vpack.c.b16 %v5053, %v5048
    %v5769 = vpack.c.b16 %v5054, %v5049
    %v5770 = vpack.c.b16 %v5060, %v5055
    %v5771 = vpack.c.b16 %v5061, %v5056
    %v5772 = vpack.c.b16 %v5062, %v5057
    %v5773 = vpack.c.b16 %v5063, %v5058
    %v5774 = vpack.c.b16 %v5064, %v5059
    %v5775 = vpack.c.b16 %v5070, %v5065
    %v5776 = vpack.c.b16 %v5071, %v5066
    %v5777 = vpack.c.b16 %v5072, %v5067
    %v5778 = vpack.c.b16 %v5073, %v5068
    %v5779 = vpack.c.b16 %v5074, %v5069
    %v5780 = vpack.c.b16 %v5080, %v5075
    %v5781 = vpack.c.b16 %v5081, %v5076
    %v5782 = vpack.c.b16 %v5082, %v5077
    %v5783 = vpack.c.b16 %v5083, %v5078
    %v5784 = vpack.c.b16 %v5084, %v5079
    %v5785 = vpack.c.b16 %v5090, %v5085
    %v5786 = vpack.c.b16 %v5091, %v5086
    %v5787 = vpack.c.b16 %v5092, %v5087
    %v5788 = vpack.c.b16 %v5093, %v5088
    %v5789 = vpack.c.b16 %v5094, %v5089
    %v5790 = vpack.c.b16 %v5100, %v5095
    %v5791 = vpack.c.b16 %v5101, %v5096
    %v5792 = vpack.c.b16 %v5102, %v5097
    %v5793 = vpack.c.b16 %v5103, %v5098
    %v5794 = vpack.c.b16 %v5104, %v5099
    %v5795 = vpack.c.b16 %v5110, %v5105
    %v5796 = vpack.c.b16 %v5111, %v5106
    %v5797 = vpack.c.b16 %v5112, %v5107
    %v5798 = vpack.c.b16 %v5113, %v5108
    %v5799 = vpack.c.b16 %v5114, %v5109
    %v5800 = vpack.c.b16 %v5120, %v5115
    %v5801 = vpack.c.b16 %v5121, %v5116
    %v5802 = vpack.c.b16 %v5122, %v5117
    %v5803 = vpack.c.b16 %v5123, %v5118
    %v5804 = vpack.c.b16 %v5124, %v5119
    %v5805 = vpack.c.b16 %v5130, %v5125
    %v5806 = vpack.c.b16 %v5131, %v5126
    %v5807 = vpack.c.b16 %v5132, %v5127
    %v5808 = vpack.c.b16 %v5133, %v5128
    %v5809 = vpack.c.b16 %v5134, %v5129
    %v5810 = vpack.c.b16 %v5140, %v5135
    %v5811 = vpack.c.b16 %v5141, %v5136
    %v5812 = vpack.c.b16 %v5142, %v5137
    %v5813 = vpack.c.b16 %v5143, %v5138
    %v5814 = vpack.c.b16 %v5144, %v5139
    %v5815 = vpack.c.b16 %v5150, %v5145
    %v5816 = vpack.c.b16 %v5151, %v5146
    %v5817 = vpack.c.b16 %v5152, %v5147
    %v5818 = vpack.c.b16 %v5153, %v5148
    %v5819 = vpack.c.b16 %v5154, %v5149
    %v5820 = vpack.c.b16 %v5160, %v5155
    %v5821 = vpack.c.b16 %v5161, %v5156
    %v5822 = vpack.c.b16 %v5162, %v5157
    %v5823 = vpack.c.b16 %v5163, %v5158
    %v5824 = vpack.c.b16 %v5164, %v5159
    %v5825 = vpack.c.b16 %v5170, %v5165
    %v5826 = vpack.c.b16 %v5171, %v5166
    %v5827 = vpack.c.b16 %v5172, %v5167
    %v5828 = vpack.c.b16 %v5173, %v5168
    %v5829 = vpack.c.b16 %v5174, %v5169
    %v5830 = vpack.c.b16 %v5180, %v5175
    %v5831 = vpack.c.b16 %v5181, %v5176
    %v5832 = vpack.c.b16 %v5182, %v5177
    %v5833 = vpack.c.b16 %v5183, %v5178
    %v5834 = vpack.c.b16 %v5184, %v5179
    %v5835 = vpack.c.b16 %v5190, %v5185
    %v5836 = vpack.c.b16 %v5191, %v5186
    %v5837 = vpack.c.b16 %v5192, %v5187
    %v5838 = vpack.c.b16 %v5193, %v5188
    %v5839 = vpack.c.b16 %v5194, %v5189
    %v5840 = vpack.c.b16 %v5200, %v5195
    %v5841 = vpack.c.b16 %v5201, %v5196
    %v5842 = vpack.c.b16 %v5202, %v5197
    %v5843 = vpack.c.b16 %v5203, %v5198
    %v5844 = vpack.c.b16 %v5204, %v5199
    %v5845 = vpack.c.b16 %v5210, %v5205
    %v5846 = vpack.c.b16 %v5211, %v5206
    %v5847 = vpack.c.b16 %v5212, %v5207
    %v5848 = vpack.c.b16 %v5213, %v5208
    %v5849 = vpack.c.b16 %v5214, %v5209
    %v5850 = vpack.c.b16 %v5220, %v5215
    %v5851 = vpack.c.b16 %v5221, %v5216
    %v5852 = vpack.c.b16 %v5222, %v5217
    %v5853 = vpack.c.b16 %v5223, %v5218
    %v5854 = vpack.c.b16 %v5224, %v5219
    %v5855 = vpack.c.b16 %v5230, %v5225
    %v5856 = vpack.c.b16 %v5231, %v5226
    %v5857 = vpack.c.b16 %v5232, %v5227
    %v5858 = vpack.c.b16 %v5233, %v5228
    %v5859 = vpack.c.b16 %v5234, %v5229
    %v5860 = vpack.c.b16 %v5240, %v5235
    %v5861 = vpack.c.b16 %v5241, %v5236
    %v5862 = vpack.c.b16 %v5242, %v5237
    %v5863 = vpack.c.b16 %v5243, %v5238
    %v5864 = vpack.c.b16 %v5244, %v5239
    %v5865 = vpack.c.b16 %v5250, %v5245
    %v5866 = vpack.c.b16 %v5251, %v5246
    %v5867 = vpack.c.b16 %v5252, %v5247
    %v5868 = vpack.c.b16 %v5253, %v5248
    %v5869 = vpack.c.b16 %v5254, %v5249
    %v5870 = vpack.c.b16 %v5260, %v5255
    %v5871 = vpack.c.b16 %v5261, %v5256
    %v5872 = vpack.c.b16 %v5262, %v5257
    %v5873 = vpack.c.b16 %v5263, %v5258
    %v5874 = vpack.c.b16 %v5264, %v5259
    %v5875 = vpack.c.b16 %v5270, %v5265
    %v5876 = vpack.c.b16 %v5271, %v5266
    %v5877 = vpack.c.b16 %v5272, %v5267
    %v5878 = vpack.c.b16 %v5273, %v5268
    %v5879 = vpack.c.b16 %v5274, %v5269
    %v5880 = vpack.c.b16 %v5280, %v5275
    %v5881 = vpack.c.b16 %v5281, %v5276
    %v5882 = vpack.c.b16 %v5282, %v5277
    %v5883 = vpack.c.b16 %v5283, %v5278
    %v5884 = vpack.c.b16 %v5284, %v5279
    %v5885 = vpack.c.b16 %v5290, %v5285
    %v5886 = vpack.c.b16 %v5291, %v5286
    %v5887 = vpack.c.b16 %v5292, %v5287
    %v5888 = vpack.c.b16 %v5293, %v5288
    %v5889 = vpack.c.b16 %v5294, %v5289
    %v5890 = vpack.c.b16 %v5300, %v5295
    %v5891 = vpack.c.b16 %v5301, %v5296
    %v5892 = vpack.c.b16 %v5302, %v5297
    %v5893 = vpack.c.b16 %v5303, %v5298
    %v5894 = vpack.c.b16 %v5304, %v5299
    %v5895 = vpack.c.b16 %v5310, %v5305
    %v5896 = vpack.c.b16 %v5311, %v5306
    %v5897 = vpack.c.b16 %v5312, %v5307
    %v5898 = vpack.c.b16 %v5313, %v5308
    %v5899 = vpack.c.b16 %v5314, %v5309
    %v5900 = vpack.c.b16 %v5320, %v5315
    %v5901 = vpack.c.b16 %v5321, %v5316
    %v5902 = vpack.c.b16 %v5322, %v5317
    %v5903 = vpack.c.b16 %v5323, %v5318
    %v5904 = vpack.c.b16 %v5324, %v5319
    %v5905 = vpack.c.b16 %v5330, %v5325
    %v5906 = vpack.c.b16 %v5331, %v5326
    %v5907 = vpack.c.b16 %v5332, %v5327
    %v5908 = vpack.c.b16 %v5333, %v5328
    %v5909 = vpack.c.b16 %v5334, %v5329
    %v5910 = vpack.c.b16 %v5340, %v5335
    %v5911 = vpack.c.b16 %v5341, %v5336
    %v5912 = vpack.c.b16 %v5342, %v5337
    %v5913 = vpack.c.b16 %v5343, %v5338
    %v5914 = vpack.c.b16 %v5344, %v5339
    %v5915 = vpack.c.b16 %v5350, %v5345
    %v5916 = vpack.c.b16 %v5351, %v5346
    %v5917 = vpack.c.b16 %v5352, %v5347
    %v5918 = vpack.c.b16 %v5353, %v5348
    %v5919 = vpack.c.b16 %v5354, %v5349
    %v5920 = vpack.c.b16 %v5360, %v5355
    %v5921 = vpack.c.b16 %v5361, %v5356
    %v5922 = vpack.c.b16 %v5362, %v5357
    %v5923 = vpack.c.b16 %v5363, %v5358
    %v5924 = vpack.c.b16 %v5364, %v5359
    %6485 = vmatpush.bf16.msra.mxu0 %v5400
    %6486 = vmatpush.bf16.msra.mxu0 %v5395
    %6487 = vmatpush.bf16.msra.mxu0 %v5390
    %6488 = vmatpush.bf16.msra.mxu0 %v5385
    %6489 = vmatpush.bf16.msra.mxu0 %v5380
    %6490 = vmatpush.bf16.msra.mxu0 %v5375
    %6491 = vmatpush.bf16.msra.mxu0 %v5370
    %6492 = vmatpush.bf16.msra.mxu0 %v5365
    %6493 = vmatmul.bf16.gmra.mxu0 %v2875
    %v6494 = vpop.f32.mrf.mxu0
    %v6495 = vadd.f32 %v3563, %v6494
    %v6496 = vpop.f32.mrf.mxu0
    %6497 = vdwg.mxu0
    %6498 = vmatpush.bf16.msra.mxu0 %v5440
    %6499 = vmatpush.bf16.msra.mxu0 %v5435
    %6500 = vmatpush.bf16.msra.mxu0 %v5430
    %6501 = vmatpush.bf16.msra.mxu0 %v5425
    %6502 = vmatpush.bf16.msra.mxu0 %v5420
    %6503 = vmatpush.bf16.msra.mxu0 %v5415
    %6504 = vmatpush.bf16.msra.mxu0 %v5410
    %6505 = vmatpush.bf16.msra.mxu0 %v5405
    %6506 = vmatmul.bf16.gmra.mxu0 %v2876
    %v6507 = vpop.f32.mrf.mxu0
    %v6508 = vadd.f32 %v6495, %v6507
    %v6509 = vpop.f32.mrf.mxu0
    %6510 = vdwg.mxu0
    %6511 = vmatpush.bf16.msra.mxu0 %v5480
    %6512 = vmatpush.bf16.msra.mxu0 %v5475
    %6513 = vmatpush.bf16.msra.mxu0 %v5470
    %6514 = vmatpush.bf16.msra.mxu0 %v5465
    %6515 = vmatpush.bf16.msra.mxu0 %v5460
    %6516 = vmatpush.bf16.msra.mxu0 %v5455
    %6517 = vmatpush.bf16.msra.mxu0 %v5450
    %6518 = vmatpush.bf16.msra.mxu0 %v5445
    %6519 = vmatmul.bf16.gmra.mxu0 %v2877
    %v6520 = vpop.f32.mrf.mxu0
    %v6521 = vadd.f32 %v6508, %v6520
    %v6522 = vpop.f32.mrf.mxu0
    %6523 = vdwg.mxu0
    %6524 = vmatpush.bf16.msra.mxu0 %v5520
    %6525 = vmatpush.bf16.msra.mxu0 %v5515
    %6526 = vmatpush.bf16.msra.mxu0 %v5510
    %6527 = vmatpush.bf16.msra.mxu0 %v5505
    %6528 = vmatpush.bf16.msra.mxu0 %v5500
    %6529 = vmatpush.bf16.msra.mxu0 %v5495
    %6530 = vmatpush.bf16.msra.mxu0 %v5490
    %6531 = vmatpush.bf16.msra.mxu0 %v5485
    %6532 = vmatmul.bf16.gmra.mxu0 %v2878
    %v6533 = vpop.f32.mrf.mxu0
    %v6534 = vadd.f32 %v6521, %v6533
    %v6535 = vpop.f32.mrf.mxu0
    %6536 = vdwg.mxu0
    %6537 = vmatpush.bf16.msra.mxu0 %v5560
    %6538 = vmatpush.bf16.msra.mxu0 %v5555
    %6539 = vmatpush.bf16.msra.mxu0 %v5550
    %6540 = vmatpush.bf16.msra.mxu0 %v5545
    %6541 = vmatpush.bf16.msra.mxu0 %v5540
    %6542 = vmatpush.bf16.msra.mxu0 %v5535
    %6543 = vmatpush.bf16.msra.mxu0 %v5530
    %6544 = vmatpush.bf16.msra.mxu0 %v5525
    %6545 = vmatmul.bf16.gmra.mxu0 %v2879
    %v6546 = vpop.f32.mrf.mxu0
    %v6547 = vadd.f32 %v6534, %v6546
    %v6548 = vpop.f32.mrf.mxu0
    %6549 = vdwg.mxu0
    %6550 = vmatpush.bf16.msra.mxu0 %v5600
    %6551 = vmatpush.bf16.msra.mxu0 %v5595
    %6552 = vmatpush.bf16.msra.mxu0 %v5590
    %6553 = vmatpush.bf16.msra.mxu0 %v5585
    %6554 = vmatpush.bf16.msra.mxu0 %v5580
    %6555 = vmatpush.bf16.msra.mxu0 %v5575
    %6556 = vmatpush.bf16.msra.mxu0 %v5570
    %6557 = vmatpush.bf16.msra.mxu0 %v5565
    %6558 = vmatmul.bf16.gmra.mxu0 %v2880
    %v6559 = vpop.f32.mrf.mxu0
    %v6560 = vadd.f32 %v6547, %v6559
    %v6561 = vpop.f32.mrf.mxu0
    %6562 = vdwg.mxu0
    %6563 = vmatpush.bf16.msra.mxu0 %v5640
    %6564 = vmatpush.bf16.msra.mxu0 %v5635
    %6565 = vmatpush.bf16.msra.mxu0 %v5630
    %6566 = vmatpush.bf16.msra.mxu0 %v5625
    %6567 = vmatpush.bf16.msra.mxu0 %v5620
    %6568 = vmatpush.bf16.msra.mxu0 %v5615
    %6569 = vmatpush.bf16.msra.mxu0 %v5610
    %6570 = vmatpush.bf16.msra.mxu0 %v5605
    %6571 = vmatmul.bf16.gmra.mxu0 %v2881
    %v6572 = vpop.f32.mrf.mxu0
    %v6573 = vadd.f32 %v6560, %v6572
    %v6574 = vpop.f32.mrf.mxu0
    %6575 = vdwg.mxu0
    %6576 = vmatpush.bf16.msra.mxu0 %v5680
    %6577 = vmatpush.bf16.msra.mxu0 %v5675
    %6578 = vmatpush.bf16.msra.mxu0 %v5670
    %6579 = vmatpush.bf16.msra.mxu0 %v5665
    %6580 = vmatpush.bf16.msra.mxu0 %v5660
    %6581 = vmatpush.bf16.msra.mxu0 %v5655
    %6582 = vmatpush.bf16.msra.mxu0 %v5650
    %6583 = vmatpush.bf16.msra.mxu0 %v5645
    %6584 = vmatmul.bf16.gmra.mxu0 %v2882
    %v6585 = vpop.f32.mrf.mxu0
    %v6586 = vadd.f32 %v6573, %v6585
    %v6587 = vpop.f32.mrf.mxu0
    %6588 = vdwg.mxu0
    %6589 = vmatpush.bf16.msra.mxu0 %v5720
    %6590 = vmatpush.bf16.msra.mxu0 %v5715
    %6591 = vmatpush.bf16.msra.mxu0 %v5710
    %6592 = vmatpush.bf16.msra.mxu0 %v5705
    %6593 = vmatpush.bf16.msra.mxu0 %v5700
    %6594 = vmatpush.bf16.msra.mxu0 %v5695
    %6595 = vmatpush.bf16.msra.mxu0 %v5690
    %6596 = vmatpush.bf16.msra.mxu0 %v5685
    %6597 = vmatmul.bf16.gmra.mxu0 %v2883
    %v6598 = vpop.f32.mrf.mxu0
    %v6599 = vadd.f32 %v6586, %v6598
    %v6600 = vpop.f32.mrf.mxu0
    %6601 = vdwg.mxu0
    %6602 = vmatpush.bf16.msra.mxu0 %v5760
    %6603 = vmatpush.bf16.msra.mxu0 %v5755
    %6604 = vmatpush.bf16.msra.mxu0 %v5750
    %6605 = vmatpush.bf16.msra.mxu0 %v5745
    %6606 = vmatpush.bf16.msra.mxu0 %v5740
    %6607 = vmatpush.bf16.msra.mxu0 %v5735
    %6608 = vmatpush.bf16.msra.mxu0 %v5730
    %6609 = vmatpush.bf16.msra.mxu0 %v5725
    %6610 = vmatmul.bf16.gmra.mxu0 %v2884
    %v6611 = vpop.f32.mrf.mxu0
    %v6612 = vadd.f32 %v6599, %v6611
    %v6613 = vpop.f32.mrf.mxu0
    %6614 = vdwg.mxu0
    %6615 = vmatpush.bf16.msra.mxu0 %v5800
    %6616 = vmatpush.bf16.msra.mxu0 %v5795
    %6617 = vmatpush.bf16.msra.mxu0 %v5790
    %6618 = vmatpush.bf16.msra.mxu0 %v5785
    %6619 = vmatpush.bf16.msra.mxu0 %v5780
    %6620 = vmatpush.bf16.msra.mxu0 %v5775
    %6621 = vmatpush.bf16.msra.mxu0 %v5770
    %6622 = vmatpush.bf16.msra.mxu0 %v5765
    %6623 = vmatmul.bf16.gmra.mxu0 %v2885
    %v6624 = vpop.f32.mrf.mxu0
    %v6625 = vadd.f32 %v6612, %v6624
    %v6626 = vpop.f32.mrf.mxu0
    %6627 = vdwg.mxu0
    %6628 = vmatpush.bf16.msra.mxu0 %v5840
    %6629 = vmatpush.bf16.msra.mxu0 %v5835
    %6630 = vmatpush.bf16.msra.mxu0 %v5830
    %6631 = vmatpush.bf16.msra.mxu0 %v5825
    %6632 = vmatpush.bf16.msra.mxu0 %v5820
    %6633 = vmatpush.bf16.msra.mxu0 %v5815
    %6634 = vmatpush.bf16.msra.mxu0 %v5810
    %6635 = vmatpush.bf16.msra.mxu0 %v5805
    %6636 = vmatmul.bf16.gmra.mxu0 %v2886
    %v6637 = vpop.f32.mrf.mxu0
    %v6638 = vadd.f32 %v6625, %v6637
    %v6639 = vpop.f32.mrf.mxu0
    %6640 = vdwg.mxu0
    %6641 = vmatpush.bf16.msra.mxu0 %v5880
    %6642 = vmatpush.bf16.msra.mxu0 %v5875
    %6643 = vmatpush.bf16.msra.mxu0 %v5870
    %6644 = vmatpush.bf16.msra.mxu0 %v5865
    %6645 = vmatpush.bf16.msra.mxu0 %v5860
    %6646 = vmatpush.bf16.msra.mxu0 %v5855
    %6647 = vmatpush.bf16.msra.mxu0 %v5850
    %6648 = vmatpush.bf16.msra.mxu0 %v5845
    %6649 = vmatmul.bf16.gmra.mxu0 %v2887
    %v6650 = vpop.f32.mrf.mxu0
    %v6651 = vadd.f32 %v6638, %v6650
    %v6652 = vpop.f32.mrf.mxu0
    %6653 = vdwg.mxu0
    %6654 = vmatpush.bf16.msra.mxu0 %v5920
    %6655 = vmatpush.bf16.msra.mxu0 %v5915
    %6656 = vmatpush.bf16.msra.mxu0 %v5910
    %6657 = vmatpush.bf16.msra.mxu0 %v5905
    %6658 = vmatpush.bf16.msra.mxu0 %v5900
    %6659 = vmatpush.bf16.msra.mxu0 %v5895
    %6660 = vmatpush.bf16.msra.mxu0 %v5890
    %6661 = vmatpush.bf16.msra.mxu0 %v5885
    %6662 = vmatmul.bf16.gmra.mxu0 %v2888
    %v6663 = vpop.f32.mrf.mxu0
    %v6664 = vadd.f32 %v6651, %v6663
    %v6665 = vpop.f32.mrf.mxu0
    %6666 = vdwg.mxu0
    %6667 = vmatpush.bf16.msra.mxu0 %v5401
    %6668 = vmatpush.bf16.msra.mxu0 %v5396
    %6669 = vmatpush.bf16.msra.mxu0 %v5391
    %6670 = vmatpush.bf16.msra.mxu0 %v5386
    %6671 = vmatpush.bf16.msra.mxu0 %v5381
    %6672 = vmatpush.bf16.msra.mxu0 %v5376
    %6673 = vmatpush.bf16.msra.mxu0 %v5371
    %6674 = vmatpush.bf16.msra.mxu0 %v5366
    %6675 = vmatmul.bf16.gmra.mxu0 %v2875
    %v6676 = vpop.f32.mrf.mxu0
    %v6677 = vadd.f32 %v3564, %v6676
    %v6678 = vpop.f32.mrf.mxu0
    %6679 = vdwg.mxu0
    %6680 = vmatpush.bf16.msra.mxu0 %v5441
    %6681 = vmatpush.bf16.msra.mxu0 %v5436
    %6682 = vmatpush.bf16.msra.mxu0 %v5431
    %6683 = vmatpush.bf16.msra.mxu0 %v5426
    %6684 = vmatpush.bf16.msra.mxu0 %v5421
    %6685 = vmatpush.bf16.msra.mxu0 %v5416
    %6686 = vmatpush.bf16.msra.mxu0 %v5411
    %6687 = vmatpush.bf16.msra.mxu0 %v5406
    %6688 = vmatmul.bf16.gmra.mxu0 %v2876
    %v6689 = vpop.f32.mrf.mxu0
    %v6690 = vadd.f32 %v6677, %v6689
    %v6691 = vpop.f32.mrf.mxu0
    %6692 = vdwg.mxu0
    %6693 = vmatpush.bf16.msra.mxu0 %v5481
    %6694 = vmatpush.bf16.msra.mxu0 %v5476
    %6695 = vmatpush.bf16.msra.mxu0 %v5471
    %6696 = vmatpush.bf16.msra.mxu0 %v5466
    %6697 = vmatpush.bf16.msra.mxu0 %v5461
    %6698 = vmatpush.bf16.msra.mxu0 %v5456
    %6699 = vmatpush.bf16.msra.mxu0 %v5451
    %6700 = vmatpush.bf16.msra.mxu0 %v5446
    %6701 = vmatmul.bf16.gmra.mxu0 %v2877
    %v6702 = vpop.f32.mrf.mxu0
    %v6703 = vadd.f32 %v6690, %v6702
    %v6704 = vpop.f32.mrf.mxu0
    %6705 = vdwg.mxu0
    %6706 = vmatpush.bf16.msra.mxu0 %v5521
    %6707 = vmatpush.bf16.msra.mxu0 %v5516
    %6708 = vmatpush.bf16.msra.mxu0 %v5511
    %6709 = vmatpush.bf16.msra.mxu0 %v5506
    %6710 = vmatpush.bf16.msra.mxu0 %v5501
    %6711 = vmatpush.bf16.msra.mxu0 %v5496
    %6712 = vmatpush.bf16.msra.mxu0 %v5491
    %6713 = vmatpush.bf16.msra.mxu0 %v5486
    %6714 = vmatmul.bf16.gmra.mxu0 %v2878
    %v6715 = vpop.f32.mrf.mxu0
    %v6716 = vadd.f32 %v6703, %v6715
    %v6717 = vpop.f32.mrf.mxu0
    %6718 = vdwg.mxu0
    %6719 = vmatpush.bf16.msra.mxu0 %v5561
    %6720 = vmatpush.bf16.msra.mxu0 %v5556
    %6721 = vmatpush.bf16.msra.mxu0 %v5551
    %6722 = vmatpush.bf16.msra.mxu0 %v5546
    %6723 = vmatpush.bf16.msra.mxu0 %v5541
    %6724 = vmatpush.bf16.msra.mxu0 %v5536
    %6725 = vmatpush.bf16.msra.mxu0 %v5531
    %6726 = vmatpush.bf16.msra.mxu0 %v5526
    %6727 = vmatmul.bf16.gmra.mxu0 %v2879
    %v6728 = vpop.f32.mrf.mxu0
    %v6729 = vadd.f32 %v6716, %v6728
    %v6730 = vpop.f32.mrf.mxu0
    %6731 = vdwg.mxu0
    %6732 = vmatpush.bf16.msra.mxu0 %v5601
    %6733 = vmatpush.bf16.msra.mxu0 %v5596
    %6734 = vmatpush.bf16.msra.mxu0 %v5591
    %6735 = vmatpush.bf16.msra.mxu0 %v5586
    %6736 = vmatpush.bf16.msra.mxu0 %v5581
    %6737 = vmatpush.bf16.msra.mxu0 %v5576
    %6738 = vmatpush.bf16.msra.mxu0 %v5571
    %6739 = vmatpush.bf16.msra.mxu0 %v5566
    %6740 = vmatmul.bf16.gmra.mxu0 %v2880
    %v6741 = vpop.f32.mrf.mxu0
    %v6742 = vadd.f32 %v6729, %v6741
    %v6743 = vpop.f32.mrf.mxu0
    %6744 = vdwg.mxu0
    %6745 = vmatpush.bf16.msra.mxu0 %v5641
    %6746 = vmatpush.bf16.msra.mxu0 %v5636
    %6747 = vmatpush.bf16.msra.mxu0 %v5631
    %6748 = vmatpush.bf16.msra.mxu0 %v5626
    %6749 = vmatpush.bf16.msra.mxu0 %v5621
    %6750 = vmatpush.bf16.msra.mxu0 %v5616
    %6751 = vmatpush.bf16.msra.mxu0 %v5611
    %6752 = vmatpush.bf16.msra.mxu0 %v5606
    %6753 = vmatmul.bf16.gmra.mxu0 %v2881
    %v6754 = vpop.f32.mrf.mxu0
    %v6755 = vadd.f32 %v6742, %v6754
    %v6756 = vpop.f32.mrf.mxu0
    %6757 = vdwg.mxu0
    %6758 = vmatpush.bf16.msra.mxu0 %v5681
    %6759 = vmatpush.bf16.msra.mxu0 %v5676
    %6760 = vmatpush.bf16.msra.mxu0 %v5671
    %6761 = vmatpush.bf16.msra.mxu0 %v5666
    %6762 = vmatpush.bf16.msra.mxu0 %v5661
    %6763 = vmatpush.bf16.msra.mxu0 %v5656
    %6764 = vmatpush.bf16.msra.mxu0 %v5651
    %6765 = vmatpush.bf16.msra.mxu0 %v5646
    %6766 = vmatmul.bf16.gmra.mxu0 %v2882
    %v6767 = vpop.f32.mrf.mxu0
    %v6768 = vadd.f32 %v6755, %v6767
    %v6769 = vpop.f32.mrf.mxu0
    %6770 = vdwg.mxu0
    %6771 = vmatpush.bf16.msra.mxu0 %v5721
    %6772 = vmatpush.bf16.msra.mxu0 %v5716
    %6773 = vmatpush.bf16.msra.mxu0 %v5711
    %6774 = vmatpush.bf16.msra.mxu0 %v5706
    %6775 = vmatpush.bf16.msra.mxu0 %v5701
    %6776 = vmatpush.bf16.msra.mxu0 %v5696
    %6777 = vmatpush.bf16.msra.mxu0 %v5691
    %6778 = vmatpush.bf16.msra.mxu0 %v5686
    %6779 = vmatmul.bf16.gmra.mxu0 %v2883
    %v6780 = vpop.f32.mrf.mxu0
    %v6781 = vadd.f32 %v6768, %v6780
    %v6782 = vpop.f32.mrf.mxu0
    %6783 = vdwg.mxu0
    %6784 = vmatpush.bf16.msra.mxu0 %v5761
    %6785 = vmatpush.bf16.msra.mxu0 %v5756
    %6786 = vmatpush.bf16.msra.mxu0 %v5751
    %6787 = vmatpush.bf16.msra.mxu0 %v5746
    %6788 = vmatpush.bf16.msra.mxu0 %v5741
    %6789 = vmatpush.bf16.msra.mxu0 %v5736
    %6790 = vmatpush.bf16.msra.mxu0 %v5731
    %6791 = vmatpush.bf16.msra.mxu0 %v5726
    %6792 = vmatmul.bf16.gmra.mxu0 %v2884
    %v6793 = vpop.f32.mrf.mxu0
    %v6794 = vadd.f32 %v6781, %v6793
    %v6795 = vpop.f32.mrf.mxu0
    %6796 = vdwg.mxu0
    %6797 = vmatpush.bf16.msra.mxu0 %v5801
    %6798 = vmatpush.bf16.msra.mxu0 %v5796
    %6799 = vmatpush.bf16.msra.mxu0 %v5791
    %6800 = vmatpush.bf16.msra.mxu0 %v5786
    %6801 = vmatpush.bf16.msra.mxu0 %v5781
    %6802 = vmatpush.bf16.msra.mxu0 %v5776
    %6803 = vmatpush.bf16.msra.mxu0 %v5771
    %6804 = vmatpush.bf16.msra.mxu0 %v5766
    %6805 = vmatmul.bf16.gmra.mxu0 %v2885
    %v6806 = vpop.f32.mrf.mxu0
    %v6807 = vadd.f32 %v6794, %v6806
    %v6808 = vpop.f32.mrf.mxu0
    %6809 = vdwg.mxu0
    %6810 = vmatpush.bf16.msra.mxu0 %v5841
    %6811 = vmatpush.bf16.msra.mxu0 %v5836
    %6812 = vmatpush.bf16.msra.mxu0 %v5831
    %6813 = vmatpush.bf16.msra.mxu0 %v5826
    %6814 = vmatpush.bf16.msra.mxu0 %v5821
    %6815 = vmatpush.bf16.msra.mxu0 %v5816
    %6816 = vmatpush.bf16.msra.mxu0 %v5811
    %6817 = vmatpush.bf16.msra.mxu0 %v5806
    %6818 = vmatmul.bf16.gmra.mxu0 %v2886
    %v6819 = vpop.f32.mrf.mxu0
    %v6820 = vadd.f32 %v6807, %v6819
    %v6821 = vpop.f32.mrf.mxu0
    %6822 = vdwg.mxu0
    %6823 = vmatpush.bf16.msra.mxu0 %v5881
    %6824 = vmatpush.bf16.msra.mxu0 %v5876
    %6825 = vmatpush.bf16.msra.mxu0 %v5871
    %6826 = vmatpush.bf16.msra.mxu0 %v5866
    %6827 = vmatpush.bf16.msra.mxu0 %v5861
    %6828 = vmatpush.bf16.msra.mxu0 %v5856
    %6829 = vmatpush.bf16.msra.mxu0 %v5851
    %6830 = vmatpush.bf16.msra.mxu0 %v5846
    %6831 = vmatmul.bf16.gmra.mxu0 %v2887
    %v6832 = vpop.f32.mrf.mxu0
    %v6833 = vadd.f32 %v6820, %v6832
    %v6834 = vpop.f32.mrf.mxu0
    %6835 = vdwg.mxu0
    %6836 = vmatpush.bf16.msra.mxu0 %v5921
    %6837 = vmatpush.bf16.msra.mxu0 %v5916
    %6838 = vmatpush.bf16.msra.mxu0 %v5911
    %6839 = vmatpush.bf16.msra.mxu0 %v5906
    %6840 = vmatpush.bf16.msra.mxu0 %v5901
    %6841 = vmatpush.bf16.msra.mxu0 %v5896
    %6842 = vmatpush.bf16.msra.mxu0 %v5891
    %6843 = vmatpush.bf16.msra.mxu0 %v5886
    %6844 = vmatmul.bf16.gmra.mxu0 %v2888
    %v6845 = vpop.f32.mrf.mxu0
    %v6846 = vadd.f32 %v6833, %v6845
    %v6847 = vpop.f32.mrf.mxu0
    %6848 = vdwg.mxu0
    %6849 = vmatpush.bf16.msra.mxu0 %v5402
    %6850 = vmatpush.bf16.msra.mxu0 %v5397
    %6851 = vmatpush.bf16.msra.mxu0 %v5392
    %6852 = vmatpush.bf16.msra.mxu0 %v5387
    %6853 = vmatpush.bf16.msra.mxu0 %v5382
    %6854 = vmatpush.bf16.msra.mxu0 %v5377
    %6855 = vmatpush.bf16.msra.mxu0 %v5372
    %6856 = vmatpush.bf16.msra.mxu0 %v5367
    %6857 = vmatmul.bf16.gmra.mxu0 %v2875
    %v6858 = vpop.f32.mrf.mxu0
    %v6859 = vadd.f32 %v3565, %v6858
    %v6860 = vpop.f32.mrf.mxu0
    %6861 = vdwg.mxu0
    %6862 = vmatpush.bf16.msra.mxu0 %v5442
    %6863 = vmatpush.bf16.msra.mxu0 %v5437
    %6864 = vmatpush.bf16.msra.mxu0 %v5432
    %6865 = vmatpush.bf16.msra.mxu0 %v5427
    %6866 = vmatpush.bf16.msra.mxu0 %v5422
    %6867 = vmatpush.bf16.msra.mxu0 %v5417
    %6868 = vmatpush.bf16.msra.mxu0 %v5412
    %6869 = vmatpush.bf16.msra.mxu0 %v5407
    %6870 = vmatmul.bf16.gmra.mxu0 %v2876
    %v6871 = vpop.f32.mrf.mxu0
    %v6872 = vadd.f32 %v6859, %v6871
    %v6873 = vpop.f32.mrf.mxu0
    %6874 = vdwg.mxu0
    %6875 = vmatpush.bf16.msra.mxu0 %v5482
    %6876 = vmatpush.bf16.msra.mxu0 %v5477
    %6877 = vmatpush.bf16.msra.mxu0 %v5472
    %6878 = vmatpush.bf16.msra.mxu0 %v5467
    %6879 = vmatpush.bf16.msra.mxu0 %v5462
    %6880 = vmatpush.bf16.msra.mxu0 %v5457
    %6881 = vmatpush.bf16.msra.mxu0 %v5452
    %6882 = vmatpush.bf16.msra.mxu0 %v5447
    %6883 = vmatmul.bf16.gmra.mxu0 %v2877
    %v6884 = vpop.f32.mrf.mxu0
    %v6885 = vadd.f32 %v6872, %v6884
    %v6886 = vpop.f32.mrf.mxu0
    %6887 = vdwg.mxu0
    %6888 = vmatpush.bf16.msra.mxu0 %v5522
    %6889 = vmatpush.bf16.msra.mxu0 %v5517
    %6890 = vmatpush.bf16.msra.mxu0 %v5512
    %6891 = vmatpush.bf16.msra.mxu0 %v5507
    %6892 = vmatpush.bf16.msra.mxu0 %v5502
    %6893 = vmatpush.bf16.msra.mxu0 %v5497
    %6894 = vmatpush.bf16.msra.mxu0 %v5492
    %6895 = vmatpush.bf16.msra.mxu0 %v5487
    %6896 = vmatmul.bf16.gmra.mxu0 %v2878
    %v6897 = vpop.f32.mrf.mxu0
    %v6898 = vadd.f32 %v6885, %v6897
    %v6899 = vpop.f32.mrf.mxu0
    %6900 = vdwg.mxu0
    %6901 = vmatpush.bf16.msra.mxu0 %v5562
    %6902 = vmatpush.bf16.msra.mxu0 %v5557
    %6903 = vmatpush.bf16.msra.mxu0 %v5552
    %6904 = vmatpush.bf16.msra.mxu0 %v5547
    %6905 = vmatpush.bf16.msra.mxu0 %v5542
    %6906 = vmatpush.bf16.msra.mxu0 %v5537
    %6907 = vmatpush.bf16.msra.mxu0 %v5532
    %6908 = vmatpush.bf16.msra.mxu0 %v5527
    %6909 = vmatmul.bf16.gmra.mxu0 %v2879
    %v6910 = vpop.f32.mrf.mxu0
    %v6911 = vadd.f32 %v6898, %v6910
    %v6912 = vpop.f32.mrf.mxu0
    %6913 = vdwg.mxu0
    %6914 = vmatpush.bf16.msra.mxu0 %v5602
    %6915 = vmatpush.bf16.msra.mxu0 %v5597
    %6916 = vmatpush.bf16.msra.mxu0 %v5592
    %6917 = vmatpush.bf16.msra.mxu0 %v5587
    %6918 = vmatpush.bf16.msra.mxu0 %v5582
    %6919 = vmatpush.bf16.msra.mxu0 %v5577
    %6920 = vmatpush.bf16.msra.mxu0 %v5572
    %6921 = vmatpush.bf16.msra.mxu0 %v5567
    %6922 = vmatmul.bf16.gmra.mxu0 %v2880
    %v6923 = vpop.f32.mrf.mxu0
    %v6924 = vadd.f32 %v6911, %v6923
    %v6925 = vpop.f32.mrf.mxu0
    %6926 = vdwg.mxu0
    %6927 = vmatpush.bf16.msra.mxu0 %v5642
    %6928 = vmatpush.bf16.msra.mxu0 %v5637
    %6929 = vmatpush.bf16.msra.mxu0 %v5632
    %6930 = vmatpush.bf16.msra.mxu0 %v5627
    %6931 = vmatpush.bf16.msra.mxu0 %v5622
    %6932 = vmatpush.bf16.msra.mxu0 %v5617
    %6933 = vmatpush.bf16.msra.mxu0 %v5612
    %6934 = vmatpush.bf16.msra.mxu0 %v5607
    %6935 = vmatmul.bf16.gmra.mxu0 %v2881
    %v6936 = vpop.f32.mrf.mxu0
    %v6937 = vadd.f32 %v6924, %v6936
    %v6938 = vpop.f32.mrf.mxu0
    %6939 = vdwg.mxu0
    %6940 = vmatpush.bf16.msra.mxu0 %v5682
    %6941 = vmatpush.bf16.msra.mxu0 %v5677
    %6942 = vmatpush.bf16.msra.mxu0 %v5672
    %6943 = vmatpush.bf16.msra.mxu0 %v5667
    %6944 = vmatpush.bf16.msra.mxu0 %v5662
    %6945 = vmatpush.bf16.msra.mxu0 %v5657
    %6946 = vmatpush.bf16.msra.mxu0 %v5652
    %6947 = vmatpush.bf16.msra.mxu0 %v5647
    %6948 = vmatmul.bf16.gmra.mxu0 %v2882
    %v6949 = vpop.f32.mrf.mxu0
    %v6950 = vadd.f32 %v6937, %v6949
    %v6951 = vpop.f32.mrf.mxu0
    %6952 = vdwg.mxu0
    %6953 = vmatpush.bf16.msra.mxu0 %v5722
    %6954 = vmatpush.bf16.msra.mxu0 %v5717
    %6955 = vmatpush.bf16.msra.mxu0 %v5712
    %6956 = vmatpush.bf16.msra.mxu0 %v5707
    %6957 = vmatpush.bf16.msra.mxu0 %v5702
    %6958 = vmatpush.bf16.msra.mxu0 %v5697
    %6959 = vmatpush.bf16.msra.mxu0 %v5692
    %6960 = vmatpush.bf16.msra.mxu0 %v5687
    %6961 = vmatmul.bf16.gmra.mxu0 %v2883
    %v6962 = vpop.f32.mrf.mxu0
    %v6963 = vadd.f32 %v6950, %v6962
    %v6964 = vpop.f32.mrf.mxu0
    %6965 = vdwg.mxu0
    %6966 = vmatpush.bf16.msra.mxu0 %v5762
    %6967 = vmatpush.bf16.msra.mxu0 %v5757
    %6968 = vmatpush.bf16.msra.mxu0 %v5752
    %6969 = vmatpush.bf16.msra.mxu0 %v5747
    %6970 = vmatpush.bf16.msra.mxu0 %v5742
    %6971 = vmatpush.bf16.msra.mxu0 %v5737
    %6972 = vmatpush.bf16.msra.mxu0 %v5732
    %6973 = vmatpush.bf16.msra.mxu0 %v5727
    %6974 = vmatmul.bf16.gmra.mxu0 %v2884
    %v6975 = vpop.f32.mrf.mxu0
    %v6976 = vadd.f32 %v6963, %v6975
    %v6977 = vpop.f32.mrf.mxu0
    %6978 = vdwg.mxu0
    %6979 = vmatpush.bf16.msra.mxu0 %v5802
    %6980 = vmatpush.bf16.msra.mxu0 %v5797
    %6981 = vmatpush.bf16.msra.mxu0 %v5792
    %6982 = vmatpush.bf16.msra.mxu0 %v5787
    %6983 = vmatpush.bf16.msra.mxu0 %v5782
    %6984 = vmatpush.bf16.msra.mxu0 %v5777
    %6985 = vmatpush.bf16.msra.mxu0 %v5772
    %6986 = vmatpush.bf16.msra.mxu0 %v5767
    %6987 = vmatmul.bf16.gmra.mxu0 %v2885
    %v6988 = vpop.f32.mrf.mxu0
    %v6989 = vadd.f32 %v6976, %v6988
    %v6990 = vpop.f32.mrf.mxu0
    %6991 = vdwg.mxu0
    %6992 = vmatpush.bf16.msra.mxu0 %v5842
    %6993 = vmatpush.bf16.msra.mxu0 %v5837
    %6994 = vmatpush.bf16.msra.mxu0 %v5832
    %6995 = vmatpush.bf16.msra.mxu0 %v5827
    %6996 = vmatpush.bf16.msra.mxu0 %v5822
    %6997 = vmatpush.bf16.msra.mxu0 %v5817
    %6998 = vmatpush.bf16.msra.mxu0 %v5812
    %6999 = vmatpush.bf16.msra.mxu0 %v5807
    %7000 = vmatmul.bf16.gmra.mxu0 %v2886
    %v7001 = vpop.f32.mrf.mxu0
    %v7002 = vadd.f32 %v6989, %v7001
    %v7003 = vpop.f32.mrf.mxu0
    %7004 = vdwg.mxu0
    %7005 = vmatpush.bf16.msra.mxu0 %v5882
    %7006 = vmatpush.bf16.msra.mxu0 %v5877
    %7007 = vmatpush.bf16.msra.mxu0 %v5872
    %7008 = vmatpush.bf16.msra.mxu0 %v5867
    %7009 = vmatpush.bf16.msra.mxu0 %v5862
    %7010 = vmatpush.bf16.msra.mxu0 %v5857
    %7011 = vmatpush.bf16.msra.mxu0 %v5852
    %7012 = vmatpush.bf16.msra.mxu0 %v5847
    %7013 = vmatmul.bf16.gmra.mxu0 %v2887
    %v7014 = vpop.f32.mrf.mxu0
    %v7015 = vadd.f32 %v7002, %v7014
    %v7016 = vpop.f32.mrf.mxu0
    %7017 = vdwg.mxu0
    %7018 = vmatpush.bf16.msra.mxu0 %v5922
    %7019 = vmatpush.bf16.msra.mxu0 %v5917
    %7020 = vmatpush.bf16.msra.mxu0 %v5912
    %7021 = vmatpush.bf16.msra.mxu0 %v5907
    %7022 = vmatpush.bf16.msra.mxu0 %v5902
    %7023 = vmatpush.bf16.msra.mxu0 %v5897
    %7024 = vmatpush.bf16.msra.mxu0 %v5892
    %7025 = vmatpush.bf16.msra.mxu0 %v5887
    %7026 = vmatmul.bf16.gmra.mxu0 %v2888
    %v7027 = vpop.f32.mrf.mxu0
    %v7028 = vadd.f32 %v7015, %v7027
    %v7029 = vpop.f32.mrf.mxu0
    %7030 = vdwg.mxu0
    %7031 = vmatpush.bf16.msra.mxu0 %v5403
    %7032 = vmatpush.bf16.msra.mxu0 %v5398
    %7033 = vmatpush.bf16.msra.mxu0 %v5393
    %7034 = vmatpush.bf16.msra.mxu0 %v5388
    %7035 = vmatpush.bf16.msra.mxu0 %v5383
    %7036 = vmatpush.bf16.msra.mxu0 %v5378
    %7037 = vmatpush.bf16.msra.mxu0 %v5373
    %7038 = vmatpush.bf16.msra.mxu0 %v5368
    %7039 = vmatmul.bf16.gmra.mxu0 %v2875
    %v7040 = vpop.f32.mrf.mxu0
    %v7041 = vadd.f32 %v3566, %v7040
    %v7042 = vpop.f32.mrf.mxu0
    %7043 = vdwg.mxu0
    %7044 = vmatpush.bf16.msra.mxu0 %v5443
    %7045 = vmatpush.bf16.msra.mxu0 %v5438
    %7046 = vmatpush.bf16.msra.mxu0 %v5433
    %7047 = vmatpush.bf16.msra.mxu0 %v5428
    %7048 = vmatpush.bf16.msra.mxu0 %v5423
    %7049 = vmatpush.bf16.msra.mxu0 %v5418
    %7050 = vmatpush.bf16.msra.mxu0 %v5413
    %7051 = vmatpush.bf16.msra.mxu0 %v5408
    %7052 = vmatmul.bf16.gmra.mxu0 %v2876
    %v7053 = vpop.f32.mrf.mxu0
    %v7054 = vadd.f32 %v7041, %v7053
    %v7055 = vpop.f32.mrf.mxu0
    %7056 = vdwg.mxu0
    %7057 = vmatpush.bf16.msra.mxu0 %v5483
    %7058 = vmatpush.bf16.msra.mxu0 %v5478
    %7059 = vmatpush.bf16.msra.mxu0 %v5473
    %7060 = vmatpush.bf16.msra.mxu0 %v5468
    %7061 = vmatpush.bf16.msra.mxu0 %v5463
    %7062 = vmatpush.bf16.msra.mxu0 %v5458
    %7063 = vmatpush.bf16.msra.mxu0 %v5453
    %7064 = vmatpush.bf16.msra.mxu0 %v5448
    %7065 = vmatmul.bf16.gmra.mxu0 %v2877
    %v7066 = vpop.f32.mrf.mxu0
    %v7067 = vadd.f32 %v7054, %v7066
    %v7068 = vpop.f32.mrf.mxu0
    %7069 = vdwg.mxu0
    %7070 = vmatpush.bf16.msra.mxu0 %v5523
    %7071 = vmatpush.bf16.msra.mxu0 %v5518
    %7072 = vmatpush.bf16.msra.mxu0 %v5513
    %7073 = vmatpush.bf16.msra.mxu0 %v5508
    %7074 = vmatpush.bf16.msra.mxu0 %v5503
    %7075 = vmatpush.bf16.msra.mxu0 %v5498
    %7076 = vmatpush.bf16.msra.mxu0 %v5493
    %7077 = vmatpush.bf16.msra.mxu0 %v5488
    %7078 = vmatmul.bf16.gmra.mxu0 %v2878
    %v7079 = vpop.f32.mrf.mxu0
    %v7080 = vadd.f32 %v7067, %v7079
    %v7081 = vpop.f32.mrf.mxu0
    %7082 = vdwg.mxu0
    %7083 = vmatpush.bf16.msra.mxu0 %v5563
    %7084 = vmatpush.bf16.msra.mxu0 %v5558
    %7085 = vmatpush.bf16.msra.mxu0 %v5553
    %7086 = vmatpush.bf16.msra.mxu0 %v5548
    %7087 = vmatpush.bf16.msra.mxu0 %v5543
    %7088 = vmatpush.bf16.msra.mxu0 %v5538
    %7089 = vmatpush.bf16.msra.mxu0 %v5533
    %7090 = vmatpush.bf16.msra.mxu0 %v5528
    %7091 = vmatmul.bf16.gmra.mxu0 %v2879
    %v7092 = vpop.f32.mrf.mxu0
    %v7093 = vadd.f32 %v7080, %v7092
    %v7094 = vpop.f32.mrf.mxu0
    %7095 = vdwg.mxu0
    %7096 = vmatpush.bf16.msra.mxu0 %v5603
    %7097 = vmatpush.bf16.msra.mxu0 %v5598
    %7098 = vmatpush.bf16.msra.mxu0 %v5593
    %7099 = vmatpush.bf16.msra.mxu0 %v5588
    %7100 = vmatpush.bf16.msra.mxu0 %v5583
    %7101 = vmatpush.bf16.msra.mxu0 %v5578
    %7102 = vmatpush.bf16.msra.mxu0 %v5573
    %7103 = vmatpush.bf16.msra.mxu0 %v5568
    %7104 = vmatmul.bf16.gmra.mxu0 %v2880
    %v7105 = vpop.f32.mrf.mxu0
    %v7106 = vadd.f32 %v7093, %v7105
    %v7107 = vpop.f32.mrf.mxu0
    %7108 = vdwg.mxu0
    %7109 = vmatpush.bf16.msra.mxu0 %v5643
    %7110 = vmatpush.bf16.msra.mxu0 %v5638
    %7111 = vmatpush.bf16.msra.mxu0 %v5633
    %7112 = vmatpush.bf16.msra.mxu0 %v5628
    %7113 = vmatpush.bf16.msra.mxu0 %v5623
    %7114 = vmatpush.bf16.msra.mxu0 %v5618
    %7115 = vmatpush.bf16.msra.mxu0 %v5613
    %7116 = vmatpush.bf16.msra.mxu0 %v5608
    %7117 = vmatmul.bf16.gmra.mxu0 %v2881
    %v7118 = vpop.f32.mrf.mxu0
    %v7119 = vadd.f32 %v7106, %v7118
    %v7120 = vpop.f32.mrf.mxu0
    %7121 = vdwg.mxu0
    %7122 = vmatpush.bf16.msra.mxu0 %v5683
    %7123 = vmatpush.bf16.msra.mxu0 %v5678
    %7124 = vmatpush.bf16.msra.mxu0 %v5673
    %7125 = vmatpush.bf16.msra.mxu0 %v5668
    %7126 = vmatpush.bf16.msra.mxu0 %v5663
    %7127 = vmatpush.bf16.msra.mxu0 %v5658
    %7128 = vmatpush.bf16.msra.mxu0 %v5653
    %7129 = vmatpush.bf16.msra.mxu0 %v5648
    %7130 = vmatmul.bf16.gmra.mxu0 %v2882
    %v7131 = vpop.f32.mrf.mxu0
    %v7132 = vadd.f32 %v7119, %v7131
    %v7133 = vpop.f32.mrf.mxu0
    %7134 = vdwg.mxu0
    %7135 = vmatpush.bf16.msra.mxu0 %v5723
    %7136 = vmatpush.bf16.msra.mxu0 %v5718
    %7137 = vmatpush.bf16.msra.mxu0 %v5713
    %7138 = vmatpush.bf16.msra.mxu0 %v5708
    %7139 = vmatpush.bf16.msra.mxu0 %v5703
    %7140 = vmatpush.bf16.msra.mxu0 %v5698
    %7141 = vmatpush.bf16.msra.mxu0 %v5693
    %7142 = vmatpush.bf16.msra.mxu0 %v5688
    %7143 = vmatmul.bf16.gmra.mxu0 %v2883
    %v7144 = vpop.f32.mrf.mxu0
    %v7145 = vadd.f32 %v7132, %v7144
    %v7146 = vpop.f32.mrf.mxu0
    %7147 = vdwg.mxu0
    %7148 = vmatpush.bf16.msra.mxu0 %v5763
    %7149 = vmatpush.bf16.msra.mxu0 %v5758
    %7150 = vmatpush.bf16.msra.mxu0 %v5753
    %7151 = vmatpush.bf16.msra.mxu0 %v5748
    %7152 = vmatpush.bf16.msra.mxu0 %v5743
    %7153 = vmatpush.bf16.msra.mxu0 %v5738
    %7154 = vmatpush.bf16.msra.mxu0 %v5733
    %7155 = vmatpush.bf16.msra.mxu0 %v5728
    %7156 = vmatmul.bf16.gmra.mxu0 %v2884
    %v7157 = vpop.f32.mrf.mxu0
    %v7158 = vadd.f32 %v7145, %v7157
    %v7159 = vpop.f32.mrf.mxu0
    %7160 = vdwg.mxu0
    %7161 = vmatpush.bf16.msra.mxu0 %v5803
    %7162 = vmatpush.bf16.msra.mxu0 %v5798
    %7163 = vmatpush.bf16.msra.mxu0 %v5793
    %7164 = vmatpush.bf16.msra.mxu0 %v5788
    %7165 = vmatpush.bf16.msra.mxu0 %v5783
    %7166 = vmatpush.bf16.msra.mxu0 %v5778
    %7167 = vmatpush.bf16.msra.mxu0 %v5773
    %7168 = vmatpush.bf16.msra.mxu0 %v5768
    %7169 = vmatmul.bf16.gmra.mxu0 %v2885
    %v7170 = vpop.f32.mrf.mxu0
    %v7171 = vadd.f32 %v7158, %v7170
    %v7172 = vpop.f32.mrf.mxu0
    %7173 = vdwg.mxu0
    %7174 = vmatpush.bf16.msra.mxu0 %v5843
    %7175 = vmatpush.bf16.msra.mxu0 %v5838
    %7176 = vmatpush.bf16.msra.mxu0 %v5833
    %7177 = vmatpush.bf16.msra.mxu0 %v5828
    %7178 = vmatpush.bf16.msra.mxu0 %v5823
    %7179 = vmatpush.bf16.msra.mxu0 %v5818
    %7180 = vmatpush.bf16.msra.mxu0 %v5813
    %7181 = vmatpush.bf16.msra.mxu0 %v5808
    %7182 = vmatmul.bf16.gmra.mxu0 %v2886
    %v7183 = vpop.f32.mrf.mxu0
    %v7184 = vadd.f32 %v7171, %v7183
    %v7185 = vpop.f32.mrf.mxu0
    %7186 = vdwg.mxu0
    %7187 = vmatpush.bf16.msra.mxu0 %v5883
    %7188 = vmatpush.bf16.msra.mxu0 %v5878
    %7189 = vmatpush.bf16.msra.mxu0 %v5873
    %7190 = vmatpush.bf16.msra.mxu0 %v5868
    %7191 = vmatpush.bf16.msra.mxu0 %v5863
    %7192 = vmatpush.bf16.msra.mxu0 %v5858
    %7193 = vmatpush.bf16.msra.mxu0 %v5853
    %7194 = vmatpush.bf16.msra.mxu0 %v5848
    %7195 = vmatmul.bf16.gmra.mxu0 %v2887
    %v7196 = vpop.f32.mrf.mxu0
    %v7197 = vadd.f32 %v7184, %v7196
    %v7198 = vpop.f32.mrf.mxu0
    %7199 = vdwg.mxu0
    %7200 = vmatpush.bf16.msra.mxu0 %v5923
    %7201 = vmatpush.bf16.msra.mxu0 %v5918
    %7202 = vmatpush.bf16.msra.mxu0 %v5913
    %7203 = vmatpush.bf16.msra.mxu0 %v5908
    %7204 = vmatpush.bf16.msra.mxu0 %v5903
    %7205 = vmatpush.bf16.msra.mxu0 %v5898
    %7206 = vmatpush.bf16.msra.mxu0 %v5893
    %7207 = vmatpush.bf16.msra.mxu0 %v5888
    %7208 = vmatmul.bf16.gmra.mxu0 %v2888
    %v7209 = vpop.f32.mrf.mxu0
    %v7210 = vadd.f32 %v7197, %v7209
    %v7211 = vpop.f32.mrf.mxu0
    %7212 = vdwg.mxu0
    %7213 = vmatpush.bf16.msra.mxu0 %v5404
    %7214 = vmatpush.bf16.msra.mxu0 %v5399
    %7215 = vmatpush.bf16.msra.mxu0 %v5394
    %7216 = vmatpush.bf16.msra.mxu0 %v5389
    %7217 = vmatpush.bf16.msra.mxu0 %v5384
    %7218 = vmatpush.bf16.msra.mxu0 %v5379
    %7219 = vmatpush.bf16.msra.mxu0 %v5374
    %7220 = vmatpush.bf16.msra.mxu0 %v5369
    %7221 = vmatmul.bf16.gmra.mxu0 %v2875
    %v7222 = vpop.f32.mrf.mxu0
    %v7223 = vadd.f32 %v3567, %v7222
    %v7224 = vpop.f32.mrf.mxu0
    %7225 = vdwg.mxu0
    %7226 = vmatpush.bf16.msra.mxu0 %v5444
    %7227 = vmatpush.bf16.msra.mxu0 %v5439
    %7228 = vmatpush.bf16.msra.mxu0 %v5434
    %7229 = vmatpush.bf16.msra.mxu0 %v5429
    %7230 = vmatpush.bf16.msra.mxu0 %v5424
    %7231 = vmatpush.bf16.msra.mxu0 %v5419
    %7232 = vmatpush.bf16.msra.mxu0 %v5414
    %7233 = vmatpush.bf16.msra.mxu0 %v5409
    %7234 = vmatmul.bf16.gmra.mxu0 %v2876
    %v7235 = vpop.f32.mrf.mxu0
    %v7236 = vadd.f32 %v7223, %v7235
    %v7237 = vpop.f32.mrf.mxu0
    %7238 = vdwg.mxu0
    %7239 = vmatpush.bf16.msra.mxu0 %v5484
    %7240 = vmatpush.bf16.msra.mxu0 %v5479
    %7241 = vmatpush.bf16.msra.mxu0 %v5474
    %7242 = vmatpush.bf16.msra.mxu0 %v5469
    %7243 = vmatpush.bf16.msra.mxu0 %v5464
    %7244 = vmatpush.bf16.msra.mxu0 %v5459
    %7245 = vmatpush.bf16.msra.mxu0 %v5454
    %7246 = vmatpush.bf16.msra.mxu0 %v5449
    %7247 = vmatmul.bf16.gmra.mxu0 %v2877
    %v7248 = vpop.f32.mrf.mxu0
    %v7249 = vadd.f32 %v7236, %v7248
    %v7250 = vpop.f32.mrf.mxu0
    %7251 = vdwg.mxu0
    %7252 = vmatpush.bf16.msra.mxu0 %v5524
    %7253 = vmatpush.bf16.msra.mxu0 %v5519
    %7254 = vmatpush.bf16.msra.mxu0 %v5514
    %7255 = vmatpush.bf16.msra.mxu0 %v5509
    %7256 = vmatpush.bf16.msra.mxu0 %v5504
    %7257 = vmatpush.bf16.msra.mxu0 %v5499
    %7258 = vmatpush.bf16.msra.mxu0 %v5494
    %7259 = vmatpush.bf16.msra.mxu0 %v5489
    %7260 = vmatmul.bf16.gmra.mxu0 %v2878
    %v7261 = vpop.f32.mrf.mxu0
    %v7262 = vadd.f32 %v7249, %v7261
    %v7263 = vpop.f32.mrf.mxu0
    %7264 = vdwg.mxu0
    %7265 = vmatpush.bf16.msra.mxu0 %v5564
    %7266 = vmatpush.bf16.msra.mxu0 %v5559
    %7267 = vmatpush.bf16.msra.mxu0 %v5554
    %7268 = vmatpush.bf16.msra.mxu0 %v5549
    %7269 = vmatpush.bf16.msra.mxu0 %v5544
    %7270 = vmatpush.bf16.msra.mxu0 %v5539
    %7271 = vmatpush.bf16.msra.mxu0 %v5534
    %7272 = vmatpush.bf16.msra.mxu0 %v5529
    %7273 = vmatmul.bf16.gmra.mxu0 %v2879
    %v7274 = vpop.f32.mrf.mxu0
    %v7275 = vadd.f32 %v7262, %v7274
    %v7276 = vpop.f32.mrf.mxu0
    %7277 = vdwg.mxu0
    %7278 = vmatpush.bf16.msra.mxu0 %v5604
    %7279 = vmatpush.bf16.msra.mxu0 %v5599
    %7280 = vmatpush.bf16.msra.mxu0 %v5594
    %7281 = vmatpush.bf16.msra.mxu0 %v5589
    %7282 = vmatpush.bf16.msra.mxu0 %v5584
    %7283 = vmatpush.bf16.msra.mxu0 %v5579
    %7284 = vmatpush.bf16.msra.mxu0 %v5574
    %7285 = vmatpush.bf16.msra.mxu0 %v5569
    %7286 = vmatmul.bf16.gmra.mxu0 %v2880
    %v7287 = vpop.f32.mrf.mxu0
    %v7288 = vadd.f32 %v7275, %v7287
    %v7289 = vpop.f32.mrf.mxu0
    %7290 = vdwg.mxu0
    %7291 = vmatpush.bf16.msra.mxu0 %v5644
    %7292 = vmatpush.bf16.msra.mxu0 %v5639
    %7293 = vmatpush.bf16.msra.mxu0 %v5634
    %7294 = vmatpush.bf16.msra.mxu0 %v5629
    %7295 = vmatpush.bf16.msra.mxu0 %v5624
    %7296 = vmatpush.bf16.msra.mxu0 %v5619
    %7297 = vmatpush.bf16.msra.mxu0 %v5614
    %7298 = vmatpush.bf16.msra.mxu0 %v5609
    %7299 = vmatmul.bf16.gmra.mxu0 %v2881
    %v7300 = vpop.f32.mrf.mxu0
    %v7301 = vadd.f32 %v7288, %v7300
    %v7302 = vpop.f32.mrf.mxu0
    %7303 = vdwg.mxu0
    %7304 = vmatpush.bf16.msra.mxu0 %v5684
    %7305 = vmatpush.bf16.msra.mxu0 %v5679
    %7306 = vmatpush.bf16.msra.mxu0 %v5674
    %7307 = vmatpush.bf16.msra.mxu0 %v5669
    %7308 = vmatpush.bf16.msra.mxu0 %v5664
    %7309 = vmatpush.bf16.msra.mxu0 %v5659
    %7310 = vmatpush.bf16.msra.mxu0 %v5654
    %7311 = vmatpush.bf16.msra.mxu0 %v5649
    %7312 = vmatmul.bf16.gmra.mxu0 %v2882
    %v7313 = vpop.f32.mrf.mxu0
    %v7314 = vadd.f32 %v7301, %v7313
    %v7315 = vpop.f32.mrf.mxu0
    %7316 = vdwg.mxu0
    %7317 = vmatpush.bf16.msra.mxu0 %v5724
    %7318 = vmatpush.bf16.msra.mxu0 %v5719
    %7319 = vmatpush.bf16.msra.mxu0 %v5714
    %7320 = vmatpush.bf16.msra.mxu0 %v5709
    %7321 = vmatpush.bf16.msra.mxu0 %v5704
    %7322 = vmatpush.bf16.msra.mxu0 %v5699
    %7323 = vmatpush.bf16.msra.mxu0 %v5694
    %7324 = vmatpush.bf16.msra.mxu0 %v5689
    %7325 = vmatmul.bf16.gmra.mxu0 %v2883
    %v7326 = vpop.f32.mrf.mxu0
    %v7327 = vadd.f32 %v7314, %v7326
    %v7328 = vpop.f32.mrf.mxu0
    %7329 = vdwg.mxu0
    %7330 = vmatpush.bf16.msra.mxu0 %v5764
    %7331 = vmatpush.bf16.msra.mxu0 %v5759
    %7332 = vmatpush.bf16.msra.mxu0 %v5754
    %7333 = vmatpush.bf16.msra.mxu0 %v5749
    %7334 = vmatpush.bf16.msra.mxu0 %v5744
    %7335 = vmatpush.bf16.msra.mxu0 %v5739
    %7336 = vmatpush.bf16.msra.mxu0 %v5734
    %7337 = vmatpush.bf16.msra.mxu0 %v5729
    %7338 = vmatmul.bf16.gmra.mxu0 %v2884
    %v7339 = vpop.f32.mrf.mxu0
    %v7340 = vadd.f32 %v7327, %v7339
    %v7341 = vpop.f32.mrf.mxu0
    %7342 = vdwg.mxu0
    %7343 = vmatpush.bf16.msra.mxu0 %v5804
    %7344 = vmatpush.bf16.msra.mxu0 %v5799
    %7345 = vmatpush.bf16.msra.mxu0 %v5794
    %7346 = vmatpush.bf16.msra.mxu0 %v5789
    %7347 = vmatpush.bf16.msra.mxu0 %v5784
    %7348 = vmatpush.bf16.msra.mxu0 %v5779
    %7349 = vmatpush.bf16.msra.mxu0 %v5774
    %7350 = vmatpush.bf16.msra.mxu0 %v5769
    %7351 = vmatmul.bf16.gmra.mxu0 %v2885
    %v7352 = vpop.f32.mrf.mxu0
    %v7353 = vadd.f32 %v7340, %v7352
    %v7354 = vpop.f32.mrf.mxu0
    %7355 = vdwg.mxu0
    %7356 = vmatpush.bf16.msra.mxu0 %v5844
    %7357 = vmatpush.bf16.msra.mxu0 %v5839
    %7358 = vmatpush.bf16.msra.mxu0 %v5834
    %7359 = vmatpush.bf16.msra.mxu0 %v5829
    %7360 = vmatpush.bf16.msra.mxu0 %v5824
    %7361 = vmatpush.bf16.msra.mxu0 %v5819
    %7362 = vmatpush.bf16.msra.mxu0 %v5814
    %7363 = vmatpush.bf16.msra.mxu0 %v5809
    %7364 = vmatmul.bf16.gmra.mxu0 %v2886
    %v7365 = vpop.f32.mrf.mxu0
    %v7366 = vadd.f32 %v7353, %v7365
    %v7367 = vpop.f32.mrf.mxu0
    %7368 = vdwg.mxu0
    %7369 = vmatpush.bf16.msra.mxu0 %v5884
    %7370 = vmatpush.bf16.msra.mxu0 %v5879
    %7371 = vmatpush.bf16.msra.mxu0 %v5874
    %7372 = vmatpush.bf16.msra.mxu0 %v5869
    %7373 = vmatpush.bf16.msra.mxu0 %v5864
    %7374 = vmatpush.bf16.msra.mxu0 %v5859
    %7375 = vmatpush.bf16.msra.mxu0 %v5854
    %7376 = vmatpush.bf16.msra.mxu0 %v5849
    %7377 = vmatmul.bf16.gmra.mxu0 %v2887
    %v7378 = vpop.f32.mrf.mxu0
    %v7379 = vadd.f32 %v7366, %v7378
    %v7380 = vpop.f32.mrf.mxu0
    %7381 = vdwg.mxu0
    %7382 = vmatpush.bf16.msra.mxu0 %v5924
    %7383 = vmatpush.bf16.msra.mxu0 %v5919
    %7384 = vmatpush.bf16.msra.mxu0 %v5914
    %7385 = vmatpush.bf16.msra.mxu0 %v5909
    %7386 = vmatpush.bf16.msra.mxu0 %v5904
    %7387 = vmatpush.bf16.msra.mxu0 %v5899
    %7388 = vmatpush.bf16.msra.mxu0 %v5894
    %7389 = vmatpush.bf16.msra.mxu0 %v5889
    %7390 = vmatmul.bf16.gmra.mxu0 %v2888
    %v7391 = vpop.f32.mrf.mxu0
    %v7392 = vadd.f32 %v7379, %v7391
    %v7393 = vpop.f32.mrf.mxu0
    %7394 = vdwg.mxu0
    %v7395 = vmax.f32 %v6664, 0.0
    %v7396 = vmax.f32 %v6846, 0.0
    %v7397 = vmax.f32 %v7028, 0.0
    %v7398 = vmax.f32 %v7210, 0.0
    %v7399 = vmax.f32 %v7392, 0.0
    %v7400 = vpack.c.bf16 %v7395, %v7395
    %v7401 = vpack.c.bf16 %v7396, %v7396
    %v7402 = vpack.c.bf16 %v7397, %v7397
    %v7403 = vpack.c.bf16 %v7398, %v7398
    %v7404 = vpack.c.bf16 %v7399, %v7399
    %v7405 = vld [vmem:[#allocation13] sm:$0xff]
    %v7406 = vld [vmem:[#allocation13 + $0x8] sm:$0xff]
    %v7407 = vld [vmem:[#allocation13 + $0x10] sm:$0xff]
    %v7408 = vld [vmem:[#allocation13 + $0x18] sm:$0xff]
    %v7409 = vld [vmem:[#allocation13 + $0x20] sm:$0xff]
    %v7410 = vld [vmem:[#allocation13 + $0x28] sm:$0xff]
    %v7411 = vld [vmem:[#allocation13 + $0x30] sm:$0xff]
    %v7412 = vld [vmem:[#allocation13 + $0x38] sm:$0xff]
    %v7413 = vld [vmem:[#allocation13 + $0x40] sm:$0xff]
    %v7414 = vld [vmem:[#allocation13 + $0x48] sm:$0xff]
    %v7415 = vld [vmem:[#allocation13 + $0x50] sm:$0xff]
    %v7416 = vld [vmem:[#allocation13 + $0x58] sm:$0xff]
    %v7417 = vld [vmem:[#allocation13 + $0x60] sm:$0xff]
    %v7418 = vld [vmem:[#allocation13 + $0x68] sm:$0xff]
    %v7419 = vld [vmem:[#allocation13 + $0x70] sm:$0xff]
    %v7420 = vld [vmem:[#allocation13 + $0x78] sm:$0xff]
    %v7421 = vld [vmem:[#allocation13 + $0x80] sm:$0xff]
    %v7422 = vld [vmem:[#allocation13 + $0x88] sm:$0xff]
    %v7423 = vld [vmem:[#allocation13 + $0x90] sm:$0xff]
    %v7424 = vld [vmem:[#allocation13 + $0x98] sm:$0xff]
    %v7425 = vld [vmem:[#allocation13 + $0xa0] sm:$0xff]
    %v7426 = vld [vmem:[#allocation13 + $0xa8] sm:$0xff]
    %v7427 = vld [vmem:[#allocation13 + $0xb0] sm:$0xff]
    %v7428 = vld [vmem:[#allocation13 + $0xb8] sm:$0xff]
    %v7429 = vld [vmem:[#allocation13 + $0xc0] sm:$0xff]
    %v7430 = vld [vmem:[#allocation13 + $0xc8] sm:$0xff]
    %v7431 = vld [vmem:[#allocation13 + $0xd0] sm:$0xff]
    %v7432 = vld [vmem:[#allocation13 + $0xd8] sm:$0xff]
    %v7433 = vld [vmem:[#allocation13 + $0xe0] sm:$0xff]
    %v7434 = vld [vmem:[#allocation13 + $0xe8] sm:$0xff]
    %v7435 = vld [vmem:[#allocation13 + $0xf0] sm:$0xff]
    %v7436 = vld [vmem:[#allocation13 + $0xf8] sm:$0xff]
    %v7437 = vld [vmem:[#allocation13 + $0x100] sm:$0xff]
    %v7438 = vld [vmem:[#allocation13 + $0x108] sm:$0xff]
    %v7439 = vld [vmem:[#allocation13 + $0x110] sm:$0xff]
    %v7440 = vld [vmem:[#allocation13 + $0x118] sm:$0xff]
    %v7441 = vld [vmem:[#allocation13 + $0x120] sm:$0xff]
    %v7442 = vld [vmem:[#allocation13 + $0x128] sm:$0xff]
    %v7443 = vld [vmem:[#allocation13 + $0x130] sm:$0xff]
    %v7444 = vld [vmem:[#allocation13 + $0x138] sm:$0xff]
    %v7445 = vld [vmem:[#allocation13 + $0x140] sm:$0xff]
    %v7446 = vld [vmem:[#allocation13 + $0x148] sm:$0xff]
    %v7447 = vld [vmem:[#allocation13 + $0x150] sm:$0xff]
    %v7448 = vld [vmem:[#allocation13 + $0x158] sm:$0xff]
    %v7449 = vld [vmem:[#allocation13 + $0x160] sm:$0xff]
    %v7450 = vld [vmem:[#allocation13 + $0x168] sm:$0xff]
    %v7451 = vld [vmem:[#allocation13 + $0x170] sm:$0xff]
    %v7452 = vld [vmem:[#allocation13 + $0x178] sm:$0xff]
    %v7453 = vld [vmem:[#allocation13 + $0x180] sm:$0xff]
    %v7454 = vld [vmem:[#allocation13 + $0x188] sm:$0xff]
    %v7455 = vld [vmem:[#allocation13 + $0x190] sm:$0xff]
    %v7456 = vld [vmem:[#allocation13 + $0x198] sm:$0xff]
    %v7457 = vld [vmem:[#allocation13 + $0x1a0] sm:$0xff]
    %v7458 = vld [vmem:[#allocation13 + $0x1a8] sm:$0xff]
    %v7459 = vld [vmem:[#allocation13 + $0x1b0] sm:$0xff]
    %v7460 = vld [vmem:[#allocation13 + $0x1b8] sm:$0xff]
    %v7461 = vld [vmem:[#allocation13 + $0x1c0] sm:$0xff]
    %v7462 = vld [vmem:[#allocation13 + $0x1c8] sm:$0xff]
    %v7463 = vld [vmem:[#allocation13 + $0x1d0] sm:$0xff]
    %v7464 = vld [vmem:[#allocation13 + $0x1d8] sm:$0xff]
    %v7465 = vld [vmem:[#allocation13 + $0x1e0] sm:$0xff]
    %v7466 = vld [vmem:[#allocation13 + $0x1e8] sm:$0xff]
    %v7467 = vld [vmem:[#allocation13 + $0x1f0] sm:$0xff]
    %v7468 = vld [vmem:[#allocation13 + $0x1f8] sm:$0xff]
    %v7469 = vld [vmem:[#allocation13 + $0x200] sm:$0xff]
    %v7470 = vld [vmem:[#allocation13 + $0x208] sm:$0xff]
    %v7471 = vld [vmem:[#allocation13 + $0x210] sm:$0xff]
    %v7472 = vld [vmem:[#allocation13 + $0x218] sm:$0xff]
    %v7473 = vld [vmem:[#allocation13 + $0x220] sm:$0xff]
    %v7474 = vld [vmem:[#allocation13 + $0x228] sm:$0xff]
    %v7475 = vld [vmem:[#allocation13 + $0x230] sm:$0xff]
    %v7476 = vld [vmem:[#allocation13 + $0x238] sm:$0xff]
    %v7477 = vld [vmem:[#allocation13 + $0x240] sm:$0xff]
    %v7478 = vld [vmem:[#allocation13 + $0x248] sm:$0xff]
    %v7479 = vld [vmem:[#allocation13 + $0x250] sm:$0xff]
    %v7480 = vld [vmem:[#allocation13 + $0x258] sm:$0xff]
    %v7481 = vld [vmem:[#allocation13 + $0x260] sm:$0xff]
    %v7482 = vld [vmem:[#allocation13 + $0x268] sm:$0xff]
    %v7483 = vld [vmem:[#allocation13 + $0x270] sm:$0xff]
    %v7484 = vld [vmem:[#allocation13 + $0x278] sm:$0xff]
    %v7485 = vld [vmem:[#allocation14] sm:$0x3]
    %v7487 = vperm.slane %v7485, 0
    %v7488 = vperm.slane %v7485, 1
    %v7571 = vunpack.c.l.b16 %v7405
    %v7572 = vunpack.c.h.b16 %v7405
    %v7573 = vunpack.c.l.b16 %v7406
    %v7574 = vunpack.c.h.b16 %v7406
    %v7575 = vunpack.c.l.b16 %v7407
    %v7576 = vunpack.c.h.b16 %v7407
    %v7577 = vunpack.c.l.b16 %v7408
    %v7578 = vunpack.c.h.b16 %v7408
    %v7579 = vunpack.c.l.b16 %v7409
    %v7580 = vunpack.c.h.b16 %v7409
    %v7581 = vunpack.c.l.b16 %v7410
    %v7582 = vunpack.c.h.b16 %v7410
    %v7583 = vunpack.c.l.b16 %v7411
    %v7584 = vunpack.c.h.b16 %v7411
    %v7585 = vunpack.c.l.b16 %v7412
    %v7586 = vunpack.c.h.b16 %v7412
    %v7587 = vunpack.c.l.b16 %v7413
    %v7588 = vunpack.c.h.b16 %v7413
    %v7589 = vunpack.c.l.b16 %v7414
    %v7590 = vunpack.c.h.b16 %v7414
    %v7591 = vunpack.c.l.b16 %v7415
    %v7592 = vunpack.c.h.b16 %v7415
    %v7593 = vunpack.c.l.b16 %v7416
    %v7594 = vunpack.c.h.b16 %v7416
    %v7595 = vunpack.c.l.b16 %v7417
    %v7596 = vunpack.c.h.b16 %v7417
    %v7597 = vunpack.c.l.b16 %v7418
    %v7598 = vunpack.c.h.b16 %v7418
    %v7599 = vunpack.c.l.b16 %v7419
    %v7600 = vunpack.c.h.b16 %v7419
    %v7601 = vunpack.c.l.b16 %v7420
    %v7602 = vunpack.c.h.b16 %v7420
    %v7603 = vunpack.c.l.b16 %v7421
    %v7604 = vunpack.c.h.b16 %v7421
    %v7605 = vunpack.c.l.b16 %v7422
    %v7606 = vunpack.c.h.b16 %v7422
    %v7607 = vunpack.c.l.b16 %v7423
    %v7608 = vunpack.c.h.b16 %v7423
    %v7609 = vunpack.c.l.b16 %v7424
    %v7610 = vunpack.c.h.b16 %v7424
    %v7611 = vunpack.c.l.b16 %v7425
    %v7612 = vunpack.c.h.b16 %v7425
    %v7613 = vunpack.c.l.b16 %v7426
    %v7614 = vunpack.c.h.b16 %v7426
    %v7615 = vunpack.c.l.b16 %v7427
    %v7616 = vunpack.c.h.b16 %v7427
    %v7617 = vunpack.c.l.b16 %v7428
    %v7618 = vunpack.c.h.b16 %v7428
    %v7619 = vunpack.c.l.b16 %v7429
    %v7620 = vunpack.c.h.b16 %v7429
    %v7621 = vunpack.c.l.b16 %v7430
    %v7622 = vunpack.c.h.b16 %v7430
    %v7623 = vunpack.c.l.b16 %v7431
    %v7624 = vunpack.c.h.b16 %v7431
    %v7625 = vunpack.c.l.b16 %v7432
    %v7626 = vunpack.c.h.b16 %v7432
    %v7627 = vunpack.c.l.b16 %v7433
    %v7628 = vunpack.c.h.b16 %v7433
    %v7629 = vunpack.c.l.b16 %v7434
    %v7630 = vunpack.c.h.b16 %v7434
    %v7631 = vunpack.c.l.b16 %v7435
    %v7632 = vunpack.c.h.b16 %v7435
    %v7633 = vunpack.c.l.b16 %v7436
    %v7634 = vunpack.c.h.b16 %v7436
    %v7635 = vunpack.c.l.b16 %v7437
    %v7636 = vunpack.c.h.b16 %v7437
    %v7637 = vunpack.c.l.b16 %v7438
    %v7638 = vunpack.c.h.b16 %v7438
    %v7639 = vunpack.c.l.b16 %v7439
    %v7640 = vunpack.c.h.b16 %v7439
    %v7641 = vunpack.c.l.b16 %v7440
    %v7642 = vunpack.c.h.b16 %v7440
    %v7643 = vunpack.c.l.b16 %v7441
    %v7644 = vunpack.c.h.b16 %v7441
    %v7645 = vunpack.c.l.b16 %v7442
    %v7646 = vunpack.c.h.b16 %v7442
    %v7647 = vunpack.c.l.b16 %v7443
    %v7648 = vunpack.c.h.b16 %v7443
    %v7649 = vunpack.c.l.b16 %v7444
    %v7650 = vunpack.c.h.b16 %v7444
    %v7651 = vunpack.c.l.b16 %v7445
    %v7652 = vunpack.c.h.b16 %v7445
    %v7653 = vunpack.c.l.b16 %v7446
    %v7654 = vunpack.c.h.b16 %v7446
    %v7655 = vunpack.c.l.b16 %v7447
    %v7656 = vunpack.c.h.b16 %v7447
    %v7657 = vunpack.c.l.b16 %v7448
    %v7658 = vunpack.c.h.b16 %v7448
    %v7659 = vunpack.c.l.b16 %v7449
    %v7660 = vunpack.c.h.b16 %v7449
    %v7661 = vunpack.c.l.b16 %v7450
    %v7662 = vunpack.c.h.b16 %v7450
    %v7663 = vunpack.c.l.b16 %v7451
    %v7664 = vunpack.c.h.b16 %v7451
    %v7665 = vunpack.c.l.b16 %v7452
    %v7666 = vunpack.c.h.b16 %v7452
    %v7667 = vunpack.c.l.b16 %v7453
    %v7668 = vunpack.c.h.b16 %v7453
    %v7669 = vunpack.c.l.b16 %v7454
    %v7670 = vunpack.c.h.b16 %v7454
    %v7671 = vunpack.c.l.b16 %v7455
    %v7672 = vunpack.c.h.b16 %v7455
    %v7673 = vunpack.c.l.b16 %v7456
    %v7674 = vunpack.c.h.b16 %v7456
    %v7675 = vunpack.c.l.b16 %v7457
    %v7676 = vunpack.c.h.b16 %v7457
    %v7677 = vunpack.c.l.b16 %v7458
    %v7678 = vunpack.c.h.b16 %v7458
    %v7679 = vunpack.c.l.b16 %v7459
    %v7680 = vunpack.c.h.b16 %v7459
    %v7681 = vunpack.c.l.b16 %v7460
    %v7682 = vunpack.c.h.b16 %v7460
    %v7683 = vunpack.c.l.b16 %v7461
    %v7684 = vunpack.c.h.b16 %v7461
    %v7685 = vunpack.c.l.b16 %v7462
    %v7686 = vunpack.c.h.b16 %v7462
    %v7687 = vunpack.c.l.b16 %v7463
    %v7688 = vunpack.c.h.b16 %v7463
    %v7689 = vunpack.c.l.b16 %v7464
    %v7690 = vunpack.c.h.b16 %v7464
    %v7691 = vunpack.c.l.b16 %v7465
    %v7692 = vunpack.c.h.b16 %v7465
    %v7693 = vunpack.c.l.b16 %v7466
    %v7694 = vunpack.c.h.b16 %v7466
    %v7695 = vunpack.c.l.b16 %v7467
    %v7696 = vunpack.c.h.b16 %v7467
    %v7697 = vunpack.c.l.b16 %v7468
    %v7698 = vunpack.c.h.b16 %v7468
    %v7699 = vunpack.c.l.b16 %v7469
    %v7700 = vunpack.c.h.b16 %v7469
    %v7701 = vunpack.c.l.b16 %v7470
    %v7702 = vunpack.c.h.b16 %v7470
    %v7703 = vunpack.c.l.b16 %v7471
    %v7704 = vunpack.c.h.b16 %v7471
    %v7705 = vunpack.c.l.b16 %v7472
    %v7706 = vunpack.c.h.b16 %v7472
    %v7707 = vunpack.c.l.b16 %v7473
    %v7708 = vunpack.c.h.b16 %v7473
    %v7709 = vunpack.c.l.b16 %v7474
    %v7710 = vunpack.c.h.b16 %v7474
    %v7711 = vunpack.c.l.b16 %v7475
    %v7712 = vunpack.c.h.b16 %v7475
    %v7713 = vunpack.c.l.b16 %v7476
    %v7714 = vunpack.c.h.b16 %v7476
    %v7715 = vunpack.c.l.b16 %v7477
    %v7716 = vunpack.c.h.b16 %v7477
    %v7717 = vunpack.c.l.b16 %v7478
    %v7718 = vunpack.c.h.b16 %v7478
    %v7719 = vunpack.c.l.b16 %v7479
    %v7720 = vunpack.c.h.b16 %v7479
    %v7721 = vunpack.c.l.b16 %v7480
    %v7722 = vunpack.c.h.b16 %v7480
    %v7723 = vunpack.c.l.b16 %v7481
    %v7724 = vunpack.c.h.b16 %v7481
    %v7725 = vunpack.c.l.b16 %v7482
    %v7726 = vunpack.c.h.b16 %v7482
    %v7727 = vunpack.c.l.b16 %v7483
    %v7728 = vunpack.c.h.b16 %v7483
    %v7729 = vunpack.c.l.b16 %v7484
    %v7730 = vunpack.c.h.b16 %v7484
    %v7731 = vpack.c.b16 %v7573, %v7571
    %v7732 = vpack.c.b16 %v7574, %v7572
    %v7733 = vpack.c.b16 %v7577, %v7575
    %v7734 = vpack.c.b16 %v7578, %v7576
    %v7735 = vpack.c.b16 %v7581, %v7579
    %v7736 = vpack.c.b16 %v7582, %v7580
    %v7737 = vpack.c.b16 %v7585, %v7583
    %v7738 = vpack.c.b16 %v7586, %v7584
    %v7739 = vpack.c.b16 %v7589, %v7587
    %v7740 = vpack.c.b16 %v7590, %v7588
    %v7741 = vpack.c.b16 %v7593, %v7591
    %v7742 = vpack.c.b16 %v7594, %v7592
    %v7743 = vpack.c.b16 %v7597, %v7595
    %v7744 = vpack.c.b16 %v7598, %v7596
    %v7745 = vpack.c.b16 %v7601, %v7599
    %v7746 = vpack.c.b16 %v7602, %v7600
    %v7747 = vpack.c.b16 %v7605, %v7603
    %v7748 = vpack.c.b16 %v7606, %v7604
    %v7749 = vpack.c.b16 %v7609, %v7607
    %v7750 = vpack.c.b16 %v7610, %v7608
    %v7751 = vpack.c.b16 %v7613, %v7611
    %v7752 = vpack.c.b16 %v7614, %v7612
    %v7753 = vpack.c.b16 %v7617, %v7615
    %v7754 = vpack.c.b16 %v7618, %v7616
    %v7755 = vpack.c.b16 %v7621, %v7619
    %v7756 = vpack.c.b16 %v7622, %v7620
    %v7757 = vpack.c.b16 %v7625, %v7623
    %v7758 = vpack.c.b16 %v7626, %v7624
    %v7759 = vpack.c.b16 %v7629, %v7627
    %v7760 = vpack.c.b16 %v7630, %v7628
    %v7761 = vpack.c.b16 %v7633, %v7631
    %v7762 = vpack.c.b16 %v7634, %v7632
    %v7763 = vpack.c.b16 %v7637, %v7635
    %v7764 = vpack.c.b16 %v7638, %v7636
    %v7765 = vpack.c.b16 %v7641, %v7639
    %v7766 = vpack.c.b16 %v7642, %v7640
    %v7767 = vpack.c.b16 %v7645, %v7643
    %v7768 = vpack.c.b16 %v7646, %v7644
    %v7769 = vpack.c.b16 %v7649, %v7647
    %v7770 = vpack.c.b16 %v7650, %v7648
    %v7771 = vpack.c.b16 %v7653, %v7651
    %v7772 = vpack.c.b16 %v7654, %v7652
    %v7773 = vpack.c.b16 %v7657, %v7655
    %v7774 = vpack.c.b16 %v7658, %v7656
    %v7775 = vpack.c.b16 %v7661, %v7659
    %v7776 = vpack.c.b16 %v7662, %v7660
    %v7777 = vpack.c.b16 %v7665, %v7663
    %v7778 = vpack.c.b16 %v7666, %v7664
    %v7779 = vpack.c.b16 %v7669, %v7667
    %v7780 = vpack.c.b16 %v7670, %v7668
    %v7781 = vpack.c.b16 %v7673, %v7671
    %v7782 = vpack.c.b16 %v7674, %v7672
    %v7783 = vpack.c.b16 %v7677, %v7675
    %v7784 = vpack.c.b16 %v7678, %v7676
    %v7785 = vpack.c.b16 %v7681, %v7679
    %v7786 = vpack.c.b16 %v7682, %v7680
    %v7787 = vpack.c.b16 %v7685, %v7683
    %v7788 = vpack.c.b16 %v7686, %v7684
    %v7789 = vpack.c.b16 %v7689, %v7687
    %v7790 = vpack.c.b16 %v7690, %v7688
    %v7791 = vpack.c.b16 %v7693, %v7691
    %v7792 = vpack.c.b16 %v7694, %v7692
    %v7793 = vpack.c.b16 %v7697, %v7695
    %v7794 = vpack.c.b16 %v7698, %v7696
    %v7795 = vpack.c.b16 %v7701, %v7699
    %v7796 = vpack.c.b16 %v7702, %v7700
    %v7797 = vpack.c.b16 %v7705, %v7703
    %v7798 = vpack.c.b16 %v7706, %v7704
    %v7799 = vpack.c.b16 %v7709, %v7707
    %v7800 = vpack.c.b16 %v7710, %v7708
    %v7801 = vpack.c.b16 %v7713, %v7711
    %v7802 = vpack.c.b16 %v7714, %v7712
    %v7803 = vpack.c.b16 %v7717, %v7715
    %v7804 = vpack.c.b16 %v7718, %v7716
    %v7805 = vpack.c.b16 %v7721, %v7719
    %v7806 = vpack.c.b16 %v7722, %v7720
    %v7807 = vpack.c.b16 %v7725, %v7723
    %v7808 = vpack.c.b16 %v7726, %v7724
    %v7809 = vpack.c.b16 %v7729, %v7727
    %v7810 = vpack.c.b16 %v7730, %v7728
    %7891 = vmatpush.bf16.msra.mxu0 %v7745
    %7892 = vmatpush.bf16.msra.mxu0 %v7743
    %7893 = vmatpush.bf16.msra.mxu0 %v7741
    %7894 = vmatpush.bf16.msra.mxu0 %v7739
    %7895 = vmatpush.bf16.msra.mxu0 %v7737
    %7896 = vmatpush.bf16.msra.mxu0 %v7735
    %7897 = vmatpush.bf16.msra.mxu0 %v7733
    %7898 = vmatpush.bf16.msra.mxu0 %v7731
    %7899 = vmatmul.bf16.gmra.mxu0 %v7400
    %v7900 = vpop.f32.mrf.mxu0
    %v7901 = vadd.f32 %v7487, %v7900
    %v7902 = vpop.f32.mrf.mxu0
    %7903 = vdwg.mxu0
    %7904 = vmatpush.bf16.msra.mxu0 %v7761
    %7905 = vmatpush.bf16.msra.mxu0 %v7759
    %7906 = vmatpush.bf16.msra.mxu0 %v7757
    %7907 = vmatpush.bf16.msra.mxu0 %v7755
    %7908 = vmatpush.bf16.msra.mxu0 %v7753
    %7909 = vmatpush.bf16.msra.mxu0 %v7751
    %7910 = vmatpush.bf16.msra.mxu0 %v7749
    %7911 = vmatpush.bf16.msra.mxu0 %v7747
    %7912 = vmatmul.bf16.gmra.mxu0 %v7401
    %v7913 = vpop.f32.mrf.mxu0
    %v7914 = vadd.f32 %v7901, %v7913
    %v7915 = vpop.f32.mrf.mxu0
    %7916 = vdwg.mxu0
    %7917 = vmatpush.bf16.msra.mxu0 %v7777
    %7918 = vmatpush.bf16.msra.mxu0 %v7775
    %7919 = vmatpush.bf16.msra.mxu0 %v7773
    %7920 = vmatpush.bf16.msra.mxu0 %v7771
    %7921 = vmatpush.bf16.msra.mxu0 %v7769
    %7922 = vmatpush.bf16.msra.mxu0 %v7767
    %7923 = vmatpush.bf16.msra.mxu0 %v7765
    %7924 = vmatpush.bf16.msra.mxu0 %v7763
    %7925 = vmatmul.bf16.gmra.mxu0 %v7402
    %v7926 = vpop.f32.mrf.mxu0
    %v7927 = vadd.f32 %v7914, %v7926
    %v7928 = vpop.f32.mrf.mxu0
    %7929 = vdwg.mxu0
    %7930 = vmatpush.bf16.msra.mxu0 %v7793
    %7931 = vmatpush.bf16.msra.mxu0 %v7791
    %7932 = vmatpush.bf16.msra.mxu0 %v7789
    %7933 = vmatpush.bf16.msra.mxu0 %v7787
    %7934 = vmatpush.bf16.msra.mxu0 %v7785
    %7935 = vmatpush.bf16.msra.mxu0 %v7783
    %7936 = vmatpush.bf16.msra.mxu0 %v7781
    %7937 = vmatpush.bf16.msra.mxu0 %v7779
    %7938 = vmatmul.bf16.gmra.mxu0 %v7403
    %v7939 = vpop.f32.mrf.mxu0
    %v7940 = vadd.f32 %v7927, %v7939
    %v7941 = vpop.f32.mrf.mxu0
    %7942 = vdwg.mxu0
    %7943 = vmatpush.bf16.msra.mxu0 %v7809
    %7944 = vmatpush.bf16.msra.mxu0 %v7807
    %7945 = vmatpush.bf16.msra.mxu0 %v7805
    %7946 = vmatpush.bf16.msra.mxu0 %v7803
    %7947 = vmatpush.bf16.msra.mxu0 %v7801
    %7948 = vmatpush.bf16.msra.mxu0 %v7799
    %7949 = vmatpush.bf16.msra.mxu0 %v7797
    %7950 = vmatpush.bf16.msra.mxu0 %v7795
    %7951 = vmatmul.bf16.gmra.mxu0 %v7404
    %v7952 = vpop.f32.mrf.mxu0
    %v7953 = vadd.f32 %v7940, %v7952
    %v7954 = vpop.f32.mrf.mxu0
    %7955 = vdwg.mxu0
    %7956 = vmatpush.bf16.msra.mxu0 %v7746
    %7957 = vmatpush.bf16.msra.mxu0 %v7744
    %7958 = vmatpush.bf16.msra.mxu0 %v7742
    %7959 = vmatpush.bf16.msra.mxu0 %v7740
    %7960 = vmatpush.bf16.msra.mxu0 %v7738
    %7961 = vmatpush.bf16.msra.mxu0 %v7736
    %7962 = vmatpush.bf16.msra.mxu0 %v7734
    %7963 = vmatpush.bf16.msra.mxu0 %v7732
    %7964 = vmatmul.bf16.gmra.mxu0 %v7400
    %v7965 = vpop.f32.mrf.mxu0
    %v7966 = vadd.f32 %v7488, %v7965
    %v7967 = vpop.f32.mrf.mxu0
    %7968 = vdwg.mxu0
    %7969 = vmatpush.bf16.msra.mxu0 %v7762
    %7970 = vmatpush.bf16.msra.mxu0 %v7760
    %7971 = vmatpush.bf16.msra.mxu0 %v7758
    %7972 = vmatpush.bf16.msra.mxu0 %v7756
    %7973 = vmatpush.bf16.msra.mxu0 %v7754
    %7974 = vmatpush.bf16.msra.mxu0 %v7752
    %7975 = vmatpush.bf16.msra.mxu0 %v7750
    %7976 = vmatpush.bf16.msra.mxu0 %v7748
    %7977 = vmatmul.bf16.gmra.mxu0 %v7401
    %v7978 = vpop.f32.mrf.mxu0
    %v7979 = vadd.f32 %v7966, %v7978
    %v7980 = vpop.f32.mrf.mxu0
    %7981 = vdwg.mxu0
    %7982 = vmatpush.bf16.msra.mxu0 %v7778
    %7983 = vmatpush.bf16.msra.mxu0 %v7776
    %7984 = vmatpush.bf16.msra.mxu0 %v7774
    %7985 = vmatpush.bf16.msra.mxu0 %v7772
    %7986 = vmatpush.bf16.msra.mxu0 %v7770
    %7987 = vmatpush.bf16.msra.mxu0 %v7768
    %7988 = vmatpush.bf16.msra.mxu0 %v7766
    %7989 = vmatpush.bf16.msra.mxu0 %v7764
    %7990 = vmatmul.bf16.gmra.mxu0 %v7402
    %v7991 = vpop.f32.mrf.mxu0
    %v7992 = vadd.f32 %v7979, %v7991
    %v7993 = vpop.f32.mrf.mxu0
    %7994 = vdwg.mxu0
    %7995 = vmatpush.bf16.msra.mxu0 %v7794
    %7996 = vmatpush.bf16.msra.mxu0 %v7792
    %7997 = vmatpush.bf16.msra.mxu0 %v7790
    %7998 = vmatpush.bf16.msra.mxu0 %v7788
    %7999 = vmatpush.bf16.msra.mxu0 %v7786
    %8000 = vmatpush.bf16.msra.mxu0 %v7784
    %8001 = vmatpush.bf16.msra.mxu0 %v7782
    %8002 = vmatpush.bf16.msra.mxu0 %v7780
    %8003 = vmatmul.bf16.gmra.mxu0 %v7403
    %v8004 = vpop.f32.mrf.mxu0
    %v8005 = vadd.f32 %v7992, %v8004
    %v8006 = vpop.f32.mrf.mxu0
    %8007 = vdwg.mxu0
    %8008 = vmatpush.bf16.msra.mxu0 %v7810
    %8009 = vmatpush.bf16.msra.mxu0 %v7808
    %8010 = vmatpush.bf16.msra.mxu0 %v7806
    %8011 = vmatpush.bf16.msra.mxu0 %v7804
    %8012 = vmatpush.bf16.msra.mxu0 %v7802
    %8013 = vmatpush.bf16.msra.mxu0 %v7800
    %8014 = vmatpush.bf16.msra.mxu0 %v7798
    %8015 = vmatpush.bf16.msra.mxu0 %v7796
    %8016 = vmatmul.bf16.gmra.mxu0 %v7404
    %v8017 = vpop.f32.mrf.mxu0
    %v8018 = vadd.f32 %v8005, %v8017
    %v8019 = vpop.f32.mrf.mxu0
    %8020 = vdwg.mxu0
    %v8021 = vmax.f32 %v7953, 0.0
    %v8022 = vmax.f32 %v8018, 0.0
    %v8023 = vpack.c.bf16 %v8021, %v8021
    %v8024 = vpack.c.bf16 %v8022, %v8022
    %v8025 = vld [vmem:[#allocation16] sm:$0xf]
    %v8026 = vld [vmem:[#allocation16 + $0x4] sm:$0xf]
    %v8027 = vld [vmem:[#allocation16 + $0x8] sm:$0xf]
    %v8028 = vld [vmem:[#allocation16 + $0xc] sm:$0xf]
    %v8029 = vld [vmem:[#allocation16 + $0x10] sm:$0xf]
    %v8030 = vld [vmem:[#allocation16 + $0x14] sm:$0xf]
    %v8031 = vld [vmem:[#allocation16 + $0x18] sm:$0xf]
    %v8032 = vld [vmem:[#allocation16 + $0x1c] sm:$0xf]
    %v8033 = vld [vmem:[#allocation16 + $0x20] sm:$0xf]
    %v8034 = vld [vmem:[#allocation16 + $0x24] sm:$0xf]
    %v8035 = vld [vmem:[#allocation16 + $0x28] sm:$0xf]
    %v8036 = vld [vmem:[#allocation16 + $0x2c] sm:$0xf]
    %v8037 = vld [vmem:[#allocation16 + $0x30] sm:$0xf]
    %v8038 = vld [vmem:[#allocation16 + $0x34] sm:$0xf]
    %v8039 = vld [vmem:[#allocation16 + $0x38] sm:$0xf]
    %v8040 = vld [vmem:[#allocation16 + $0x3c] sm:$0xf]
    %v8041 = vld [vmem:[#allocation16 + $0x40] sm:$0xf]
    %v8042 = vld [vmem:[#allocation16 + $0x44] sm:$0xf]
    %v8043 = vld [vmem:[#allocation16 + $0x48] sm:$0xf]
    %v8044 = vld [vmem:[#allocation16 + $0x4c] sm:$0xf]
    %v8045 = vld [vmem:[#allocation16 + $0x50] sm:$0xf]
    %v8046 = vld [vmem:[#allocation16 + $0x54] sm:$0xf]
    %v8047 = vld [vmem:[#allocation16 + $0x58] sm:$0xf]
    %v8048 = vld [vmem:[#allocation16 + $0x5c] sm:$0xf]
    %v8049 = vld [vmem:[#allocation16 + $0x60] sm:$0xf]
    %v8050 = vld [vmem:[#allocation16 + $0x64] sm:$0xf]
    %v8051 = vld [vmem:[#allocation16 + $0x68] sm:$0xf]
    %v8052 = vld [vmem:[#allocation16 + $0x6c] sm:$0xf]
    %v8053 = vld [vmem:[#allocation16 + $0x70] sm:$0xf]
    %v8054 = vld [vmem:[#allocation16 + $0x74] sm:$0xf]
    %v8055 = vld [vmem:[#allocation16 + $0x78] sm:$0xf]
    %v8056 = vld [vmem:[#allocation16 + $0x7c] sm:$0xf]
    %v8057 = vld [vmem:[#allocation17] sm:$0x1]
    %v8059 = vperm.slane %v8057, 0
    %v8093 = vunpack.c.l.b16 %v8025
    %v8094 = vunpack.c.l.b16 %v8026
    %v8095 = vunpack.c.l.b16 %v8027
    %v8096 = vunpack.c.l.b16 %v8028
    %v8097 = vunpack.c.l.b16 %v8029
    %v8098 = vunpack.c.l.b16 %v8030
    %v8099 = vunpack.c.l.b16 %v8031
    %v8100 = vunpack.c.l.b16 %v8032
    %v8101 = vunpack.c.l.b16 %v8033
    %v8102 = vunpack.c.l.b16 %v8034
    %v8103 = vunpack.c.l.b16 %v8035
    %v8104 = vunpack.c.l.b16 %v8036
    %v8105 = vunpack.c.l.b16 %v8037
    %v8106 = vunpack.c.l.b16 %v8038
    %v8107 = vunpack.c.l.b16 %v8039
    %v8108 = vunpack.c.l.b16 %v8040
    %v8109 = vunpack.c.l.b16 %v8041
    %v8110 = vunpack.c.l.b16 %v8042
    %v8111 = vunpack.c.l.b16 %v8043
    %v8112 = vunpack.c.l.b16 %v8044
    %v8113 = vunpack.c.l.b16 %v8045
    %v8114 = vunpack.c.l.b16 %v8046
    %v8115 = vunpack.c.l.b16 %v8047
    %v8116 = vunpack.c.l.b16 %v8048
    %v8117 = vunpack.c.l.b16 %v8049
    %v8118 = vunpack.c.l.b16 %v8050
    %v8119 = vunpack.c.l.b16 %v8051
    %v8120 = vunpack.c.l.b16 %v8052
    %v8121 = vunpack.c.l.b16 %v8053
    %v8122 = vunpack.c.l.b16 %v8054
    %v8123 = vunpack.c.l.b16 %v8055
    %v8124 = vunpack.c.l.b16 %v8056
    %v8125 = vpack.c.b16 %v8094, %v8093
    %v8126 = vpack.c.b16 %v8096, %v8095
    %v8127 = vpack.c.b16 %v8098, %v8097
    %v8128 = vpack.c.b16 %v8100, %v8099
    %v8129 = vpack.c.b16 %v8102, %v8101
    %v8130 = vpack.c.b16 %v8104, %v8103
    %v8131 = vpack.c.b16 %v8106, %v8105
    %v8132 = vpack.c.b16 %v8108, %v8107
    %v8133 = vpack.c.b16 %v8110, %v8109
    %v8134 = vpack.c.b16 %v8112, %v8111
    %v8135 = vpack.c.b16 %v8114, %v8113
    %v8136 = vpack.c.b16 %v8116, %v8115
    %v8137 = vpack.c.b16 %v8118, %v8117
    %v8138 = vpack.c.b16 %v8120, %v8119
    %v8139 = vpack.c.b16 %v8122, %v8121
    %v8140 = vpack.c.b16 %v8124, %v8123
    %8157 = vmatpush.bf16.msra.mxu0 %v8132
    %8158 = vmatpush.bf16.msra.mxu0 %v8131
    %8159 = vmatpush.bf16.msra.mxu0 %v8130
    %8160 = vmatpush.bf16.msra.mxu0 %v8129
    %8161 = vmatpush.bf16.msra.mxu0 %v8128
    %8162 = vmatpush.bf16.msra.mxu0 %v8127
    %8163 = vmatpush.bf16.msra.mxu0 %v8126
    %8164 = vmatpush.bf16.msra.mxu0 %v8125
    %8165 = vmatmul.bf16.gmra.mxu0 %v8023
    %v8166 = vpop.f32.mrf.mxu0
    %v8167 = vadd.f32 %v8059, %v8166
    %v8168 = vpop.f32.mrf.mxu0
    %8169 = vdwg.mxu0
    %8170 = vmatpush.bf16.msra.mxu0 %v8140
    %8171 = vmatpush.bf16.msra.mxu0 %v8139
    %8172 = vmatpush.bf16.msra.mxu0 %v8138
    %8173 = vmatpush.bf16.msra.mxu0 %v8137
    %8174 = vmatpush.bf16.msra.mxu0 %v8136
    %8175 = vmatpush.bf16.msra.mxu0 %v8135
    %8176 = vmatpush.bf16.msra.mxu0 %v8134
    %8177 = vmatpush.bf16.msra.mxu0 %v8133
    %8178 = vmatmul.bf16.gmra.mxu0 %v8024
    %v8179 = vpop.f32.mrf.mxu0
    %v8180 = vadd.f32 %v8167, %v8179
    %v8181 = vpop.f32.mrf.mxu0
    %8182 = vdwg.mxu0
    %8183 = vst [vmem:[#allocation19] sm:$0x3] %v8180
    // Predicated region
    $region86: #{network_forward.1} parent=1 // pred_check
      _
    $region87: #{network_forward.1} parent=1 // pred_check_branch
      %8185 = sbr.rel (0) target = $region89
    $region88: #{network_forward.1} parent=1 // pred_region
      %8187 = vsyncadd [#allocation4], 0
      %s8189 = sshll.u32 [#allocation19], 4
      %s8190 = int_to_ptr.vmem [resolvable:$true] %s8189
      %s8191 = sshll.u32 %s11, 4
      %s8192 = int_to_ptr.hbm [resolvable:$true] %s8191
      %8194 = dma.vmem_to_hbm [thread:$0]  %s8190, 32, %s8192, [#allocation4]
    $region89: #{network_forward.1} parent=1 // pred_fallthru
      _
    // Predicated region
    $region90: #{network_forward.1} parent=1 // pred_check
      _
    $region91: #{network_forward.1} parent=1 // pred_check_branch
      %8196 = sbr.rel (0) target = $region93
    $region92: #{network_forward.1} parent=1 // pred_region
      %8198 = dma.done [#allocation4], 32
    $region93: #{network_forward.1} parent=1 // pred_fallthru
      _
    %8199 = vsyncpa [#allocation3], 1
    %8200 = vsyncpa [#allocation6], 1
    %8201 = vsyncpa [#allocation9], 1
    %8202 = vsyncpa [#allocation12], 1
    %8203 = vsyncpa [#allocation15], 1
    %8204 = vsyncpa [#allocation18], 1
    %8205 = vsyncpa [#allocation4], 1

</llo_original>
